<compile_context>
chip_gen: v5e
topology: v5e:2x2
jax: 0.10.0
libtpu: 0.0.40
codegen_flags: <defaults>
</compile_context>

<pallas_src>
import functools

import jax
import jax.numpy as jnp
from jax.experimental import pallas as pl
from jax.experimental.pallas import tpu as pltpu

LEAKY_SLOPE = 0.01                 # F.leaky_relu default negative_slope
BN_EPS = 1e-5                      # nn.BatchNorm1d default eps
_HIGHEST = jax.lax.Precision.HIGHEST
_LANE = 128                        # lane width: keep the batch axis a multiple of this


def _resnet_kernel(n_sketches, sketch_dim, hidden, out_dim, batch,
                   x_ref, w_in_ref, w_hid_ref, vcols_ref, o_ref):
    """Feature-major (lane-dense) forward pass; batch rides the 128-wide lane axis.

    x_ref     : (Bp, input_dim)         batch-major input (transpose folded into matmul 1)
    w_in_ref  : (2H, input_dim)         rows [Wp ; W1]            (PyTorch (out, in) layout)
    w_hid_ref : (2H + out_dim, H)       rows [W2 ; W3 ; Wo(group-major row order)]
    vcols_ref : (max(2H, out_dim), 10)  cols [b_in, b2, b3, bo, g1, be1, g2, be2, g3, be3]
    o_ref     : (out_dim, Bp)           probabilities, group-major rows, batch on lanes
    """
    H = hidden
    D = out_dim
    b_pad = x_ref.shape[0]

    x = x_ref[...]                       # (Bp, in)
    vc = vcols_ref[...]                  # (R, 10) packed bias / BN params

    def col(idx, rows):
        return vc[:rows, idx:idx + 1]    # (rows, 1) -> broadcasts along lanes

    b_in = col(0, 2 * H)
    b2, b3, bo = col(1, H), col(2, H), col(3, D)
    g1, be1 = col(4, H), col(5, H)
    g2, be2 = col(6, H), col(7, H)
    g3, be3 = col(8, H), col(9, H)

    # Batch-validity column (hoisted once): padded lanes must not contribute to the BN
    # statistics.  Static Python branch -> zero cost when the batch is already aligned.
    if b_pad == batch:
        valid = jnp.ones((b_pad, 1), jnp.float32)
    else:
        valid = (jax.lax.broadcasted_iota(jnp.int32, (b_pad, 1), 0)
                 < batch).astype(jnp.float32)
    inv_n = jnp.float32(1.0 / batch)

    def leaky_relu(v):
        return jnp.where(v >= 0, v, LEAKY_SLOPE * v)

    def batchnorm(v, g, b):
        # Training-mode BN over the batch (lane) axis.  The two lane reductions are
        # K=B contractions on the otherwise-idle MXU (instead of VPU jnp.sum chains);
        # var = E[x^2] - E[x]^2 keeps it a single pass over v.
        s1 = jnp.dot(v, valid, preferred_element_type=jnp.float32, precision=_HIGHEST)
        s2 = jnp.dot(v * v, valid, preferred_element_type=jnp.float32, precision=_HIGHEST)
        mean = s1 * inv_n                             # (H, 1)
        var = s2 * inv_n - mean * mean
        return (v - mean) * jax.lax.rsqrt(var + BN_EPS) * g + b

    # --- fused projection + l1 (shared RHS x): one MXU matmul, input transpose folded in ---
    h0 = jax.lax.dot_general(
        w_in_ref[...], x, dimension_numbers=(((1,), (1,)), ((), ())),
        preferred_element_type=jnp.float32, precision=_HIGHEST) + b_in        # (2H, Bp)
    x_proj = h0[:H, :]                                    # projection(x_input)
    h = batchnorm(leaky_relu(h0[H:, :]), g1, be1)         # bn1(leaky_relu(l1(x)))

    w_all = w_hid_ref[...]                                # (2H + D, H)
    w2 = w_all[:H, :]
    w3 = w_all[H:2 * H, :]
    wo = w_all[2 * H:, :]                                 # group-major rows (see packing)

    # x = bn2(leaky_relu(l2(x) + x_proj))
    h = batchnorm(
        leaky_relu(jnp.dot(w2, h, preferred_element_type=jnp.float32,
                           precision=_HIGHEST) + b2 + x_proj),
        g2, be2)
    # x = l_output(bn3(leaky_relu(l3(x) + x_proj)))
    h = batchnorm(
        leaky_relu(jnp.dot(w3, h, preferred_element_type=jnp.float32,
                           precision=_HIGHEST) + b3 + x_proj),
        g3, be3)
    logits = jnp.dot(wo, h, preferred_element_type=jnp.float32,
                     precision=_HIGHEST) + bo                                 # (D, Bp)

    # --- grouped softmax over contiguous row blocks ---
    # Wo's rows were permuted at pack time so every softmax group is a contiguous block
    # of `sketch_dim` rows (sublane-aligned when sketch_dim % 8 == 0).  Each group needs
    # one aligned static slice, an XLU max/sum reduce, and one exp pass: no masked-select
    # passes, no roll tree, no (D, D) indicator matmul.
    for g in range(n_sketches):                           # static, tiny
        lo, hi = g * sketch_dim, (g + 1) * sketch_dim
        blk = logits[lo:hi, :]                            # (sketch_dim, Bp)
        m = jnp.max(blk, axis=0, keepdims=True)           # (1, Bp)  XLU
        e = jnp.exp(blk - m)                              # EUP
        s = jnp.sum(e, axis=0, keepdims=True)             # (1, Bp)  XLU
        # exact reciprocal: probabilities sum to 1 to f32 accuracy (correctness fix)
        o_ref[lo:hi, :] = e * pl.reciprocal(s, approx=False)


def _pack_params(p, *, hidden_size, n_sketches, sketch_dim):
    """Pack the 14 small parameter tensors into 3 VMEM buffers (done once, outside).

    The output layer's rows are permuted to group-major order so that the kernel's
    softmax groups are contiguous row blocks: kernel row r = g*sketch_dim + s holds the
    original feature j = s*n_sketches + g.
    """
    H = hidden_size
    D = n_sketches * sketch_dim
    r = jnp.arange(D)
    perm = (r % sketch_dim) * n_sketches + (r // sketch_dim)
    wo_p = p["wo"][perm, :]
    bo_p = p["bo"][perm]

    w_in = jnp.concatenate([p["wp"], p["w1"]], axis=0)              # (2H, in)
    w_hid = jnp.concatenate([p["w2"], p["w3"], wo_p], axis=0)       # (2H + D, H)
    R = max(2 * H, D)

    def colvec(v):
        v = v.reshape(-1)
        return jnp.pad(v, (0, R - v.shape[0]))[:, None]             # (R, 1)

    b_in = jnp.concatenate([p["bp"], p["b1"]])
    vcols = jnp.concatenate(
        [colvec(b_in), colvec(p["b2"]), colvec(p["b3"]), colvec(bo_p),
         colvec(p["g1"]), colvec(p["be1"]), colvec(p["g2"]), colvec(p["be2"]),
         colvec(p["g3"]), colvec(p["be3"])], axis=1)                # (R, 10)
    return w_in, w_hid, vcols


def _vmem_limit_bytes():
    """Generation-aware scoped-VMEM limit (v5e/v6e: 128 MiB physical, v7x: 64 MiB)."""
    try:
        cap = int(pltpu.get_tpu_info().vmem_capacity_bytes)
        return max(32 << 20, min(cap - (16 << 20), 96 << 20))
    except Exception:  # no TPU visible / interpret mode on CPU -> conservative default
        return 32 << 20


def resnet_forward(x, params, *, n_sketches, sketch_dim):
    B, input_dim = x.shape
    hidden_size = params["w2"].shape[0]
    output_dim = sketch_dim * n_sketches

    # Lane-align the batch so all kernel loads/stores stay full-width unmasked vst
    # (perf only; BN statistics exclude the padded rows via `valid` inside the kernel).
    b_pad = ((B + _LANE - 1) // _LANE) * _LANE
    x_in = x if b_pad == B else jnp.pad(x, ((0, b_pad - B), (0, 0)))

    w_in, w_hid, vcols = _pack_params(params, hidden_size=hidden_size,
                                      n_sketches=n_sketches, sketch_dim=sketch_dim)

    # Training-mode BN needs full-batch statistics -> whole batch must be VMEM resident.
    vmem_limit = _vmem_limit_bytes()
    live_bytes = 4 * b_pad * (input_dim + 5 * hidden_size + 3 * output_dim) \
        + 4 * (w_in.size + w_hid.size + vcols.size)
    if live_bytes > vmem_limit:
        # TODO(synk): chunked two-pass BN (accumulate stats over batch slabs, then
        # normalize) for batches beyond VMEM residency.
        raise NotImplementedError(
            f"batch {B} needs ~{live_bytes >> 20} MiB VMEM (> {vmem_limit >> 20} MiB)")

    kernel = functools.partial(_resnet_kernel, n_sketches, sketch_dim,
                               hidden_size, output_dim, B)

    flops = 2 * b_pad * (2 * hidden_size * input_dim          # fused proj + l1
                         + 2 * hidden_size * hidden_size      # l2, l3
                         + output_dim * hidden_size           # l_output
                         + 6 * hidden_size)                   # BN sum/sum-of-squares dots
    cost = pl.CostEstimate(flops=flops,
                           transcendentals=b_pad * output_dim,
                           bytes_accessed=live_bytes)

    out_gm = pl.pallas_call(
        kernel,
        out_shape=jax.ShapeDtypeStruct((output_dim, b_pad), jnp.float32),
        # Gridless: the whole batch stays VMEM-resident (required for training-mode BN).
        # TODO(synk): v7x megacore split (grid over lanes + CMEM exchange of BN stats).
        in_specs=[pl.BlockSpec(memory_space=pltpu.MemorySpace.VMEM)] * 4,
        out_specs=pl.BlockSpec(memory_space=pltpu.MemorySpace.VMEM),
        compiler_params=pltpu.CompilerParams(vmem_limit_bytes=vmem_limit),
        cost_estimate=cost,
    )(x_in, w_in, w_hid, vcols)

    # Kernel output is (out_dim, Bp) with group-major rows (lane-dense unmasked stores).
    # One boundary transpose restores the module's (B, out_dim) feature order — this is
    # the documented, required cost of the lane-dense internal layout.
    out = jnp.transpose(out_gm.reshape(n_sketches, sketch_dim, b_pad), (2, 1, 0))
    return out.reshape(b_pad, output_dim)[:B]


def _reference_forward(x, p, *, n_sketches, sketch_dim):
    """Pure-JAX reference of the same forward pass (full-f32 matmul precision)."""
    def lin(v, w, b):
        return jnp.dot(v, w.T, precision=_HIGHEST) + b

    def lrelu(v):
        return jnp.where(v >= 0, v, LEAKY_SLOPE * v)

    def bn(v, g, b):
        mean = jnp.mean(v, axis=0, keepdims=True)
        var = jnp.mean((v - mean) ** 2, axis=0, keepdims=True)
        return (v - mean) / jnp.sqrt(var + BN_EPS) * g + b

    x_proj = lin(x, p["wp"], p["bp"])
    h = bn(lrelu(lin(x, p["w1"], p["b1"])), p["g1"], p["be1"])
    h = bn(lrelu(lin(h, p["w2"], p["b2"]) + x_proj), p["g2"], p["be2"])
    h = bn(lrelu(lin(h, p["w3"], p["b3"]) + x_proj), p["g3"], p["be3"])
    logits = lin(h, p["wo"], p["bo"])
    B = logits.shape[0]
    z = logits.reshape(B, sketch_dim, n_sketches)
    return jax.nn.softmax(z, axis=1).reshape(B, sketch_dim * n_sketches)


def _init_params(key, input_dim, hidden_size, output_dim):
    """Deterministic PyTorch-like init: W (out, in), b (out,), U(-1/sqrt(fan_in), ...)."""
    def linear_init(k, fan_in, fan_out):
        kw, kb = jax.random.split(k)
        bound = 1.0 / jnp.sqrt(jnp.float32(fan_in))
        w = jax.random.uniform(kw, (fan_out, fan_in), jnp.float32, -bound, bound)
        b = jax.random.uniform(kb, (fan_out,), jnp.float32, -bound, bound)
        return w, b

    keys = jax.random.split(key, 5)
    wp, bp = linear_init(keys[0], input_dim, hidden_size)
    w1, b1 = linear_init(keys[1], input_dim, hidden_size)
    w2, b2 = linear_init(keys[2], hidden_size, hidden_size)
    w3, b3 = linear_init(keys[3], hidden_size, hidden_size)
    wo, bo = linear_init(keys[4], hidden_size, output_dim)
    ones = jnp.ones((hidden_size,), jnp.float32)
    zeros = jnp.zeros((hidden_size,), jnp.float32)
    return {
        "wp": wp, "bp": bp, "w1": w1, "b1": b1, "w2": w2, "b2": b2,
        "w3": w3, "b3": b3, "wo": wo, "bo": bo,
        "g1": ones, "be1": zeros, "g2": ones, "be2": zeros, "g3": ones, "be3": zeros,
    }


if __name__ == "__main__":
    # Pin full-f32 matmul precision everywhere: the previous 1.8e-3 kernel/reference
    # mismatch came from TPU DEFAULT (bf16-pass) matmul precision, not from the kernel's
    # math.  Explicit Precision.HIGHEST is also passed at every dot call site.
    jax.config.update("jax_default_matmul_precision", "highest")

    # Small shapes consistent with the module's constructor.
    # batch = 256 (multiple of 128) -> lane-dense layout with full-width stores, no padding.
    n_sketches = 4
    sketch_dim = 8
    input_dim = 32
    hidden_size = 32
    output_dim = sketch_dim * n_sketches   # 32
    batch = 256

    key = jax.random.PRNGKey(0)
    kx, kp = jax.random.split(key)
    x = jax.random.normal(kx, (batch, input_dim), jnp.float32)
    params = _init_params(kp, input_dim, hidden_size, output_dim)

    fwd = jax.jit(functools.partial(resnet_forward,
                                    n_sketches=n_sketches, sketch_dim=sketch_dim))
    out = jax.block_until_ready(fwd(x, params))

    ref = jax.block_until_ready(
        _reference_forward(x, params, n_sketches=n_sketches, sketch_dim=sketch_dim))

    assert out.shape == (batch, output_dim)
    # Expected agreement after the precision fix is ~1e-5; tolerance leaves headroom for
    # per-generation MXU f32 pass-decomposition differences vs. the XLA reference.
    assert bool(jnp.allclose(out, ref, atol=2e-3, rtol=2e-3)), \
        float(jnp.max(jnp.abs(out - ref)))
    print("KERNEL_OK")
</pallas_src>

<mosaic_0001>
module attributes {stable_mosaic.version = 11 : i64} {
  func.func @_resnet_kernel(%arg0: memref<256x32xf32, #tpu.memory_space<vmem>>, %arg1: memref<64x32xf32, #tpu.memory_space<vmem>>, %arg2: memref<96x32xf32, #tpu.memory_space<vmem>>, %arg3: memref<64x10xf32, #tpu.memory_space<vmem>>, %arg4: memref<32x256xf32, #tpu.memory_space<vmem>>) attributes {dimension_semantics = [], scalar_prefetch = 0 : i64, scratch_operands = 0 : i64, tpu.core_type = #tpu.core_type<tc>} {
    %c0 = arith.constant 0 : index
    %c0_0 = arith.constant 0 : index
    %0 = vector.load %arg0[%c0, %c0_0] : memref<256x32xf32, #tpu.memory_space<vmem>>, vector<256x32xf32>
    %c0_1 = arith.constant 0 : index
    %c0_2 = arith.constant 0 : index
    %1 = vector.load %arg3[%c0_1, %c0_2] : memref<64x10xf32, #tpu.memory_space<vmem>>, vector<64x10xf32>
    %2 = vector.extract_strided_slice %1 {offsets = [0, 0], sizes = [64, 1], strides = [1, 1]} : vector<64x10xf32> to vector<64x1xf32>
    %3 = vector.extract_strided_slice %1 {offsets = [0, 1], sizes = [32, 1], strides = [1, 1]} : vector<64x10xf32> to vector<32x1xf32>
    %4 = vector.extract_strided_slice %1 {offsets = [0, 2], sizes = [32, 1], strides = [1, 1]} : vector<64x10xf32> to vector<32x1xf32>
    %5 = vector.extract_strided_slice %1 {offsets = [0, 3], sizes = [32, 1], strides = [1, 1]} : vector<64x10xf32> to vector<32x1xf32>
    %6 = vector.extract_strided_slice %1 {offsets = [0, 4], sizes = [32, 1], strides = [1, 1]} : vector<64x10xf32> to vector<32x1xf32>
    %7 = vector.extract_strided_slice %1 {offsets = [0, 5], sizes = [32, 1], strides = [1, 1]} : vector<64x10xf32> to vector<32x1xf32>
    %8 = vector.extract_strided_slice %1 {offsets = [0, 6], sizes = [32, 1], strides = [1, 1]} : vector<64x10xf32> to vector<32x1xf32>
    %9 = vector.extract_strided_slice %1 {offsets = [0, 7], sizes = [32, 1], strides = [1, 1]} : vector<64x10xf32> to vector<32x1xf32>
    %10 = vector.extract_strided_slice %1 {offsets = [0, 8], sizes = [32, 1], strides = [1, 1]} : vector<64x10xf32> to vector<32x1xf32>
    %11 = vector.extract_strided_slice %1 {offsets = [0, 9], sizes = [32, 1], strides = [1, 1]} : vector<64x10xf32> to vector<32x1xf32>
    %cst = arith.constant 1.000000e+00 : f32
    %12 = vector.broadcast %cst : f32 to vector<256x1xf32>
    %c0_3 = arith.constant 0 : index
    %c0_4 = arith.constant 0 : index
    %13 = vector.load %arg1[%c0_3, %c0_4] : memref<64x32xf32, #tpu.memory_space<vmem>>, vector<64x32xf32>
    %cst_5 = arith.constant dense<0.000000e+00> : vector<64x256xf32>
    %14 = tpu.matmul %13, %0, %cst_5 {dimension_numbers = #tpu.dot_dimension_numbers<[1], [1], [0], [0], [0, 0, 1, 0], [], []>, precision = #tpu.contract_precision<fp32>} : vector<64x32xf32>, vector<256x32xf32>, vector<64x256xf32> -> vector<64x256xf32>
    %15 = vector.broadcast %2 : vector<64x1xf32> to vector<64x256xf32>
    %16 = arith.addf %14, %15 : vector<64x256xf32>
    %17 = vector.extract_strided_slice %16 {offsets = [0, 0], sizes = [32, 256], strides = [1, 1]} : vector<64x256xf32> to vector<32x256xf32>
    %18 = vector.extract_strided_slice %16 {offsets = [32, 0], sizes = [32, 256], strides = [1, 1]} : vector<64x256xf32> to vector<32x256xf32>
    %cst_6 = arith.constant 0.000000e+00 : f32
    %19 = vector.broadcast %cst_6 : f32 to vector<32x256xf32>
    %20 = arith.cmpf oge, %18, %19 : vector<32x256xf32>
    %cst_7 = arith.constant 0.00999999977 : f32
    %21 = vector.broadcast %cst_7 : f32 to vector<32x256xf32>
    %22 = arith.mulf %21, %18 : vector<32x256xf32>
    %23 = arith.select %20, %18, %22 : vector<32x256xi1>, vector<32x256xf32>
    %cst_8 = arith.constant dense<0.000000e+00> : vector<32x1xf32>
    %24 = tpu.matmul %23, %12, %cst_8 {dimension_numbers = #tpu.dot_dimension_numbers<[1], [0], [0], [1], [0, 0, 1, 1], [], []>, precision = #tpu.contract_precision<fp32>} : vector<32x256xf32>, vector<256x1xf32>, vector<32x1xf32> -> vector<32x1xf32>
    %25 = arith.mulf %23, %23 : vector<32x256xf32>
    %cst_9 = arith.constant dense<0.000000e+00> : vector<32x1xf32>
    %26 = tpu.matmul %25, %12, %cst_9 {dimension_numbers = #tpu.dot_dimension_numbers<[1], [0], [0], [1], [0, 0, 1, 1], [], []>, precision = #tpu.contract_precision<fp32>} : vector<32x256xf32>, vector<256x1xf32>, vector<32x1xf32> -> vector<32x1xf32>
    %cst_10 = arith.constant 3.906250e-03 : f32
    %27 = vector.broadcast %cst_10 : f32 to vector<32x1xf32>
    %28 = arith.mulf %24, %27 : vector<32x1xf32>
    %cst_11 = arith.constant 3.906250e-03 : f32
    %29 = vector.broadcast %cst_11 : f32 to vector<32x1xf32>
    %30 = arith.mulf %26, %29 : vector<32x1xf32>
    %31 = arith.mulf %28, %28 : vector<32x1xf32>
    %32 = arith.subf %30, %31 : vector<32x1xf32>
    %33 = vector.broadcast %28 : vector<32x1xf32> to vector<32x256xf32>
    %34 = arith.subf %23, %33 : vector<32x256xf32>
    %cst_12 = arith.constant 9.99999974E-6 : f32
    %35 = vector.broadcast %cst_12 : f32 to vector<32x1xf32>
    %36 = arith.addf %32, %35 : vector<32x1xf32>
    %37 = math.rsqrt %36 : vector<32x1xf32>
    %38 = vector.broadcast %37 : vector<32x1xf32> to vector<32x256xf32>
    %39 = arith.mulf %34, %38 : vector<32x256xf32>
    %40 = vector.broadcast %6 : vector<32x1xf32> to vector<32x256xf32>
    %41 = arith.mulf %39, %40 : vector<32x256xf32>
    %42 = vector.broadcast %7 : vector<32x1xf32> to vector<32x256xf32>
    %43 = arith.addf %41, %42 : vector<32x256xf32>
    %c0_13 = arith.constant 0 : index
    %c0_14 = arith.constant 0 : index
    %44 = vector.load %arg2[%c0_13, %c0_14] : memref<96x32xf32, #tpu.memory_space<vmem>>, vector<96x32xf32>
    %45 = vector.extract_strided_slice %44 {offsets = [0, 0], sizes = [32, 32], strides = [1, 1]} : vector<96x32xf32> to vector<32x32xf32>
    %46 = vector.extract_strided_slice %44 {offsets = [32, 0], sizes = [32, 32], strides = [1, 1]} : vector<96x32xf32> to vector<32x32xf32>
    %47 = vector.extract_strided_slice %44 {offsets = [64, 0], sizes = [32, 32], strides = [1, 1]} : vector<96x32xf32> to vector<32x32xf32>
    %cst_15 = arith.constant dense<0.000000e+00> : vector<32x256xf32>
    %48 = tpu.matmul %45, %43, %cst_15 {dimension_numbers = #tpu.dot_dimension_numbers<[1], [0], [0], [1], [0, 0, 1, 1], [], []>, precision = #tpu.contract_precision<fp32>} : vector<32x32xf32>, vector<32x256xf32>, vector<32x256xf32> -> vector<32x256xf32>
    %49 = vector.broadcast %3 : vector<32x1xf32> to vector<32x256xf32>
    %50 = arith.addf %48, %49 : vector<32x256xf32>
    %51 = arith.addf %50, %17 : vector<32x256xf32>
    %cst_16 = arith.constant 0.000000e+00 : f32
    %52 = vector.broadcast %cst_16 : f32 to vector<32x256xf32>
    %53 = arith.cmpf oge, %51, %52 : vector<32x256xf32>
    %cst_17 = arith.constant 0.00999999977 : f32
    %54 = vector.broadcast %cst_17 : f32 to vector<32x256xf32>
    %55 = arith.mulf %54, %51 : vector<32x256xf32>
    %56 = arith.select %53, %51, %55 : vector<32x256xi1>, vector<32x256xf32>
    %cst_18 = arith.constant dense<0.000000e+00> : vector<32x1xf32>
    %57 = tpu.matmul %56, %12, %cst_18 {dimension_numbers = #tpu.dot_dimension_numbers<[1], [0], [0], [1], [0, 0, 1, 1], [], []>, precision = #tpu.contract_precision<fp32>} : vector<32x256xf32>, vector<256x1xf32>, vector<32x1xf32> -> vector<32x1xf32>
    %58 = arith.mulf %56, %56 : vector<32x256xf32>
    %cst_19 = arith.constant dense<0.000000e+00> : vector<32x1xf32>
    %59 = tpu.matmul %58, %12, %cst_19 {dimension_numbers = #tpu.dot_dimension_numbers<[1], [0], [0], [1], [0, 0, 1, 1], [], []>, precision = #tpu.contract_precision<fp32>} : vector<32x256xf32>, vector<256x1xf32>, vector<32x1xf32> -> vector<32x1xf32>
    %cst_20 = arith.constant 3.906250e-03 : f32
    %60 = vector.broadcast %cst_20 : f32 to vector<32x1xf32>
    %61 = arith.mulf %57, %60 : vector<32x1xf32>
    %cst_21 = arith.constant 3.906250e-03 : f32
    %62 = vector.broadcast %cst_21 : f32 to vector<32x1xf32>
    %63 = arith.mulf %59, %62 : vector<32x1xf32>
    %64 = arith.mulf %61, %61 : vector<32x1xf32>
    %65 = arith.subf %63, %64 : vector<32x1xf32>
    %66 = vector.broadcast %61 : vector<32x1xf32> to vector<32x256xf32>
    %67 = arith.subf %56, %66 : vector<32x256xf32>
    %cst_22 = arith.constant 9.99999974E-6 : f32
    %68 = vector.broadcast %cst_22 : f32 to vector<32x1xf32>
    %69 = arith.addf %65, %68 : vector<32x1xf32>
    %70 = math.rsqrt %69 : vector<32x1xf32>
    %71 = vector.broadcast %70 : vector<32x1xf32> to vector<32x256xf32>
    %72 = arith.mulf %67, %71 : vector<32x256xf32>
    %73 = vector.broadcast %8 : vector<32x1xf32> to vector<32x256xf32>
    %74 = arith.mulf %72, %73 : vector<32x256xf32>
    %75 = vector.broadcast %9 : vector<32x1xf32> to vector<32x256xf32>
    %76 = arith.addf %74, %75 : vector<32x256xf32>
    %cst_23 = arith.constant dense<0.000000e+00> : vector<32x256xf32>
    %77 = tpu.matmul %46, %76, %cst_23 {dimension_numbers = #tpu.dot_dimension_numbers<[1], [0], [0], [1], [0, 0, 1, 1], [], []>, precision = #tpu.contract_precision<fp32>} : vector<32x32xf32>, vector<32x256xf32>, vector<32x256xf32> -> vector<32x256xf32>
    %78 = vector.broadcast %4 : vector<32x1xf32> to vector<32x256xf32>
    %79 = arith.addf %77, %78 : vector<32x256xf32>
    %80 = arith.addf %79, %17 : vector<32x256xf32>
    %cst_24 = arith.constant 0.000000e+00 : f32
    %81 = vector.broadcast %cst_24 : f32 to vector<32x256xf32>
    %82 = arith.cmpf oge, %80, %81 : vector<32x256xf32>
    %cst_25 = arith.constant 0.00999999977 : f32
    %83 = vector.broadcast %cst_25 : f32 to vector<32x256xf32>
    %84 = arith.mulf %83, %80 : vector<32x256xf32>
    %85 = arith.select %82, %80, %84 : vector<32x256xi1>, vector<32x256xf32>
    %cst_26 = arith.constant dense<0.000000e+00> : vector<32x1xf32>
    %86 = tpu.matmul %85, %12, %cst_26 {dimension_numbers = #tpu.dot_dimension_numbers<[1], [0], [0], [1], [0, 0, 1, 1], [], []>, precision = #tpu.contract_precision<fp32>} : vector<32x256xf32>, vector<256x1xf32>, vector<32x1xf32> -> vector<32x1xf32>
    %87 = arith.mulf %85, %85 : vector<32x256xf32>
    %cst_27 = arith.constant dense<0.000000e+00> : vector<32x1xf32>
    %88 = tpu.matmul %87, %12, %cst_27 {dimension_numbers = #tpu.dot_dimension_numbers<[1], [0], [0], [1], [0, 0, 1, 1], [], []>, precision = #tpu.contract_precision<fp32>} : vector<32x256xf32>, vector<256x1xf32>, vector<32x1xf32> -> vector<32x1xf32>
    %cst_28 = arith.constant 3.906250e-03 : f32
    %89 = vector.broadcast %cst_28 : f32 to vector<32x1xf32>
    %90 = arith.mulf %86, %89 : vector<32x1xf32>
    %cst_29 = arith.constant 3.906250e-03 : f32
    %91 = vector.broadcast %cst_29 : f32 to vector<32x1xf32>
    %92 = arith.mulf %88, %91 : vector<32x1xf32>
    %93 = arith.mulf %90, %90 : vector<32x1xf32>
    %94 = arith.subf %92, %93 : vector<32x1xf32>
    %95 = vector.broadcast %90 : vector<32x1xf32> to vector<32x256xf32>
    %96 = arith.subf %85, %95 : vector<32x256xf32>
    %cst_30 = arith.constant 9.99999974E-6 : f32
    %97 = vector.broadcast %cst_30 : f32 to vector<32x1xf32>
    %98 = arith.addf %94, %97 : vector<32x1xf32>
    %99 = math.rsqrt %98 : vector<32x1xf32>
    %100 = vector.broadcast %99 : vector<32x1xf32> to vector<32x256xf32>
    %101 = arith.mulf %96, %100 : vector<32x256xf32>
    %102 = vector.broadcast %10 : vector<32x1xf32> to vector<32x256xf32>
    %103 = arith.mulf %101, %102 : vector<32x256xf32>
    %104 = vector.broadcast %11 : vector<32x1xf32> to vector<32x256xf32>
    %105 = arith.addf %103, %104 : vector<32x256xf32>
    %cst_31 = arith.constant dense<0.000000e+00> : vector<32x256xf32>
    %106 = tpu.matmul %47, %105, %cst_31 {dimension_numbers = #tpu.dot_dimension_numbers<[1], [0], [0], [1], [0, 0, 1, 1], [], []>, precision = #tpu.contract_precision<fp32>} : vector<32x32xf32>, vector<32x256xf32>, vector<32x256xf32> -> vector<32x256xf32>
    %107 = vector.broadcast %5 : vector<32x1xf32> to vector<32x256xf32>
    %108 = arith.addf %106, %107 : vector<32x256xf32>
    %109 = vector.extract_strided_slice %108 {offsets = [0, 0], sizes = [8, 256], strides = [1, 1]} : vector<32x256xf32> to vector<8x256xf32>
    %cst_32 = arith.constant dense<0xFF800000> : vector<256xf32>
    %110 = vector.multi_reduction <maximumf>, %109, %cst_32 [0] : vector<8x256xf32> to vector<256xf32>
    %111 = vector.shape_cast %110 : vector<256xf32> to vector<1x256xf32>
    %112 = vector.broadcast %111 : vector<1x256xf32> to vector<8x256xf32>
    %113 = arith.subf %109, %112 : vector<8x256xf32>
    %114 = math.exp %113 : vector<8x256xf32>
    %cst_33 = arith.constant dense<0.000000e+00> : vector<256xf32>
    %115 = vector.multi_reduction <add>, %114, %cst_33 [0] : vector<8x256xf32> to vector<256xf32>
    %116 = vector.shape_cast %115 : vector<256xf32> to vector<1x256xf32>
    %117 = tpu.reciprocal %116 : vector<1x256xf32> -> vector<1x256xf32>
    %118 = vector.broadcast %117 : vector<1x256xf32> to vector<8x256xf32>
    %119 = arith.mulf %114, %118 : vector<8x256xf32>
    %c0_34 = arith.constant 0 : index
    %c0_35 = arith.constant 0 : index
    %120 = vector.load %arg4[%c0_34, %c0_35] : memref<32x256xf32, #tpu.memory_space<vmem>>, vector<8x256xf32>
    tpu.vector_store %arg4[%c0_34, %c0_35], %119 {strides = array<i32>} : memref<32x256xf32, #tpu.memory_space<vmem>>, vector<8x256xf32>,
    %121 = vector.extract_strided_slice %108 {offsets = [8, 0], sizes = [8, 256], strides = [1, 1]} : vector<32x256xf32> to vector<8x256xf32>
    %cst_36 = arith.constant dense<0xFF800000> : vector<256xf32>
    %122 = vector.multi_reduction <maximumf>, %121, %cst_36 [0] : vector<8x256xf32> to vector<256xf32>
    %123 = vector.shape_cast %122 : vector<256xf32> to vector<1x256xf32>
    %124 = vector.broadcast %123 : vector<1x256xf32> to vector<8x256xf32>
    %125 = arith.subf %121, %124 : vector<8x256xf32>
    %126 = math.exp %125 : vector<8x256xf32>
    %cst_37 = arith.constant dense<0.000000e+00> : vector<256xf32>
    %127 = vector.multi_reduction <add>, %126, %cst_37 [0] : vector<8x256xf32> to vector<256xf32>
    %128 = vector.shape_cast %127 : vector<256xf32> to vector<1x256xf32>
    %129 = tpu.reciprocal %128 : vector<1x256xf32> -> vector<1x256xf32>
    %130 = vector.broadcast %129 : vector<1x256xf32> to vector<8x256xf32>
    %131 = arith.mulf %126, %130 : vector<8x256xf32>
    %c8 = arith.constant 8 : index
    %c0_38 = arith.constant 0 : index
    %132 = vector.load %arg4[%c8, %c0_38] : memref<32x256xf32, #tpu.memory_space<vmem>>, vector<8x256xf32>
    tpu.vector_store %arg4[%c8, %c0_38], %131 {strides = array<i32>} : memref<32x256xf32, #tpu.memory_space<vmem>>, vector<8x256xf32>,
    %133 = vector.extract_strided_slice %108 {offsets = [16, 0], sizes = [8, 256], strides = [1, 1]} : vector<32x256xf32> to vector<8x256xf32>
    %cst_39 = arith.constant dense<0xFF800000> : vector<256xf32>
    %134 = vector.multi_reduction <maximumf>, %133, %cst_39 [0] : vector<8x256xf32> to vector<256xf32>
    %135 = vector.shape_cast %134 : vector<256xf32> to vector<1x256xf32>
    %136 = vector.broadcast %135 : vector<1x256xf32> to vector<8x256xf32>
    %137 = arith.subf %133, %136 : vector<8x256xf32>
    %138 = math.exp %137 : vector<8x256xf32>
    %cst_40 = arith.constant dense<0.000000e+00> : vector<256xf32>
    %139 = vector.multi_reduction <add>, %138, %cst_40 [0] : vector<8x256xf32> to vector<256xf32>
    %140 = vector.shape_cast %139 : vector<256xf32> to vector<1x256xf32>
    %141 = tpu.reciprocal %140 : vector<1x256xf32> -> vector<1x256xf32>
    %142 = vector.broadcast %141 : vector<1x256xf32> to vector<8x256xf32>
    %143 = arith.mulf %138, %142 : vector<8x256xf32>
    %c16 = arith.constant 16 : index
    %c0_41 = arith.constant 0 : index
    %144 = vector.load %arg4[%c16, %c0_41] : memref<32x256xf32, #tpu.memory_space<vmem>>, vector<8x256xf32>
    tpu.vector_store %arg4[%c16, %c0_41], %143 {strides = array<i32>} : memref<32x256xf32, #tpu.memory_space<vmem>>, vector<8x256xf32>,
    %145 = vector.extract_strided_slice %108 {offsets = [24, 0], sizes = [8, 256], strides = [1, 1]} : vector<32x256xf32> to vector<8x256xf32>
    %cst_42 = arith.constant dense<0xFF800000> : vector<256xf32>
    %146 = vector.multi_reduction <maximumf>, %145, %cst_42 [0] : vector<8x256xf32> to vector<256xf32>
    %147 = vector.shape_cast %146 : vector<256xf32> to vector<1x256xf32>
    %148 = vector.broadcast %147 : vector<1x256xf32> to vector<8x256xf32>
    %149 = arith.subf %145, %148 : vector<8x256xf32>
    %150 = math.exp %149 : vector<8x256xf32>
    %cst_43 = arith.constant dense<0.000000e+00> : vector<256xf32>
    %151 = vector.multi_reduction <add>, %150, %cst_43 [0] : vector<8x256xf32> to vector<256xf32>
    %152 = vector.shape_cast %151 : vector<256xf32> to vector<1x256xf32>
    %153 = tpu.reciprocal %152 : vector<1x256xf32> -> vector<1x256xf32>
    %154 = vector.broadcast %153 : vector<1x256xf32> to vector<8x256xf32>
    %155 = arith.mulf %150, %154 : vector<8x256xf32>
    %c24 = arith.constant 24 : index
    %c0_44 = arith.constant 0 : index
    %156 = vector.load %arg4[%c24, %c0_44] : memref<32x256xf32, #tpu.memory_space<vmem>>, vector<8x256xf32>
    tpu.vector_store %arg4[%c24, %c0_44], %155 {strides = array<i32>} : memref<32x256xf32, #tpu.memory_space<vmem>>, vector<8x256xf32>,
    return
  }
}

</mosaic_0001>

<llo_original>
// kernel: resnet_forward.1
$region0: #{resnet_forward.1}
  #allocation0 [shape = 'u32[]', space=smem, size = 0x4, offset = 0x4, fixed_abs, tag = 'smem constant byte address 0x4 - core index']
  #allocation1 [shape = 'u32[72,128]{1,0:T(1,128)}', space=vmem, size = 0x9000, scoped, tag = 'internal scratch']
  %s0 = inlined_call_operand.vmem [shape: f32[256,32], index: 0, kind: input, shape index: {}]
  %s1 = inlined_call_operand.vmem [shape: f32[64,32], index: 1, kind: input, shape index: {}]
  %s2 = inlined_call_operand.vmem [shape: f32[96,32], index: 2, kind: input, shape index: {}]
  %s3 = inlined_call_operand.vmem [shape: f32[64,10], index: 3, kind: input, shape index: {}]
  %s4 = inlined_call_operand.vmem [shape: f32[32,256], index: 4, kind: output, shape index: {}]
  %s5 = sld [smem:[#allocation0]]
  $region26: #{resnet_forward.1} parent=0
    _
  %s7 = ssub.s32 1, %s5
  %s8 = scalar_select 0, %s7, %s5
  // Predicated region
  $region2: #{resnet_forward.1} parent=0 // pred_check
    _
  $region3: #{resnet_forward.1} parent=0 // pred_check_branch
    %10 = sbr.rel (0) target = $region5
  $region4: #{resnet_forward.1} parent=0 // pred_region
    _
  $region5: #{resnet_forward.1} parent=0 // pred_fallthru
    _
  // Predicated region
  $region6: #{resnet_forward.1} parent=0 // pred_check
    _
  $region7: #{resnet_forward.1} parent=0 // pred_check_branch
    %12 = sbr.rel (0) target = $region9
  $region8: #{resnet_forward.1} parent=0 // pred_region
    _
  $region9: #{resnet_forward.1} parent=0 // pred_fallthru
    _
  // Predicated region
  $region10: #{resnet_forward.1} parent=0 // pred_check
    _
  $region11: #{resnet_forward.1} parent=0 // pred_check_branch
    %14 = sbr.rel (0) target = $region13
  $region12: #{resnet_forward.1} parent=0 // pred_region
    _
  $region13: #{resnet_forward.1} parent=0 // pred_fallthru
    _
  // Predicated region
  $region14: #{resnet_forward.1} parent=0 // pred_check
    _
  $region15: #{resnet_forward.1} parent=0 // pred_check_branch
    %16 = sbr.rel (0) target = $region17
  $region16: #{resnet_forward.1} parent=0 // pred_region
    _
  $region17: #{resnet_forward.1} parent=0 // pred_fallthru
    _
  %v17 = vld [vmem:[%s0] sm:$0xff]
  %v18 = vld [vmem:[%s0 + $0x8] sm:$0xff]
  %v19 = vld [vmem:[%s0 + $0x10] sm:$0xff]
  %v20 = vld [vmem:[%s0 + $0x18] sm:$0xff]
  %v21 = vld [vmem:[%s0 + $0x20] sm:$0xff]
  %v22 = vld [vmem:[%s0 + $0x28] sm:$0xff]
  %v23 = vld [vmem:[%s0 + $0x30] sm:$0xff]
  %v24 = vld [vmem:[%s0 + $0x38] sm:$0xff]
  %v25 = vld [vmem:[%s0 + $0x40] sm:$0xff]
  %v26 = vld [vmem:[%s0 + $0x48] sm:$0xff]
  %v27 = vld [vmem:[%s0 + $0x50] sm:$0xff]
  %v28 = vld [vmem:[%s0 + $0x58] sm:$0xff]
  %v29 = vld [vmem:[%s0 + $0x60] sm:$0xff]
  %v30 = vld [vmem:[%s0 + $0x68] sm:$0xff]
  %v31 = vld [vmem:[%s0 + $0x70] sm:$0xff]
  %v32 = vld [vmem:[%s0 + $0x78] sm:$0xff]
  %v33 = vld [vmem:[%s0 + $0x80] sm:$0xff]
  %v34 = vld [vmem:[%s0 + $0x88] sm:$0xff]
  %v35 = vld [vmem:[%s0 + $0x90] sm:$0xff]
  %v36 = vld [vmem:[%s0 + $0x98] sm:$0xff]
  %v37 = vld [vmem:[%s0 + $0xa0] sm:$0xff]
  %v38 = vld [vmem:[%s0 + $0xa8] sm:$0xff]
  %v39 = vld [vmem:[%s0 + $0xb0] sm:$0xff]
  %v40 = vld [vmem:[%s0 + $0xb8] sm:$0xff]
  %v41 = vld [vmem:[%s0 + $0xc0] sm:$0xff]
  %v42 = vld [vmem:[%s0 + $0xc8] sm:$0xff]
  %v43 = vld [vmem:[%s0 + $0xd0] sm:$0xff]
  %v44 = vld [vmem:[%s0 + $0xd8] sm:$0xff]
  %v45 = vld [vmem:[%s0 + $0xe0] sm:$0xff]
  %v46 = vld [vmem:[%s0 + $0xe8] sm:$0xff]
  %v47 = vld [vmem:[%s0 + $0xf0] sm:$0xff]
  %v48 = vld [vmem:[%s0 + $0xf8] sm:$0xff]
  %v49 = vld [vmem:[%s3] sm:$0xff]
  %v50 = vld [vmem:[%s3 + $0x8] sm:$0xff]
  %v51 = vld [vmem:[%s3 + $0x10] sm:$0xff]
  %v52 = vld [vmem:[%s3 + $0x18] sm:$0xff]
  %v53 = vld [vmem:[%s3 + $0x20] sm:$0xff]
  %v54 = vld [vmem:[%s3 + $0x28] sm:$0xff]
  %v55 = vld [vmem:[%s3 + $0x30] sm:$0xff]
  %v56 = vld [vmem:[%s3 + $0x38] sm:$0xff]
  %v57 = vld [vmem:[%s1] sm:$0xff]
  %v58 = vld [vmem:[%s1 + $0x8] sm:$0xff]
  %v59 = vld [vmem:[%s1 + $0x10] sm:$0xff]
  %v60 = vld [vmem:[%s1 + $0x18] sm:$0xff]
  %v61 = vld [vmem:[%s1 + $0x20] sm:$0xff]
  %v62 = vld [vmem:[%s1 + $0x28] sm:$0xff]
  %v63 = vld [vmem:[%s1 + $0x30] sm:$0xff]
  %v64 = vld [vmem:[%s1 + $0x38] sm:$0xff]
  %66 = vset.pattern.permute.xlu0 0
  %67 = vperm.xlu0 %66, %v49
  %v68 = vpop.permute.xlu0 %67
  %71 = vset.pattern.permute.xlu0 0
  %72 = vperm.xlu0 %71, %v50
  %v73 = vpop.permute.xlu0 %72
  %76 = vset.pattern.permute.xlu0 0
  %77 = vperm.xlu0 %76, %v51
  %v78 = vpop.permute.xlu0 %77
  %81 = vset.pattern.permute.xlu0 0
  %82 = vperm.xlu0 %81, %v52
  %v83 = vpop.permute.xlu0 %82
  %86 = vset.pattern.permute.xlu0 0
  %87 = vperm.xlu0 %86, %v53
  %v88 = vpop.permute.xlu0 %87
  %91 = vset.pattern.permute.xlu0 0
  %92 = vperm.xlu0 %91, %v54
  %v93 = vpop.permute.xlu0 %92
  %96 = vset.pattern.permute.xlu0 0
  %97 = vperm.xlu0 %96, %v55
  %v98 = vpop.permute.xlu0 %97
  %101 = vset.pattern.permute.xlu0 0
  %102 = vperm.xlu0 %101, %v56
  %v103 = vpop.permute.xlu0 %102
  %vm105 = vcmask 261120
  %v107 = vsel %vm105, %v57, 0
  %v110 = vsel %vm105, %v58, 0
  %v113 = vsel %vm105, %v59, 0
  %v116 = vsel %vm105, %v60, 0
  %v119 = vsel %vm105, %v61, 0
  %v122 = vsel %vm105, %v62, 0
  %v125 = vsel %vm105, %v63, 0
  %v128 = vsel %vm105, %v64, 0
  %v131 = vsel %vm105, %v17, 0
  %v134 = vsel %vm105, %v18, 0
  %v137 = vsel %vm105, %v19, 0
  %v140 = vsel %vm105, %v20, 0
  %v143 = vsel %vm105, %v21, 0
  %v146 = vsel %vm105, %v22, 0
  %v149 = vsel %vm105, %v23, 0
  %v152 = vsel %vm105, %v24, 0
  %v155 = vsel %vm105, %v25, 0
  %v158 = vsel %vm105, %v26, 0
  %v161 = vsel %vm105, %v27, 0
  %v164 = vsel %vm105, %v28, 0
  %v167 = vsel %vm105, %v29, 0
  %v170 = vsel %vm105, %v30, 0
  %v173 = vsel %vm105, %v31, 0
  %v176 = vsel %vm105, %v32, 0
  %v179 = vsel %vm105, %v33, 0
  %v182 = vsel %vm105, %v34, 0
  %v185 = vsel %vm105, %v35, 0
  %v188 = vsel %vm105, %v36, 0
  %v191 = vsel %vm105, %v37, 0
  %v194 = vsel %vm105, %v38, 0
  %v197 = vsel %vm105, %v39, 0
  %v200 = vsel %vm105, %v40, 0
  %v203 = vsel %vm105, %v41, 0
  %v206 = vsel %vm105, %v42, 0
  %v209 = vsel %vm105, %v43, 0
  %v212 = vsel %vm105, %v44, 0
  %v215 = vsel %vm105, %v45, 0
  %v218 = vsel %vm105, %v46, 0
  %v221 = vsel %vm105, %v47, 0
  %v224 = vsel %vm105, %v48, 0
  %v226 = vand.u32 %v176, 4294901760
  %227 = vmatpush.xpose.msra.mxu0 %v226
  %v228 = vand.u32 %v173, 4294901760
  %229 = vmatpush.xpose.msra.mxu0 %v228
  %v230 = vand.u32 %v170, 4294901760
  %231 = vmatpush.xpose.msra.mxu0 %v230
  %v232 = vand.u32 %v167, 4294901760
  %233 = vmatpush.xpose.msra.mxu0 %v232
  %v234 = vand.u32 %v164, 4294901760
  %235 = vmatpush.xpose.msra.mxu0 %v234
  %v236 = vand.u32 %v161, 4294901760
  %237 = vmatpush.xpose.msra.mxu0 %v236
  %v238 = vand.u32 %v158, 4294901760
  %239 = vmatpush.xpose.msra.mxu0 %v238
  %v240 = vand.u32 %v155, 4294901760
  %241 = vmatpush.xpose.msra.mxu0 %v240
  %v242 = vand.u32 %v152, 4294901760
  %243 = vmatpush.xpose.msra.mxu0 %v242
  %v244 = vand.u32 %v149, 4294901760
  %245 = vmatpush.xpose.msra.mxu0 %v244
  %v246 = vand.u32 %v146, 4294901760
  %247 = vmatpush.xpose.msra.mxu0 %v246
  %v248 = vand.u32 %v143, 4294901760
  %249 = vmatpush.xpose.msra.mxu0 %v248
  %v250 = vand.u32 %v140, 4294901760
  %251 = vmatpush.xpose.msra.mxu0 %v250
  %v252 = vand.u32 %v137, 4294901760
  %253 = vmatpush.xpose.msra.mxu0 %v252
  %v254 = vand.u32 %v134, 4294901760
  %255 = vmatpush.xpose.msra.mxu0 %v254
  %v256 = vand.u32 %v131, 4294901760
  %257 = vmatpush.xpose.msra.mxu0 %v256
  %v258 = vand.u32 %v107, 4294901760
  %v259 = vsub.f32 %v107, %v258
  %v260 = vand.u32 %v259, 4294901760
  %v261 = vsub.f32 %v259, %v260
  %v262 = vand.u32 %v261, 4294901760
  %263 = vmatmul.f32.gmra.mxu0 %v262
  %v264 = vpop.f32.mrf.mxu0
  %v265 = vadd.f32 %v68, %v264
  %v266 = vand.u32 %v110, 4294901760
  %v267 = vsub.f32 %v110, %v266
  %v268 = vand.u32 %v267, 4294901760
  %v269 = vsub.f32 %v267, %v268
  %v270 = vand.u32 %v269, 4294901760
  %271 = vmatmul.f32.gmra.mxu0 %v270
  %v272 = vpop.f32.mrf.mxu0
  %v273 = vadd.f32 %v73, %v272
  %v274 = vand.u32 %v113, 4294901760
  %v275 = vsub.f32 %v113, %v274
  %v276 = vand.u32 %v275, 4294901760
  %v277 = vsub.f32 %v275, %v276
  %v278 = vand.u32 %v277, 4294901760
  %279 = vmatmul.f32.gmra.mxu0 %v278
  %v280 = vpop.f32.mrf.mxu0
  %v281 = vadd.f32 %v78, %v280
  %v282 = vand.u32 %v116, 4294901760
  %v283 = vsub.f32 %v116, %v282
  %v284 = vand.u32 %v283, 4294901760
  %v285 = vsub.f32 %v283, %v284
  %v286 = vand.u32 %v285, 4294901760
  %287 = vmatmul.f32.gmra.mxu0 %v286
  %v288 = vpop.f32.mrf.mxu0
  %v289 = vadd.f32 %v83, %v288
  %v290 = vand.u32 %v119, 4294901760
  %v291 = vsub.f32 %v119, %v290
  %v292 = vand.u32 %v291, 4294901760
  %v293 = vsub.f32 %v291, %v292
  %v294 = vand.u32 %v293, 4294901760
  %295 = vmatmul.f32.gmra.mxu0 %v294
  %v296 = vpop.f32.mrf.mxu0
  %v297 = vadd.f32 %v88, %v296
  %v298 = vand.u32 %v122, 4294901760
  %v299 = vsub.f32 %v122, %v298
  %v300 = vand.u32 %v299, 4294901760
  %v301 = vsub.f32 %v299, %v300
  %v302 = vand.u32 %v301, 4294901760
  %303 = vmatmul.f32.gmra.mxu0 %v302
  %v304 = vpop.f32.mrf.mxu0
  %v305 = vadd.f32 %v93, %v304
  %v306 = vand.u32 %v125, 4294901760
  %v307 = vsub.f32 %v125, %v306
  %v308 = vand.u32 %v307, 4294901760
  %v309 = vsub.f32 %v307, %v308
  %v310 = vand.u32 %v309, 4294901760
  %311 = vmatmul.f32.gmra.mxu0 %v310
  %v312 = vpop.f32.mrf.mxu0
  %v313 = vadd.f32 %v98, %v312
  %v314 = vand.u32 %v128, 4294901760
  %v315 = vsub.f32 %v128, %v314
  %v316 = vand.u32 %v315, 4294901760
  %v317 = vsub.f32 %v315, %v316
  %v318 = vand.u32 %v317, 4294901760
  %319 = vmatmul.f32.gmra.mxu0 %v318
  %v320 = vpop.f32.mrf.mxu0
  %v321 = vadd.f32 %v103, %v320
  %322 = vdwg.mxu0
  %v323 = vand.u32 %v176, 4294901760
  %v324 = vsub.f32 %v176, %v323
  %v325 = vand.u32 %v324, 4294901760
  %v326 = vsub.f32 %v324, %v325
  %v327 = vand.u32 %v326, 4294901760
  %328 = vmatpush.xpose.msra.mxu0 %v327
  %v329 = vand.u32 %v173, 4294901760
  %v330 = vsub.f32 %v173, %v329
  %v331 = vand.u32 %v330, 4294901760
  %v332 = vsub.f32 %v330, %v331
  %v333 = vand.u32 %v332, 4294901760
  %334 = vmatpush.xpose.msra.mxu0 %v333
  %v335 = vand.u32 %v170, 4294901760
  %v336 = vsub.f32 %v170, %v335
  %v337 = vand.u32 %v336, 4294901760
  %v338 = vsub.f32 %v336, %v337
  %v339 = vand.u32 %v338, 4294901760
  %340 = vmatpush.xpose.msra.mxu0 %v339
  %v341 = vand.u32 %v167, 4294901760
  %v342 = vsub.f32 %v167, %v341
  %v343 = vand.u32 %v342, 4294901760
  %v344 = vsub.f32 %v342, %v343
  %v345 = vand.u32 %v344, 4294901760
  %346 = vmatpush.xpose.msra.mxu0 %v345
  %v347 = vand.u32 %v164, 4294901760
  %v348 = vsub.f32 %v164, %v347
  %v349 = vand.u32 %v348, 4294901760
  %v350 = vsub.f32 %v348, %v349
  %v351 = vand.u32 %v350, 4294901760
  %352 = vmatpush.xpose.msra.mxu0 %v351
  %v353 = vand.u32 %v161, 4294901760
  %v354 = vsub.f32 %v161, %v353
  %v355 = vand.u32 %v354, 4294901760
  %v356 = vsub.f32 %v354, %v355
  %v357 = vand.u32 %v356, 4294901760
  %358 = vmatpush.xpose.msra.mxu0 %v357
  %v359 = vand.u32 %v158, 4294901760
  %v360 = vsub.f32 %v158, %v359
  %v361 = vand.u32 %v360, 4294901760
  %v362 = vsub.f32 %v360, %v361
  %v363 = vand.u32 %v362, 4294901760
  %364 = vmatpush.xpose.msra.mxu0 %v363
  %v365 = vand.u32 %v155, 4294901760
  %v366 = vsub.f32 %v155, %v365
  %v367 = vand.u32 %v366, 4294901760
  %v368 = vsub.f32 %v366, %v367
  %v369 = vand.u32 %v368, 4294901760
  %370 = vmatpush.xpose.msra.mxu0 %v369
  %v371 = vand.u32 %v152, 4294901760
  %v372 = vsub.f32 %v152, %v371
  %v373 = vand.u32 %v372, 4294901760
  %v374 = vsub.f32 %v372, %v373
  %v375 = vand.u32 %v374, 4294901760
  %376 = vmatpush.xpose.msra.mxu0 %v375
  %v377 = vand.u32 %v149, 4294901760
  %v378 = vsub.f32 %v149, %v377
  %v379 = vand.u32 %v378, 4294901760
  %v380 = vsub.f32 %v378, %v379
  %v381 = vand.u32 %v380, 4294901760
  %382 = vmatpush.xpose.msra.mxu0 %v381
  %v383 = vand.u32 %v146, 4294901760
  %v384 = vsub.f32 %v146, %v383
  %v385 = vand.u32 %v384, 4294901760
  %v386 = vsub.f32 %v384, %v385
  %v387 = vand.u32 %v386, 4294901760
  %388 = vmatpush.xpose.msra.mxu0 %v387
  %v389 = vand.u32 %v143, 4294901760
  %v390 = vsub.f32 %v143, %v389
  %v391 = vand.u32 %v390, 4294901760
  %v392 = vsub.f32 %v390, %v391
  %v393 = vand.u32 %v392, 4294901760
  %394 = vmatpush.xpose.msra.mxu0 %v393
  %v395 = vand.u32 %v140, 4294901760
  %v396 = vsub.f32 %v140, %v395
  %v397 = vand.u32 %v396, 4294901760
  %v398 = vsub.f32 %v396, %v397
  %v399 = vand.u32 %v398, 4294901760
  %400 = vmatpush.xpose.msra.mxu0 %v399
  %v401 = vand.u32 %v137, 4294901760
  %v402 = vsub.f32 %v137, %v401
  %v403 = vand.u32 %v402, 4294901760
  %v404 = vsub.f32 %v402, %v403
  %v405 = vand.u32 %v404, 4294901760
  %406 = vmatpush.xpose.msra.mxu0 %v405
  %v407 = vand.u32 %v134, 4294901760
  %v408 = vsub.f32 %v134, %v407
  %v409 = vand.u32 %v408, 4294901760
  %v410 = vsub.f32 %v408, %v409
  %v411 = vand.u32 %v410, 4294901760
  %412 = vmatpush.xpose.msra.mxu0 %v411
  %v413 = vand.u32 %v131, 4294901760
  %v414 = vsub.f32 %v131, %v413
  %v415 = vand.u32 %v414, 4294901760
  %v416 = vsub.f32 %v414, %v415
  %v417 = vand.u32 %v416, 4294901760
  %418 = vmatpush.xpose.msra.mxu0 %v417
  %v419 = vand.u32 %v107, 4294901760
  %420 = vmatmul.f32.gmra.mxu0 %v419
  %v421 = vpop.f32.mrf.mxu0
  %v422 = vadd.f32 %v265, %v421
  %v423 = vand.u32 %v110, 4294901760
  %424 = vmatmul.f32.gmra.mxu0 %v423
  %v425 = vpop.f32.mrf.mxu0
  %v426 = vadd.f32 %v273, %v425
  %v427 = vand.u32 %v113, 4294901760
  %428 = vmatmul.f32.gmra.mxu0 %v427
  %v429 = vpop.f32.mrf.mxu0
  %v430 = vadd.f32 %v281, %v429
  %v431 = vand.u32 %v116, 4294901760
  %432 = vmatmul.f32.gmra.mxu0 %v431
  %v433 = vpop.f32.mrf.mxu0
  %v434 = vadd.f32 %v289, %v433
  %v435 = vand.u32 %v119, 4294901760
  %436 = vmatmul.f32.gmra.mxu0 %v435
  %v437 = vpop.f32.mrf.mxu0
  %v438 = vadd.f32 %v297, %v437
  %v439 = vand.u32 %v122, 4294901760
  %440 = vmatmul.f32.gmra.mxu0 %v439
  %v441 = vpop.f32.mrf.mxu0
  %v442 = vadd.f32 %v305, %v441
  %v443 = vand.u32 %v125, 4294901760
  %444 = vmatmul.f32.gmra.mxu0 %v443
  %v445 = vpop.f32.mrf.mxu0
  %v446 = vadd.f32 %v313, %v445
  %v447 = vand.u32 %v128, 4294901760
  %448 = vmatmul.f32.gmra.mxu0 %v447
  %v449 = vpop.f32.mrf.mxu0
  %v450 = vadd.f32 %v321, %v449
  %451 = vdwg.mxu0
  %v452 = vand.u32 %v176, 4294901760
  %v453 = vsub.f32 %v176, %v452
  %454 = vmatpush.xpose.msra.mxu0 %v453
  %v455 = vand.u32 %v173, 4294901760
  %v456 = vsub.f32 %v173, %v455
  %457 = vmatpush.xpose.msra.mxu0 %v456
  %v458 = vand.u32 %v170, 4294901760
  %v459 = vsub.f32 %v170, %v458
  %460 = vmatpush.xpose.msra.mxu0 %v459
  %v461 = vand.u32 %v167, 4294901760
  %v462 = vsub.f32 %v167, %v461
  %463 = vmatpush.xpose.msra.mxu0 %v462
  %v464 = vand.u32 %v164, 4294901760
  %v465 = vsub.f32 %v164, %v464
  %466 = vmatpush.xpose.msra.mxu0 %v465
  %v467 = vand.u32 %v161, 4294901760
  %v468 = vsub.f32 %v161, %v467
  %469 = vmatpush.xpose.msra.mxu0 %v468
  %v470 = vand.u32 %v158, 4294901760
  %v471 = vsub.f32 %v158, %v470
  %472 = vmatpush.xpose.msra.mxu0 %v471
  %v473 = vand.u32 %v155, 4294901760
  %v474 = vsub.f32 %v155, %v473
  %475 = vmatpush.xpose.msra.mxu0 %v474
  %v476 = vand.u32 %v152, 4294901760
  %v477 = vsub.f32 %v152, %v476
  %478 = vmatpush.xpose.msra.mxu0 %v477
  %v479 = vand.u32 %v149, 4294901760
  %v480 = vsub.f32 %v149, %v479
  %481 = vmatpush.xpose.msra.mxu0 %v480
  %v482 = vand.u32 %v146, 4294901760
  %v483 = vsub.f32 %v146, %v482
  %484 = vmatpush.xpose.msra.mxu0 %v483
  %v485 = vand.u32 %v143, 4294901760
  %v486 = vsub.f32 %v143, %v485
  %487 = vmatpush.xpose.msra.mxu0 %v486
  %v488 = vand.u32 %v140, 4294901760
  %v489 = vsub.f32 %v140, %v488
  %490 = vmatpush.xpose.msra.mxu0 %v489
  %v491 = vand.u32 %v137, 4294901760
  %v492 = vsub.f32 %v137, %v491
  %493 = vmatpush.xpose.msra.mxu0 %v492
  %v494 = vand.u32 %v134, 4294901760
  %v495 = vsub.f32 %v134, %v494
  %496 = vmatpush.xpose.msra.mxu0 %v495
  %v497 = vand.u32 %v131, 4294901760
  %v498 = vsub.f32 %v131, %v497
  %499 = vmatpush.xpose.msra.mxu0 %v498
  %v500 = vand.u32 %v107, 4294901760
  %v501 = vsub.f32 %v107, %v500
  %502 = vmatmul.f32.gmra.mxu0 %v501
  %v503 = vpop.f32.mrf.mxu0
  %v504 = vadd.f32 %v422, %v503
  %v505 = vand.u32 %v110, 4294901760
  %v506 = vsub.f32 %v110, %v505
  %507 = vmatmul.f32.gmra.mxu0 %v506
  %v508 = vpop.f32.mrf.mxu0
  %v509 = vadd.f32 %v426, %v508
  %v510 = vand.u32 %v113, 4294901760
  %v511 = vsub.f32 %v113, %v510
  %512 = vmatmul.f32.gmra.mxu0 %v511
  %v513 = vpop.f32.mrf.mxu0
  %v514 = vadd.f32 %v430, %v513
  %v515 = vand.u32 %v116, 4294901760
  %v516 = vsub.f32 %v116, %v515
  %517 = vmatmul.f32.gmra.mxu0 %v516
  %v518 = vpop.f32.mrf.mxu0
  %v519 = vadd.f32 %v434, %v518
  %v520 = vand.u32 %v119, 4294901760
  %v521 = vsub.f32 %v119, %v520
  %522 = vmatmul.f32.gmra.mxu0 %v521
  %v523 = vpop.f32.mrf.mxu0
  %v524 = vadd.f32 %v438, %v523
  %v525 = vand.u32 %v122, 4294901760
  %v526 = vsub.f32 %v122, %v525
  %527 = vmatmul.f32.gmra.mxu0 %v526
  %v528 = vpop.f32.mrf.mxu0
  %v529 = vadd.f32 %v442, %v528
  %v530 = vand.u32 %v125, 4294901760
  %v531 = vsub.f32 %v125, %v530
  %532 = vmatmul.f32.gmra.mxu0 %v531
  %v533 = vpop.f32.mrf.mxu0
  %v534 = vadd.f32 %v446, %v533
  %v535 = vand.u32 %v128, 4294901760
  %v536 = vsub.f32 %v128, %v535
  %537 = vmatmul.f32.gmra.mxu0 %v536
  %v538 = vpop.f32.mrf.mxu0
  %v539 = vadd.f32 %v450, %v538
  %540 = vdwg.mxu0
  %v541 = vand.u32 %v176, 4294901760
  %542 = vmatpush.xpose.msra.mxu0 %v541
  %v543 = vand.u32 %v173, 4294901760
  %544 = vmatpush.xpose.msra.mxu0 %v543
  %v545 = vand.u32 %v170, 4294901760
  %546 = vmatpush.xpose.msra.mxu0 %v545
  %v547 = vand.u32 %v167, 4294901760
  %548 = vmatpush.xpose.msra.mxu0 %v547
  %v549 = vand.u32 %v164, 4294901760
  %550 = vmatpush.xpose.msra.mxu0 %v549
  %v551 = vand.u32 %v161, 4294901760
  %552 = vmatpush.xpose.msra.mxu0 %v551
  %v553 = vand.u32 %v158, 4294901760
  %554 = vmatpush.xpose.msra.mxu0 %v553
  %v555 = vand.u32 %v155, 4294901760
  %556 = vmatpush.xpose.msra.mxu0 %v555
  %v557 = vand.u32 %v152, 4294901760
  %558 = vmatpush.xpose.msra.mxu0 %v557
  %v559 = vand.u32 %v149, 4294901760
  %560 = vmatpush.xpose.msra.mxu0 %v559
  %v561 = vand.u32 %v146, 4294901760
  %562 = vmatpush.xpose.msra.mxu0 %v561
  %v563 = vand.u32 %v143, 4294901760
  %564 = vmatpush.xpose.msra.mxu0 %v563
  %v565 = vand.u32 %v140, 4294901760
  %566 = vmatpush.xpose.msra.mxu0 %v565
  %v567 = vand.u32 %v137, 4294901760
  %568 = vmatpush.xpose.msra.mxu0 %v567
  %v569 = vand.u32 %v134, 4294901760
  %570 = vmatpush.xpose.msra.mxu0 %v569
  %v571 = vand.u32 %v131, 4294901760
  %572 = vmatpush.xpose.msra.mxu0 %v571
  %v573 = vand.u32 %v107, 4294901760
  %v574 = vsub.f32 %v107, %v573
  %v575 = vand.u32 %v574, 4294901760
  %576 = vmatmul.f32.gmra.mxu0 %v575
  %v577 = vpop.f32.mrf.mxu0
  %v578 = vadd.f32 %v504, %v577
  %v579 = vand.u32 %v110, 4294901760
  %v580 = vsub.f32 %v110, %v579
  %v581 = vand.u32 %v580, 4294901760
  %582 = vmatmul.f32.gmra.mxu0 %v581
  %v583 = vpop.f32.mrf.mxu0
  %v584 = vadd.f32 %v509, %v583
  %v585 = vand.u32 %v113, 4294901760
  %v586 = vsub.f32 %v113, %v585
  %v587 = vand.u32 %v586, 4294901760
  %588 = vmatmul.f32.gmra.mxu0 %v587
  %v589 = vpop.f32.mrf.mxu0
  %v590 = vadd.f32 %v514, %v589
  %v591 = vand.u32 %v116, 4294901760
  %v592 = vsub.f32 %v116, %v591
  %v593 = vand.u32 %v592, 4294901760
  %594 = vmatmul.f32.gmra.mxu0 %v593
  %v595 = vpop.f32.mrf.mxu0
  %v596 = vadd.f32 %v519, %v595
  %v597 = vand.u32 %v119, 4294901760
  %v598 = vsub.f32 %v119, %v597
  %v599 = vand.u32 %v598, 4294901760
  %600 = vmatmul.f32.gmra.mxu0 %v599
  %v601 = vpop.f32.mrf.mxu0
  %v602 = vadd.f32 %v524, %v601
  %v603 = vand.u32 %v122, 4294901760
  %v604 = vsub.f32 %v122, %v603
  %v605 = vand.u32 %v604, 4294901760
  %606 = vmatmul.f32.gmra.mxu0 %v605
  %v607 = vpop.f32.mrf.mxu0
  %v608 = vadd.f32 %v529, %v607
  %v609 = vand.u32 %v125, 4294901760
  %v610 = vsub.f32 %v125, %v609
  %v611 = vand.u32 %v610, 4294901760
  %612 = vmatmul.f32.gmra.mxu0 %v611
  %v613 = vpop.f32.mrf.mxu0
  %v614 = vadd.f32 %v534, %v613
  %v615 = vand.u32 %v128, 4294901760
  %v616 = vsub.f32 %v128, %v615
  %v617 = vand.u32 %v616, 4294901760
  %618 = vmatmul.f32.gmra.mxu0 %v617
  %v619 = vpop.f32.mrf.mxu0
  %v620 = vadd.f32 %v539, %v619
  %621 = vdwg.mxu0
  %v622 = vand.u32 %v176, 4294901760
  %v623 = vsub.f32 %v176, %v622
  %v624 = vand.u32 %v623, 4294901760
  %625 = vmatpush.xpose.msra.mxu0 %v624
  %v626 = vand.u32 %v173, 4294901760
  %v627 = vsub.f32 %v173, %v626
  %v628 = vand.u32 %v627, 4294901760
  %629 = vmatpush.xpose.msra.mxu0 %v628
  %v630 = vand.u32 %v170, 4294901760
  %v631 = vsub.f32 %v170, %v630
  %v632 = vand.u32 %v631, 4294901760
  %633 = vmatpush.xpose.msra.mxu0 %v632
  %v634 = vand.u32 %v167, 4294901760
  %v635 = vsub.f32 %v167, %v634
  %v636 = vand.u32 %v635, 4294901760
  %637 = vmatpush.xpose.msra.mxu0 %v636
  %v638 = vand.u32 %v164, 4294901760
  %v639 = vsub.f32 %v164, %v638
  %v640 = vand.u32 %v639, 4294901760
  %641 = vmatpush.xpose.msra.mxu0 %v640
  %v642 = vand.u32 %v161, 4294901760
  %v643 = vsub.f32 %v161, %v642
  %v644 = vand.u32 %v643, 4294901760
  %645 = vmatpush.xpose.msra.mxu0 %v644
  %v646 = vand.u32 %v158, 4294901760
  %v647 = vsub.f32 %v158, %v646
  %v648 = vand.u32 %v647, 4294901760
  %649 = vmatpush.xpose.msra.mxu0 %v648
  %v650 = vand.u32 %v155, 4294901760
  %v651 = vsub.f32 %v155, %v650
  %v652 = vand.u32 %v651, 4294901760
  %653 = vmatpush.xpose.msra.mxu0 %v652
  %v654 = vand.u32 %v152, 4294901760
  %v655 = vsub.f32 %v152, %v654
  %v656 = vand.u32 %v655, 4294901760
  %657 = vmatpush.xpose.msra.mxu0 %v656
  %v658 = vand.u32 %v149, 4294901760
  %v659 = vsub.f32 %v149, %v658
  %v660 = vand.u32 %v659, 4294901760
  %661 = vmatpush.xpose.msra.mxu0 %v660
  %v662 = vand.u32 %v146, 4294901760
  %v663 = vsub.f32 %v146, %v662
  %v664 = vand.u32 %v663, 4294901760
  %665 = vmatpush.xpose.msra.mxu0 %v664
  %v666 = vand.u32 %v143, 4294901760
  %v667 = vsub.f32 %v143, %v666
  %v668 = vand.u32 %v667, 4294901760
  %669 = vmatpush.xpose.msra.mxu0 %v668
  %v670 = vand.u32 %v140, 4294901760
  %v671 = vsub.f32 %v140, %v670
  %v672 = vand.u32 %v671, 4294901760
  %673 = vmatpush.xpose.msra.mxu0 %v672
  %v674 = vand.u32 %v137, 4294901760
  %v675 = vsub.f32 %v137, %v674
  %v676 = vand.u32 %v675, 4294901760
  %677 = vmatpush.xpose.msra.mxu0 %v676
  %v678 = vand.u32 %v134, 4294901760
  %v679 = vsub.f32 %v134, %v678
  %v680 = vand.u32 %v679, 4294901760
  %681 = vmatpush.xpose.msra.mxu0 %v680
  %v682 = vand.u32 %v131, 4294901760
  %v683 = vsub.f32 %v131, %v682
  %v684 = vand.u32 %v683, 4294901760
  %685 = vmatpush.xpose.msra.mxu0 %v684
  %v686 = vand.u32 %v107, 4294901760
  %687 = vmatmul.f32.gmra.mxu0 %v686
  %v688 = vpop.f32.mrf.mxu0
  %v689 = vadd.f32 %v578, %v688
  %v690 = vand.u32 %v110, 4294901760
  %691 = vmatmul.f32.gmra.mxu0 %v690
  %v692 = vpop.f32.mrf.mxu0
  %v693 = vadd.f32 %v584, %v692
  %v694 = vand.u32 %v113, 4294901760
  %695 = vmatmul.f32.gmra.mxu0 %v694
  %v696 = vpop.f32.mrf.mxu0
  %v697 = vadd.f32 %v590, %v696
  %v698 = vand.u32 %v116, 4294901760
  %699 = vmatmul.f32.gmra.mxu0 %v698
  %v700 = vpop.f32.mrf.mxu0
  %v701 = vadd.f32 %v596, %v700
  %v702 = vand.u32 %v119, 4294901760
  %703 = vmatmul.f32.gmra.mxu0 %v702
  %v704 = vpop.f32.mrf.mxu0
  %v705 = vadd.f32 %v602, %v704
  %v706 = vand.u32 %v122, 4294901760
  %707 = vmatmul.f32.gmra.mxu0 %v706
  %v708 = vpop.f32.mrf.mxu0
  %v709 = vadd.f32 %v608, %v708
  %v710 = vand.u32 %v125, 4294901760
  %711 = vmatmul.f32.gmra.mxu0 %v710
  %v712 = vpop.f32.mrf.mxu0
  %v713 = vadd.f32 %v614, %v712
  %v714 = vand.u32 %v128, 4294901760
  %715 = vmatmul.f32.gmra.mxu0 %v714
  %v716 = vpop.f32.mrf.mxu0
  %v717 = vadd.f32 %v620, %v716
  %718 = vdwg.mxu0
  %v719 = vand.u32 %v176, 4294901760
  %720 = vmatpush.xpose.msra.mxu0 %v719
  %v721 = vand.u32 %v173, 4294901760
  %722 = vmatpush.xpose.msra.mxu0 %v721
  %v723 = vand.u32 %v170, 4294901760
  %724 = vmatpush.xpose.msra.mxu0 %v723
  %v725 = vand.u32 %v167, 4294901760
  %726 = vmatpush.xpose.msra.mxu0 %v725
  %v727 = vand.u32 %v164, 4294901760
  %728 = vmatpush.xpose.msra.mxu0 %v727
  %v729 = vand.u32 %v161, 4294901760
  %730 = vmatpush.xpose.msra.mxu0 %v729
  %v731 = vand.u32 %v158, 4294901760
  %732 = vmatpush.xpose.msra.mxu0 %v731
  %v733 = vand.u32 %v155, 4294901760
  %734 = vmatpush.xpose.msra.mxu0 %v733
  %v735 = vand.u32 %v152, 4294901760
  %736 = vmatpush.xpose.msra.mxu0 %v735
  %v737 = vand.u32 %v149, 4294901760
  %738 = vmatpush.xpose.msra.mxu0 %v737
  %v739 = vand.u32 %v146, 4294901760
  %740 = vmatpush.xpose.msra.mxu0 %v739
  %v741 = vand.u32 %v143, 4294901760
  %742 = vmatpush.xpose.msra.mxu0 %v741
  %v743 = vand.u32 %v140, 4294901760
  %744 = vmatpush.xpose.msra.mxu0 %v743
  %v745 = vand.u32 %v137, 4294901760
  %746 = vmatpush.xpose.msra.mxu0 %v745
  %v747 = vand.u32 %v134, 4294901760
  %748 = vmatpush.xpose.msra.mxu0 %v747
  %v749 = vand.u32 %v131, 4294901760
  %750 = vmatpush.xpose.msra.mxu0 %v749
  %v751 = vand.u32 %v107, 4294901760
  %752 = vmatmul.f32.gmra.mxu0 %v751
  %v753 = vpop.f32.mrf.mxu0
  %v754 = vadd.f32 %v689, %v753
  %v755 = vand.u32 %v110, 4294901760
  %756 = vmatmul.f32.gmra.mxu0 %v755
  %v757 = vpop.f32.mrf.mxu0
  %v758 = vadd.f32 %v693, %v757
  %v759 = vand.u32 %v113, 4294901760
  %760 = vmatmul.f32.gmra.mxu0 %v759
  %v761 = vpop.f32.mrf.mxu0
  %v762 = vadd.f32 %v697, %v761
  %v763 = vand.u32 %v116, 4294901760
  %764 = vmatmul.f32.gmra.mxu0 %v763
  %v765 = vpop.f32.mrf.mxu0
  %v766 = vadd.f32 %v701, %v765
  %v767 = vand.u32 %v119, 4294901760
  %768 = vmatmul.f32.gmra.mxu0 %v767
  %v769 = vpop.f32.mrf.mxu0
  %v770 = vadd.f32 %v705, %v769
  %v771 = vand.u32 %v122, 4294901760
  %772 = vmatmul.f32.gmra.mxu0 %v771
  %v773 = vpop.f32.mrf.mxu0
  %v774 = vadd.f32 %v709, %v773
  %v775 = vand.u32 %v125, 4294901760
  %776 = vmatmul.f32.gmra.mxu0 %v775
  %v777 = vpop.f32.mrf.mxu0
  %v778 = vadd.f32 %v713, %v777
  %v779 = vand.u32 %v128, 4294901760
  %780 = vmatmul.f32.gmra.mxu0 %v779
  %v781 = vpop.f32.mrf.mxu0
  %v782 = vadd.f32 %v717, %v781
  %783 = vdwg.mxu0
  %v784 = vand.u32 %v224, 4294901760
  %785 = vmatpush.xpose.msra.mxu0 %v784
  %v786 = vand.u32 %v221, 4294901760
  %787 = vmatpush.xpose.msra.mxu0 %v786
  %v788 = vand.u32 %v218, 4294901760
  %789 = vmatpush.xpose.msra.mxu0 %v788
  %v790 = vand.u32 %v215, 4294901760
  %791 = vmatpush.xpose.msra.mxu0 %v790
  %v792 = vand.u32 %v212, 4294901760
  %793 = vmatpush.xpose.msra.mxu0 %v792
  %v794 = vand.u32 %v209, 4294901760
  %795 = vmatpush.xpose.msra.mxu0 %v794
  %v796 = vand.u32 %v206, 4294901760
  %797 = vmatpush.xpose.msra.mxu0 %v796
  %v798 = vand.u32 %v203, 4294901760
  %799 = vmatpush.xpose.msra.mxu0 %v798
  %v800 = vand.u32 %v200, 4294901760
  %801 = vmatpush.xpose.msra.mxu0 %v800
  %v802 = vand.u32 %v197, 4294901760
  %803 = vmatpush.xpose.msra.mxu0 %v802
  %v804 = vand.u32 %v194, 4294901760
  %805 = vmatpush.xpose.msra.mxu0 %v804
  %v806 = vand.u32 %v191, 4294901760
  %807 = vmatpush.xpose.msra.mxu0 %v806
  %v808 = vand.u32 %v188, 4294901760
  %809 = vmatpush.xpose.msra.mxu0 %v808
  %v810 = vand.u32 %v185, 4294901760
  %811 = vmatpush.xpose.msra.mxu0 %v810
  %v812 = vand.u32 %v182, 4294901760
  %813 = vmatpush.xpose.msra.mxu0 %v812
  %v814 = vand.u32 %v179, 4294901760
  %815 = vmatpush.xpose.msra.mxu0 %v814
  %v816 = vand.u32 %v107, 4294901760
  %v817 = vsub.f32 %v107, %v816
  %v818 = vand.u32 %v817, 4294901760
  %v819 = vsub.f32 %v817, %v818
  %v820 = vand.u32 %v819, 4294901760
  %821 = vmatmul.f32.gmra.mxu0 %v820
  %v822 = vpop.f32.mrf.mxu0
  %v823 = vadd.f32 %v68, %v822
  %v824 = vand.u32 %v110, 4294901760
  %v825 = vsub.f32 %v110, %v824
  %v826 = vand.u32 %v825, 4294901760
  %v827 = vsub.f32 %v825, %v826
  %v828 = vand.u32 %v827, 4294901760
  %829 = vmatmul.f32.gmra.mxu0 %v828
  %v830 = vpop.f32.mrf.mxu0
  %v831 = vadd.f32 %v73, %v830
  %v832 = vand.u32 %v113, 4294901760
  %v833 = vsub.f32 %v113, %v832
  %v834 = vand.u32 %v833, 4294901760
  %v835 = vsub.f32 %v833, %v834
  %v836 = vand.u32 %v835, 4294901760
  %837 = vmatmul.f32.gmra.mxu0 %v836
  %v838 = vpop.f32.mrf.mxu0
  %v839 = vadd.f32 %v78, %v838
  %v840 = vand.u32 %v116, 4294901760
  %v841 = vsub.f32 %v116, %v840
  %v842 = vand.u32 %v841, 4294901760
  %v843 = vsub.f32 %v841, %v842
  %v844 = vand.u32 %v843, 4294901760
  %845 = vmatmul.f32.gmra.mxu0 %v844
  %v846 = vpop.f32.mrf.mxu0
  %v847 = vadd.f32 %v83, %v846
  %v848 = vand.u32 %v119, 4294901760
  %v849 = vsub.f32 %v119, %v848
  %v850 = vand.u32 %v849, 4294901760
  %v851 = vsub.f32 %v849, %v850
  %v852 = vand.u32 %v851, 4294901760
  %853 = vmatmul.f32.gmra.mxu0 %v852
  %v854 = vpop.f32.mrf.mxu0
  %v855 = vadd.f32 %v88, %v854
  %v856 = vand.u32 %v122, 4294901760
  %v857 = vsub.f32 %v122, %v856
  %v858 = vand.u32 %v857, 4294901760
  %v859 = vsub.f32 %v857, %v858
  %v860 = vand.u32 %v859, 4294901760
  %861 = vmatmul.f32.gmra.mxu0 %v860
  %v862 = vpop.f32.mrf.mxu0
  %v863 = vadd.f32 %v93, %v862
  %v864 = vand.u32 %v125, 4294901760
  %v865 = vsub.f32 %v125, %v864
  %v866 = vand.u32 %v865, 4294901760
  %v867 = vsub.f32 %v865, %v866
  %v868 = vand.u32 %v867, 4294901760
  %869 = vmatmul.f32.gmra.mxu0 %v868
  %v870 = vpop.f32.mrf.mxu0
  %v871 = vadd.f32 %v98, %v870
  %v872 = vand.u32 %v128, 4294901760
  %v873 = vsub.f32 %v128, %v872
  %v874 = vand.u32 %v873, 4294901760
  %v875 = vsub.f32 %v873, %v874
  %v876 = vand.u32 %v875, 4294901760
  %877 = vmatmul.f32.gmra.mxu0 %v876
  %v878 = vpop.f32.mrf.mxu0
  %v879 = vadd.f32 %v103, %v878
  %880 = vdwg.mxu0
  %v881 = vand.u32 %v224, 4294901760
  %v882 = vsub.f32 %v224, %v881
  %v883 = vand.u32 %v882, 4294901760
  %v884 = vsub.f32 %v882, %v883
  %v885 = vand.u32 %v884, 4294901760
  %886 = vmatpush.xpose.msra.mxu0 %v885
  %v887 = vand.u32 %v221, 4294901760
  %v888 = vsub.f32 %v221, %v887
  %v889 = vand.u32 %v888, 4294901760
  %v890 = vsub.f32 %v888, %v889
  %v891 = vand.u32 %v890, 4294901760
  %892 = vmatpush.xpose.msra.mxu0 %v891
  %v893 = vand.u32 %v218, 4294901760
  %v894 = vsub.f32 %v218, %v893
  %v895 = vand.u32 %v894, 4294901760
  %v896 = vsub.f32 %v894, %v895
  %v897 = vand.u32 %v896, 4294901760
  %898 = vmatpush.xpose.msra.mxu0 %v897
  %v899 = vand.u32 %v215, 4294901760
  %v900 = vsub.f32 %v215, %v899
  %v901 = vand.u32 %v900, 4294901760
  %v902 = vsub.f32 %v900, %v901
  %v903 = vand.u32 %v902, 4294901760
  %904 = vmatpush.xpose.msra.mxu0 %v903
  %v905 = vand.u32 %v212, 4294901760
  %v906 = vsub.f32 %v212, %v905
  %v907 = vand.u32 %v906, 4294901760
  %v908 = vsub.f32 %v906, %v907
  %v909 = vand.u32 %v908, 4294901760
  %910 = vmatpush.xpose.msra.mxu0 %v909
  %v911 = vand.u32 %v209, 4294901760
  %v912 = vsub.f32 %v209, %v911
  %v913 = vand.u32 %v912, 4294901760
  %v914 = vsub.f32 %v912, %v913
  %v915 = vand.u32 %v914, 4294901760
  %916 = vmatpush.xpose.msra.mxu0 %v915
  %v917 = vand.u32 %v206, 4294901760
  %v918 = vsub.f32 %v206, %v917
  %v919 = vand.u32 %v918, 4294901760
  %v920 = vsub.f32 %v918, %v919
  %v921 = vand.u32 %v920, 4294901760
  %922 = vmatpush.xpose.msra.mxu0 %v921
  %v923 = vand.u32 %v203, 4294901760
  %v924 = vsub.f32 %v203, %v923
  %v925 = vand.u32 %v924, 4294901760
  %v926 = vsub.f32 %v924, %v925
  %v927 = vand.u32 %v926, 4294901760
  %928 = vmatpush.xpose.msra.mxu0 %v927
  %v929 = vand.u32 %v200, 4294901760
  %v930 = vsub.f32 %v200, %v929
  %v931 = vand.u32 %v930, 4294901760
  %v932 = vsub.f32 %v930, %v931
  %v933 = vand.u32 %v932, 4294901760
  %934 = vmatpush.xpose.msra.mxu0 %v933
  %v935 = vand.u32 %v197, 4294901760
  %v936 = vsub.f32 %v197, %v935
  %v937 = vand.u32 %v936, 4294901760
  %v938 = vsub.f32 %v936, %v937
  %v939 = vand.u32 %v938, 4294901760
  %940 = vmatpush.xpose.msra.mxu0 %v939
  %v941 = vand.u32 %v194, 4294901760
  %v942 = vsub.f32 %v194, %v941
  %v943 = vand.u32 %v942, 4294901760
  %v944 = vsub.f32 %v942, %v943
  %v945 = vand.u32 %v944, 4294901760
  %946 = vmatpush.xpose.msra.mxu0 %v945
  %v947 = vand.u32 %v191, 4294901760
  %v948 = vsub.f32 %v191, %v947
  %v949 = vand.u32 %v948, 4294901760
  %v950 = vsub.f32 %v948, %v949
  %v951 = vand.u32 %v950, 4294901760
  %952 = vmatpush.xpose.msra.mxu0 %v951
  %v953 = vand.u32 %v188, 4294901760
  %v954 = vsub.f32 %v188, %v953
  %v955 = vand.u32 %v954, 4294901760
  %v956 = vsub.f32 %v954, %v955
  %v957 = vand.u32 %v956, 4294901760
  %958 = vmatpush.xpose.msra.mxu0 %v957
  %v959 = vand.u32 %v185, 4294901760
  %v960 = vsub.f32 %v185, %v959
  %v961 = vand.u32 %v960, 4294901760
  %v962 = vsub.f32 %v960, %v961
  %v963 = vand.u32 %v962, 4294901760
  %964 = vmatpush.xpose.msra.mxu0 %v963
  %v965 = vand.u32 %v182, 4294901760
  %v966 = vsub.f32 %v182, %v965
  %v967 = vand.u32 %v966, 4294901760
  %v968 = vsub.f32 %v966, %v967
  %v969 = vand.u32 %v968, 4294901760
  %970 = vmatpush.xpose.msra.mxu0 %v969
  %v971 = vand.u32 %v179, 4294901760
  %v972 = vsub.f32 %v179, %v971
  %v973 = vand.u32 %v972, 4294901760
  %v974 = vsub.f32 %v972, %v973
  %v975 = vand.u32 %v974, 4294901760
  %976 = vmatpush.xpose.msra.mxu0 %v975
  %v977 = vand.u32 %v107, 4294901760
  %978 = vmatmul.f32.gmra.mxu0 %v977
  %v979 = vpop.f32.mrf.mxu0
  %v980 = vadd.f32 %v823, %v979
  %v981 = vand.u32 %v110, 4294901760
  %982 = vmatmul.f32.gmra.mxu0 %v981
  %v983 = vpop.f32.mrf.mxu0
  %v984 = vadd.f32 %v831, %v983
  %v985 = vand.u32 %v113, 4294901760
  %986 = vmatmul.f32.gmra.mxu0 %v985
  %v987 = vpop.f32.mrf.mxu0
  %v988 = vadd.f32 %v839, %v987
  %v989 = vand.u32 %v116, 4294901760
  %990 = vmatmul.f32.gmra.mxu0 %v989
  %v991 = vpop.f32.mrf.mxu0
  %v992 = vadd.f32 %v847, %v991
  %v993 = vand.u32 %v119, 4294901760
  %994 = vmatmul.f32.gmra.mxu0 %v993
  %v995 = vpop.f32.mrf.mxu0
  %v996 = vadd.f32 %v855, %v995
  %v997 = vand.u32 %v122, 4294901760
  %998 = vmatmul.f32.gmra.mxu0 %v997
  %v999 = vpop.f32.mrf.mxu0
  %v1000 = vadd.f32 %v863, %v999
  %v1001 = vand.u32 %v125, 4294901760
  %1002 = vmatmul.f32.gmra.mxu0 %v1001
  %v1003 = vpop.f32.mrf.mxu0
  %v1004 = vadd.f32 %v871, %v1003
  %v1005 = vand.u32 %v128, 4294901760
  %1006 = vmatmul.f32.gmra.mxu0 %v1005
  %v1007 = vpop.f32.mrf.mxu0
  %v1008 = vadd.f32 %v879, %v1007
  %1009 = vdwg.mxu0
  %v1010 = vand.u32 %v224, 4294901760
  %v1011 = vsub.f32 %v224, %v1010
  %1012 = vmatpush.xpose.msra.mxu0 %v1011
  %v1013 = vand.u32 %v221, 4294901760
  %v1014 = vsub.f32 %v221, %v1013
  %1015 = vmatpush.xpose.msra.mxu0 %v1014
  %v1016 = vand.u32 %v218, 4294901760
  %v1017 = vsub.f32 %v218, %v1016
  %1018 = vmatpush.xpose.msra.mxu0 %v1017
  %v1019 = vand.u32 %v215, 4294901760
  %v1020 = vsub.f32 %v215, %v1019
  %1021 = vmatpush.xpose.msra.mxu0 %v1020
  %v1022 = vand.u32 %v212, 4294901760
  %v1023 = vsub.f32 %v212, %v1022
  %1024 = vmatpush.xpose.msra.mxu0 %v1023
  %v1025 = vand.u32 %v209, 4294901760
  %v1026 = vsub.f32 %v209, %v1025
  %1027 = vmatpush.xpose.msra.mxu0 %v1026
  %v1028 = vand.u32 %v206, 4294901760
  %v1029 = vsub.f32 %v206, %v1028
  %1030 = vmatpush.xpose.msra.mxu0 %v1029
  %v1031 = vand.u32 %v203, 4294901760
  %v1032 = vsub.f32 %v203, %v1031
  %1033 = vmatpush.xpose.msra.mxu0 %v1032
  %v1034 = vand.u32 %v200, 4294901760
  %v1035 = vsub.f32 %v200, %v1034
  %1036 = vmatpush.xpose.msra.mxu0 %v1035
  %v1037 = vand.u32 %v197, 4294901760
  %v1038 = vsub.f32 %v197, %v1037
  %1039 = vmatpush.xpose.msra.mxu0 %v1038
  %v1040 = vand.u32 %v194, 4294901760
  %v1041 = vsub.f32 %v194, %v1040
  %1042 = vmatpush.xpose.msra.mxu0 %v1041
  %v1043 = vand.u32 %v191, 4294901760
  %v1044 = vsub.f32 %v191, %v1043
  %1045 = vmatpush.xpose.msra.mxu0 %v1044
  %v1046 = vand.u32 %v188, 4294901760
  %v1047 = vsub.f32 %v188, %v1046
  %1048 = vmatpush.xpose.msra.mxu0 %v1047
  %v1049 = vand.u32 %v185, 4294901760
  %v1050 = vsub.f32 %v185, %v1049
  %1051 = vmatpush.xpose.msra.mxu0 %v1050
  %v1052 = vand.u32 %v182, 4294901760
  %v1053 = vsub.f32 %v182, %v1052
  %1054 = vmatpush.xpose.msra.mxu0 %v1053
  %v1055 = vand.u32 %v179, 4294901760
  %v1056 = vsub.f32 %v179, %v1055
  %1057 = vmatpush.xpose.msra.mxu0 %v1056
  %v1058 = vand.u32 %v107, 4294901760
  %v1059 = vsub.f32 %v107, %v1058
  %1060 = vmatmul.f32.gmra.mxu0 %v1059
  %v1061 = vpop.f32.mrf.mxu0
  %v1062 = vadd.f32 %v980, %v1061
  %v1063 = vand.u32 %v110, 4294901760
  %v1064 = vsub.f32 %v110, %v1063
  %1065 = vmatmul.f32.gmra.mxu0 %v1064
  %v1066 = vpop.f32.mrf.mxu0
  %v1067 = vadd.f32 %v984, %v1066
  %v1068 = vand.u32 %v113, 4294901760
  %v1069 = vsub.f32 %v113, %v1068
  %1070 = vmatmul.f32.gmra.mxu0 %v1069
  %v1071 = vpop.f32.mrf.mxu0
  %v1072 = vadd.f32 %v988, %v1071
  %v1073 = vand.u32 %v116, 4294901760
  %v1074 = vsub.f32 %v116, %v1073
  %1075 = vmatmul.f32.gmra.mxu0 %v1074
  %v1076 = vpop.f32.mrf.mxu0
  %v1077 = vadd.f32 %v992, %v1076
  %v1078 = vand.u32 %v119, 4294901760
  %v1079 = vsub.f32 %v119, %v1078
  %1080 = vmatmul.f32.gmra.mxu0 %v1079
  %v1081 = vpop.f32.mrf.mxu0
  %v1082 = vadd.f32 %v996, %v1081
  %v1083 = vand.u32 %v122, 4294901760
  %v1084 = vsub.f32 %v122, %v1083
  %1085 = vmatmul.f32.gmra.mxu0 %v1084
  %v1086 = vpop.f32.mrf.mxu0
  %v1087 = vadd.f32 %v1000, %v1086
  %v1088 = vand.u32 %v125, 4294901760
  %v1089 = vsub.f32 %v125, %v1088
  %1090 = vmatmul.f32.gmra.mxu0 %v1089
  %v1091 = vpop.f32.mrf.mxu0
  %v1092 = vadd.f32 %v1004, %v1091
  %v1093 = vand.u32 %v128, 4294901760
  %v1094 = vsub.f32 %v128, %v1093
  %1095 = vmatmul.f32.gmra.mxu0 %v1094
  %v1096 = vpop.f32.mrf.mxu0
  %v1097 = vadd.f32 %v1008, %v1096
  %1098 = vdwg.mxu0
  %v1099 = vand.u32 %v224, 4294901760
  %1100 = vmatpush.xpose.msra.mxu0 %v1099
  %v1101 = vand.u32 %v221, 4294901760
  %1102 = vmatpush.xpose.msra.mxu0 %v1101
  %v1103 = vand.u32 %v218, 4294901760
  %1104 = vmatpush.xpose.msra.mxu0 %v1103
  %v1105 = vand.u32 %v215, 4294901760
  %1106 = vmatpush.xpose.msra.mxu0 %v1105
  %v1107 = vand.u32 %v212, 4294901760
  %1108 = vmatpush.xpose.msra.mxu0 %v1107
  %v1109 = vand.u32 %v209, 4294901760
  %1110 = vmatpush.xpose.msra.mxu0 %v1109
  %v1111 = vand.u32 %v206, 4294901760
  %1112 = vmatpush.xpose.msra.mxu0 %v1111
  %v1113 = vand.u32 %v203, 4294901760
  %1114 = vmatpush.xpose.msra.mxu0 %v1113
  %v1115 = vand.u32 %v200, 4294901760
  %1116 = vmatpush.xpose.msra.mxu0 %v1115
  %v1117 = vand.u32 %v197, 4294901760
  %1118 = vmatpush.xpose.msra.mxu0 %v1117
  %v1119 = vand.u32 %v194, 4294901760
  %1120 = vmatpush.xpose.msra.mxu0 %v1119
  %v1121 = vand.u32 %v191, 4294901760
  %1122 = vmatpush.xpose.msra.mxu0 %v1121
  %v1123 = vand.u32 %v188, 4294901760
  %1124 = vmatpush.xpose.msra.mxu0 %v1123
  %v1125 = vand.u32 %v185, 4294901760
  %1126 = vmatpush.xpose.msra.mxu0 %v1125
  %v1127 = vand.u32 %v182, 4294901760
  %1128 = vmatpush.xpose.msra.mxu0 %v1127
  %v1129 = vand.u32 %v179, 4294901760
  %1130 = vmatpush.xpose.msra.mxu0 %v1129
  %v1131 = vand.u32 %v107, 4294901760
  %v1132 = vsub.f32 %v107, %v1131
  %v1133 = vand.u32 %v1132, 4294901760
  %1134 = vmatmul.f32.gmra.mxu0 %v1133
  %v1135 = vpop.f32.mrf.mxu0
  %v1136 = vadd.f32 %v1062, %v1135
  %v1137 = vand.u32 %v110, 4294901760
  %v1138 = vsub.f32 %v110, %v1137
  %v1139 = vand.u32 %v1138, 4294901760
  %1140 = vmatmul.f32.gmra.mxu0 %v1139
  %v1141 = vpop.f32.mrf.mxu0
  %v1142 = vadd.f32 %v1067, %v1141
  %v1143 = vand.u32 %v113, 4294901760
  %v1144 = vsub.f32 %v113, %v1143
  %v1145 = vand.u32 %v1144, 4294901760
  %1146 = vmatmul.f32.gmra.mxu0 %v1145
  %v1147 = vpop.f32.mrf.mxu0
  %v1148 = vadd.f32 %v1072, %v1147
  %v1149 = vand.u32 %v116, 4294901760
  %v1150 = vsub.f32 %v116, %v1149
  %v1151 = vand.u32 %v1150, 4294901760
  %1152 = vmatmul.f32.gmra.mxu0 %v1151
  %v1153 = vpop.f32.mrf.mxu0
  %v1154 = vadd.f32 %v1077, %v1153
  %v1155 = vand.u32 %v119, 4294901760
  %v1156 = vsub.f32 %v119, %v1155
  %v1157 = vand.u32 %v1156, 4294901760
  %1158 = vmatmul.f32.gmra.mxu0 %v1157
  %v1159 = vpop.f32.mrf.mxu0
  %v1160 = vadd.f32 %v1082, %v1159
  %v1161 = vand.u32 %v122, 4294901760
  %v1162 = vsub.f32 %v122, %v1161
  %v1163 = vand.u32 %v1162, 4294901760
  %1164 = vmatmul.f32.gmra.mxu0 %v1163
  %v1165 = vpop.f32.mrf.mxu0
  %v1166 = vadd.f32 %v1087, %v1165
  %v1167 = vand.u32 %v125, 4294901760
  %v1168 = vsub.f32 %v125, %v1167
  %v1169 = vand.u32 %v1168, 4294901760
  %1170 = vmatmul.f32.gmra.mxu0 %v1169
  %v1171 = vpop.f32.mrf.mxu0
  %v1172 = vadd.f32 %v1092, %v1171
  %v1173 = vand.u32 %v128, 4294901760
  %v1174 = vsub.f32 %v128, %v1173
  %v1175 = vand.u32 %v1174, 4294901760
  %1176 = vmatmul.f32.gmra.mxu0 %v1175
  %v1177 = vpop.f32.mrf.mxu0
  %v1178 = vadd.f32 %v1097, %v1177
  %1179 = vdwg.mxu0
  %v1180 = vand.u32 %v224, 4294901760
  %v1181 = vsub.f32 %v224, %v1180
  %v1182 = vand.u32 %v1181, 4294901760
  %1183 = vmatpush.xpose.msra.mxu0 %v1182
  %v1184 = vand.u32 %v221, 4294901760
  %v1185 = vsub.f32 %v221, %v1184
  %v1186 = vand.u32 %v1185, 4294901760
  %1187 = vmatpush.xpose.msra.mxu0 %v1186
  %v1188 = vand.u32 %v218, 4294901760
  %v1189 = vsub.f32 %v218, %v1188
  %v1190 = vand.u32 %v1189, 4294901760
  %1191 = vmatpush.xpose.msra.mxu0 %v1190
  %v1192 = vand.u32 %v215, 4294901760
  %v1193 = vsub.f32 %v215, %v1192
  %v1194 = vand.u32 %v1193, 4294901760
  %1195 = vmatpush.xpose.msra.mxu0 %v1194
  %v1196 = vand.u32 %v212, 4294901760
  %v1197 = vsub.f32 %v212, %v1196
  %v1198 = vand.u32 %v1197, 4294901760
  %1199 = vmatpush.xpose.msra.mxu0 %v1198
  %v1200 = vand.u32 %v209, 4294901760
  %v1201 = vsub.f32 %v209, %v1200
  %v1202 = vand.u32 %v1201, 4294901760
  %1203 = vmatpush.xpose.msra.mxu0 %v1202
  %v1204 = vand.u32 %v206, 4294901760
  %v1205 = vsub.f32 %v206, %v1204
  %v1206 = vand.u32 %v1205, 4294901760
  %1207 = vmatpush.xpose.msra.mxu0 %v1206
  %v1208 = vand.u32 %v203, 4294901760
  %v1209 = vsub.f32 %v203, %v1208
  %v1210 = vand.u32 %v1209, 4294901760
  %1211 = vmatpush.xpose.msra.mxu0 %v1210
  %v1212 = vand.u32 %v200, 4294901760
  %v1213 = vsub.f32 %v200, %v1212
  %v1214 = vand.u32 %v1213, 4294901760
  %1215 = vmatpush.xpose.msra.mxu0 %v1214
  %v1216 = vand.u32 %v197, 4294901760
  %v1217 = vsub.f32 %v197, %v1216
  %v1218 = vand.u32 %v1217, 4294901760
  %1219 = vmatpush.xpose.msra.mxu0 %v1218
  %v1220 = vand.u32 %v194, 4294901760
  %v1221 = vsub.f32 %v194, %v1220
  %v1222 = vand.u32 %v1221, 4294901760
  %1223 = vmatpush.xpose.msra.mxu0 %v1222
  %v1224 = vand.u32 %v191, 4294901760
  %v1225 = vsub.f32 %v191, %v1224
  %v1226 = vand.u32 %v1225, 4294901760
  %1227 = vmatpush.xpose.msra.mxu0 %v1226
  %v1228 = vand.u32 %v188, 4294901760
  %v1229 = vsub.f32 %v188, %v1228
  %v1230 = vand.u32 %v1229, 4294901760
  %1231 = vmatpush.xpose.msra.mxu0 %v1230
  %v1232 = vand.u32 %v185, 4294901760
  %v1233 = vsub.f32 %v185, %v1232
  %v1234 = vand.u32 %v1233, 4294901760
  %1235 = vmatpush.xpose.msra.mxu0 %v1234
  %v1236 = vand.u32 %v182, 4294901760
  %v1237 = vsub.f32 %v182, %v1236
  %v1238 = vand.u32 %v1237, 4294901760
  %1239 = vmatpush.xpose.msra.mxu0 %v1238
  %v1240 = vand.u32 %v179, 4294901760
  %v1241 = vsub.f32 %v179, %v1240
  %v1242 = vand.u32 %v1241, 4294901760
  %1243 = vmatpush.xpose.msra.mxu0 %v1242
  %v1244 = vand.u32 %v107, 4294901760
  %1245 = vmatmul.f32.gmra.mxu0 %v1244
  %v1246 = vpop.f32.mrf.mxu0
  %v1247 = vadd.f32 %v1136, %v1246
  %v1248 = vand.u32 %v110, 4294901760
  %1249 = vmatmul.f32.gmra.mxu0 %v1248
  %v1250 = vpop.f32.mrf.mxu0
  %v1251 = vadd.f32 %v1142, %v1250
  %v1252 = vand.u32 %v113, 4294901760
  %1253 = vmatmul.f32.gmra.mxu0 %v1252
  %v1254 = vpop.f32.mrf.mxu0
  %v1255 = vadd.f32 %v1148, %v1254
  %v1256 = vand.u32 %v116, 4294901760
  %1257 = vmatmul.f32.gmra.mxu0 %v1256
  %v1258 = vpop.f32.mrf.mxu0
  %v1259 = vadd.f32 %v1154, %v1258
  %v1260 = vand.u32 %v119, 4294901760
  %1261 = vmatmul.f32.gmra.mxu0 %v1260
  %v1262 = vpop.f32.mrf.mxu0
  %v1263 = vadd.f32 %v1160, %v1262
  %v1264 = vand.u32 %v122, 4294901760
  %1265 = vmatmul.f32.gmra.mxu0 %v1264
  %v1266 = vpop.f32.mrf.mxu0
  %v1267 = vadd.f32 %v1166, %v1266
  %v1268 = vand.u32 %v125, 4294901760
  %1269 = vmatmul.f32.gmra.mxu0 %v1268
  %v1270 = vpop.f32.mrf.mxu0
  %v1271 = vadd.f32 %v1172, %v1270
  %v1272 = vand.u32 %v128, 4294901760
  %1273 = vmatmul.f32.gmra.mxu0 %v1272
  %v1274 = vpop.f32.mrf.mxu0
  %v1275 = vadd.f32 %v1178, %v1274
  %1276 = vdwg.mxu0
  %v1277 = vand.u32 %v224, 4294901760
  %1278 = vmatpush.xpose.msra.mxu0 %v1277
  %v1279 = vand.u32 %v221, 4294901760
  %1280 = vmatpush.xpose.msra.mxu0 %v1279
  %v1281 = vand.u32 %v218, 4294901760
  %1282 = vmatpush.xpose.msra.mxu0 %v1281
  %v1283 = vand.u32 %v215, 4294901760
  %1284 = vmatpush.xpose.msra.mxu0 %v1283
  %v1285 = vand.u32 %v212, 4294901760
  %1286 = vmatpush.xpose.msra.mxu0 %v1285
  %v1287 = vand.u32 %v209, 4294901760
  %1288 = vmatpush.xpose.msra.mxu0 %v1287
  %v1289 = vand.u32 %v206, 4294901760
  %1290 = vmatpush.xpose.msra.mxu0 %v1289
  %v1291 = vand.u32 %v203, 4294901760
  %1292 = vmatpush.xpose.msra.mxu0 %v1291
  %v1293 = vand.u32 %v200, 4294901760
  %1294 = vmatpush.xpose.msra.mxu0 %v1293
  %v1295 = vand.u32 %v197, 4294901760
  %1296 = vmatpush.xpose.msra.mxu0 %v1295
  %v1297 = vand.u32 %v194, 4294901760
  %1298 = vmatpush.xpose.msra.mxu0 %v1297
  %v1299 = vand.u32 %v191, 4294901760
  %1300 = vmatpush.xpose.msra.mxu0 %v1299
  %v1301 = vand.u32 %v188, 4294901760
  %1302 = vmatpush.xpose.msra.mxu0 %v1301
  %v1303 = vand.u32 %v185, 4294901760
  %1304 = vmatpush.xpose.msra.mxu0 %v1303
  %v1305 = vand.u32 %v182, 4294901760
  %1306 = vmatpush.xpose.msra.mxu0 %v1305
  %v1307 = vand.u32 %v179, 4294901760
  %1308 = vmatpush.xpose.msra.mxu0 %v1307
  %v1309 = vand.u32 %v107, 4294901760
  %1310 = vmatmul.f32.gmra.mxu0 %v1309
  %v1311 = vpop.f32.mrf.mxu0
  %v1312 = vadd.f32 %v1247, %v1311
  %v1313 = vand.u32 %v110, 4294901760
  %1314 = vmatmul.f32.gmra.mxu0 %v1313
  %v1315 = vpop.f32.mrf.mxu0
  %v1316 = vadd.f32 %v1251, %v1315
  %v1317 = vand.u32 %v113, 4294901760
  %1318 = vmatmul.f32.gmra.mxu0 %v1317
  %v1319 = vpop.f32.mrf.mxu0
  %v1320 = vadd.f32 %v1255, %v1319
  %v1321 = vand.u32 %v116, 4294901760
  %1322 = vmatmul.f32.gmra.mxu0 %v1321
  %v1323 = vpop.f32.mrf.mxu0
  %v1324 = vadd.f32 %v1259, %v1323
  %v1325 = vand.u32 %v119, 4294901760
  %1326 = vmatmul.f32.gmra.mxu0 %v1325
  %v1327 = vpop.f32.mrf.mxu0
  %v1328 = vadd.f32 %v1263, %v1327
  %v1329 = vand.u32 %v122, 4294901760
  %1330 = vmatmul.f32.gmra.mxu0 %v1329
  %v1331 = vpop.f32.mrf.mxu0
  %v1332 = vadd.f32 %v1267, %v1331
  %v1333 = vand.u32 %v125, 4294901760
  %1334 = vmatmul.f32.gmra.mxu0 %v1333
  %v1335 = vpop.f32.mrf.mxu0
  %v1336 = vadd.f32 %v1271, %v1335
  %v1337 = vand.u32 %v128, 4294901760
  %1338 = vmatmul.f32.gmra.mxu0 %v1337
  %v1339 = vpop.f32.mrf.mxu0
  %v1340 = vadd.f32 %v1275, %v1339
  %1341 = vdwg.mxu0
  %vm1342 = vcmp.ge.f32.partialorder %v770, 0.0
  %vm1343 = vcmp.ge.f32.partialorder %v1328, 0.0
  %vm1344 = vcmp.ge.f32.partialorder %v774, 0.0
  %vm1345 = vcmp.ge.f32.partialorder %v1332, 0.0
  %vm1346 = vcmp.ge.f32.partialorder %v778, 0.0
  %vm1347 = vcmp.ge.f32.partialorder %v1336, 0.0
  %vm1348 = vcmp.ge.f32.partialorder %v782, 0.0
  %vm1349 = vcmp.ge.f32.partialorder %v1340, 0.0
  %v1350 = vmul.f32 %v770, 0.01
  %v1351 = vmul.f32 %v1328, 0.01
  %v1352 = vmul.f32 %v774, 0.01
  %v1353 = vmul.f32 %v1332, 0.01
  %v1354 = vmul.f32 %v778, 0.01
  %v1355 = vmul.f32 %v1336, 0.01
  %v1356 = vmul.f32 %v782, 0.01
  %v1357 = vmul.f32 %v1340, 0.01
  %v1358 = vsel %vm1342, %v770, %v1350
  %v1359 = vsel %vm1343, %v1328, %v1351
  %v1360 = vsel %vm1344, %v774, %v1352
  %v1361 = vsel %vm1345, %v1332, %v1353
  %v1362 = vsel %vm1346, %v778, %v1354
  %v1363 = vsel %vm1347, %v1336, %v1355
  %v1364 = vsel %vm1348, %v782, %v1356
  %v1365 = vsel %vm1349, %v1340, %v1357
  %1366 = vmatpush.msra.mxu0 1.0
  %1367 = vmatpush.msra.mxu0 1.0
  %1368 = vmatpush.msra.mxu0 1.0
  %1369 = vmatpush.msra.mxu0 1.0
  %1370 = vmatpush.msra.mxu0 1.0
  %1371 = vmatpush.msra.mxu0 1.0
  %1372 = vmatpush.msra.mxu0 1.0
  %1373 = vmatpush.msra.mxu0 1.0
  %1374 = vmatpush.msra.mxu0 1.0
  %1375 = vmatpush.msra.mxu0 1.0
  %1376 = vmatpush.msra.mxu0 1.0
  %1377 = vmatpush.msra.mxu0 1.0
  %1378 = vmatpush.msra.mxu0 1.0
  %1379 = vmatpush.msra.mxu0 1.0
  %1380 = vmatpush.msra.mxu0 1.0
  %1381 = vmatpush.msra.mxu0 1.0
  %v1382 = vand.u32 %v1358, 4294901760
  %v1383 = vsub.f32 %v1358, %v1382
  %v1384 = vand.u32 %v1383, 4294901760
  %v1385 = vsub.f32 %v1383, %v1384
  %v1386 = vand.u32 %v1385, 4294901760
  %1387 = vmatmul.f32.gmra.mxu0 %v1386
  %v1388 = vpop.f32.mrf.mxu0
  %v1389 = vadd.f32 0.0, %v1388
  %v1390 = vand.u32 %v1360, 4294901760
  %v1391 = vsub.f32 %v1360, %v1390
  %v1392 = vand.u32 %v1391, 4294901760
  %v1393 = vsub.f32 %v1391, %v1392
  %v1394 = vand.u32 %v1393, 4294901760
  %1395 = vmatmul.f32.gmra.mxu0 %v1394
  %v1396 = vpop.f32.mrf.mxu0
  %v1397 = vadd.f32 0.0, %v1396
  %v1398 = vand.u32 %v1362, 4294901760
  %v1399 = vsub.f32 %v1362, %v1398
  %v1400 = vand.u32 %v1399, 4294901760
  %v1401 = vsub.f32 %v1399, %v1400
  %v1402 = vand.u32 %v1401, 4294901760
  %1403 = vmatmul.f32.gmra.mxu0 %v1402
  %v1404 = vpop.f32.mrf.mxu0
  %v1405 = vadd.f32 0.0, %v1404
  %v1406 = vand.u32 %v1364, 4294901760
  %v1407 = vsub.f32 %v1364, %v1406
  %v1408 = vand.u32 %v1407, 4294901760
  %v1409 = vsub.f32 %v1407, %v1408
  %v1410 = vand.u32 %v1409, 4294901760
  %1411 = vmatmul.f32.gmra.mxu0 %v1410
  %v1412 = vpop.f32.mrf.mxu0
  %v1413 = vadd.f32 0.0, %v1412
  %1414 = vdwg.mxu0
  %1415 = vmatpush.msra.mxu0 0.0
  %1416 = vmatpush.msra.mxu0 0.0
  %1417 = vmatpush.msra.mxu0 0.0
  %1418 = vmatpush.msra.mxu0 0.0
  %1419 = vmatpush.msra.mxu0 0.0
  %1420 = vmatpush.msra.mxu0 0.0
  %1421 = vmatpush.msra.mxu0 0.0
  %1422 = vmatpush.msra.mxu0 0.0
  %1423 = vmatpush.msra.mxu0 0.0
  %1424 = vmatpush.msra.mxu0 0.0
  %1425 = vmatpush.msra.mxu0 0.0
  %1426 = vmatpush.msra.mxu0 0.0
  %1427 = vmatpush.msra.mxu0 0.0
  %1428 = vmatpush.msra.mxu0 0.0
  %1429 = vmatpush.msra.mxu0 0.0
  %1430 = vmatpush.msra.mxu0 0.0
  %v1431 = vand.u32 %v1358, 4294901760
  %1432 = vmatmul.f32.gmra.mxu0 %v1431
  %v1433 = vpop.f32.mrf.mxu0
  %v1434 = vadd.f32 %v1389, %v1433
  %v1435 = vand.u32 %v1360, 4294901760
  %1436 = vmatmul.f32.gmra.mxu0 %v1435
  %v1437 = vpop.f32.mrf.mxu0
  %v1438 = vadd.f32 %v1397, %v1437
  %v1439 = vand.u32 %v1362, 4294901760
  %1440 = vmatmul.f32.gmra.mxu0 %v1439
  %v1441 = vpop.f32.mrf.mxu0
  %v1442 = vadd.f32 %v1405, %v1441
  %v1443 = vand.u32 %v1364, 4294901760
  %1444 = vmatmul.f32.gmra.mxu0 %v1443
  %v1445 = vpop.f32.mrf.mxu0
  %v1446 = vadd.f32 %v1413, %v1445
  %1447 = vdwg.mxu0
  %1448 = vmatpush.msra.mxu0 0.0
  %1449 = vmatpush.msra.mxu0 0.0
  %1450 = vmatpush.msra.mxu0 0.0
  %1451 = vmatpush.msra.mxu0 0.0
  %1452 = vmatpush.msra.mxu0 0.0
  %1453 = vmatpush.msra.mxu0 0.0
  %1454 = vmatpush.msra.mxu0 0.0
  %1455 = vmatpush.msra.mxu0 0.0
  %1456 = vmatpush.msra.mxu0 0.0
  %1457 = vmatpush.msra.mxu0 0.0
  %1458 = vmatpush.msra.mxu0 0.0
  %1459 = vmatpush.msra.mxu0 0.0
  %1460 = vmatpush.msra.mxu0 0.0
  %1461 = vmatpush.msra.mxu0 0.0
  %1462 = vmatpush.msra.mxu0 0.0
  %1463 = vmatpush.msra.mxu0 0.0
  %v1464 = vand.u32 %v1358, 4294901760
  %v1465 = vsub.f32 %v1358, %v1464
  %1466 = vmatmul.f32.gmra.mxu0 %v1465
  %v1467 = vpop.f32.mrf.mxu0
  %v1468 = vadd.f32 %v1434, %v1467
  %v1469 = vand.u32 %v1360, 4294901760
  %v1470 = vsub.f32 %v1360, %v1469
  %1471 = vmatmul.f32.gmra.mxu0 %v1470
  %v1472 = vpop.f32.mrf.mxu0
  %v1473 = vadd.f32 %v1438, %v1472
  %v1474 = vand.u32 %v1362, 4294901760
  %v1475 = vsub.f32 %v1362, %v1474
  %1476 = vmatmul.f32.gmra.mxu0 %v1475
  %v1477 = vpop.f32.mrf.mxu0
  %v1478 = vadd.f32 %v1442, %v1477
  %v1479 = vand.u32 %v1364, 4294901760
  %v1480 = vsub.f32 %v1364, %v1479
  %1481 = vmatmul.f32.gmra.mxu0 %v1480
  %v1482 = vpop.f32.mrf.mxu0
  %v1483 = vadd.f32 %v1446, %v1482
  %1484 = vdwg.mxu0
  %1485 = vmatpush.msra.mxu0 1.0
  %1486 = vmatpush.msra.mxu0 1.0
  %1487 = vmatpush.msra.mxu0 1.0
  %1488 = vmatpush.msra.mxu0 1.0
  %1489 = vmatpush.msra.mxu0 1.0
  %1490 = vmatpush.msra.mxu0 1.0
  %1491 = vmatpush.msra.mxu0 1.0
  %1492 = vmatpush.msra.mxu0 1.0
  %1493 = vmatpush.msra.mxu0 1.0
  %1494 = vmatpush.msra.mxu0 1.0
  %1495 = vmatpush.msra.mxu0 1.0
  %1496 = vmatpush.msra.mxu0 1.0
  %1497 = vmatpush.msra.mxu0 1.0
  %1498 = vmatpush.msra.mxu0 1.0
  %1499 = vmatpush.msra.mxu0 1.0
  %1500 = vmatpush.msra.mxu0 1.0
  %v1501 = vand.u32 %v1358, 4294901760
  %v1502 = vsub.f32 %v1358, %v1501
  %v1503 = vand.u32 %v1502, 4294901760
  %1504 = vmatmul.f32.gmra.mxu0 %v1503
  %v1505 = vpop.f32.mrf.mxu0
  %v1506 = vadd.f32 %v1468, %v1505
  %v1507 = vand.u32 %v1360, 4294901760
  %v1508 = vsub.f32 %v1360, %v1507
  %v1509 = vand.u32 %v1508, 4294901760
  %1510 = vmatmul.f32.gmra.mxu0 %v1509
  %v1511 = vpop.f32.mrf.mxu0
  %v1512 = vadd.f32 %v1473, %v1511
  %v1513 = vand.u32 %v1362, 4294901760
  %v1514 = vsub.f32 %v1362, %v1513
  %v1515 = vand.u32 %v1514, 4294901760
  %1516 = vmatmul.f32.gmra.mxu0 %v1515
  %v1517 = vpop.f32.mrf.mxu0
  %v1518 = vadd.f32 %v1478, %v1517
  %v1519 = vand.u32 %v1364, 4294901760
  %v1520 = vsub.f32 %v1364, %v1519
  %v1521 = vand.u32 %v1520, 4294901760
  %1522 = vmatmul.f32.gmra.mxu0 %v1521
  %v1523 = vpop.f32.mrf.mxu0
  %v1524 = vadd.f32 %v1483, %v1523
  %1525 = vdwg.mxu0
  %1526 = vmatpush.msra.mxu0 0.0
  %1527 = vmatpush.msra.mxu0 0.0
  %1528 = vmatpush.msra.mxu0 0.0
  %1529 = vmatpush.msra.mxu0 0.0
  %1530 = vmatpush.msra.mxu0 0.0
  %1531 = vmatpush.msra.mxu0 0.0
  %1532 = vmatpush.msra.mxu0 0.0
  %1533 = vmatpush.msra.mxu0 0.0
  %1534 = vmatpush.msra.mxu0 0.0
  %1535 = vmatpush.msra.mxu0 0.0
  %1536 = vmatpush.msra.mxu0 0.0
  %1537 = vmatpush.msra.mxu0 0.0
  %1538 = vmatpush.msra.mxu0 0.0
  %1539 = vmatpush.msra.mxu0 0.0
  %1540 = vmatpush.msra.mxu0 0.0
  %1541 = vmatpush.msra.mxu0 0.0
  %v1542 = vand.u32 %v1358, 4294901760
  %1543 = vmatmul.f32.gmra.mxu0 %v1542
  %v1544 = vpop.f32.mrf.mxu0
  %v1545 = vadd.f32 %v1506, %v1544
  %v1546 = vand.u32 %v1360, 4294901760
  %1547 = vmatmul.f32.gmra.mxu0 %v1546
  %v1548 = vpop.f32.mrf.mxu0
  %v1549 = vadd.f32 %v1512, %v1548
  %v1550 = vand.u32 %v1362, 4294901760
  %1551 = vmatmul.f32.gmra.mxu0 %v1550
  %v1552 = vpop.f32.mrf.mxu0
  %v1553 = vadd.f32 %v1518, %v1552
  %v1554 = vand.u32 %v1364, 4294901760
  %1555 = vmatmul.f32.gmra.mxu0 %v1554
  %v1556 = vpop.f32.mrf.mxu0
  %v1557 = vadd.f32 %v1524, %v1556
  %1558 = vdwg.mxu0
  %1559 = vmatpush.msra.mxu0 1.0
  %1560 = vmatpush.msra.mxu0 1.0
  %1561 = vmatpush.msra.mxu0 1.0
  %1562 = vmatpush.msra.mxu0 1.0
  %1563 = vmatpush.msra.mxu0 1.0
  %1564 = vmatpush.msra.mxu0 1.0
  %1565 = vmatpush.msra.mxu0 1.0
  %1566 = vmatpush.msra.mxu0 1.0
  %1567 = vmatpush.msra.mxu0 1.0
  %1568 = vmatpush.msra.mxu0 1.0
  %1569 = vmatpush.msra.mxu0 1.0
  %1570 = vmatpush.msra.mxu0 1.0
  %1571 = vmatpush.msra.mxu0 1.0
  %1572 = vmatpush.msra.mxu0 1.0
  %1573 = vmatpush.msra.mxu0 1.0
  %1574 = vmatpush.msra.mxu0 1.0
  %v1575 = vand.u32 %v1358, 4294901760
  %1576 = vmatmul.f32.gmra.mxu0 %v1575
  %v1577 = vpop.f32.mrf.mxu0
  %v1578 = vadd.f32 %v1545, %v1577
  %v1579 = vand.u32 %v1360, 4294901760
  %1580 = vmatmul.f32.gmra.mxu0 %v1579
  %v1581 = vpop.f32.mrf.mxu0
  %v1582 = vadd.f32 %v1549, %v1581
  %v1583 = vand.u32 %v1362, 4294901760
  %1584 = vmatmul.f32.gmra.mxu0 %v1583
  %v1585 = vpop.f32.mrf.mxu0
  %v1586 = vadd.f32 %v1553, %v1585
  %v1587 = vand.u32 %v1364, 4294901760
  %1588 = vmatmul.f32.gmra.mxu0 %v1587
  %v1589 = vpop.f32.mrf.mxu0
  %v1590 = vadd.f32 %v1557, %v1589
  %1591 = vdwg.mxu0
  %1592 = vmatpush.msra.mxu0 1.0
  %1593 = vmatpush.msra.mxu0 1.0
  %1594 = vmatpush.msra.mxu0 1.0
  %1595 = vmatpush.msra.mxu0 1.0
  %1596 = vmatpush.msra.mxu0 1.0
  %1597 = vmatpush.msra.mxu0 1.0
  %1598 = vmatpush.msra.mxu0 1.0
  %1599 = vmatpush.msra.mxu0 1.0
  %1600 = vmatpush.msra.mxu0 1.0
  %1601 = vmatpush.msra.mxu0 1.0
  %1602 = vmatpush.msra.mxu0 1.0
  %1603 = vmatpush.msra.mxu0 1.0
  %1604 = vmatpush.msra.mxu0 1.0
  %1605 = vmatpush.msra.mxu0 1.0
  %1606 = vmatpush.msra.mxu0 1.0
  %1607 = vmatpush.msra.mxu0 1.0
  %v1608 = vand.u32 %v1359, 4294901760
  %v1609 = vsub.f32 %v1359, %v1608
  %v1610 = vand.u32 %v1609, 4294901760
  %v1611 = vsub.f32 %v1609, %v1610
  %v1612 = vand.u32 %v1611, 4294901760
  %1613 = vmatmul.f32.gmra.mxu0 %v1612
  %v1614 = vpop.f32.mrf.mxu0
  %v1615 = vadd.f32 %v1578, %v1614
  %v1616 = vand.u32 %v1361, 4294901760
  %v1617 = vsub.f32 %v1361, %v1616
  %v1618 = vand.u32 %v1617, 4294901760
  %v1619 = vsub.f32 %v1617, %v1618
  %v1620 = vand.u32 %v1619, 4294901760
  %1621 = vmatmul.f32.gmra.mxu0 %v1620
  %v1622 = vpop.f32.mrf.mxu0
  %v1623 = vadd.f32 %v1582, %v1622
  %v1624 = vand.u32 %v1363, 4294901760
  %v1625 = vsub.f32 %v1363, %v1624
  %v1626 = vand.u32 %v1625, 4294901760
  %v1627 = vsub.f32 %v1625, %v1626
  %v1628 = vand.u32 %v1627, 4294901760
  %1629 = vmatmul.f32.gmra.mxu0 %v1628
  %v1630 = vpop.f32.mrf.mxu0
  %v1631 = vadd.f32 %v1586, %v1630
  %v1632 = vand.u32 %v1365, 4294901760
  %v1633 = vsub.f32 %v1365, %v1632
  %v1634 = vand.u32 %v1633, 4294901760
  %v1635 = vsub.f32 %v1633, %v1634
  %v1636 = vand.u32 %v1635, 4294901760
  %1637 = vmatmul.f32.gmra.mxu0 %v1636
  %v1638 = vpop.f32.mrf.mxu0
  %v1639 = vadd.f32 %v1590, %v1638
  %1640 = vdwg.mxu0
  %1641 = vmatpush.msra.mxu0 0.0
  %1642 = vmatpush.msra.mxu0 0.0
  %1643 = vmatpush.msra.mxu0 0.0
  %1644 = vmatpush.msra.mxu0 0.0
  %1645 = vmatpush.msra.mxu0 0.0
  %1646 = vmatpush.msra.mxu0 0.0
  %1647 = vmatpush.msra.mxu0 0.0
  %1648 = vmatpush.msra.mxu0 0.0
  %1649 = vmatpush.msra.mxu0 0.0
  %1650 = vmatpush.msra.mxu0 0.0
  %1651 = vmatpush.msra.mxu0 0.0
  %1652 = vmatpush.msra.mxu0 0.0
  %1653 = vmatpush.msra.mxu0 0.0
  %1654 = vmatpush.msra.mxu0 0.0
  %1655 = vmatpush.msra.mxu0 0.0
  %1656 = vmatpush.msra.mxu0 0.0
  %v1657 = vand.u32 %v1359, 4294901760
  %1658 = vmatmul.f32.gmra.mxu0 %v1657
  %v1659 = vpop.f32.mrf.mxu0
  %v1660 = vadd.f32 %v1615, %v1659
  %v1661 = vand.u32 %v1361, 4294901760
  %1662 = vmatmul.f32.gmra.mxu0 %v1661
  %v1663 = vpop.f32.mrf.mxu0
  %v1664 = vadd.f32 %v1623, %v1663
  %v1665 = vand.u32 %v1363, 4294901760
  %1666 = vmatmul.f32.gmra.mxu0 %v1665
  %v1667 = vpop.f32.mrf.mxu0
  %v1668 = vadd.f32 %v1631, %v1667
  %v1669 = vand.u32 %v1365, 4294901760
  %1670 = vmatmul.f32.gmra.mxu0 %v1669
  %v1671 = vpop.f32.mrf.mxu0
  %v1672 = vadd.f32 %v1639, %v1671
  %1673 = vdwg.mxu0
  %1674 = vmatpush.msra.mxu0 0.0
  %1675 = vmatpush.msra.mxu0 0.0
  %1676 = vmatpush.msra.mxu0 0.0
  %1677 = vmatpush.msra.mxu0 0.0
  %1678 = vmatpush.msra.mxu0 0.0
  %1679 = vmatpush.msra.mxu0 0.0
  %1680 = vmatpush.msra.mxu0 0.0
  %1681 = vmatpush.msra.mxu0 0.0
  %1682 = vmatpush.msra.mxu0 0.0
  %1683 = vmatpush.msra.mxu0 0.0
  %1684 = vmatpush.msra.mxu0 0.0
  %1685 = vmatpush.msra.mxu0 0.0
  %1686 = vmatpush.msra.mxu0 0.0
  %1687 = vmatpush.msra.mxu0 0.0
  %1688 = vmatpush.msra.mxu0 0.0
  %1689 = vmatpush.msra.mxu0 0.0
  %v1690 = vand.u32 %v1359, 4294901760
  %v1691 = vsub.f32 %v1359, %v1690
  %1692 = vmatmul.f32.gmra.mxu0 %v1691
  %v1693 = vpop.f32.mrf.mxu0
  %v1694 = vadd.f32 %v1660, %v1693
  %v1695 = vand.u32 %v1361, 4294901760
  %v1696 = vsub.f32 %v1361, %v1695
  %1697 = vmatmul.f32.gmra.mxu0 %v1696
  %v1698 = vpop.f32.mrf.mxu0
  %v1699 = vadd.f32 %v1664, %v1698
  %v1700 = vand.u32 %v1363, 4294901760
  %v1701 = vsub.f32 %v1363, %v1700
  %1702 = vmatmul.f32.gmra.mxu0 %v1701
  %v1703 = vpop.f32.mrf.mxu0
  %v1704 = vadd.f32 %v1668, %v1703
  %v1705 = vand.u32 %v1365, 4294901760
  %v1706 = vsub.f32 %v1365, %v1705
  %1707 = vmatmul.f32.gmra.mxu0 %v1706
  %v1708 = vpop.f32.mrf.mxu0
  %v1709 = vadd.f32 %v1672, %v1708
  %1710 = vdwg.mxu0
  %1711 = vmatpush.msra.mxu0 1.0
  %1712 = vmatpush.msra.mxu0 1.0
  %1713 = vmatpush.msra.mxu0 1.0
  %1714 = vmatpush.msra.mxu0 1.0
  %1715 = vmatpush.msra.mxu0 1.0
  %1716 = vmatpush.msra.mxu0 1.0
  %1717 = vmatpush.msra.mxu0 1.0
  %1718 = vmatpush.msra.mxu0 1.0
  %1719 = vmatpush.msra.mxu0 1.0
  %1720 = vmatpush.msra.mxu0 1.0
  %1721 = vmatpush.msra.mxu0 1.0
  %1722 = vmatpush.msra.mxu0 1.0
  %1723 = vmatpush.msra.mxu0 1.0
  %1724 = vmatpush.msra.mxu0 1.0
  %1725 = vmatpush.msra.mxu0 1.0
  %1726 = vmatpush.msra.mxu0 1.0
  %v1727 = vand.u32 %v1359, 4294901760
  %v1728 = vsub.f32 %v1359, %v1727
  %v1729 = vand.u32 %v1728, 4294901760
  %1730 = vmatmul.f32.gmra.mxu0 %v1729
  %v1731 = vpop.f32.mrf.mxu0
  %v1732 = vadd.f32 %v1694, %v1731
  %v1733 = vand.u32 %v1361, 4294901760
  %v1734 = vsub.f32 %v1361, %v1733
  %v1735 = vand.u32 %v1734, 4294901760
  %1736 = vmatmul.f32.gmra.mxu0 %v1735
  %v1737 = vpop.f32.mrf.mxu0
  %v1738 = vadd.f32 %v1699, %v1737
  %v1739 = vand.u32 %v1363, 4294901760
  %v1740 = vsub.f32 %v1363, %v1739
  %v1741 = vand.u32 %v1740, 4294901760
  %1742 = vmatmul.f32.gmra.mxu0 %v1741
  %v1743 = vpop.f32.mrf.mxu0
  %v1744 = vadd.f32 %v1704, %v1743
  %v1745 = vand.u32 %v1365, 4294901760
  %v1746 = vsub.f32 %v1365, %v1745
  %v1747 = vand.u32 %v1746, 4294901760
  %1748 = vmatmul.f32.gmra.mxu0 %v1747
  %v1749 = vpop.f32.mrf.mxu0
  %v1750 = vadd.f32 %v1709, %v1749
  %1751 = vdwg.mxu0
  %1752 = vmatpush.msra.mxu0 0.0
  %1753 = vmatpush.msra.mxu0 0.0
  %1754 = vmatpush.msra.mxu0 0.0
  %1755 = vmatpush.msra.mxu0 0.0
  %1756 = vmatpush.msra.mxu0 0.0
  %1757 = vmatpush.msra.mxu0 0.0
  %1758 = vmatpush.msra.mxu0 0.0
  %1759 = vmatpush.msra.mxu0 0.0
  %1760 = vmatpush.msra.mxu0 0.0
  %1761 = vmatpush.msra.mxu0 0.0
  %1762 = vmatpush.msra.mxu0 0.0
  %1763 = vmatpush.msra.mxu0 0.0
  %1764 = vmatpush.msra.mxu0 0.0
  %1765 = vmatpush.msra.mxu0 0.0
  %1766 = vmatpush.msra.mxu0 0.0
  %1767 = vmatpush.msra.mxu0 0.0
  %v1768 = vand.u32 %v1359, 4294901760
  %1769 = vmatmul.f32.gmra.mxu0 %v1768
  %v1770 = vpop.f32.mrf.mxu0
  %v1771 = vadd.f32 %v1732, %v1770
  %v1772 = vand.u32 %v1361, 4294901760
  %1773 = vmatmul.f32.gmra.mxu0 %v1772
  %v1774 = vpop.f32.mrf.mxu0
  %v1775 = vadd.f32 %v1738, %v1774
  %v1776 = vand.u32 %v1363, 4294901760
  %1777 = vmatmul.f32.gmra.mxu0 %v1776
  %v1778 = vpop.f32.mrf.mxu0
  %v1779 = vadd.f32 %v1744, %v1778
  %v1780 = vand.u32 %v1365, 4294901760
  %1781 = vmatmul.f32.gmra.mxu0 %v1780
  %v1782 = vpop.f32.mrf.mxu0
  %v1783 = vadd.f32 %v1750, %v1782
  %1784 = vdwg.mxu0
  %1785 = vmatpush.msra.mxu0 1.0
  %1786 = vmatpush.msra.mxu0 1.0
  %1787 = vmatpush.msra.mxu0 1.0
  %1788 = vmatpush.msra.mxu0 1.0
  %1789 = vmatpush.msra.mxu0 1.0
  %1790 = vmatpush.msra.mxu0 1.0
  %1791 = vmatpush.msra.mxu0 1.0
  %1792 = vmatpush.msra.mxu0 1.0
  %1793 = vmatpush.msra.mxu0 1.0
  %1794 = vmatpush.msra.mxu0 1.0
  %1795 = vmatpush.msra.mxu0 1.0
  %1796 = vmatpush.msra.mxu0 1.0
  %1797 = vmatpush.msra.mxu0 1.0
  %1798 = vmatpush.msra.mxu0 1.0
  %1799 = vmatpush.msra.mxu0 1.0
  %1800 = vmatpush.msra.mxu0 1.0
  %v1801 = vand.u32 %v1359, 4294901760
  %1802 = vmatmul.f32.gmra.mxu0 %v1801
  %v1803 = vpop.f32.mrf.mxu0
  %v1804 = vadd.f32 %v1771, %v1803
  %v1805 = vand.u32 %v1361, 4294901760
  %1806 = vmatmul.f32.gmra.mxu0 %v1805
  %v1807 = vpop.f32.mrf.mxu0
  %v1808 = vadd.f32 %v1775, %v1807
  %v1809 = vand.u32 %v1363, 4294901760
  %1810 = vmatmul.f32.gmra.mxu0 %v1809
  %v1811 = vpop.f32.mrf.mxu0
  %v1812 = vadd.f32 %v1779, %v1811
  %v1813 = vand.u32 %v1365, 4294901760
  %1814 = vmatmul.f32.gmra.mxu0 %v1813
  %v1815 = vpop.f32.mrf.mxu0
  %v1816 = vadd.f32 %v1783, %v1815
  %1817 = vdwg.mxu0
  %v1818 = vmul.f32 %v1358, %v1358
  %v1819 = vmul.f32 %v1359, %v1359
  %v1820 = vmul.f32 %v1360, %v1360
  %v1821 = vmul.f32 %v1361, %v1361
  %v1822 = vmul.f32 %v1362, %v1362
  %v1823 = vmul.f32 %v1363, %v1363
  %v1824 = vmul.f32 %v1364, %v1364
  %v1825 = vmul.f32 %v1365, %v1365
  %1826 = vmatpush.msra.mxu0 1.0
  %1827 = vmatpush.msra.mxu0 1.0
  %1828 = vmatpush.msra.mxu0 1.0
  %1829 = vmatpush.msra.mxu0 1.0
  %1830 = vmatpush.msra.mxu0 1.0
  %1831 = vmatpush.msra.mxu0 1.0
  %1832 = vmatpush.msra.mxu0 1.0
  %1833 = vmatpush.msra.mxu0 1.0
  %1834 = vmatpush.msra.mxu0 1.0
  %1835 = vmatpush.msra.mxu0 1.0
  %1836 = vmatpush.msra.mxu0 1.0
  %1837 = vmatpush.msra.mxu0 1.0
  %1838 = vmatpush.msra.mxu0 1.0
  %1839 = vmatpush.msra.mxu0 1.0
  %1840 = vmatpush.msra.mxu0 1.0
  %1841 = vmatpush.msra.mxu0 1.0
  %v1842 = vand.u32 %v1818, 4294901760
  %v1843 = vsub.f32 %v1818, %v1842
  %v1844 = vand.u32 %v1843, 4294901760
  %v1845 = vsub.f32 %v1843, %v1844
  %v1846 = vand.u32 %v1845, 4294901760
  %1847 = vmatmul.f32.gmra.mxu0 %v1846
  %v1848 = vpop.f32.mrf.mxu0
  %v1849 = vadd.f32 0.0, %v1848
  %v1850 = vand.u32 %v1820, 4294901760
  %v1851 = vsub.f32 %v1820, %v1850
  %v1852 = vand.u32 %v1851, 4294901760
  %v1853 = vsub.f32 %v1851, %v1852
  %v1854 = vand.u32 %v1853, 4294901760
  %1855 = vmatmul.f32.gmra.mxu0 %v1854
  %v1856 = vpop.f32.mrf.mxu0
  %v1857 = vadd.f32 0.0, %v1856
  %v1858 = vand.u32 %v1822, 4294901760
  %v1859 = vsub.f32 %v1822, %v1858
  %v1860 = vand.u32 %v1859, 4294901760
  %v1861 = vsub.f32 %v1859, %v1860
  %v1862 = vand.u32 %v1861, 4294901760
  %1863 = vmatmul.f32.gmra.mxu0 %v1862
  %v1864 = vpop.f32.mrf.mxu0
  %v1865 = vadd.f32 0.0, %v1864
  %v1866 = vand.u32 %v1824, 4294901760
  %v1867 = vsub.f32 %v1824, %v1866
  %v1868 = vand.u32 %v1867, 4294901760
  %v1869 = vsub.f32 %v1867, %v1868
  %v1870 = vand.u32 %v1869, 4294901760
  %1871 = vmatmul.f32.gmra.mxu0 %v1870
  %v1872 = vpop.f32.mrf.mxu0
  %v1873 = vadd.f32 0.0, %v1872
  %1874 = vdwg.mxu0
  %1875 = vmatpush.msra.mxu0 0.0
  %1876 = vmatpush.msra.mxu0 0.0
  %1877 = vmatpush.msra.mxu0 0.0
  %1878 = vmatpush.msra.mxu0 0.0
  %1879 = vmatpush.msra.mxu0 0.0
  %1880 = vmatpush.msra.mxu0 0.0
  %1881 = vmatpush.msra.mxu0 0.0
  %1882 = vmatpush.msra.mxu0 0.0
  %1883 = vmatpush.msra.mxu0 0.0
  %1884 = vmatpush.msra.mxu0 0.0
  %1885 = vmatpush.msra.mxu0 0.0
  %1886 = vmatpush.msra.mxu0 0.0
  %1887 = vmatpush.msra.mxu0 0.0
  %1888 = vmatpush.msra.mxu0 0.0
  %1889 = vmatpush.msra.mxu0 0.0
  %1890 = vmatpush.msra.mxu0 0.0
  %v1891 = vand.u32 %v1818, 4294901760
  %1892 = vmatmul.f32.gmra.mxu0 %v1891
  %v1893 = vpop.f32.mrf.mxu0
  %v1894 = vadd.f32 %v1849, %v1893
  %v1895 = vand.u32 %v1820, 4294901760
  %1896 = vmatmul.f32.gmra.mxu0 %v1895
  %v1897 = vpop.f32.mrf.mxu0
  %v1898 = vadd.f32 %v1857, %v1897
  %v1899 = vand.u32 %v1822, 4294901760
  %1900 = vmatmul.f32.gmra.mxu0 %v1899
  %v1901 = vpop.f32.mrf.mxu0
  %v1902 = vadd.f32 %v1865, %v1901
  %v1903 = vand.u32 %v1824, 4294901760
  %1904 = vmatmul.f32.gmra.mxu0 %v1903
  %v1905 = vpop.f32.mrf.mxu0
  %v1906 = vadd.f32 %v1873, %v1905
  %1907 = vdwg.mxu0
  %1908 = vmatpush.msra.mxu0 0.0
  %1909 = vmatpush.msra.mxu0 0.0
  %1910 = vmatpush.msra.mxu0 0.0
  %1911 = vmatpush.msra.mxu0 0.0
  %1912 = vmatpush.msra.mxu0 0.0
  %1913 = vmatpush.msra.mxu0 0.0
  %1914 = vmatpush.msra.mxu0 0.0
  %1915 = vmatpush.msra.mxu0 0.0
  %1916 = vmatpush.msra.mxu0 0.0
  %1917 = vmatpush.msra.mxu0 0.0
  %1918 = vmatpush.msra.mxu0 0.0
  %1919 = vmatpush.msra.mxu0 0.0
  %1920 = vmatpush.msra.mxu0 0.0
  %1921 = vmatpush.msra.mxu0 0.0
  %1922 = vmatpush.msra.mxu0 0.0
  %1923 = vmatpush.msra.mxu0 0.0
  %v1924 = vand.u32 %v1818, 4294901760
  %v1925 = vsub.f32 %v1818, %v1924
  %1926 = vmatmul.f32.gmra.mxu0 %v1925
  %v1927 = vpop.f32.mrf.mxu0
  %v1928 = vadd.f32 %v1894, %v1927
  %v1929 = vand.u32 %v1820, 4294901760
  %v1930 = vsub.f32 %v1820, %v1929
  %1931 = vmatmul.f32.gmra.mxu0 %v1930
  %v1932 = vpop.f32.mrf.mxu0
  %v1933 = vadd.f32 %v1898, %v1932
  %v1934 = vand.u32 %v1822, 4294901760
  %v1935 = vsub.f32 %v1822, %v1934
  %1936 = vmatmul.f32.gmra.mxu0 %v1935
  %v1937 = vpop.f32.mrf.mxu0
  %v1938 = vadd.f32 %v1902, %v1937
  %v1939 = vand.u32 %v1824, 4294901760
  %v1940 = vsub.f32 %v1824, %v1939
  %1941 = vmatmul.f32.gmra.mxu0 %v1940
  %v1942 = vpop.f32.mrf.mxu0
  %v1943 = vadd.f32 %v1906, %v1942
  %1944 = vdwg.mxu0
  %1945 = vmatpush.msra.mxu0 1.0
  %1946 = vmatpush.msra.mxu0 1.0
  %1947 = vmatpush.msra.mxu0 1.0
  %1948 = vmatpush.msra.mxu0 1.0
  %1949 = vmatpush.msra.mxu0 1.0
  %1950 = vmatpush.msra.mxu0 1.0
  %1951 = vmatpush.msra.mxu0 1.0
  %1952 = vmatpush.msra.mxu0 1.0
  %1953 = vmatpush.msra.mxu0 1.0
  %1954 = vmatpush.msra.mxu0 1.0
  %1955 = vmatpush.msra.mxu0 1.0
  %1956 = vmatpush.msra.mxu0 1.0
  %1957 = vmatpush.msra.mxu0 1.0
  %1958 = vmatpush.msra.mxu0 1.0
  %1959 = vmatpush.msra.mxu0 1.0
  %1960 = vmatpush.msra.mxu0 1.0
  %v1961 = vand.u32 %v1818, 4294901760
  %v1962 = vsub.f32 %v1818, %v1961
  %v1963 = vand.u32 %v1962, 4294901760
  %1964 = vmatmul.f32.gmra.mxu0 %v1963
  %v1965 = vpop.f32.mrf.mxu0
  %v1966 = vadd.f32 %v1928, %v1965
  %v1967 = vand.u32 %v1820, 4294901760
  %v1968 = vsub.f32 %v1820, %v1967
  %v1969 = vand.u32 %v1968, 4294901760
  %1970 = vmatmul.f32.gmra.mxu0 %v1969
  %v1971 = vpop.f32.mrf.mxu0
  %v1972 = vadd.f32 %v1933, %v1971
  %v1973 = vand.u32 %v1822, 4294901760
  %v1974 = vsub.f32 %v1822, %v1973
  %v1975 = vand.u32 %v1974, 4294901760
  %1976 = vmatmul.f32.gmra.mxu0 %v1975
  %v1977 = vpop.f32.mrf.mxu0
  %v1978 = vadd.f32 %v1938, %v1977
  %v1979 = vand.u32 %v1824, 4294901760
  %v1980 = vsub.f32 %v1824, %v1979
  %v1981 = vand.u32 %v1980, 4294901760
  %1982 = vmatmul.f32.gmra.mxu0 %v1981
  %v1983 = vpop.f32.mrf.mxu0
  %v1984 = vadd.f32 %v1943, %v1983
  %1985 = vdwg.mxu0
  %1986 = vmatpush.msra.mxu0 0.0
  %1987 = vmatpush.msra.mxu0 0.0
  %1988 = vmatpush.msra.mxu0 0.0
  %1989 = vmatpush.msra.mxu0 0.0
  %1990 = vmatpush.msra.mxu0 0.0
  %1991 = vmatpush.msra.mxu0 0.0
  %1992 = vmatpush.msra.mxu0 0.0
  %1993 = vmatpush.msra.mxu0 0.0
  %1994 = vmatpush.msra.mxu0 0.0
  %1995 = vmatpush.msra.mxu0 0.0
  %1996 = vmatpush.msra.mxu0 0.0
  %1997 = vmatpush.msra.mxu0 0.0
  %1998 = vmatpush.msra.mxu0 0.0
  %1999 = vmatpush.msra.mxu0 0.0
  %2000 = vmatpush.msra.mxu0 0.0
  %2001 = vmatpush.msra.mxu0 0.0
  %v2002 = vand.u32 %v1818, 4294901760
  %2003 = vmatmul.f32.gmra.mxu0 %v2002
  %v2004 = vpop.f32.mrf.mxu0
  %v2005 = vadd.f32 %v1966, %v2004
  %v2006 = vand.u32 %v1820, 4294901760
  %2007 = vmatmul.f32.gmra.mxu0 %v2006
  %v2008 = vpop.f32.mrf.mxu0
  %v2009 = vadd.f32 %v1972, %v2008
  %v2010 = vand.u32 %v1822, 4294901760
  %2011 = vmatmul.f32.gmra.mxu0 %v2010
  %v2012 = vpop.f32.mrf.mxu0
  %v2013 = vadd.f32 %v1978, %v2012
  %v2014 = vand.u32 %v1824, 4294901760
  %2015 = vmatmul.f32.gmra.mxu0 %v2014
  %v2016 = vpop.f32.mrf.mxu0
  %v2017 = vadd.f32 %v1984, %v2016
  %2018 = vdwg.mxu0
  %2019 = vmatpush.msra.mxu0 1.0
  %2020 = vmatpush.msra.mxu0 1.0
  %2021 = vmatpush.msra.mxu0 1.0
  %2022 = vmatpush.msra.mxu0 1.0
  %2023 = vmatpush.msra.mxu0 1.0
  %2024 = vmatpush.msra.mxu0 1.0
  %2025 = vmatpush.msra.mxu0 1.0
  %2026 = vmatpush.msra.mxu0 1.0
  %2027 = vmatpush.msra.mxu0 1.0
  %2028 = vmatpush.msra.mxu0 1.0
  %2029 = vmatpush.msra.mxu0 1.0
  %2030 = vmatpush.msra.mxu0 1.0
  %2031 = vmatpush.msra.mxu0 1.0
  %2032 = vmatpush.msra.mxu0 1.0
  %2033 = vmatpush.msra.mxu0 1.0
  %2034 = vmatpush.msra.mxu0 1.0
  %v2035 = vand.u32 %v1818, 4294901760
  %2036 = vmatmul.f32.gmra.mxu0 %v2035
  %v2037 = vpop.f32.mrf.mxu0
  %v2038 = vadd.f32 %v2005, %v2037
  %v2039 = vand.u32 %v1820, 4294901760
  %2040 = vmatmul.f32.gmra.mxu0 %v2039
  %v2041 = vpop.f32.mrf.mxu0
  %v2042 = vadd.f32 %v2009, %v2041
  %v2043 = vand.u32 %v1822, 4294901760
  %2044 = vmatmul.f32.gmra.mxu0 %v2043
  %v2045 = vpop.f32.mrf.mxu0
  %v2046 = vadd.f32 %v2013, %v2045
  %v2047 = vand.u32 %v1824, 4294901760
  %2048 = vmatmul.f32.gmra.mxu0 %v2047
  %v2049 = vpop.f32.mrf.mxu0
  %v2050 = vadd.f32 %v2017, %v2049
  %2051 = vdwg.mxu0
  %2052 = vmatpush.msra.mxu0 1.0
  %2053 = vmatpush.msra.mxu0 1.0
  %2054 = vmatpush.msra.mxu0 1.0
  %2055 = vmatpush.msra.mxu0 1.0
  %2056 = vmatpush.msra.mxu0 1.0
  %2057 = vmatpush.msra.mxu0 1.0
  %2058 = vmatpush.msra.mxu0 1.0
  %2059 = vmatpush.msra.mxu0 1.0
  %2060 = vmatpush.msra.mxu0 1.0
  %2061 = vmatpush.msra.mxu0 1.0
  %2062 = vmatpush.msra.mxu0 1.0
  %2063 = vmatpush.msra.mxu0 1.0
  %2064 = vmatpush.msra.mxu0 1.0
  %2065 = vmatpush.msra.mxu0 1.0
  %2066 = vmatpush.msra.mxu0 1.0
  %2067 = vmatpush.msra.mxu0 1.0
  %v2068 = vand.u32 %v1819, 4294901760
  %v2069 = vsub.f32 %v1819, %v2068
  %v2070 = vand.u32 %v2069, 4294901760
  %v2071 = vsub.f32 %v2069, %v2070
  %v2072 = vand.u32 %v2071, 4294901760
  %2073 = vmatmul.f32.gmra.mxu0 %v2072
  %v2074 = vpop.f32.mrf.mxu0
  %v2075 = vadd.f32 %v2038, %v2074
  %v2076 = vand.u32 %v1821, 4294901760
  %v2077 = vsub.f32 %v1821, %v2076
  %v2078 = vand.u32 %v2077, 4294901760
  %v2079 = vsub.f32 %v2077, %v2078
  %v2080 = vand.u32 %v2079, 4294901760
  %2081 = vmatmul.f32.gmra.mxu0 %v2080
  %v2082 = vpop.f32.mrf.mxu0
  %v2083 = vadd.f32 %v2042, %v2082
  %v2084 = vand.u32 %v1823, 4294901760
  %v2085 = vsub.f32 %v1823, %v2084
  %v2086 = vand.u32 %v2085, 4294901760
  %v2087 = vsub.f32 %v2085, %v2086
  %v2088 = vand.u32 %v2087, 4294901760
  %2089 = vmatmul.f32.gmra.mxu0 %v2088
  %v2090 = vpop.f32.mrf.mxu0
  %v2091 = vadd.f32 %v2046, %v2090
  %v2092 = vand.u32 %v1825, 4294901760
  %v2093 = vsub.f32 %v1825, %v2092
  %v2094 = vand.u32 %v2093, 4294901760
  %v2095 = vsub.f32 %v2093, %v2094
  %v2096 = vand.u32 %v2095, 4294901760
  %2097 = vmatmul.f32.gmra.mxu0 %v2096
  %v2098 = vpop.f32.mrf.mxu0
  %v2099 = vadd.f32 %v2050, %v2098
  %2100 = vdwg.mxu0
  %2101 = vmatpush.msra.mxu0 0.0
  %2102 = vmatpush.msra.mxu0 0.0
  %2103 = vmatpush.msra.mxu0 0.0
  %2104 = vmatpush.msra.mxu0 0.0
  %2105 = vmatpush.msra.mxu0 0.0
  %2106 = vmatpush.msra.mxu0 0.0
  %2107 = vmatpush.msra.mxu0 0.0
  %2108 = vmatpush.msra.mxu0 0.0
  %2109 = vmatpush.msra.mxu0 0.0
  %2110 = vmatpush.msra.mxu0 0.0
  %2111 = vmatpush.msra.mxu0 0.0
  %2112 = vmatpush.msra.mxu0 0.0
  %2113 = vmatpush.msra.mxu0 0.0
  %2114 = vmatpush.msra.mxu0 0.0
  %2115 = vmatpush.msra.mxu0 0.0
  %2116 = vmatpush.msra.mxu0 0.0
  %v2117 = vand.u32 %v1819, 4294901760
  %2118 = vmatmul.f32.gmra.mxu0 %v2117
  %v2119 = vpop.f32.mrf.mxu0
  %v2120 = vadd.f32 %v2075, %v2119
  %v2121 = vand.u32 %v1821, 4294901760
  %2122 = vmatmul.f32.gmra.mxu0 %v2121
  %v2123 = vpop.f32.mrf.mxu0
  %v2124 = vadd.f32 %v2083, %v2123
  %v2125 = vand.u32 %v1823, 4294901760
  %2126 = vmatmul.f32.gmra.mxu0 %v2125
  %v2127 = vpop.f32.mrf.mxu0
  %v2128 = vadd.f32 %v2091, %v2127
  %v2129 = vand.u32 %v1825, 4294901760
  %2130 = vmatmul.f32.gmra.mxu0 %v2129
  %v2131 = vpop.f32.mrf.mxu0
  %v2132 = vadd.f32 %v2099, %v2131
  %2133 = vdwg.mxu0
  %2134 = vmatpush.msra.mxu0 0.0
  %2135 = vmatpush.msra.mxu0 0.0
  %2136 = vmatpush.msra.mxu0 0.0
  %2137 = vmatpush.msra.mxu0 0.0
  %2138 = vmatpush.msra.mxu0 0.0
  %2139 = vmatpush.msra.mxu0 0.0
  %2140 = vmatpush.msra.mxu0 0.0
  %2141 = vmatpush.msra.mxu0 0.0
  %2142 = vmatpush.msra.mxu0 0.0
  %2143 = vmatpush.msra.mxu0 0.0
  %2144 = vmatpush.msra.mxu0 0.0
  %2145 = vmatpush.msra.mxu0 0.0
  %2146 = vmatpush.msra.mxu0 0.0
  %2147 = vmatpush.msra.mxu0 0.0
  %2148 = vmatpush.msra.mxu0 0.0
  %2149 = vmatpush.msra.mxu0 0.0
  %v2150 = vand.u32 %v1819, 4294901760
  %v2151 = vsub.f32 %v1819, %v2150
  %2152 = vmatmul.f32.gmra.mxu0 %v2151
  %v2153 = vpop.f32.mrf.mxu0
  %v2154 = vadd.f32 %v2120, %v2153
  %v2155 = vand.u32 %v1821, 4294901760
  %v2156 = vsub.f32 %v1821, %v2155
  %2157 = vmatmul.f32.gmra.mxu0 %v2156
  %v2158 = vpop.f32.mrf.mxu0
  %v2159 = vadd.f32 %v2124, %v2158
  %v2160 = vand.u32 %v1823, 4294901760
  %v2161 = vsub.f32 %v1823, %v2160
  %2162 = vmatmul.f32.gmra.mxu0 %v2161
  %v2163 = vpop.f32.mrf.mxu0
  %v2164 = vadd.f32 %v2128, %v2163
  %v2165 = vand.u32 %v1825, 4294901760
  %v2166 = vsub.f32 %v1825, %v2165
  %2167 = vmatmul.f32.gmra.mxu0 %v2166
  %v2168 = vpop.f32.mrf.mxu0
  %v2169 = vadd.f32 %v2132, %v2168
  %2170 = vdwg.mxu0
  %2171 = vmatpush.msra.mxu0 1.0
  %2172 = vmatpush.msra.mxu0 1.0
  %2173 = vmatpush.msra.mxu0 1.0
  %2174 = vmatpush.msra.mxu0 1.0
  %2175 = vmatpush.msra.mxu0 1.0
  %2176 = vmatpush.msra.mxu0 1.0
  %2177 = vmatpush.msra.mxu0 1.0
  %2178 = vmatpush.msra.mxu0 1.0
  %2179 = vmatpush.msra.mxu0 1.0
  %2180 = vmatpush.msra.mxu0 1.0
  %2181 = vmatpush.msra.mxu0 1.0
  %2182 = vmatpush.msra.mxu0 1.0
  %2183 = vmatpush.msra.mxu0 1.0
  %2184 = vmatpush.msra.mxu0 1.0
  %2185 = vmatpush.msra.mxu0 1.0
  %2186 = vmatpush.msra.mxu0 1.0
  %v2187 = vand.u32 %v1819, 4294901760
  %v2188 = vsub.f32 %v1819, %v2187
  %v2189 = vand.u32 %v2188, 4294901760
  %2190 = vmatmul.f32.gmra.mxu0 %v2189
  %v2191 = vpop.f32.mrf.mxu0
  %v2192 = vadd.f32 %v2154, %v2191
  %v2193 = vand.u32 %v1821, 4294901760
  %v2194 = vsub.f32 %v1821, %v2193
  %v2195 = vand.u32 %v2194, 4294901760
  %2196 = vmatmul.f32.gmra.mxu0 %v2195
  %v2197 = vpop.f32.mrf.mxu0
  %v2198 = vadd.f32 %v2159, %v2197
  %v2199 = vand.u32 %v1823, 4294901760
  %v2200 = vsub.f32 %v1823, %v2199
  %v2201 = vand.u32 %v2200, 4294901760
  %2202 = vmatmul.f32.gmra.mxu0 %v2201
  %v2203 = vpop.f32.mrf.mxu0
  %v2204 = vadd.f32 %v2164, %v2203
  %v2205 = vand.u32 %v1825, 4294901760
  %v2206 = vsub.f32 %v1825, %v2205
  %v2207 = vand.u32 %v2206, 4294901760
  %2208 = vmatmul.f32.gmra.mxu0 %v2207
  %v2209 = vpop.f32.mrf.mxu0
  %v2210 = vadd.f32 %v2169, %v2209
  %2211 = vdwg.mxu0
  %2212 = vmatpush.msra.mxu0 0.0
  %2213 = vmatpush.msra.mxu0 0.0
  %2214 = vmatpush.msra.mxu0 0.0
  %2215 = vmatpush.msra.mxu0 0.0
  %2216 = vmatpush.msra.mxu0 0.0
  %2217 = vmatpush.msra.mxu0 0.0
  %2218 = vmatpush.msra.mxu0 0.0
  %2219 = vmatpush.msra.mxu0 0.0
  %2220 = vmatpush.msra.mxu0 0.0
  %2221 = vmatpush.msra.mxu0 0.0
  %2222 = vmatpush.msra.mxu0 0.0
  %2223 = vmatpush.msra.mxu0 0.0
  %2224 = vmatpush.msra.mxu0 0.0
  %2225 = vmatpush.msra.mxu0 0.0
  %2226 = vmatpush.msra.mxu0 0.0
  %2227 = vmatpush.msra.mxu0 0.0
  %v2228 = vand.u32 %v1819, 4294901760
  %2229 = vmatmul.f32.gmra.mxu0 %v2228
  %v2230 = vpop.f32.mrf.mxu0
  %v2231 = vadd.f32 %v2192, %v2230
  %v2232 = vand.u32 %v1821, 4294901760
  %2233 = vmatmul.f32.gmra.mxu0 %v2232
  %v2234 = vpop.f32.mrf.mxu0
  %v2235 = vadd.f32 %v2198, %v2234
  %v2236 = vand.u32 %v1823, 4294901760
  %2237 = vmatmul.f32.gmra.mxu0 %v2236
  %v2238 = vpop.f32.mrf.mxu0
  %v2239 = vadd.f32 %v2204, %v2238
  %v2240 = vand.u32 %v1825, 4294901760
  %2241 = vmatmul.f32.gmra.mxu0 %v2240
  %v2242 = vpop.f32.mrf.mxu0
  %v2243 = vadd.f32 %v2210, %v2242
  %2244 = vdwg.mxu0
  %2245 = vmatpush.msra.mxu0 1.0
  %2246 = vmatpush.msra.mxu0 1.0
  %2247 = vmatpush.msra.mxu0 1.0
  %2248 = vmatpush.msra.mxu0 1.0
  %2249 = vmatpush.msra.mxu0 1.0
  %2250 = vmatpush.msra.mxu0 1.0
  %2251 = vmatpush.msra.mxu0 1.0
  %2252 = vmatpush.msra.mxu0 1.0
  %2253 = vmatpush.msra.mxu0 1.0
  %2254 = vmatpush.msra.mxu0 1.0
  %2255 = vmatpush.msra.mxu0 1.0
  %2256 = vmatpush.msra.mxu0 1.0
  %2257 = vmatpush.msra.mxu0 1.0
  %2258 = vmatpush.msra.mxu0 1.0
  %2259 = vmatpush.msra.mxu0 1.0
  %2260 = vmatpush.msra.mxu0 1.0
  %v2261 = vand.u32 %v1819, 4294901760
  %2262 = vmatmul.f32.gmra.mxu0 %v2261
  %v2263 = vpop.f32.mrf.mxu0
  %v2264 = vadd.f32 %v2231, %v2263
  %v2265 = vand.u32 %v1821, 4294901760
  %2266 = vmatmul.f32.gmra.mxu0 %v2265
  %v2267 = vpop.f32.mrf.mxu0
  %v2268 = vadd.f32 %v2235, %v2267
  %v2269 = vand.u32 %v1823, 4294901760
  %2270 = vmatmul.f32.gmra.mxu0 %v2269
  %v2271 = vpop.f32.mrf.mxu0
  %v2272 = vadd.f32 %v2239, %v2271
  %v2273 = vand.u32 %v1825, 4294901760
  %2274 = vmatmul.f32.gmra.mxu0 %v2273
  %v2275 = vpop.f32.mrf.mxu0
  %v2276 = vadd.f32 %v2243, %v2275
  %2277 = vdwg.mxu0
  %v2278 = vmul.f32 %v1804, 0.00390625
  %v2279 = vmul.f32 %v1808, 0.00390625
  %v2280 = vmul.f32 %v1812, 0.00390625
  %v2281 = vmul.f32 %v1816, 0.00390625
  %v2282 = vmul.f32 %v2264, 0.00390625
  %v2283 = vmul.f32 %v2268, 0.00390625
  %v2284 = vmul.f32 %v2272, 0.00390625
  %v2285 = vmul.f32 %v2276, 0.00390625
  %v2286 = vmul.f32 %v2278, %v2278
  %v2287 = vmul.f32 %v2279, %v2279
  %v2288 = vmul.f32 %v2280, %v2280
  %v2289 = vmul.f32 %v2281, %v2281
  %v2290 = vsub.f32 %v2282, %v2286
  %v2291 = vsub.f32 %v2283, %v2287
  %v2292 = vsub.f32 %v2284, %v2288
  %v2293 = vsub.f32 %v2285, %v2289
  %2295 = vset.pattern.permute.xlu0 0
  %2296 = vperm.xlu0 %2295, %v2278
  %v2297 = vpop.permute.xlu0 %2296
  %2300 = vset.pattern.permute.xlu0 0
  %2301 = vperm.xlu0 %2300, %v2279
  %v2302 = vpop.permute.xlu0 %2301
  %2305 = vset.pattern.permute.xlu0 0
  %2306 = vperm.xlu0 %2305, %v2280
  %v2307 = vpop.permute.xlu0 %2306
  %2310 = vset.pattern.permute.xlu0 0
  %2311 = vperm.xlu0 %2310, %v2281
  %v2312 = vpop.permute.xlu0 %2311
  %v2314 = vsub.f32 %v1358, %v2297
  %v2315 = vsub.f32 %v1359, %v2297
  %v2316 = vsub.f32 %v1360, %v2302
  %v2317 = vsub.f32 %v1361, %v2302
  %v2318 = vsub.f32 %v1362, %v2307
  %v2319 = vsub.f32 %v1363, %v2307
  %v2320 = vsub.f32 %v1364, %v2312
  %v2321 = vsub.f32 %v1365, %v2312
  %v2322 = vadd.f32 %v2290, 1e-05
  %v2323 = vadd.f32 %v2291, 1e-05
  %v2324 = vadd.f32 %v2292, 1e-05
  %v2325 = vadd.f32 %v2293, 1e-05
  %v2326 = vrsqrt.pop %v2322
  %v2327 = vmul.f32 %v2326, %v2322
  %v2328 = vmul.f32 %v2327, %v2326
  %v2329 = vmul.f32 0.5, %v2328
  %v2330 = vsub.f32 1.5, %v2329
  %v2331 = vmul.f32 %v2326, %v2330
  %vm2332 = vweird.f32 %v2322
  %vm2333 = vweird.f32 %v2326
  %vm2334 = vmor %vm2332, %vm2333
  %v2335 = vsel %vm2334, %v2326, %v2331
  %v2336 = vrsqrt.pop %v2323
  %v2337 = vmul.f32 %v2336, %v2323
  %v2338 = vmul.f32 %v2337, %v2336
  %v2339 = vmul.f32 0.5, %v2338
  %v2340 = vsub.f32 1.5, %v2339
  %v2341 = vmul.f32 %v2336, %v2340
  %vm2342 = vweird.f32 %v2323
  %vm2343 = vweird.f32 %v2336
  %vm2344 = vmor %vm2342, %vm2343
  %v2345 = vsel %vm2344, %v2336, %v2341
  %v2346 = vrsqrt.pop %v2324
  %v2347 = vmul.f32 %v2346, %v2324
  %v2348 = vmul.f32 %v2347, %v2346
  %v2349 = vmul.f32 0.5, %v2348
  %v2350 = vsub.f32 1.5, %v2349
  %v2351 = vmul.f32 %v2346, %v2350
  %vm2352 = vweird.f32 %v2324
  %vm2353 = vweird.f32 %v2346
  %vm2354 = vmor %vm2352, %vm2353
  %v2355 = vsel %vm2354, %v2346, %v2351
  %v2356 = vrsqrt.pop %v2325
  %v2357 = vmul.f32 %v2356, %v2325
  %v2358 = vmul.f32 %v2357, %v2356
  %v2359 = vmul.f32 0.5, %v2358
  %v2360 = vsub.f32 1.5, %v2359
  %v2361 = vmul.f32 %v2356, %v2360
  %vm2362 = vweird.f32 %v2325
  %vm2363 = vweird.f32 %v2356
  %vm2364 = vmor %vm2362, %vm2363
  %v2365 = vsel %vm2364, %v2356, %v2361
  %2367 = vset.pattern.permute.xlu0 0
  %2368 = vperm.xlu0 %2367, %v2335
  %v2369 = vpop.permute.xlu0 %2368
  %2372 = vset.pattern.permute.xlu0 0
  %2373 = vperm.xlu0 %2372, %v2345
  %v2374 = vpop.permute.xlu0 %2373
  %2377 = vset.pattern.permute.xlu0 0
  %2378 = vperm.xlu0 %2377, %v2355
  %v2379 = vpop.permute.xlu0 %2378
  %2382 = vset.pattern.permute.xlu0 0
  %2383 = vperm.xlu0 %2382, %v2365
  %v2384 = vpop.permute.xlu0 %2383
  %v2386 = vmul.f32 %v2314, %v2369
  %v2387 = vmul.f32 %v2315, %v2369
  %v2388 = vmul.f32 %v2316, %v2374
  %v2389 = vmul.f32 %v2317, %v2374
  %v2390 = vmul.f32 %v2318, %v2379
  %v2391 = vmul.f32 %v2319, %v2379
  %v2392 = vmul.f32 %v2320, %v2384
  %v2393 = vmul.f32 %v2321, %v2384
  %2394 = vset.pattern.permute.xlu0 4
  %2395 = vperm.xlu0 %2394, %v49
  %v2396 = vpop.permute.xlu0 %2395
  %2398 = vset.pattern.permute.xlu0 4
  %2399 = vperm.xlu0 %2398, %v50
  %v2400 = vpop.permute.xlu0 %2399
  %2402 = vset.pattern.permute.xlu0 4
  %2403 = vperm.xlu0 %2402, %v51
  %v2404 = vpop.permute.xlu0 %2403
  %2406 = vset.pattern.permute.xlu0 4
  %2407 = vperm.xlu0 %2406, %v52
  %v2408 = vpop.permute.xlu0 %2407
  %v2410 = vmul.f32 %v2386, %v2396
  %v2411 = vmul.f32 %v2387, %v2396
  %v2412 = vmul.f32 %v2388, %v2400
  %v2413 = vmul.f32 %v2389, %v2400
  %v2414 = vmul.f32 %v2390, %v2404
  %v2415 = vmul.f32 %v2391, %v2404
  %v2416 = vmul.f32 %v2392, %v2408
  %v2417 = vmul.f32 %v2393, %v2408
  %2418 = vset.pattern.permute.xlu0 5
  %2419 = vperm.xlu0 %2418, %v49
  %v2420 = vpop.permute.xlu0 %2419
  %2422 = vset.pattern.permute.xlu0 5
  %2423 = vperm.xlu0 %2422, %v50
  %v2424 = vpop.permute.xlu0 %2423
  %2426 = vset.pattern.permute.xlu0 5
  %2427 = vperm.xlu0 %2426, %v51
  %v2428 = vpop.permute.xlu0 %2427
  %2430 = vset.pattern.permute.xlu0 5
  %2431 = vperm.xlu0 %2430, %v52
  %v2432 = vpop.permute.xlu0 %2431
  %v2434 = vadd.f32 %v2410, %v2420
  %v2435 = vadd.f32 %v2411, %v2420
  %v2436 = vadd.f32 %v2412, %v2424
  %v2437 = vadd.f32 %v2413, %v2424
  %v2438 = vadd.f32 %v2414, %v2428
  %v2439 = vadd.f32 %v2415, %v2428
  %v2440 = vadd.f32 %v2416, %v2432
  %v2441 = vadd.f32 %v2417, %v2432
  %v2442 = vld [vmem:[%s2] sm:$0xff]
  %v2443 = vld [vmem:[%s2 + $0x8] sm:$0xff]
  %v2444 = vld [vmem:[%s2 + $0x10] sm:$0xff]
  %v2445 = vld [vmem:[%s2 + $0x18] sm:$0xff]
  %v2446 = vld [vmem:[%s2 + $0x20] sm:$0xff]
  %v2447 = vld [vmem:[%s2 + $0x28] sm:$0xff]
  %v2448 = vld [vmem:[%s2 + $0x30] sm:$0xff]
  %v2449 = vld [vmem:[%s2 + $0x38] sm:$0xff]
  %v2450 = vld [vmem:[%s2 + $0x40] sm:$0xff]
  %v2451 = vld [vmem:[%s2 + $0x48] sm:$0xff]
  %v2452 = vld [vmem:[%s2 + $0x50] sm:$0xff]
  %v2453 = vld [vmem:[%s2 + $0x58] sm:$0xff]
  %2454 = vset.pattern.permute.xlu0 1
  %2455 = vperm.xlu0 %2454, %v49
  %v2456 = vpop.permute.xlu0 %2455
  %2458 = vset.pattern.permute.xlu0 1
  %2459 = vperm.xlu0 %2458, %v50
  %v2460 = vpop.permute.xlu0 %2459
  %2462 = vset.pattern.permute.xlu0 1
  %2463 = vperm.xlu0 %2462, %v51
  %v2464 = vpop.permute.xlu0 %2463
  %2466 = vset.pattern.permute.xlu0 1
  %2467 = vperm.xlu0 %2466, %v52
  %v2468 = vpop.permute.xlu0 %2467
  %v2471 = vsel %vm105, %v2442, 0
  %v2474 = vsel %vm105, %v2443, 0
  %v2477 = vsel %vm105, %v2444, 0
  %v2480 = vsel %vm105, %v2445, 0
  %2482 = vmatpush.msra.mxu0 0.0
  %2483 = vmatpush.msra.mxu0 0.0
  %2484 = vmatpush.msra.mxu0 0.0
  %2485 = vmatpush.msra.mxu0 0.0
  %2486 = vmatpush.msra.mxu0 0.0
  %2487 = vmatpush.msra.mxu0 0.0
  %2488 = vmatpush.msra.mxu0 0.0
  %2489 = vmatpush.msra.mxu0 0.0
  %2490 = vmatpush.msra.mxu0 0.0
  %2491 = vmatpush.msra.mxu0 0.0
  %2492 = vmatpush.msra.mxu0 0.0
  %2493 = vmatpush.msra.mxu0 0.0
  %v2494 = vand.u32 %v2440, 4294901760
  %2495 = vmatpush.msra.mxu0 %v2494
  %v2496 = vand.u32 %v2438, 4294901760
  %2497 = vmatpush.msra.mxu0 %v2496
  %v2498 = vand.u32 %v2436, 4294901760
  %2499 = vmatpush.msra.mxu0 %v2498
  %v2500 = vand.u32 %v2434, 4294901760
  %2501 = vmatpush.msra.mxu0 %v2500
  %v2502 = vand.u32 %v2471, 4294901760
  %v2503 = vsub.f32 %v2471, %v2502
  %v2504 = vand.u32 %v2503, 4294901760
  %v2505 = vsub.f32 %v2503, %v2504
  %v2506 = vand.u32 %v2505, 4294901760
  %2507 = vmatmul.f32.gmra.mxu0 %v2506
  %v2508 = vpop.f32.mrf.mxu0
  %v2509 = vadd.f32 %v2456, %v2508
  %v2510 = vand.u32 %v2474, 4294901760
  %v2511 = vsub.f32 %v2474, %v2510
  %v2512 = vand.u32 %v2511, 4294901760
  %v2513 = vsub.f32 %v2511, %v2512
  %v2514 = vand.u32 %v2513, 4294901760
  %2515 = vmatmul.f32.gmra.mxu0 %v2514
  %v2516 = vpop.f32.mrf.mxu0
  %v2517 = vadd.f32 %v2460, %v2516
  %v2518 = vand.u32 %v2477, 4294901760
  %v2519 = vsub.f32 %v2477, %v2518
  %v2520 = vand.u32 %v2519, 4294901760
  %v2521 = vsub.f32 %v2519, %v2520
  %v2522 = vand.u32 %v2521, 4294901760
  %2523 = vmatmul.f32.gmra.mxu0 %v2522
  %v2524 = vpop.f32.mrf.mxu0
  %v2525 = vadd.f32 %v2464, %v2524
  %v2526 = vand.u32 %v2480, 4294901760
  %v2527 = vsub.f32 %v2480, %v2526
  %v2528 = vand.u32 %v2527, 4294901760
  %v2529 = vsub.f32 %v2527, %v2528
  %v2530 = vand.u32 %v2529, 4294901760
  %2531 = vmatmul.f32.gmra.mxu0 %v2530
  %v2532 = vpop.f32.mrf.mxu0
  %v2533 = vadd.f32 %v2468, %v2532
  %2534 = vdwg.mxu0
  %2535 = vmatpush.msra.mxu0 0.0
  %2536 = vmatpush.msra.mxu0 0.0
  %2537 = vmatpush.msra.mxu0 0.0
  %2538 = vmatpush.msra.mxu0 0.0
  %2539 = vmatpush.msra.mxu0 0.0
  %2540 = vmatpush.msra.mxu0 0.0
  %2541 = vmatpush.msra.mxu0 0.0
  %2542 = vmatpush.msra.mxu0 0.0
  %2543 = vmatpush.msra.mxu0 0.0
  %2544 = vmatpush.msra.mxu0 0.0
  %2545 = vmatpush.msra.mxu0 0.0
  %2546 = vmatpush.msra.mxu0 0.0
  %v2547 = vand.u32 %v2440, 4294901760
  %v2548 = vsub.f32 %v2440, %v2547
  %v2549 = vand.u32 %v2548, 4294901760
  %v2550 = vsub.f32 %v2548, %v2549
  %v2551 = vand.u32 %v2550, 4294901760
  %2552 = vmatpush.msra.mxu0 %v2551
  %v2553 = vand.u32 %v2438, 4294901760
  %v2554 = vsub.f32 %v2438, %v2553
  %v2555 = vand.u32 %v2554, 4294901760
  %v2556 = vsub.f32 %v2554, %v2555
  %v2557 = vand.u32 %v2556, 4294901760
  %2558 = vmatpush.msra.mxu0 %v2557
  %v2559 = vand.u32 %v2436, 4294901760
  %v2560 = vsub.f32 %v2436, %v2559
  %v2561 = vand.u32 %v2560, 4294901760
  %v2562 = vsub.f32 %v2560, %v2561
  %v2563 = vand.u32 %v2562, 4294901760
  %2564 = vmatpush.msra.mxu0 %v2563
  %v2565 = vand.u32 %v2434, 4294901760
  %v2566 = vsub.f32 %v2434, %v2565
  %v2567 = vand.u32 %v2566, 4294901760
  %v2568 = vsub.f32 %v2566, %v2567
  %v2569 = vand.u32 %v2568, 4294901760
  %2570 = vmatpush.msra.mxu0 %v2569
  %v2571 = vand.u32 %v2471, 4294901760
  %2572 = vmatmul.f32.gmra.mxu0 %v2571
  %v2573 = vpop.f32.mrf.mxu0
  %v2574 = vadd.f32 %v2509, %v2573
  %v2575 = vand.u32 %v2474, 4294901760
  %2576 = vmatmul.f32.gmra.mxu0 %v2575
  %v2577 = vpop.f32.mrf.mxu0
  %v2578 = vadd.f32 %v2517, %v2577
  %v2579 = vand.u32 %v2477, 4294901760
  %2580 = vmatmul.f32.gmra.mxu0 %v2579
  %v2581 = vpop.f32.mrf.mxu0
  %v2582 = vadd.f32 %v2525, %v2581
  %v2583 = vand.u32 %v2480, 4294901760
  %2584 = vmatmul.f32.gmra.mxu0 %v2583
  %v2585 = vpop.f32.mrf.mxu0
  %v2586 = vadd.f32 %v2533, %v2585
  %2587 = vdwg.mxu0
  %2588 = vmatpush.msra.mxu0 0.0
  %2589 = vmatpush.msra.mxu0 0.0
  %2590 = vmatpush.msra.mxu0 0.0
  %2591 = vmatpush.msra.mxu0 0.0
  %2592 = vmatpush.msra.mxu0 0.0
  %2593 = vmatpush.msra.mxu0 0.0
  %2594 = vmatpush.msra.mxu0 0.0
  %2595 = vmatpush.msra.mxu0 0.0
  %2596 = vmatpush.msra.mxu0 0.0
  %2597 = vmatpush.msra.mxu0 0.0
  %2598 = vmatpush.msra.mxu0 0.0
  %2599 = vmatpush.msra.mxu0 0.0
  %v2600 = vand.u32 %v2440, 4294901760
  %v2601 = vsub.f32 %v2440, %v2600
  %2602 = vmatpush.msra.mxu0 %v2601
  %v2603 = vand.u32 %v2438, 4294901760
  %v2604 = vsub.f32 %v2438, %v2603
  %2605 = vmatpush.msra.mxu0 %v2604
  %v2606 = vand.u32 %v2436, 4294901760
  %v2607 = vsub.f32 %v2436, %v2606
  %2608 = vmatpush.msra.mxu0 %v2607
  %v2609 = vand.u32 %v2434, 4294901760
  %v2610 = vsub.f32 %v2434, %v2609
  %2611 = vmatpush.msra.mxu0 %v2610
  %v2612 = vand.u32 %v2471, 4294901760
  %v2613 = vsub.f32 %v2471, %v2612
  %2614 = vmatmul.f32.gmra.mxu0 %v2613
  %v2615 = vpop.f32.mrf.mxu0
  %v2616 = vadd.f32 %v2574, %v2615
  %v2617 = vand.u32 %v2474, 4294901760
  %v2618 = vsub.f32 %v2474, %v2617
  %2619 = vmatmul.f32.gmra.mxu0 %v2618
  %v2620 = vpop.f32.mrf.mxu0
  %v2621 = vadd.f32 %v2578, %v2620
  %v2622 = vand.u32 %v2477, 4294901760
  %v2623 = vsub.f32 %v2477, %v2622
  %2624 = vmatmul.f32.gmra.mxu0 %v2623
  %v2625 = vpop.f32.mrf.mxu0
  %v2626 = vadd.f32 %v2582, %v2625
  %v2627 = vand.u32 %v2480, 4294901760
  %v2628 = vsub.f32 %v2480, %v2627
  %2629 = vmatmul.f32.gmra.mxu0 %v2628
  %v2630 = vpop.f32.mrf.mxu0
  %v2631 = vadd.f32 %v2586, %v2630
  %2632 = vdwg.mxu0
  %2633 = vmatpush.msra.mxu0 0.0
  %2634 = vmatpush.msra.mxu0 0.0
  %2635 = vmatpush.msra.mxu0 0.0
  %2636 = vmatpush.msra.mxu0 0.0
  %2637 = vmatpush.msra.mxu0 0.0
  %2638 = vmatpush.msra.mxu0 0.0
  %2639 = vmatpush.msra.mxu0 0.0
  %2640 = vmatpush.msra.mxu0 0.0
  %2641 = vmatpush.msra.mxu0 0.0
  %2642 = vmatpush.msra.mxu0 0.0
  %2643 = vmatpush.msra.mxu0 0.0
  %2644 = vmatpush.msra.mxu0 0.0
  %v2645 = vand.u32 %v2440, 4294901760
  %2646 = vmatpush.msra.mxu0 %v2645
  %v2647 = vand.u32 %v2438, 4294901760
  %2648 = vmatpush.msra.mxu0 %v2647
  %v2649 = vand.u32 %v2436, 4294901760
  %2650 = vmatpush.msra.mxu0 %v2649
  %v2651 = vand.u32 %v2434, 4294901760
  %2652 = vmatpush.msra.mxu0 %v2651
  %v2653 = vand.u32 %v2471, 4294901760
  %v2654 = vsub.f32 %v2471, %v2653
  %v2655 = vand.u32 %v2654, 4294901760
  %2656 = vmatmul.f32.gmra.mxu0 %v2655
  %v2657 = vpop.f32.mrf.mxu0
  %v2658 = vadd.f32 %v2616, %v2657
  %v2659 = vand.u32 %v2474, 4294901760
  %v2660 = vsub.f32 %v2474, %v2659
  %v2661 = vand.u32 %v2660, 4294901760
  %2662 = vmatmul.f32.gmra.mxu0 %v2661
  %v2663 = vpop.f32.mrf.mxu0
  %v2664 = vadd.f32 %v2621, %v2663
  %v2665 = vand.u32 %v2477, 4294901760
  %v2666 = vsub.f32 %v2477, %v2665
  %v2667 = vand.u32 %v2666, 4294901760
  %2668 = vmatmul.f32.gmra.mxu0 %v2667
  %v2669 = vpop.f32.mrf.mxu0
  %v2670 = vadd.f32 %v2626, %v2669
  %v2671 = vand.u32 %v2480, 4294901760
  %v2672 = vsub.f32 %v2480, %v2671
  %v2673 = vand.u32 %v2672, 4294901760
  %2674 = vmatmul.f32.gmra.mxu0 %v2673
  %v2675 = vpop.f32.mrf.mxu0
  %v2676 = vadd.f32 %v2631, %v2675
  %2677 = vdwg.mxu0
  %2678 = vmatpush.msra.mxu0 0.0
  %2679 = vmatpush.msra.mxu0 0.0
  %2680 = vmatpush.msra.mxu0 0.0
  %2681 = vmatpush.msra.mxu0 0.0
  %2682 = vmatpush.msra.mxu0 0.0
  %2683 = vmatpush.msra.mxu0 0.0
  %2684 = vmatpush.msra.mxu0 0.0
  %2685 = vmatpush.msra.mxu0 0.0
  %2686 = vmatpush.msra.mxu0 0.0
  %2687 = vmatpush.msra.mxu0 0.0
  %2688 = vmatpush.msra.mxu0 0.0
  %2689 = vmatpush.msra.mxu0 0.0
  %v2690 = vand.u32 %v2440, 4294901760
  %v2691 = vsub.f32 %v2440, %v2690
  %v2692 = vand.u32 %v2691, 4294901760
  %2693 = vmatpush.msra.mxu0 %v2692
  %v2694 = vand.u32 %v2438, 4294901760
  %v2695 = vsub.f32 %v2438, %v2694
  %v2696 = vand.u32 %v2695, 4294901760
  %2697 = vmatpush.msra.mxu0 %v2696
  %v2698 = vand.u32 %v2436, 4294901760
  %v2699 = vsub.f32 %v2436, %v2698
  %v2700 = vand.u32 %v2699, 4294901760
  %2701 = vmatpush.msra.mxu0 %v2700
  %v2702 = vand.u32 %v2434, 4294901760
  %v2703 = vsub.f32 %v2434, %v2702
  %v2704 = vand.u32 %v2703, 4294901760
  %2705 = vmatpush.msra.mxu0 %v2704
  %v2706 = vand.u32 %v2471, 4294901760
  %2707 = vmatmul.f32.gmra.mxu0 %v2706
  %v2708 = vpop.f32.mrf.mxu0
  %v2709 = vadd.f32 %v2658, %v2708
  %v2710 = vand.u32 %v2474, 4294901760
  %2711 = vmatmul.f32.gmra.mxu0 %v2710
  %v2712 = vpop.f32.mrf.mxu0
  %v2713 = vadd.f32 %v2664, %v2712
  %v2714 = vand.u32 %v2477, 4294901760
  %2715 = vmatmul.f32.gmra.mxu0 %v2714
  %v2716 = vpop.f32.mrf.mxu0
  %v2717 = vadd.f32 %v2670, %v2716
  %v2718 = vand.u32 %v2480, 4294901760
  %2719 = vmatmul.f32.gmra.mxu0 %v2718
  %v2720 = vpop.f32.mrf.mxu0
  %v2721 = vadd.f32 %v2676, %v2720
  %2722 = vdwg.mxu0
  %2723 = vmatpush.msra.mxu0 0.0
  %2724 = vmatpush.msra.mxu0 0.0
  %2725 = vmatpush.msra.mxu0 0.0
  %2726 = vmatpush.msra.mxu0 0.0
  %2727 = vmatpush.msra.mxu0 0.0
  %2728 = vmatpush.msra.mxu0 0.0
  %2729 = vmatpush.msra.mxu0 0.0
  %2730 = vmatpush.msra.mxu0 0.0
  %2731 = vmatpush.msra.mxu0 0.0
  %2732 = vmatpush.msra.mxu0 0.0
  %2733 = vmatpush.msra.mxu0 0.0
  %2734 = vmatpush.msra.mxu0 0.0
  %v2735 = vand.u32 %v2440, 4294901760
  %2736 = vmatpush.msra.mxu0 %v2735
  %v2737 = vand.u32 %v2438, 4294901760
  %2738 = vmatpush.msra.mxu0 %v2737
  %v2739 = vand.u32 %v2436, 4294901760
  %2740 = vmatpush.msra.mxu0 %v2739
  %v2741 = vand.u32 %v2434, 4294901760
  %2742 = vmatpush.msra.mxu0 %v2741
  %v2743 = vand.u32 %v2471, 4294901760
  %2744 = vmatmul.f32.gmra.mxu0 %v2743
  %v2745 = vpop.f32.mrf.mxu0
  %v2746 = vadd.f32 %v2709, %v2745
  %v2747 = vand.u32 %v2474, 4294901760
  %2748 = vmatmul.f32.gmra.mxu0 %v2747
  %v2749 = vpop.f32.mrf.mxu0
  %v2750 = vadd.f32 %v2713, %v2749
  %v2751 = vand.u32 %v2477, 4294901760
  %2752 = vmatmul.f32.gmra.mxu0 %v2751
  %v2753 = vpop.f32.mrf.mxu0
  %v2754 = vadd.f32 %v2717, %v2753
  %v2755 = vand.u32 %v2480, 4294901760
  %2756 = vmatmul.f32.gmra.mxu0 %v2755
  %v2757 = vpop.f32.mrf.mxu0
  %v2758 = vadd.f32 %v2721, %v2757
  %2759 = vdwg.mxu0
  %2760 = vmatpush.msra.mxu0 0.0
  %2761 = vmatpush.msra.mxu0 0.0
  %2762 = vmatpush.msra.mxu0 0.0
  %2763 = vmatpush.msra.mxu0 0.0
  %2764 = vmatpush.msra.mxu0 0.0
  %2765 = vmatpush.msra.mxu0 0.0
  %2766 = vmatpush.msra.mxu0 0.0
  %2767 = vmatpush.msra.mxu0 0.0
  %2768 = vmatpush.msra.mxu0 0.0
  %2769 = vmatpush.msra.mxu0 0.0
  %2770 = vmatpush.msra.mxu0 0.0
  %2771 = vmatpush.msra.mxu0 0.0
  %v2772 = vand.u32 %v2441, 4294901760
  %2773 = vmatpush.msra.mxu0 %v2772
  %v2774 = vand.u32 %v2439, 4294901760
  %2775 = vmatpush.msra.mxu0 %v2774
  %v2776 = vand.u32 %v2437, 4294901760
  %2777 = vmatpush.msra.mxu0 %v2776
  %v2778 = vand.u32 %v2435, 4294901760
  %2779 = vmatpush.msra.mxu0 %v2778
  %v2780 = vand.u32 %v2471, 4294901760
  %v2781 = vsub.f32 %v2471, %v2780
  %v2782 = vand.u32 %v2781, 4294901760
  %v2783 = vsub.f32 %v2781, %v2782
  %v2784 = vand.u32 %v2783, 4294901760
  %2785 = vmatmul.f32.gmra.mxu0 %v2784
  %v2786 = vpop.f32.mrf.mxu0
  %v2787 = vadd.f32 %v2456, %v2786
  %v2788 = vand.u32 %v2474, 4294901760
  %v2789 = vsub.f32 %v2474, %v2788
  %v2790 = vand.u32 %v2789, 4294901760
  %v2791 = vsub.f32 %v2789, %v2790
  %v2792 = vand.u32 %v2791, 4294901760
  %2793 = vmatmul.f32.gmra.mxu0 %v2792
  %v2794 = vpop.f32.mrf.mxu0
  %v2795 = vadd.f32 %v2460, %v2794
  %v2796 = vand.u32 %v2477, 4294901760
  %v2797 = vsub.f32 %v2477, %v2796
  %v2798 = vand.u32 %v2797, 4294901760
  %v2799 = vsub.f32 %v2797, %v2798
  %v2800 = vand.u32 %v2799, 4294901760
  %2801 = vmatmul.f32.gmra.mxu0 %v2800
  %v2802 = vpop.f32.mrf.mxu0
  %v2803 = vadd.f32 %v2464, %v2802
  %v2804 = vand.u32 %v2480, 4294901760
  %v2805 = vsub.f32 %v2480, %v2804
  %v2806 = vand.u32 %v2805, 4294901760
  %v2807 = vsub.f32 %v2805, %v2806
  %v2808 = vand.u32 %v2807, 4294901760
  %2809 = vmatmul.f32.gmra.mxu0 %v2808
  %v2810 = vpop.f32.mrf.mxu0
  %v2811 = vadd.f32 %v2468, %v2810
  %2812 = vdwg.mxu0
  %2813 = vmatpush.msra.mxu0 0.0
  %2814 = vmatpush.msra.mxu0 0.0
  %2815 = vmatpush.msra.mxu0 0.0
  %2816 = vmatpush.msra.mxu0 0.0
  %2817 = vmatpush.msra.mxu0 0.0
  %2818 = vmatpush.msra.mxu0 0.0
  %2819 = vmatpush.msra.mxu0 0.0
  %2820 = vmatpush.msra.mxu0 0.0
  %2821 = vmatpush.msra.mxu0 0.0
  %2822 = vmatpush.msra.mxu0 0.0
  %2823 = vmatpush.msra.mxu0 0.0
  %2824 = vmatpush.msra.mxu0 0.0
  %v2825 = vand.u32 %v2441, 4294901760
  %v2826 = vsub.f32 %v2441, %v2825
  %v2827 = vand.u32 %v2826, 4294901760
  %v2828 = vsub.f32 %v2826, %v2827
  %v2829 = vand.u32 %v2828, 4294901760
  %2830 = vmatpush.msra.mxu0 %v2829
  %v2831 = vand.u32 %v2439, 4294901760
  %v2832 = vsub.f32 %v2439, %v2831
  %v2833 = vand.u32 %v2832, 4294901760
  %v2834 = vsub.f32 %v2832, %v2833
  %v2835 = vand.u32 %v2834, 4294901760
  %2836 = vmatpush.msra.mxu0 %v2835
  %v2837 = vand.u32 %v2437, 4294901760
  %v2838 = vsub.f32 %v2437, %v2837
  %v2839 = vand.u32 %v2838, 4294901760
  %v2840 = vsub.f32 %v2838, %v2839
  %v2841 = vand.u32 %v2840, 4294901760
  %2842 = vmatpush.msra.mxu0 %v2841
  %v2843 = vand.u32 %v2435, 4294901760
  %v2844 = vsub.f32 %v2435, %v2843
  %v2845 = vand.u32 %v2844, 4294901760
  %v2846 = vsub.f32 %v2844, %v2845
  %v2847 = vand.u32 %v2846, 4294901760
  %2848 = vmatpush.msra.mxu0 %v2847
  %v2849 = vand.u32 %v2471, 4294901760
  %2850 = vmatmul.f32.gmra.mxu0 %v2849
  %v2851 = vpop.f32.mrf.mxu0
  %v2852 = vadd.f32 %v2787, %v2851
  %v2853 = vand.u32 %v2474, 4294901760
  %2854 = vmatmul.f32.gmra.mxu0 %v2853
  %v2855 = vpop.f32.mrf.mxu0
  %v2856 = vadd.f32 %v2795, %v2855
  %v2857 = vand.u32 %v2477, 4294901760
  %2858 = vmatmul.f32.gmra.mxu0 %v2857
  %v2859 = vpop.f32.mrf.mxu0
  %v2860 = vadd.f32 %v2803, %v2859
  %v2861 = vand.u32 %v2480, 4294901760
  %2862 = vmatmul.f32.gmra.mxu0 %v2861
  %v2863 = vpop.f32.mrf.mxu0
  %v2864 = vadd.f32 %v2811, %v2863
  %2865 = vdwg.mxu0
  %2866 = vmatpush.msra.mxu0 0.0
  %2867 = vmatpush.msra.mxu0 0.0
  %2868 = vmatpush.msra.mxu0 0.0
  %2869 = vmatpush.msra.mxu0 0.0
  %2870 = vmatpush.msra.mxu0 0.0
  %2871 = vmatpush.msra.mxu0 0.0
  %2872 = vmatpush.msra.mxu0 0.0
  %2873 = vmatpush.msra.mxu0 0.0
  %2874 = vmatpush.msra.mxu0 0.0
  %2875 = vmatpush.msra.mxu0 0.0
  %2876 = vmatpush.msra.mxu0 0.0
  %2877 = vmatpush.msra.mxu0 0.0
  %v2878 = vand.u32 %v2441, 4294901760
  %v2879 = vsub.f32 %v2441, %v2878
  %2880 = vmatpush.msra.mxu0 %v2879
  %v2881 = vand.u32 %v2439, 4294901760
  %v2882 = vsub.f32 %v2439, %v2881
  %2883 = vmatpush.msra.mxu0 %v2882
  %v2884 = vand.u32 %v2437, 4294901760
  %v2885 = vsub.f32 %v2437, %v2884
  %2886 = vmatpush.msra.mxu0 %v2885
  %v2887 = vand.u32 %v2435, 4294901760
  %v2888 = vsub.f32 %v2435, %v2887
  %2889 = vmatpush.msra.mxu0 %v2888
  %v2890 = vand.u32 %v2471, 4294901760
  %v2891 = vsub.f32 %v2471, %v2890
  %2892 = vmatmul.f32.gmra.mxu0 %v2891
  %v2893 = vpop.f32.mrf.mxu0
  %v2894 = vadd.f32 %v2852, %v2893
  %v2895 = vand.u32 %v2474, 4294901760
  %v2896 = vsub.f32 %v2474, %v2895
  %2897 = vmatmul.f32.gmra.mxu0 %v2896
  %v2898 = vpop.f32.mrf.mxu0
  %v2899 = vadd.f32 %v2856, %v2898
  %v2900 = vand.u32 %v2477, 4294901760
  %v2901 = vsub.f32 %v2477, %v2900
  %2902 = vmatmul.f32.gmra.mxu0 %v2901
  %v2903 = vpop.f32.mrf.mxu0
  %v2904 = vadd.f32 %v2860, %v2903
  %v2905 = vand.u32 %v2480, 4294901760
  %v2906 = vsub.f32 %v2480, %v2905
  %2907 = vmatmul.f32.gmra.mxu0 %v2906
  %v2908 = vpop.f32.mrf.mxu0
  %v2909 = vadd.f32 %v2864, %v2908
  %2910 = vdwg.mxu0
  %2911 = vmatpush.msra.mxu0 0.0
  %2912 = vmatpush.msra.mxu0 0.0
  %2913 = vmatpush.msra.mxu0 0.0
  %2914 = vmatpush.msra.mxu0 0.0
  %2915 = vmatpush.msra.mxu0 0.0
  %2916 = vmatpush.msra.mxu0 0.0
  %2917 = vmatpush.msra.mxu0 0.0
  %2918 = vmatpush.msra.mxu0 0.0
  %2919 = vmatpush.msra.mxu0 0.0
  %2920 = vmatpush.msra.mxu0 0.0
  %2921 = vmatpush.msra.mxu0 0.0
  %2922 = vmatpush.msra.mxu0 0.0
  %v2923 = vand.u32 %v2441, 4294901760
  %2924 = vmatpush.msra.mxu0 %v2923
  %v2925 = vand.u32 %v2439, 4294901760
  %2926 = vmatpush.msra.mxu0 %v2925
  %v2927 = vand.u32 %v2437, 4294901760
  %2928 = vmatpush.msra.mxu0 %v2927
  %v2929 = vand.u32 %v2435, 4294901760
  %2930 = vmatpush.msra.mxu0 %v2929
  %v2931 = vand.u32 %v2471, 4294901760
  %v2932 = vsub.f32 %v2471, %v2931
  %v2933 = vand.u32 %v2932, 4294901760
  %2934 = vmatmul.f32.gmra.mxu0 %v2933
  %v2935 = vpop.f32.mrf.mxu0
  %v2936 = vadd.f32 %v2894, %v2935
  %v2937 = vand.u32 %v2474, 4294901760
  %v2938 = vsub.f32 %v2474, %v2937
  %v2939 = vand.u32 %v2938, 4294901760
  %2940 = vmatmul.f32.gmra.mxu0 %v2939
  %v2941 = vpop.f32.mrf.mxu0
  %v2942 = vadd.f32 %v2899, %v2941
  %v2943 = vand.u32 %v2477, 4294901760
  %v2944 = vsub.f32 %v2477, %v2943
  %v2945 = vand.u32 %v2944, 4294901760
  %2946 = vmatmul.f32.gmra.mxu0 %v2945
  %v2947 = vpop.f32.mrf.mxu0
  %v2948 = vadd.f32 %v2904, %v2947
  %v2949 = vand.u32 %v2480, 4294901760
  %v2950 = vsub.f32 %v2480, %v2949
  %v2951 = vand.u32 %v2950, 4294901760
  %2952 = vmatmul.f32.gmra.mxu0 %v2951
  %v2953 = vpop.f32.mrf.mxu0
  %v2954 = vadd.f32 %v2909, %v2953
  %2955 = vdwg.mxu0
  %2956 = vmatpush.msra.mxu0 0.0
  %2957 = vmatpush.msra.mxu0 0.0
  %2958 = vmatpush.msra.mxu0 0.0
  %2959 = vmatpush.msra.mxu0 0.0
  %2960 = vmatpush.msra.mxu0 0.0
  %2961 = vmatpush.msra.mxu0 0.0
  %2962 = vmatpush.msra.mxu0 0.0
  %2963 = vmatpush.msra.mxu0 0.0
  %2964 = vmatpush.msra.mxu0 0.0
  %2965 = vmatpush.msra.mxu0 0.0
  %2966 = vmatpush.msra.mxu0 0.0
  %2967 = vmatpush.msra.mxu0 0.0
  %v2968 = vand.u32 %v2441, 4294901760
  %v2969 = vsub.f32 %v2441, %v2968
  %v2970 = vand.u32 %v2969, 4294901760
  %2971 = vmatpush.msra.mxu0 %v2970
  %v2972 = vand.u32 %v2439, 4294901760
  %v2973 = vsub.f32 %v2439, %v2972
  %v2974 = vand.u32 %v2973, 4294901760
  %2975 = vmatpush.msra.mxu0 %v2974
  %v2976 = vand.u32 %v2437, 4294901760
  %v2977 = vsub.f32 %v2437, %v2976
  %v2978 = vand.u32 %v2977, 4294901760
  %2979 = vmatpush.msra.mxu0 %v2978
  %v2980 = vand.u32 %v2435, 4294901760
  %v2981 = vsub.f32 %v2435, %v2980
  %v2982 = vand.u32 %v2981, 4294901760
  %2983 = vmatpush.msra.mxu0 %v2982
  %v2984 = vand.u32 %v2471, 4294901760
  %2985 = vmatmul.f32.gmra.mxu0 %v2984
  %v2986 = vpop.f32.mrf.mxu0
  %v2987 = vadd.f32 %v2936, %v2986
  %v2988 = vand.u32 %v2474, 4294901760
  %2989 = vmatmul.f32.gmra.mxu0 %v2988
  %v2990 = vpop.f32.mrf.mxu0
  %v2991 = vadd.f32 %v2942, %v2990
  %v2992 = vand.u32 %v2477, 4294901760
  %2993 = vmatmul.f32.gmra.mxu0 %v2992
  %v2994 = vpop.f32.mrf.mxu0
  %v2995 = vadd.f32 %v2948, %v2994
  %v2996 = vand.u32 %v2480, 4294901760
  %2997 = vmatmul.f32.gmra.mxu0 %v2996
  %v2998 = vpop.f32.mrf.mxu0
  %v2999 = vadd.f32 %v2954, %v2998
  %3000 = vdwg.mxu0
  %3001 = vmatpush.msra.mxu0 0.0
  %3002 = vmatpush.msra.mxu0 0.0
  %3003 = vmatpush.msra.mxu0 0.0
  %3004 = vmatpush.msra.mxu0 0.0
  %3005 = vmatpush.msra.mxu0 0.0
  %3006 = vmatpush.msra.mxu0 0.0
  %3007 = vmatpush.msra.mxu0 0.0
  %3008 = vmatpush.msra.mxu0 0.0
  %3009 = vmatpush.msra.mxu0 0.0
  %3010 = vmatpush.msra.mxu0 0.0
  %3011 = vmatpush.msra.mxu0 0.0
  %3012 = vmatpush.msra.mxu0 0.0
  %v3013 = vand.u32 %v2441, 4294901760
  %3014 = vmatpush.msra.mxu0 %v3013
  %v3015 = vand.u32 %v2439, 4294901760
  %3016 = vmatpush.msra.mxu0 %v3015
  %v3017 = vand.u32 %v2437, 4294901760
  %3018 = vmatpush.msra.mxu0 %v3017
  %v3019 = vand.u32 %v2435, 4294901760
  %3020 = vmatpush.msra.mxu0 %v3019
  %v3021 = vand.u32 %v2471, 4294901760
  %3022 = vmatmul.f32.gmra.mxu0 %v3021
  %v3023 = vpop.f32.mrf.mxu0
  %v3024 = vadd.f32 %v2987, %v3023
  %v3025 = vand.u32 %v2474, 4294901760
  %3026 = vmatmul.f32.gmra.mxu0 %v3025
  %v3027 = vpop.f32.mrf.mxu0
  %v3028 = vadd.f32 %v2991, %v3027
  %v3029 = vand.u32 %v2477, 4294901760
  %3030 = vmatmul.f32.gmra.mxu0 %v3029
  %v3031 = vpop.f32.mrf.mxu0
  %v3032 = vadd.f32 %v2995, %v3031
  %v3033 = vand.u32 %v2480, 4294901760
  %3034 = vmatmul.f32.gmra.mxu0 %v3033
  %v3035 = vpop.f32.mrf.mxu0
  %v3036 = vadd.f32 %v2999, %v3035
  %3037 = vdwg.mxu0
  %v3038 = vadd.f32 %v2746, %v754
  %v3039 = vadd.f32 %v3024, %v1312
  %v3040 = vadd.f32 %v2750, %v758
  %v3041 = vadd.f32 %v3028, %v1316
  %v3042 = vadd.f32 %v2754, %v762
  %v3043 = vadd.f32 %v3032, %v1320
  %v3044 = vadd.f32 %v2758, %v766
  %v3045 = vadd.f32 %v3036, %v1324
  %vm3046 = vcmp.ge.f32.partialorder %v3038, 0.0
  %vm3047 = vcmp.ge.f32.partialorder %v3039, 0.0
  %vm3048 = vcmp.ge.f32.partialorder %v3040, 0.0
  %vm3049 = vcmp.ge.f32.partialorder %v3041, 0.0
  %vm3050 = vcmp.ge.f32.partialorder %v3042, 0.0
  %vm3051 = vcmp.ge.f32.partialorder %v3043, 0.0
  %vm3052 = vcmp.ge.f32.partialorder %v3044, 0.0
  %vm3053 = vcmp.ge.f32.partialorder %v3045, 0.0
  %v3054 = vmul.f32 %v3038, 0.01
  %v3055 = vmul.f32 %v3039, 0.01
  %v3056 = vmul.f32 %v3040, 0.01
  %v3057 = vmul.f32 %v3041, 0.01
  %v3058 = vmul.f32 %v3042, 0.01
  %v3059 = vmul.f32 %v3043, 0.01
  %v3060 = vmul.f32 %v3044, 0.01
  %v3061 = vmul.f32 %v3045, 0.01
  %v3062 = vsel %vm3046, %v3038, %v3054
  %v3063 = vsel %vm3047, %v3039, %v3055
  %v3064 = vsel %vm3048, %v3040, %v3056
  %v3065 = vsel %vm3049, %v3041, %v3057
  %v3066 = vsel %vm3050, %v3042, %v3058
  %v3067 = vsel %vm3051, %v3043, %v3059
  %v3068 = vsel %vm3052, %v3044, %v3060
  %v3069 = vsel %vm3053, %v3045, %v3061
  %3070 = vmatpush.msra.mxu0 1.0
  %3071 = vmatpush.msra.mxu0 1.0
  %3072 = vmatpush.msra.mxu0 1.0
  %3073 = vmatpush.msra.mxu0 1.0
  %3074 = vmatpush.msra.mxu0 1.0
  %3075 = vmatpush.msra.mxu0 1.0
  %3076 = vmatpush.msra.mxu0 1.0
  %3077 = vmatpush.msra.mxu0 1.0
  %3078 = vmatpush.msra.mxu0 1.0
  %3079 = vmatpush.msra.mxu0 1.0
  %3080 = vmatpush.msra.mxu0 1.0
  %3081 = vmatpush.msra.mxu0 1.0
  %3082 = vmatpush.msra.mxu0 1.0
  %3083 = vmatpush.msra.mxu0 1.0
  %3084 = vmatpush.msra.mxu0 1.0
  %3085 = vmatpush.msra.mxu0 1.0
  %v3086 = vand.u32 %v3062, 4294901760
  %v3087 = vsub.f32 %v3062, %v3086
  %v3088 = vand.u32 %v3087, 4294901760
  %v3089 = vsub.f32 %v3087, %v3088
  %v3090 = vand.u32 %v3089, 4294901760
  %3091 = vmatmul.f32.gmra.mxu0 %v3090
  %v3092 = vpop.f32.mrf.mxu0
  %v3093 = vadd.f32 0.0, %v3092
  %v3094 = vand.u32 %v3064, 4294901760
  %v3095 = vsub.f32 %v3064, %v3094
  %v3096 = vand.u32 %v3095, 4294901760
  %v3097 = vsub.f32 %v3095, %v3096
  %v3098 = vand.u32 %v3097, 4294901760
  %3099 = vmatmul.f32.gmra.mxu0 %v3098
  %v3100 = vpop.f32.mrf.mxu0
  %v3101 = vadd.f32 0.0, %v3100
  %v3102 = vand.u32 %v3066, 4294901760
  %v3103 = vsub.f32 %v3066, %v3102
  %v3104 = vand.u32 %v3103, 4294901760
  %v3105 = vsub.f32 %v3103, %v3104
  %v3106 = vand.u32 %v3105, 4294901760
  %3107 = vmatmul.f32.gmra.mxu0 %v3106
  %v3108 = vpop.f32.mrf.mxu0
  %v3109 = vadd.f32 0.0, %v3108
  %v3110 = vand.u32 %v3068, 4294901760
  %v3111 = vsub.f32 %v3068, %v3110
  %v3112 = vand.u32 %v3111, 4294901760
  %v3113 = vsub.f32 %v3111, %v3112
  %v3114 = vand.u32 %v3113, 4294901760
  %3115 = vmatmul.f32.gmra.mxu0 %v3114
  %v3116 = vpop.f32.mrf.mxu0
  %v3117 = vadd.f32 0.0, %v3116
  %3118 = vdwg.mxu0
  %3119 = vmatpush.msra.mxu0 0.0
  %3120 = vmatpush.msra.mxu0 0.0
  %3121 = vmatpush.msra.mxu0 0.0
  %3122 = vmatpush.msra.mxu0 0.0
  %3123 = vmatpush.msra.mxu0 0.0
  %3124 = vmatpush.msra.mxu0 0.0
  %3125 = vmatpush.msra.mxu0 0.0
  %3126 = vmatpush.msra.mxu0 0.0
  %3127 = vmatpush.msra.mxu0 0.0
  %3128 = vmatpush.msra.mxu0 0.0
  %3129 = vmatpush.msra.mxu0 0.0
  %3130 = vmatpush.msra.mxu0 0.0
  %3131 = vmatpush.msra.mxu0 0.0
  %3132 = vmatpush.msra.mxu0 0.0
  %3133 = vmatpush.msra.mxu0 0.0
  %3134 = vmatpush.msra.mxu0 0.0
  %v3135 = vand.u32 %v3062, 4294901760
  %3136 = vmatmul.f32.gmra.mxu0 %v3135
  %v3137 = vpop.f32.mrf.mxu0
  %v3138 = vadd.f32 %v3093, %v3137
  %v3139 = vand.u32 %v3064, 4294901760
  %3140 = vmatmul.f32.gmra.mxu0 %v3139
  %v3141 = vpop.f32.mrf.mxu0
  %v3142 = vadd.f32 %v3101, %v3141
  %v3143 = vand.u32 %v3066, 4294901760
  %3144 = vmatmul.f32.gmra.mxu0 %v3143
  %v3145 = vpop.f32.mrf.mxu0
  %v3146 = vadd.f32 %v3109, %v3145
  %v3147 = vand.u32 %v3068, 4294901760
  %3148 = vmatmul.f32.gmra.mxu0 %v3147
  %v3149 = vpop.f32.mrf.mxu0
  %v3150 = vadd.f32 %v3117, %v3149
  %3151 = vdwg.mxu0
  %3152 = vmatpush.msra.mxu0 0.0
  %3153 = vmatpush.msra.mxu0 0.0
  %3154 = vmatpush.msra.mxu0 0.0
  %3155 = vmatpush.msra.mxu0 0.0
  %3156 = vmatpush.msra.mxu0 0.0
  %3157 = vmatpush.msra.mxu0 0.0
  %3158 = vmatpush.msra.mxu0 0.0
  %3159 = vmatpush.msra.mxu0 0.0
  %3160 = vmatpush.msra.mxu0 0.0
  %3161 = vmatpush.msra.mxu0 0.0
  %3162 = vmatpush.msra.mxu0 0.0
  %3163 = vmatpush.msra.mxu0 0.0
  %3164 = vmatpush.msra.mxu0 0.0
  %3165 = vmatpush.msra.mxu0 0.0
  %3166 = vmatpush.msra.mxu0 0.0
  %3167 = vmatpush.msra.mxu0 0.0
  %v3168 = vand.u32 %v3062, 4294901760
  %v3169 = vsub.f32 %v3062, %v3168
  %3170 = vmatmul.f32.gmra.mxu0 %v3169
  %v3171 = vpop.f32.mrf.mxu0
  %v3172 = vadd.f32 %v3138, %v3171
  %v3173 = vand.u32 %v3064, 4294901760
  %v3174 = vsub.f32 %v3064, %v3173
  %3175 = vmatmul.f32.gmra.mxu0 %v3174
  %v3176 = vpop.f32.mrf.mxu0
  %v3177 = vadd.f32 %v3142, %v3176
  %v3178 = vand.u32 %v3066, 4294901760
  %v3179 = vsub.f32 %v3066, %v3178
  %3180 = vmatmul.f32.gmra.mxu0 %v3179
  %v3181 = vpop.f32.mrf.mxu0
  %v3182 = vadd.f32 %v3146, %v3181
  %v3183 = vand.u32 %v3068, 4294901760
  %v3184 = vsub.f32 %v3068, %v3183
  %3185 = vmatmul.f32.gmra.mxu0 %v3184
  %v3186 = vpop.f32.mrf.mxu0
  %v3187 = vadd.f32 %v3150, %v3186
  %3188 = vdwg.mxu0
  %3189 = vmatpush.msra.mxu0 1.0
  %3190 = vmatpush.msra.mxu0 1.0
  %3191 = vmatpush.msra.mxu0 1.0
  %3192 = vmatpush.msra.mxu0 1.0
  %3193 = vmatpush.msra.mxu0 1.0
  %3194 = vmatpush.msra.mxu0 1.0
  %3195 = vmatpush.msra.mxu0 1.0
  %3196 = vmatpush.msra.mxu0 1.0
  %3197 = vmatpush.msra.mxu0 1.0
  %3198 = vmatpush.msra.mxu0 1.0
  %3199 = vmatpush.msra.mxu0 1.0
  %3200 = vmatpush.msra.mxu0 1.0
  %3201 = vmatpush.msra.mxu0 1.0
  %3202 = vmatpush.msra.mxu0 1.0
  %3203 = vmatpush.msra.mxu0 1.0
  %3204 = vmatpush.msra.mxu0 1.0
  %v3205 = vand.u32 %v3062, 4294901760
  %v3206 = vsub.f32 %v3062, %v3205
  %v3207 = vand.u32 %v3206, 4294901760
  %3208 = vmatmul.f32.gmra.mxu0 %v3207
  %v3209 = vpop.f32.mrf.mxu0
  %v3210 = vadd.f32 %v3172, %v3209
  %v3211 = vand.u32 %v3064, 4294901760
  %v3212 = vsub.f32 %v3064, %v3211
  %v3213 = vand.u32 %v3212, 4294901760
  %3214 = vmatmul.f32.gmra.mxu0 %v3213
  %v3215 = vpop.f32.mrf.mxu0
  %v3216 = vadd.f32 %v3177, %v3215
  %v3217 = vand.u32 %v3066, 4294901760
  %v3218 = vsub.f32 %v3066, %v3217
  %v3219 = vand.u32 %v3218, 4294901760
  %3220 = vmatmul.f32.gmra.mxu0 %v3219
  %v3221 = vpop.f32.mrf.mxu0
  %v3222 = vadd.f32 %v3182, %v3221
  %v3223 = vand.u32 %v3068, 4294901760
  %v3224 = vsub.f32 %v3068, %v3223
  %v3225 = vand.u32 %v3224, 4294901760
  %3226 = vmatmul.f32.gmra.mxu0 %v3225
  %v3227 = vpop.f32.mrf.mxu0
  %v3228 = vadd.f32 %v3187, %v3227
  %3229 = vdwg.mxu0
  %3230 = vmatpush.msra.mxu0 0.0
  %3231 = vmatpush.msra.mxu0 0.0
  %3232 = vmatpush.msra.mxu0 0.0
  %3233 = vmatpush.msra.mxu0 0.0
  %3234 = vmatpush.msra.mxu0 0.0
  %3235 = vmatpush.msra.mxu0 0.0
  %3236 = vmatpush.msra.mxu0 0.0
  %3237 = vmatpush.msra.mxu0 0.0
  %3238 = vmatpush.msra.mxu0 0.0
  %3239 = vmatpush.msra.mxu0 0.0
  %3240 = vmatpush.msra.mxu0 0.0
  %3241 = vmatpush.msra.mxu0 0.0
  %3242 = vmatpush.msra.mxu0 0.0
  %3243 = vmatpush.msra.mxu0 0.0
  %3244 = vmatpush.msra.mxu0 0.0
  %3245 = vmatpush.msra.mxu0 0.0
  %v3246 = vand.u32 %v3062, 4294901760
  %3247 = vmatmul.f32.gmra.mxu0 %v3246
  %v3248 = vpop.f32.mrf.mxu0
  %v3249 = vadd.f32 %v3210, %v3248
  %v3250 = vand.u32 %v3064, 4294901760
  %3251 = vmatmul.f32.gmra.mxu0 %v3250
  %v3252 = vpop.f32.mrf.mxu0
  %v3253 = vadd.f32 %v3216, %v3252
  %v3254 = vand.u32 %v3066, 4294901760
  %3255 = vmatmul.f32.gmra.mxu0 %v3254
  %v3256 = vpop.f32.mrf.mxu0
  %v3257 = vadd.f32 %v3222, %v3256
  %v3258 = vand.u32 %v3068, 4294901760
  %3259 = vmatmul.f32.gmra.mxu0 %v3258
  %v3260 = vpop.f32.mrf.mxu0
  %v3261 = vadd.f32 %v3228, %v3260
  %3262 = vdwg.mxu0
  %3263 = vmatpush.msra.mxu0 1.0
  %3264 = vmatpush.msra.mxu0 1.0
  %3265 = vmatpush.msra.mxu0 1.0
  %3266 = vmatpush.msra.mxu0 1.0
  %3267 = vmatpush.msra.mxu0 1.0
  %3268 = vmatpush.msra.mxu0 1.0
  %3269 = vmatpush.msra.mxu0 1.0
  %3270 = vmatpush.msra.mxu0 1.0
  %3271 = vmatpush.msra.mxu0 1.0
  %3272 = vmatpush.msra.mxu0 1.0
  %3273 = vmatpush.msra.mxu0 1.0
  %3274 = vmatpush.msra.mxu0 1.0
  %3275 = vmatpush.msra.mxu0 1.0
  %3276 = vmatpush.msra.mxu0 1.0
  %3277 = vmatpush.msra.mxu0 1.0
  %3278 = vmatpush.msra.mxu0 1.0
  %v3279 = vand.u32 %v3062, 4294901760
  %3280 = vmatmul.f32.gmra.mxu0 %v3279
  %v3281 = vpop.f32.mrf.mxu0
  %v3282 = vadd.f32 %v3249, %v3281
  %v3283 = vand.u32 %v3064, 4294901760
  %3284 = vmatmul.f32.gmra.mxu0 %v3283
  %v3285 = vpop.f32.mrf.mxu0
  %v3286 = vadd.f32 %v3253, %v3285
  %v3287 = vand.u32 %v3066, 4294901760
  %3288 = vmatmul.f32.gmra.mxu0 %v3287
  %v3289 = vpop.f32.mrf.mxu0
  %v3290 = vadd.f32 %v3257, %v3289
  %v3291 = vand.u32 %v3068, 4294901760
  %3292 = vmatmul.f32.gmra.mxu0 %v3291
  %v3293 = vpop.f32.mrf.mxu0
  %v3294 = vadd.f32 %v3261, %v3293
  %3295 = vdwg.mxu0
  %3296 = vmatpush.msra.mxu0 1.0
  %3297 = vmatpush.msra.mxu0 1.0
  %3298 = vmatpush.msra.mxu0 1.0
  %3299 = vmatpush.msra.mxu0 1.0
  %3300 = vmatpush.msra.mxu0 1.0
  %3301 = vmatpush.msra.mxu0 1.0
  %3302 = vmatpush.msra.mxu0 1.0
  %3303 = vmatpush.msra.mxu0 1.0
  %3304 = vmatpush.msra.mxu0 1.0
  %3305 = vmatpush.msra.mxu0 1.0
  %3306 = vmatpush.msra.mxu0 1.0
  %3307 = vmatpush.msra.mxu0 1.0
  %3308 = vmatpush.msra.mxu0 1.0
  %3309 = vmatpush.msra.mxu0 1.0
  %3310 = vmatpush.msra.mxu0 1.0
  %3311 = vmatpush.msra.mxu0 1.0
  %v3312 = vand.u32 %v3063, 4294901760
  %v3313 = vsub.f32 %v3063, %v3312
  %v3314 = vand.u32 %v3313, 4294901760
  %v3315 = vsub.f32 %v3313, %v3314
  %v3316 = vand.u32 %v3315, 4294901760
  %3317 = vmatmul.f32.gmra.mxu0 %v3316
  %v3318 = vpop.f32.mrf.mxu0
  %v3319 = vadd.f32 %v3282, %v3318
  %v3320 = vand.u32 %v3065, 4294901760
  %v3321 = vsub.f32 %v3065, %v3320
  %v3322 = vand.u32 %v3321, 4294901760
  %v3323 = vsub.f32 %v3321, %v3322
  %v3324 = vand.u32 %v3323, 4294901760
  %3325 = vmatmul.f32.gmra.mxu0 %v3324
  %v3326 = vpop.f32.mrf.mxu0
  %v3327 = vadd.f32 %v3286, %v3326
  %v3328 = vand.u32 %v3067, 4294901760
  %v3329 = vsub.f32 %v3067, %v3328
  %v3330 = vand.u32 %v3329, 4294901760
  %v3331 = vsub.f32 %v3329, %v3330
  %v3332 = vand.u32 %v3331, 4294901760
  %3333 = vmatmul.f32.gmra.mxu0 %v3332
  %v3334 = vpop.f32.mrf.mxu0
  %v3335 = vadd.f32 %v3290, %v3334
  %v3336 = vand.u32 %v3069, 4294901760
  %v3337 = vsub.f32 %v3069, %v3336
  %v3338 = vand.u32 %v3337, 4294901760
  %v3339 = vsub.f32 %v3337, %v3338
  %v3340 = vand.u32 %v3339, 4294901760
  %3341 = vmatmul.f32.gmra.mxu0 %v3340
  %v3342 = vpop.f32.mrf.mxu0
  %v3343 = vadd.f32 %v3294, %v3342
  %3344 = vdwg.mxu0
  %3345 = vmatpush.msra.mxu0 0.0
  %3346 = vmatpush.msra.mxu0 0.0
  %3347 = vmatpush.msra.mxu0 0.0
  %3348 = vmatpush.msra.mxu0 0.0
  %3349 = vmatpush.msra.mxu0 0.0
  %3350 = vmatpush.msra.mxu0 0.0
  %3351 = vmatpush.msra.mxu0 0.0
  %3352 = vmatpush.msra.mxu0 0.0
  %3353 = vmatpush.msra.mxu0 0.0
  %3354 = vmatpush.msra.mxu0 0.0
  %3355 = vmatpush.msra.mxu0 0.0
  %3356 = vmatpush.msra.mxu0 0.0
  %3357 = vmatpush.msra.mxu0 0.0
  %3358 = vmatpush.msra.mxu0 0.0
  %3359 = vmatpush.msra.mxu0 0.0
  %3360 = vmatpush.msra.mxu0 0.0
  %v3361 = vand.u32 %v3063, 4294901760
  %3362 = vmatmul.f32.gmra.mxu0 %v3361
  %v3363 = vpop.f32.mrf.mxu0
  %v3364 = vadd.f32 %v3319, %v3363
  %v3365 = vand.u32 %v3065, 4294901760
  %3366 = vmatmul.f32.gmra.mxu0 %v3365
  %v3367 = vpop.f32.mrf.mxu0
  %v3368 = vadd.f32 %v3327, %v3367
  %v3369 = vand.u32 %v3067, 4294901760
  %3370 = vmatmul.f32.gmra.mxu0 %v3369
  %v3371 = vpop.f32.mrf.mxu0
  %v3372 = vadd.f32 %v3335, %v3371
  %v3373 = vand.u32 %v3069, 4294901760
  %3374 = vmatmul.f32.gmra.mxu0 %v3373
  %v3375 = vpop.f32.mrf.mxu0
  %v3376 = vadd.f32 %v3343, %v3375
  %3377 = vdwg.mxu0
  %3378 = vmatpush.msra.mxu0 0.0
  %3379 = vmatpush.msra.mxu0 0.0
  %3380 = vmatpush.msra.mxu0 0.0
  %3381 = vmatpush.msra.mxu0 0.0
  %3382 = vmatpush.msra.mxu0 0.0
  %3383 = vmatpush.msra.mxu0 0.0
  %3384 = vmatpush.msra.mxu0 0.0
  %3385 = vmatpush.msra.mxu0 0.0
  %3386 = vmatpush.msra.mxu0 0.0
  %3387 = vmatpush.msra.mxu0 0.0
  %3388 = vmatpush.msra.mxu0 0.0
  %3389 = vmatpush.msra.mxu0 0.0
  %3390 = vmatpush.msra.mxu0 0.0
  %3391 = vmatpush.msra.mxu0 0.0
  %3392 = vmatpush.msra.mxu0 0.0
  %3393 = vmatpush.msra.mxu0 0.0
  %v3394 = vand.u32 %v3063, 4294901760
  %v3395 = vsub.f32 %v3063, %v3394
  %3396 = vmatmul.f32.gmra.mxu0 %v3395
  %v3397 = vpop.f32.mrf.mxu0
  %v3398 = vadd.f32 %v3364, %v3397
  %v3399 = vand.u32 %v3065, 4294901760
  %v3400 = vsub.f32 %v3065, %v3399
  %3401 = vmatmul.f32.gmra.mxu0 %v3400
  %v3402 = vpop.f32.mrf.mxu0
  %v3403 = vadd.f32 %v3368, %v3402
  %v3404 = vand.u32 %v3067, 4294901760
  %v3405 = vsub.f32 %v3067, %v3404
  %3406 = vmatmul.f32.gmra.mxu0 %v3405
  %v3407 = vpop.f32.mrf.mxu0
  %v3408 = vadd.f32 %v3372, %v3407
  %v3409 = vand.u32 %v3069, 4294901760
  %v3410 = vsub.f32 %v3069, %v3409
  %3411 = vmatmul.f32.gmra.mxu0 %v3410
  %v3412 = vpop.f32.mrf.mxu0
  %v3413 = vadd.f32 %v3376, %v3412
  %3414 = vdwg.mxu0
  %3415 = vmatpush.msra.mxu0 1.0
  %3416 = vmatpush.msra.mxu0 1.0
  %3417 = vmatpush.msra.mxu0 1.0
  %3418 = vmatpush.msra.mxu0 1.0
  %3419 = vmatpush.msra.mxu0 1.0
  %3420 = vmatpush.msra.mxu0 1.0
  %3421 = vmatpush.msra.mxu0 1.0
  %3422 = vmatpush.msra.mxu0 1.0
  %3423 = vmatpush.msra.mxu0 1.0
  %3424 = vmatpush.msra.mxu0 1.0
  %3425 = vmatpush.msra.mxu0 1.0
  %3426 = vmatpush.msra.mxu0 1.0
  %3427 = vmatpush.msra.mxu0 1.0
  %3428 = vmatpush.msra.mxu0 1.0
  %3429 = vmatpush.msra.mxu0 1.0
  %3430 = vmatpush.msra.mxu0 1.0
  %v3431 = vand.u32 %v3063, 4294901760
  %v3432 = vsub.f32 %v3063, %v3431
  %v3433 = vand.u32 %v3432, 4294901760
  %3434 = vmatmul.f32.gmra.mxu0 %v3433
  %v3435 = vpop.f32.mrf.mxu0
  %v3436 = vadd.f32 %v3398, %v3435
  %v3437 = vand.u32 %v3065, 4294901760
  %v3438 = vsub.f32 %v3065, %v3437
  %v3439 = vand.u32 %v3438, 4294901760
  %3440 = vmatmul.f32.gmra.mxu0 %v3439
  %v3441 = vpop.f32.mrf.mxu0
  %v3442 = vadd.f32 %v3403, %v3441
  %v3443 = vand.u32 %v3067, 4294901760
  %v3444 = vsub.f32 %v3067, %v3443
  %v3445 = vand.u32 %v3444, 4294901760
  %3446 = vmatmul.f32.gmra.mxu0 %v3445
  %v3447 = vpop.f32.mrf.mxu0
  %v3448 = vadd.f32 %v3408, %v3447
  %v3449 = vand.u32 %v3069, 4294901760
  %v3450 = vsub.f32 %v3069, %v3449
  %v3451 = vand.u32 %v3450, 4294901760
  %3452 = vmatmul.f32.gmra.mxu0 %v3451
  %v3453 = vpop.f32.mrf.mxu0
  %v3454 = vadd.f32 %v3413, %v3453
  %3455 = vdwg.mxu0
  %3456 = vmatpush.msra.mxu0 0.0
  %3457 = vmatpush.msra.mxu0 0.0
  %3458 = vmatpush.msra.mxu0 0.0
  %3459 = vmatpush.msra.mxu0 0.0
  %3460 = vmatpush.msra.mxu0 0.0
  %3461 = vmatpush.msra.mxu0 0.0
  %3462 = vmatpush.msra.mxu0 0.0
  %3463 = vmatpush.msra.mxu0 0.0
  %3464 = vmatpush.msra.mxu0 0.0
  %3465 = vmatpush.msra.mxu0 0.0
  %3466 = vmatpush.msra.mxu0 0.0
  %3467 = vmatpush.msra.mxu0 0.0
  %3468 = vmatpush.msra.mxu0 0.0
  %3469 = vmatpush.msra.mxu0 0.0
  %3470 = vmatpush.msra.mxu0 0.0
  %3471 = vmatpush.msra.mxu0 0.0
  %v3472 = vand.u32 %v3063, 4294901760
  %3473 = vmatmul.f32.gmra.mxu0 %v3472
  %v3474 = vpop.f32.mrf.mxu0
  %v3475 = vadd.f32 %v3436, %v3474
  %v3476 = vand.u32 %v3065, 4294901760
  %3477 = vmatmul.f32.gmra.mxu0 %v3476
  %v3478 = vpop.f32.mrf.mxu0
  %v3479 = vadd.f32 %v3442, %v3478
  %v3480 = vand.u32 %v3067, 4294901760
  %3481 = vmatmul.f32.gmra.mxu0 %v3480
  %v3482 = vpop.f32.mrf.mxu0
  %v3483 = vadd.f32 %v3448, %v3482
  %v3484 = vand.u32 %v3069, 4294901760
  %3485 = vmatmul.f32.gmra.mxu0 %v3484
  %v3486 = vpop.f32.mrf.mxu0
  %v3487 = vadd.f32 %v3454, %v3486
  %3488 = vdwg.mxu0
  %3489 = vmatpush.msra.mxu0 1.0
  %3490 = vmatpush.msra.mxu0 1.0
  %3491 = vmatpush.msra.mxu0 1.0
  %3492 = vmatpush.msra.mxu0 1.0
  %3493 = vmatpush.msra.mxu0 1.0
  %3494 = vmatpush.msra.mxu0 1.0
  %3495 = vmatpush.msra.mxu0 1.0
  %3496 = vmatpush.msra.mxu0 1.0
  %3497 = vmatpush.msra.mxu0 1.0
  %3498 = vmatpush.msra.mxu0 1.0
  %3499 = vmatpush.msra.mxu0 1.0
  %3500 = vmatpush.msra.mxu0 1.0
  %3501 = vmatpush.msra.mxu0 1.0
  %3502 = vmatpush.msra.mxu0 1.0
  %3503 = vmatpush.msra.mxu0 1.0
  %3504 = vmatpush.msra.mxu0 1.0
  %v3505 = vand.u32 %v3063, 4294901760
  %3506 = vmatmul.f32.gmra.mxu0 %v3505
  %v3507 = vpop.f32.mrf.mxu0
  %v3508 = vadd.f32 %v3475, %v3507
  %v3509 = vand.u32 %v3065, 4294901760
  %3510 = vmatmul.f32.gmra.mxu0 %v3509
  %v3511 = vpop.f32.mrf.mxu0
  %v3512 = vadd.f32 %v3479, %v3511
  %v3513 = vand.u32 %v3067, 4294901760
  %3514 = vmatmul.f32.gmra.mxu0 %v3513
  %v3515 = vpop.f32.mrf.mxu0
  %v3516 = vadd.f32 %v3483, %v3515
  %v3517 = vand.u32 %v3069, 4294901760
  %3518 = vmatmul.f32.gmra.mxu0 %v3517
  %v3519 = vpop.f32.mrf.mxu0
  %v3520 = vadd.f32 %v3487, %v3519
  %3521 = vdwg.mxu0
  %v3522 = vmul.f32 %v3062, %v3062
  %v3523 = vmul.f32 %v3063, %v3063
  %v3524 = vmul.f32 %v3064, %v3064
  %v3525 = vmul.f32 %v3065, %v3065
  %v3526 = vmul.f32 %v3066, %v3066
  %v3527 = vmul.f32 %v3067, %v3067
  %v3528 = vmul.f32 %v3068, %v3068
  %v3529 = vmul.f32 %v3069, %v3069
  %3530 = vmatpush.msra.mxu0 1.0
  %3531 = vmatpush.msra.mxu0 1.0
  %3532 = vmatpush.msra.mxu0 1.0
  %3533 = vmatpush.msra.mxu0 1.0
  %3534 = vmatpush.msra.mxu0 1.0
  %3535 = vmatpush.msra.mxu0 1.0
  %3536 = vmatpush.msra.mxu0 1.0
  %3537 = vmatpush.msra.mxu0 1.0
  %3538 = vmatpush.msra.mxu0 1.0
  %3539 = vmatpush.msra.mxu0 1.0
  %3540 = vmatpush.msra.mxu0 1.0
  %3541 = vmatpush.msra.mxu0 1.0
  %3542 = vmatpush.msra.mxu0 1.0
  %3543 = vmatpush.msra.mxu0 1.0
  %3544 = vmatpush.msra.mxu0 1.0
  %3545 = vmatpush.msra.mxu0 1.0
  %v3546 = vand.u32 %v3522, 4294901760
  %v3547 = vsub.f32 %v3522, %v3546
  %v3548 = vand.u32 %v3547, 4294901760
  %v3549 = vsub.f32 %v3547, %v3548
  %v3550 = vand.u32 %v3549, 4294901760
  %3551 = vmatmul.f32.gmra.mxu0 %v3550
  %v3552 = vpop.f32.mrf.mxu0
  %v3553 = vadd.f32 0.0, %v3552
  %v3554 = vand.u32 %v3524, 4294901760
  %v3555 = vsub.f32 %v3524, %v3554
  %v3556 = vand.u32 %v3555, 4294901760
  %v3557 = vsub.f32 %v3555, %v3556
  %v3558 = vand.u32 %v3557, 4294901760
  %3559 = vmatmul.f32.gmra.mxu0 %v3558
  %v3560 = vpop.f32.mrf.mxu0
  %v3561 = vadd.f32 0.0, %v3560
  %v3562 = vand.u32 %v3526, 4294901760
  %v3563 = vsub.f32 %v3526, %v3562
  %v3564 = vand.u32 %v3563, 4294901760
  %v3565 = vsub.f32 %v3563, %v3564
  %v3566 = vand.u32 %v3565, 4294901760
  %3567 = vmatmul.f32.gmra.mxu0 %v3566
  %v3568 = vpop.f32.mrf.mxu0
  %v3569 = vadd.f32 0.0, %v3568
  %v3570 = vand.u32 %v3528, 4294901760
  %v3571 = vsub.f32 %v3528, %v3570
  %v3572 = vand.u32 %v3571, 4294901760
  %v3573 = vsub.f32 %v3571, %v3572
  %v3574 = vand.u32 %v3573, 4294901760
  %3575 = vmatmul.f32.gmra.mxu0 %v3574
  %v3576 = vpop.f32.mrf.mxu0
  %v3577 = vadd.f32 0.0, %v3576
  %3578 = vdwg.mxu0
  %3579 = vmatpush.msra.mxu0 0.0
  %3580 = vmatpush.msra.mxu0 0.0
  %3581 = vmatpush.msra.mxu0 0.0
  %3582 = vmatpush.msra.mxu0 0.0
  %3583 = vmatpush.msra.mxu0 0.0
  %3584 = vmatpush.msra.mxu0 0.0
  %3585 = vmatpush.msra.mxu0 0.0
  %3586 = vmatpush.msra.mxu0 0.0
  %3587 = vmatpush.msra.mxu0 0.0
  %3588 = vmatpush.msra.mxu0 0.0
  %3589 = vmatpush.msra.mxu0 0.0
  %3590 = vmatpush.msra.mxu0 0.0
  %3591 = vmatpush.msra.mxu0 0.0
  %3592 = vmatpush.msra.mxu0 0.0
  %3593 = vmatpush.msra.mxu0 0.0
  %3594 = vmatpush.msra.mxu0 0.0
  %v3595 = vand.u32 %v3522, 4294901760
  %3596 = vmatmul.f32.gmra.mxu0 %v3595
  %v3597 = vpop.f32.mrf.mxu0
  %v3598 = vadd.f32 %v3553, %v3597
  %v3599 = vand.u32 %v3524, 4294901760
  %3600 = vmatmul.f32.gmra.mxu0 %v3599
  %v3601 = vpop.f32.mrf.mxu0
  %v3602 = vadd.f32 %v3561, %v3601
  %v3603 = vand.u32 %v3526, 4294901760
  %3604 = vmatmul.f32.gmra.mxu0 %v3603
  %v3605 = vpop.f32.mrf.mxu0
  %v3606 = vadd.f32 %v3569, %v3605
  %v3607 = vand.u32 %v3528, 4294901760
  %3608 = vmatmul.f32.gmra.mxu0 %v3607
  %v3609 = vpop.f32.mrf.mxu0
  %v3610 = vadd.f32 %v3577, %v3609
  %3611 = vdwg.mxu0
  %3612 = vmatpush.msra.mxu0 0.0
  %3613 = vmatpush.msra.mxu0 0.0
  %3614 = vmatpush.msra.mxu0 0.0
  %3615 = vmatpush.msra.mxu0 0.0
  %3616 = vmatpush.msra.mxu0 0.0
  %3617 = vmatpush.msra.mxu0 0.0
  %3618 = vmatpush.msra.mxu0 0.0
  %3619 = vmatpush.msra.mxu0 0.0
  %3620 = vmatpush.msra.mxu0 0.0
  %3621 = vmatpush.msra.mxu0 0.0
  %3622 = vmatpush.msra.mxu0 0.0
  %3623 = vmatpush.msra.mxu0 0.0
  %3624 = vmatpush.msra.mxu0 0.0
  %3625 = vmatpush.msra.mxu0 0.0
  %3626 = vmatpush.msra.mxu0 0.0
  %3627 = vmatpush.msra.mxu0 0.0
  %v3628 = vand.u32 %v3522, 4294901760
  %v3629 = vsub.f32 %v3522, %v3628
  %3630 = vmatmul.f32.gmra.mxu0 %v3629
  %v3631 = vpop.f32.mrf.mxu0
  %v3632 = vadd.f32 %v3598, %v3631
  %v3633 = vand.u32 %v3524, 4294901760
  %v3634 = vsub.f32 %v3524, %v3633
  %3635 = vmatmul.f32.gmra.mxu0 %v3634
  %v3636 = vpop.f32.mrf.mxu0
  %v3637 = vadd.f32 %v3602, %v3636
  %v3638 = vand.u32 %v3526, 4294901760
  %v3639 = vsub.f32 %v3526, %v3638
  %3640 = vmatmul.f32.gmra.mxu0 %v3639
  %v3641 = vpop.f32.mrf.mxu0
  %v3642 = vadd.f32 %v3606, %v3641
  %v3643 = vand.u32 %v3528, 4294901760
  %v3644 = vsub.f32 %v3528, %v3643
  %3645 = vmatmul.f32.gmra.mxu0 %v3644
  %v3646 = vpop.f32.mrf.mxu0
  %v3647 = vadd.f32 %v3610, %v3646
  %3648 = vdwg.mxu0
  %3649 = vmatpush.msra.mxu0 1.0
  %3650 = vmatpush.msra.mxu0 1.0
  %3651 = vmatpush.msra.mxu0 1.0
  %3652 = vmatpush.msra.mxu0 1.0
  %3653 = vmatpush.msra.mxu0 1.0
  %3654 = vmatpush.msra.mxu0 1.0
  %3655 = vmatpush.msra.mxu0 1.0
  %3656 = vmatpush.msra.mxu0 1.0
  %3657 = vmatpush.msra.mxu0 1.0
  %3658 = vmatpush.msra.mxu0 1.0
  %3659 = vmatpush.msra.mxu0 1.0
  %3660 = vmatpush.msra.mxu0 1.0
  %3661 = vmatpush.msra.mxu0 1.0
  %3662 = vmatpush.msra.mxu0 1.0
  %3663 = vmatpush.msra.mxu0 1.0
  %3664 = vmatpush.msra.mxu0 1.0
  %v3665 = vand.u32 %v3522, 4294901760
  %v3666 = vsub.f32 %v3522, %v3665
  %v3667 = vand.u32 %v3666, 4294901760
  %3668 = vmatmul.f32.gmra.mxu0 %v3667
  %v3669 = vpop.f32.mrf.mxu0
  %v3670 = vadd.f32 %v3632, %v3669
  %v3671 = vand.u32 %v3524, 4294901760
  %v3672 = vsub.f32 %v3524, %v3671
  %v3673 = vand.u32 %v3672, 4294901760
  %3674 = vmatmul.f32.gmra.mxu0 %v3673
  %v3675 = vpop.f32.mrf.mxu0
  %v3676 = vadd.f32 %v3637, %v3675
  %v3677 = vand.u32 %v3526, 4294901760
  %v3678 = vsub.f32 %v3526, %v3677
  %v3679 = vand.u32 %v3678, 4294901760
  %3680 = vmatmul.f32.gmra.mxu0 %v3679
  %v3681 = vpop.f32.mrf.mxu0
  %v3682 = vadd.f32 %v3642, %v3681
  %v3683 = vand.u32 %v3528, 4294901760
  %v3684 = vsub.f32 %v3528, %v3683
  %v3685 = vand.u32 %v3684, 4294901760
  %3686 = vmatmul.f32.gmra.mxu0 %v3685
  %v3687 = vpop.f32.mrf.mxu0
  %v3688 = vadd.f32 %v3647, %v3687
  %3689 = vdwg.mxu0
  %3690 = vmatpush.msra.mxu0 0.0
  %3691 = vmatpush.msra.mxu0 0.0
  %3692 = vmatpush.msra.mxu0 0.0
  %3693 = vmatpush.msra.mxu0 0.0
  %3694 = vmatpush.msra.mxu0 0.0
  %3695 = vmatpush.msra.mxu0 0.0
  %3696 = vmatpush.msra.mxu0 0.0
  %3697 = vmatpush.msra.mxu0 0.0
  %3698 = vmatpush.msra.mxu0 0.0
  %3699 = vmatpush.msra.mxu0 0.0
  %3700 = vmatpush.msra.mxu0 0.0
  %3701 = vmatpush.msra.mxu0 0.0
  %3702 = vmatpush.msra.mxu0 0.0
  %3703 = vmatpush.msra.mxu0 0.0
  %3704 = vmatpush.msra.mxu0 0.0
  %3705 = vmatpush.msra.mxu0 0.0
  %v3706 = vand.u32 %v3522, 4294901760
  %3707 = vmatmul.f32.gmra.mxu0 %v3706
  %v3708 = vpop.f32.mrf.mxu0
  %v3709 = vadd.f32 %v3670, %v3708
  %v3710 = vand.u32 %v3524, 4294901760
  %3711 = vmatmul.f32.gmra.mxu0 %v3710
  %v3712 = vpop.f32.mrf.mxu0
  %v3713 = vadd.f32 %v3676, %v3712
  %v3714 = vand.u32 %v3526, 4294901760
  %3715 = vmatmul.f32.gmra.mxu0 %v3714
  %v3716 = vpop.f32.mrf.mxu0
  %v3717 = vadd.f32 %v3682, %v3716
  %v3718 = vand.u32 %v3528, 4294901760
  %3719 = vmatmul.f32.gmra.mxu0 %v3718
  %v3720 = vpop.f32.mrf.mxu0
  %v3721 = vadd.f32 %v3688, %v3720
  %3722 = vdwg.mxu0
  %3723 = vmatpush.msra.mxu0 1.0
  %3724 = vmatpush.msra.mxu0 1.0
  %3725 = vmatpush.msra.mxu0 1.0
  %3726 = vmatpush.msra.mxu0 1.0
  %3727 = vmatpush.msra.mxu0 1.0
  %3728 = vmatpush.msra.mxu0 1.0
  %3729 = vmatpush.msra.mxu0 1.0
  %3730 = vmatpush.msra.mxu0 1.0
  %3731 = vmatpush.msra.mxu0 1.0
  %3732 = vmatpush.msra.mxu0 1.0
  %3733 = vmatpush.msra.mxu0 1.0
  %3734 = vmatpush.msra.mxu0 1.0
  %3735 = vmatpush.msra.mxu0 1.0
  %3736 = vmatpush.msra.mxu0 1.0
  %3737 = vmatpush.msra.mxu0 1.0
  %3738 = vmatpush.msra.mxu0 1.0
  %v3739 = vand.u32 %v3522, 4294901760
  %3740 = vmatmul.f32.gmra.mxu0 %v3739
  %v3741 = vpop.f32.mrf.mxu0
  %v3742 = vadd.f32 %v3709, %v3741
  %v3743 = vand.u32 %v3524, 4294901760
  %3744 = vmatmul.f32.gmra.mxu0 %v3743
  %v3745 = vpop.f32.mrf.mxu0
  %v3746 = vadd.f32 %v3713, %v3745
  %v3747 = vand.u32 %v3526, 4294901760
  %3748 = vmatmul.f32.gmra.mxu0 %v3747
  %v3749 = vpop.f32.mrf.mxu0
  %v3750 = vadd.f32 %v3717, %v3749
  %v3751 = vand.u32 %v3528, 4294901760
  %3752 = vmatmul.f32.gmra.mxu0 %v3751
  %v3753 = vpop.f32.mrf.mxu0
  %v3754 = vadd.f32 %v3721, %v3753
  %3755 = vdwg.mxu0
  %3756 = vmatpush.msra.mxu0 1.0
  %3757 = vmatpush.msra.mxu0 1.0
  %3758 = vmatpush.msra.mxu0 1.0
  %3759 = vmatpush.msra.mxu0 1.0
  %3760 = vmatpush.msra.mxu0 1.0
  %3761 = vmatpush.msra.mxu0 1.0
  %3762 = vmatpush.msra.mxu0 1.0
  %3763 = vmatpush.msra.mxu0 1.0
  %3764 = vmatpush.msra.mxu0 1.0
  %3765 = vmatpush.msra.mxu0 1.0
  %3766 = vmatpush.msra.mxu0 1.0
  %3767 = vmatpush.msra.mxu0 1.0
  %3768 = vmatpush.msra.mxu0 1.0
  %3769 = vmatpush.msra.mxu0 1.0
  %3770 = vmatpush.msra.mxu0 1.0
  %3771 = vmatpush.msra.mxu0 1.0
  %v3772 = vand.u32 %v3523, 4294901760
  %v3773 = vsub.f32 %v3523, %v3772
  %v3774 = vand.u32 %v3773, 4294901760
  %v3775 = vsub.f32 %v3773, %v3774
  %v3776 = vand.u32 %v3775, 4294901760
  %3777 = vmatmul.f32.gmra.mxu0 %v3776
  %v3778 = vpop.f32.mrf.mxu0
  %v3779 = vadd.f32 %v3742, %v3778
  %v3780 = vand.u32 %v3525, 4294901760
  %v3781 = vsub.f32 %v3525, %v3780
  %v3782 = vand.u32 %v3781, 4294901760
  %v3783 = vsub.f32 %v3781, %v3782
  %v3784 = vand.u32 %v3783, 4294901760
  %3785 = vmatmul.f32.gmra.mxu0 %v3784
  %v3786 = vpop.f32.mrf.mxu0
  %v3787 = vadd.f32 %v3746, %v3786
  %v3788 = vand.u32 %v3527, 4294901760
  %v3789 = vsub.f32 %v3527, %v3788
  %v3790 = vand.u32 %v3789, 4294901760
  %v3791 = vsub.f32 %v3789, %v3790
  %v3792 = vand.u32 %v3791, 4294901760
  %3793 = vmatmul.f32.gmra.mxu0 %v3792
  %v3794 = vpop.f32.mrf.mxu0
  %v3795 = vadd.f32 %v3750, %v3794
  %v3796 = vand.u32 %v3529, 4294901760
  %v3797 = vsub.f32 %v3529, %v3796
  %v3798 = vand.u32 %v3797, 4294901760
  %v3799 = vsub.f32 %v3797, %v3798
  %v3800 = vand.u32 %v3799, 4294901760
  %3801 = vmatmul.f32.gmra.mxu0 %v3800
  %v3802 = vpop.f32.mrf.mxu0
  %v3803 = vadd.f32 %v3754, %v3802
  %3804 = vdwg.mxu0
  %3805 = vmatpush.msra.mxu0 0.0
  %3806 = vmatpush.msra.mxu0 0.0
  %3807 = vmatpush.msra.mxu0 0.0
  %3808 = vmatpush.msra.mxu0 0.0
  %3809 = vmatpush.msra.mxu0 0.0
  %3810 = vmatpush.msra.mxu0 0.0
  %3811 = vmatpush.msra.mxu0 0.0
  %3812 = vmatpush.msra.mxu0 0.0
  %3813 = vmatpush.msra.mxu0 0.0
  %3814 = vmatpush.msra.mxu0 0.0
  %3815 = vmatpush.msra.mxu0 0.0
  %3816 = vmatpush.msra.mxu0 0.0
  %3817 = vmatpush.msra.mxu0 0.0
  %3818 = vmatpush.msra.mxu0 0.0
  %3819 = vmatpush.msra.mxu0 0.0
  %3820 = vmatpush.msra.mxu0 0.0
  %v3821 = vand.u32 %v3523, 4294901760
  %3822 = vmatmul.f32.gmra.mxu0 %v3821
  %v3823 = vpop.f32.mrf.mxu0
  %v3824 = vadd.f32 %v3779, %v3823
  %v3825 = vand.u32 %v3525, 4294901760
  %3826 = vmatmul.f32.gmra.mxu0 %v3825
  %v3827 = vpop.f32.mrf.mxu0
  %v3828 = vadd.f32 %v3787, %v3827
  %v3829 = vand.u32 %v3527, 4294901760
  %3830 = vmatmul.f32.gmra.mxu0 %v3829
  %v3831 = vpop.f32.mrf.mxu0
  %v3832 = vadd.f32 %v3795, %v3831
  %v3833 = vand.u32 %v3529, 4294901760
  %3834 = vmatmul.f32.gmra.mxu0 %v3833
  %v3835 = vpop.f32.mrf.mxu0
  %v3836 = vadd.f32 %v3803, %v3835
  %3837 = vdwg.mxu0
  %3838 = vmatpush.msra.mxu0 0.0
  %3839 = vmatpush.msra.mxu0 0.0
  %3840 = vmatpush.msra.mxu0 0.0
  %3841 = vmatpush.msra.mxu0 0.0
  %3842 = vmatpush.msra.mxu0 0.0
  %3843 = vmatpush.msra.mxu0 0.0
  %3844 = vmatpush.msra.mxu0 0.0
  %3845 = vmatpush.msra.mxu0 0.0
  %3846 = vmatpush.msra.mxu0 0.0
  %3847 = vmatpush.msra.mxu0 0.0
  %3848 = vmatpush.msra.mxu0 0.0
  %3849 = vmatpush.msra.mxu0 0.0
  %3850 = vmatpush.msra.mxu0 0.0
  %3851 = vmatpush.msra.mxu0 0.0
  %3852 = vmatpush.msra.mxu0 0.0
  %3853 = vmatpush.msra.mxu0 0.0
  %v3854 = vand.u32 %v3523, 4294901760
  %v3855 = vsub.f32 %v3523, %v3854
  %3856 = vmatmul.f32.gmra.mxu0 %v3855
  %v3857 = vpop.f32.mrf.mxu0
  %v3858 = vadd.f32 %v3824, %v3857
  %v3859 = vand.u32 %v3525, 4294901760
  %v3860 = vsub.f32 %v3525, %v3859
  %3861 = vmatmul.f32.gmra.mxu0 %v3860
  %v3862 = vpop.f32.mrf.mxu0
  %v3863 = vadd.f32 %v3828, %v3862
  %v3864 = vand.u32 %v3527, 4294901760
  %v3865 = vsub.f32 %v3527, %v3864
  %3866 = vmatmul.f32.gmra.mxu0 %v3865
  %v3867 = vpop.f32.mrf.mxu0
  %v3868 = vadd.f32 %v3832, %v3867
  %v3869 = vand.u32 %v3529, 4294901760
  %v3870 = vsub.f32 %v3529, %v3869
  %3871 = vmatmul.f32.gmra.mxu0 %v3870
  %v3872 = vpop.f32.mrf.mxu0
  %v3873 = vadd.f32 %v3836, %v3872
  %3874 = vdwg.mxu0
  %3875 = vmatpush.msra.mxu0 1.0
  %3876 = vmatpush.msra.mxu0 1.0
  %3877 = vmatpush.msra.mxu0 1.0
  %3878 = vmatpush.msra.mxu0 1.0
  %3879 = vmatpush.msra.mxu0 1.0
  %3880 = vmatpush.msra.mxu0 1.0
  %3881 = vmatpush.msra.mxu0 1.0
  %3882 = vmatpush.msra.mxu0 1.0
  %3883 = vmatpush.msra.mxu0 1.0
  %3884 = vmatpush.msra.mxu0 1.0
  %3885 = vmatpush.msra.mxu0 1.0
  %3886 = vmatpush.msra.mxu0 1.0
  %3887 = vmatpush.msra.mxu0 1.0
  %3888 = vmatpush.msra.mxu0 1.0
  %3889 = vmatpush.msra.mxu0 1.0
  %3890 = vmatpush.msra.mxu0 1.0
  %v3891 = vand.u32 %v3523, 4294901760
  %v3892 = vsub.f32 %v3523, %v3891
  %v3893 = vand.u32 %v3892, 4294901760
  %3894 = vmatmul.f32.gmra.mxu0 %v3893
  %v3895 = vpop.f32.mrf.mxu0
  %v3896 = vadd.f32 %v3858, %v3895
  %v3897 = vand.u32 %v3525, 4294901760
  %v3898 = vsub.f32 %v3525, %v3897
  %v3899 = vand.u32 %v3898, 4294901760
  %3900 = vmatmul.f32.gmra.mxu0 %v3899
  %v3901 = vpop.f32.mrf.mxu0
  %v3902 = vadd.f32 %v3863, %v3901
  %v3903 = vand.u32 %v3527, 4294901760
  %v3904 = vsub.f32 %v3527, %v3903
  %v3905 = vand.u32 %v3904, 4294901760
  %3906 = vmatmul.f32.gmra.mxu0 %v3905
  %v3907 = vpop.f32.mrf.mxu0
  %v3908 = vadd.f32 %v3868, %v3907
  %v3909 = vand.u32 %v3529, 4294901760
  %v3910 = vsub.f32 %v3529, %v3909
  %v3911 = vand.u32 %v3910, 4294901760
  %3912 = vmatmul.f32.gmra.mxu0 %v3911
  %v3913 = vpop.f32.mrf.mxu0
  %v3914 = vadd.f32 %v3873, %v3913
  %3915 = vdwg.mxu0
  %3916 = vmatpush.msra.mxu0 0.0
  %3917 = vmatpush.msra.mxu0 0.0
  %3918 = vmatpush.msra.mxu0 0.0
  %3919 = vmatpush.msra.mxu0 0.0
  %3920 = vmatpush.msra.mxu0 0.0
  %3921 = vmatpush.msra.mxu0 0.0
  %3922 = vmatpush.msra.mxu0 0.0
  %3923 = vmatpush.msra.mxu0 0.0
  %3924 = vmatpush.msra.mxu0 0.0
  %3925 = vmatpush.msra.mxu0 0.0
  %3926 = vmatpush.msra.mxu0 0.0
  %3927 = vmatpush.msra.mxu0 0.0
  %3928 = vmatpush.msra.mxu0 0.0
  %3929 = vmatpush.msra.mxu0 0.0
  %3930 = vmatpush.msra.mxu0 0.0
  %3931 = vmatpush.msra.mxu0 0.0
  %v3932 = vand.u32 %v3523, 4294901760
  %3933 = vmatmul.f32.gmra.mxu0 %v3932
  %v3934 = vpop.f32.mrf.mxu0
  %v3935 = vadd.f32 %v3896, %v3934
  %v3936 = vand.u32 %v3525, 4294901760
  %3937 = vmatmul.f32.gmra.mxu0 %v3936
  %v3938 = vpop.f32.mrf.mxu0
  %v3939 = vadd.f32 %v3902, %v3938
  %v3940 = vand.u32 %v3527, 4294901760
  %3941 = vmatmul.f32.gmra.mxu0 %v3940
  %v3942 = vpop.f32.mrf.mxu0
  %v3943 = vadd.f32 %v3908, %v3942
  %v3944 = vand.u32 %v3529, 4294901760
  %3945 = vmatmul.f32.gmra.mxu0 %v3944
  %v3946 = vpop.f32.mrf.mxu0
  %v3947 = vadd.f32 %v3914, %v3946
  %3948 = vdwg.mxu0
  %3949 = vmatpush.msra.mxu0 1.0
  %3950 = vmatpush.msra.mxu0 1.0
  %3951 = vmatpush.msra.mxu0 1.0
  %3952 = vmatpush.msra.mxu0 1.0
  %3953 = vmatpush.msra.mxu0 1.0
  %3954 = vmatpush.msra.mxu0 1.0
  %3955 = vmatpush.msra.mxu0 1.0
  %3956 = vmatpush.msra.mxu0 1.0
  %3957 = vmatpush.msra.mxu0 1.0
  %3958 = vmatpush.msra.mxu0 1.0
  %3959 = vmatpush.msra.mxu0 1.0
  %3960 = vmatpush.msra.mxu0 1.0
  %3961 = vmatpush.msra.mxu0 1.0
  %3962 = vmatpush.msra.mxu0 1.0
  %3963 = vmatpush.msra.mxu0 1.0
  %3964 = vmatpush.msra.mxu0 1.0
  %v3965 = vand.u32 %v3523, 4294901760
  %3966 = vmatmul.f32.gmra.mxu0 %v3965
  %v3967 = vpop.f32.mrf.mxu0
  %v3968 = vadd.f32 %v3935, %v3967
  %v3969 = vand.u32 %v3525, 4294901760
  %3970 = vmatmul.f32.gmra.mxu0 %v3969
  %v3971 = vpop.f32.mrf.mxu0
  %v3972 = vadd.f32 %v3939, %v3971
  %v3973 = vand.u32 %v3527, 4294901760
  %3974 = vmatmul.f32.gmra.mxu0 %v3973
  %v3975 = vpop.f32.mrf.mxu0
  %v3976 = vadd.f32 %v3943, %v3975
  %v3977 = vand.u32 %v3529, 4294901760
  %3978 = vmatmul.f32.gmra.mxu0 %v3977
  %v3979 = vpop.f32.mrf.mxu0
  %v3980 = vadd.f32 %v3947, %v3979
  %3981 = vdwg.mxu0
  %v3982 = vmul.f32 %v3508, 0.00390625
  %v3983 = vmul.f32 %v3512, 0.00390625
  %v3984 = vmul.f32 %v3516, 0.00390625
  %v3985 = vmul.f32 %v3520, 0.00390625
  %v3986 = vmul.f32 %v3968, 0.00390625
  %v3987 = vmul.f32 %v3972, 0.00390625
  %v3988 = vmul.f32 %v3976, 0.00390625
  %v3989 = vmul.f32 %v3980, 0.00390625
  %v3990 = vmul.f32 %v3982, %v3982
  %v3991 = vmul.f32 %v3983, %v3983
  %v3992 = vmul.f32 %v3984, %v3984
  %v3993 = vmul.f32 %v3985, %v3985
  %v3994 = vsub.f32 %v3986, %v3990
  %v3995 = vsub.f32 %v3987, %v3991
  %v3996 = vsub.f32 %v3988, %v3992
  %v3997 = vsub.f32 %v3989, %v3993
  %3999 = vset.pattern.permute.xlu0 0
  %4000 = vperm.xlu0 %3999, %v3982
  %v4001 = vpop.permute.xlu0 %4000
  %4004 = vset.pattern.permute.xlu0 0
  %4005 = vperm.xlu0 %4004, %v3983
  %v4006 = vpop.permute.xlu0 %4005
  %4009 = vset.pattern.permute.xlu0 0
  %4010 = vperm.xlu0 %4009, %v3984
  %v4011 = vpop.permute.xlu0 %4010
  %4014 = vset.pattern.permute.xlu0 0
  %4015 = vperm.xlu0 %4014, %v3985
  %v4016 = vpop.permute.xlu0 %4015
  %v4018 = vsub.f32 %v3062, %v4001
  %v4019 = vsub.f32 %v3063, %v4001
  %v4020 = vsub.f32 %v3064, %v4006
  %v4021 = vsub.f32 %v3065, %v4006
  %v4022 = vsub.f32 %v3066, %v4011
  %v4023 = vsub.f32 %v3067, %v4011
  %v4024 = vsub.f32 %v3068, %v4016
  %v4025 = vsub.f32 %v3069, %v4016
  %v4026 = vadd.f32 %v3994, 1e-05
  %v4027 = vadd.f32 %v3995, 1e-05
  %v4028 = vadd.f32 %v3996, 1e-05
  %v4029 = vadd.f32 %v3997, 1e-05
  %v4030 = vrsqrt.pop %v4026
  %v4031 = vmul.f32 %v4030, %v4026
  %v4032 = vmul.f32 %v4031, %v4030
  %v4033 = vmul.f32 0.5, %v4032
  %v4034 = vsub.f32 1.5, %v4033
  %v4035 = vmul.f32 %v4030, %v4034
  %vm4036 = vweird.f32 %v4026
  %vm4037 = vweird.f32 %v4030
  %vm4038 = vmor %vm4036, %vm4037
  %v4039 = vsel %vm4038, %v4030, %v4035
  %v4040 = vrsqrt.pop %v4027
  %v4041 = vmul.f32 %v4040, %v4027
  %v4042 = vmul.f32 %v4041, %v4040
  %v4043 = vmul.f32 0.5, %v4042
  %v4044 = vsub.f32 1.5, %v4043
  %v4045 = vmul.f32 %v4040, %v4044
  %vm4046 = vweird.f32 %v4027
  %vm4047 = vweird.f32 %v4040
  %vm4048 = vmor %vm4046, %vm4047
  %v4049 = vsel %vm4048, %v4040, %v4045
  %v4050 = vrsqrt.pop %v4028
  %v4051 = vmul.f32 %v4050, %v4028
  %v4052 = vmul.f32 %v4051, %v4050
  %v4053 = vmul.f32 0.5, %v4052
  %v4054 = vsub.f32 1.5, %v4053
  %v4055 = vmul.f32 %v4050, %v4054
  %vm4056 = vweird.f32 %v4028
  %vm4057 = vweird.f32 %v4050
  %vm4058 = vmor %vm4056, %vm4057
  %v4059 = vsel %vm4058, %v4050, %v4055
  %v4060 = vrsqrt.pop %v4029
  %v4061 = vmul.f32 %v4060, %v4029
  %v4062 = vmul.f32 %v4061, %v4060
  %v4063 = vmul.f32 0.5, %v4062
  %v4064 = vsub.f32 1.5, %v4063
  %v4065 = vmul.f32 %v4060, %v4064
  %vm4066 = vweird.f32 %v4029
  %vm4067 = vweird.f32 %v4060
  %vm4068 = vmor %vm4066, %vm4067
  %v4069 = vsel %vm4068, %v4060, %v4065
  %4071 = vset.pattern.permute.xlu0 0
  %4072 = vperm.xlu0 %4071, %v4039
  %v4073 = vpop.permute.xlu0 %4072
  %4076 = vset.pattern.permute.xlu0 0
  %4077 = vperm.xlu0 %4076, %v4049
  %v4078 = vpop.permute.xlu0 %4077
  %4081 = vset.pattern.permute.xlu0 0
  %4082 = vperm.xlu0 %4081, %v4059
  %v4083 = vpop.permute.xlu0 %4082
  %4086 = vset.pattern.permute.xlu0 0
  %4087 = vperm.xlu0 %4086, %v4069
  %v4088 = vpop.permute.xlu0 %4087
  %v4090 = vmul.f32 %v4018, %v4073
  %v4091 = vmul.f32 %v4019, %v4073
  %v4092 = vmul.f32 %v4020, %v4078
  %v4093 = vmul.f32 %v4021, %v4078
  %v4094 = vmul.f32 %v4022, %v4083
  %v4095 = vmul.f32 %v4023, %v4083
  %v4096 = vmul.f32 %v4024, %v4088
  %v4097 = vmul.f32 %v4025, %v4088
  %4098 = vset.pattern.permute.xlu0 6
  %4099 = vperm.xlu0 %4098, %v49
  %v4100 = vpop.permute.xlu0 %4099
  %4102 = vset.pattern.permute.xlu0 6
  %4103 = vperm.xlu0 %4102, %v50
  %v4104 = vpop.permute.xlu0 %4103
  %4106 = vset.pattern.permute.xlu0 6
  %4107 = vperm.xlu0 %4106, %v51
  %v4108 = vpop.permute.xlu0 %4107
  %4110 = vset.pattern.permute.xlu0 6
  %4111 = vperm.xlu0 %4110, %v52
  %v4112 = vpop.permute.xlu0 %4111
  %v4114 = vmul.f32 %v4090, %v4100
  %v4115 = vmul.f32 %v4091, %v4100
  %v4116 = vmul.f32 %v4092, %v4104
  %v4117 = vmul.f32 %v4093, %v4104
  %v4118 = vmul.f32 %v4094, %v4108
  %v4119 = vmul.f32 %v4095, %v4108
  %v4120 = vmul.f32 %v4096, %v4112
  %v4121 = vmul.f32 %v4097, %v4112
  %4122 = vset.pattern.permute.xlu0 7
  %4123 = vperm.xlu0 %4122, %v49
  %v4124 = vpop.permute.xlu0 %4123
  %4126 = vset.pattern.permute.xlu0 7
  %4127 = vperm.xlu0 %4126, %v50
  %v4128 = vpop.permute.xlu0 %4127
  %4130 = vset.pattern.permute.xlu0 7
  %4131 = vperm.xlu0 %4130, %v51
  %v4132 = vpop.permute.xlu0 %4131
  %4134 = vset.pattern.permute.xlu0 7
  %4135 = vperm.xlu0 %4134, %v52
  %v4136 = vpop.permute.xlu0 %4135
  %v4138 = vadd.f32 %v4114, %v4124
  %v4139 = vadd.f32 %v4115, %v4124
  %v4140 = vadd.f32 %v4116, %v4128
  %v4141 = vadd.f32 %v4117, %v4128
  %v4142 = vadd.f32 %v4118, %v4132
  %v4143 = vadd.f32 %v4119, %v4132
  %v4144 = vadd.f32 %v4120, %v4136
  %v4145 = vadd.f32 %v4121, %v4136
  %4146 = vset.pattern.permute.xlu0 2
  %4147 = vperm.xlu0 %4146, %v49
  %v4148 = vpop.permute.xlu0 %4147
  %4150 = vset.pattern.permute.xlu0 2
  %4151 = vperm.xlu0 %4150, %v50
  %v4152 = vpop.permute.xlu0 %4151
  %4154 = vset.pattern.permute.xlu0 2
  %4155 = vperm.xlu0 %4154, %v51
  %v4156 = vpop.permute.xlu0 %4155
  %4158 = vset.pattern.permute.xlu0 2
  %4159 = vperm.xlu0 %4158, %v52
  %v4160 = vpop.permute.xlu0 %4159
  %v4163 = vsel %vm105, %v2446, 0
  %v4166 = vsel %vm105, %v2447, 0
  %v4169 = vsel %vm105, %v2448, 0
  %v4172 = vsel %vm105, %v2449, 0
  %4174 = vmatpush.msra.mxu0 0.0
  %4175 = vmatpush.msra.mxu0 0.0
  %4176 = vmatpush.msra.mxu0 0.0
  %4177 = vmatpush.msra.mxu0 0.0
  %4178 = vmatpush.msra.mxu0 0.0
  %4179 = vmatpush.msra.mxu0 0.0
  %4180 = vmatpush.msra.mxu0 0.0
  %4181 = vmatpush.msra.mxu0 0.0
  %4182 = vmatpush.msra.mxu0 0.0
  %4183 = vmatpush.msra.mxu0 0.0
  %4184 = vmatpush.msra.mxu0 0.0
  %4185 = vmatpush.msra.mxu0 0.0
  %v4186 = vand.u32 %v4144, 4294901760
  %4187 = vmatpush.msra.mxu0 %v4186
  %v4188 = vand.u32 %v4142, 4294901760
  %4189 = vmatpush.msra.mxu0 %v4188
  %v4190 = vand.u32 %v4140, 4294901760
  %4191 = vmatpush.msra.mxu0 %v4190
  %v4192 = vand.u32 %v4138, 4294901760
  %4193 = vmatpush.msra.mxu0 %v4192
  %v4194 = vand.u32 %v4163, 4294901760
  %v4195 = vsub.f32 %v4163, %v4194
  %v4196 = vand.u32 %v4195, 4294901760
  %v4197 = vsub.f32 %v4195, %v4196
  %v4198 = vand.u32 %v4197, 4294901760
  %4199 = vmatmul.f32.gmra.mxu0 %v4198
  %v4200 = vpop.f32.mrf.mxu0
  %v4201 = vadd.f32 %v4148, %v4200
  %v4202 = vand.u32 %v4166, 4294901760
  %v4203 = vsub.f32 %v4166, %v4202
  %v4204 = vand.u32 %v4203, 4294901760
  %v4205 = vsub.f32 %v4203, %v4204
  %v4206 = vand.u32 %v4205, 4294901760
  %4207 = vmatmul.f32.gmra.mxu0 %v4206
  %v4208 = vpop.f32.mrf.mxu0
  %v4209 = vadd.f32 %v4152, %v4208
  %v4210 = vand.u32 %v4169, 4294901760
  %v4211 = vsub.f32 %v4169, %v4210
  %v4212 = vand.u32 %v4211, 4294901760
  %v4213 = vsub.f32 %v4211, %v4212
  %v4214 = vand.u32 %v4213, 4294901760
  %4215 = vmatmul.f32.gmra.mxu0 %v4214
  %v4216 = vpop.f32.mrf.mxu0
  %v4217 = vadd.f32 %v4156, %v4216
  %v4218 = vand.u32 %v4172, 4294901760
  %v4219 = vsub.f32 %v4172, %v4218
  %v4220 = vand.u32 %v4219, 4294901760
  %v4221 = vsub.f32 %v4219, %v4220
  %v4222 = vand.u32 %v4221, 4294901760
  %4223 = vmatmul.f32.gmra.mxu0 %v4222
  %v4224 = vpop.f32.mrf.mxu0
  %v4225 = vadd.f32 %v4160, %v4224
  %4226 = vdwg.mxu0
  %4227 = vmatpush.msra.mxu0 0.0
  %4228 = vmatpush.msra.mxu0 0.0
  %4229 = vmatpush.msra.mxu0 0.0
  %4230 = vmatpush.msra.mxu0 0.0
  %4231 = vmatpush.msra.mxu0 0.0
  %4232 = vmatpush.msra.mxu0 0.0
  %4233 = vmatpush.msra.mxu0 0.0
  %4234 = vmatpush.msra.mxu0 0.0
  %4235 = vmatpush.msra.mxu0 0.0
  %4236 = vmatpush.msra.mxu0 0.0
  %4237 = vmatpush.msra.mxu0 0.0
  %4238 = vmatpush.msra.mxu0 0.0
  %v4239 = vand.u32 %v4144, 4294901760
  %v4240 = vsub.f32 %v4144, %v4239
  %v4241 = vand.u32 %v4240, 4294901760
  %v4242 = vsub.f32 %v4240, %v4241
  %v4243 = vand.u32 %v4242, 4294901760
  %4244 = vmatpush.msra.mxu0 %v4243
  %v4245 = vand.u32 %v4142, 4294901760
  %v4246 = vsub.f32 %v4142, %v4245
  %v4247 = vand.u32 %v4246, 4294901760
  %v4248 = vsub.f32 %v4246, %v4247
  %v4249 = vand.u32 %v4248, 4294901760
  %4250 = vmatpush.msra.mxu0 %v4249
  %v4251 = vand.u32 %v4140, 4294901760
  %v4252 = vsub.f32 %v4140, %v4251
  %v4253 = vand.u32 %v4252, 4294901760
  %v4254 = vsub.f32 %v4252, %v4253
  %v4255 = vand.u32 %v4254, 4294901760
  %4256 = vmatpush.msra.mxu0 %v4255
  %v4257 = vand.u32 %v4138, 4294901760
  %v4258 = vsub.f32 %v4138, %v4257
  %v4259 = vand.u32 %v4258, 4294901760
  %v4260 = vsub.f32 %v4258, %v4259
  %v4261 = vand.u32 %v4260, 4294901760
  %4262 = vmatpush.msra.mxu0 %v4261
  %v4263 = vand.u32 %v4163, 4294901760
  %4264 = vmatmul.f32.gmra.mxu0 %v4263
  %v4265 = vpop.f32.mrf.mxu0
  %v4266 = vadd.f32 %v4201, %v4265
  %v4267 = vand.u32 %v4166, 4294901760
  %4268 = vmatmul.f32.gmra.mxu0 %v4267
  %v4269 = vpop.f32.mrf.mxu0
  %v4270 = vadd.f32 %v4209, %v4269
  %v4271 = vand.u32 %v4169, 4294901760
  %4272 = vmatmul.f32.gmra.mxu0 %v4271
  %v4273 = vpop.f32.mrf.mxu0
  %v4274 = vadd.f32 %v4217, %v4273
  %v4275 = vand.u32 %v4172, 4294901760
  %4276 = vmatmul.f32.gmra.mxu0 %v4275
  %v4277 = vpop.f32.mrf.mxu0
  %v4278 = vadd.f32 %v4225, %v4277
  %4279 = vdwg.mxu0
  %4280 = vmatpush.msra.mxu0 0.0
  %4281 = vmatpush.msra.mxu0 0.0
  %4282 = vmatpush.msra.mxu0 0.0
  %4283 = vmatpush.msra.mxu0 0.0
  %4284 = vmatpush.msra.mxu0 0.0
  %4285 = vmatpush.msra.mxu0 0.0
  %4286 = vmatpush.msra.mxu0 0.0
  %4287 = vmatpush.msra.mxu0 0.0
  %4288 = vmatpush.msra.mxu0 0.0
  %4289 = vmatpush.msra.mxu0 0.0
  %4290 = vmatpush.msra.mxu0 0.0
  %4291 = vmatpush.msra.mxu0 0.0
  %v4292 = vand.u32 %v4144, 4294901760
  %v4293 = vsub.f32 %v4144, %v4292
  %4294 = vmatpush.msra.mxu0 %v4293
  %v4295 = vand.u32 %v4142, 4294901760
  %v4296 = vsub.f32 %v4142, %v4295
  %4297 = vmatpush.msra.mxu0 %v4296
  %v4298 = vand.u32 %v4140, 4294901760
  %v4299 = vsub.f32 %v4140, %v4298
  %4300 = vmatpush.msra.mxu0 %v4299
  %v4301 = vand.u32 %v4138, 4294901760
  %v4302 = vsub.f32 %v4138, %v4301
  %4303 = vmatpush.msra.mxu0 %v4302
  %v4304 = vand.u32 %v4163, 4294901760
  %v4305 = vsub.f32 %v4163, %v4304
  %4306 = vmatmul.f32.gmra.mxu0 %v4305
  %v4307 = vpop.f32.mrf.mxu0
  %v4308 = vadd.f32 %v4266, %v4307
  %v4309 = vand.u32 %v4166, 4294901760
  %v4310 = vsub.f32 %v4166, %v4309
  %4311 = vmatmul.f32.gmra.mxu0 %v4310
  %v4312 = vpop.f32.mrf.mxu0
  %v4313 = vadd.f32 %v4270, %v4312
  %v4314 = vand.u32 %v4169, 4294901760
  %v4315 = vsub.f32 %v4169, %v4314
  %4316 = vmatmul.f32.gmra.mxu0 %v4315
  %v4317 = vpop.f32.mrf.mxu0
  %v4318 = vadd.f32 %v4274, %v4317
  %v4319 = vand.u32 %v4172, 4294901760
  %v4320 = vsub.f32 %v4172, %v4319
  %4321 = vmatmul.f32.gmra.mxu0 %v4320
  %v4322 = vpop.f32.mrf.mxu0
  %v4323 = vadd.f32 %v4278, %v4322
  %4324 = vdwg.mxu0
  %4325 = vmatpush.msra.mxu0 0.0
  %4326 = vmatpush.msra.mxu0 0.0
  %4327 = vmatpush.msra.mxu0 0.0
  %4328 = vmatpush.msra.mxu0 0.0
  %4329 = vmatpush.msra.mxu0 0.0
  %4330 = vmatpush.msra.mxu0 0.0
  %4331 = vmatpush.msra.mxu0 0.0
  %4332 = vmatpush.msra.mxu0 0.0
  %4333 = vmatpush.msra.mxu0 0.0
  %4334 = vmatpush.msra.mxu0 0.0
  %4335 = vmatpush.msra.mxu0 0.0
  %4336 = vmatpush.msra.mxu0 0.0
  %v4337 = vand.u32 %v4144, 4294901760
  %4338 = vmatpush.msra.mxu0 %v4337
  %v4339 = vand.u32 %v4142, 4294901760
  %4340 = vmatpush.msra.mxu0 %v4339
  %v4341 = vand.u32 %v4140, 4294901760
  %4342 = vmatpush.msra.mxu0 %v4341
  %v4343 = vand.u32 %v4138, 4294901760
  %4344 = vmatpush.msra.mxu0 %v4343
  %v4345 = vand.u32 %v4163, 4294901760
  %v4346 = vsub.f32 %v4163, %v4345
  %v4347 = vand.u32 %v4346, 4294901760
  %4348 = vmatmul.f32.gmra.mxu0 %v4347
  %v4349 = vpop.f32.mrf.mxu0
  %v4350 = vadd.f32 %v4308, %v4349
  %v4351 = vand.u32 %v4166, 4294901760
  %v4352 = vsub.f32 %v4166, %v4351
  %v4353 = vand.u32 %v4352, 4294901760
  %4354 = vmatmul.f32.gmra.mxu0 %v4353
  %v4355 = vpop.f32.mrf.mxu0
  %v4356 = vadd.f32 %v4313, %v4355
  %v4357 = vand.u32 %v4169, 4294901760
  %v4358 = vsub.f32 %v4169, %v4357
  %v4359 = vand.u32 %v4358, 4294901760
  %4360 = vmatmul.f32.gmra.mxu0 %v4359
  %v4361 = vpop.f32.mrf.mxu0
  %v4362 = vadd.f32 %v4318, %v4361
  %v4363 = vand.u32 %v4172, 4294901760
  %v4364 = vsub.f32 %v4172, %v4363
  %v4365 = vand.u32 %v4364, 4294901760
  %4366 = vmatmul.f32.gmra.mxu0 %v4365
  %v4367 = vpop.f32.mrf.mxu0
  %v4368 = vadd.f32 %v4323, %v4367
  %4369 = vdwg.mxu0
  %4370 = vmatpush.msra.mxu0 0.0
  %4371 = vmatpush.msra.mxu0 0.0
  %4372 = vmatpush.msra.mxu0 0.0
  %4373 = vmatpush.msra.mxu0 0.0
  %4374 = vmatpush.msra.mxu0 0.0
  %4375 = vmatpush.msra.mxu0 0.0
  %4376 = vmatpush.msra.mxu0 0.0
  %4377 = vmatpush.msra.mxu0 0.0
  %4378 = vmatpush.msra.mxu0 0.0
  %4379 = vmatpush.msra.mxu0 0.0
  %4380 = vmatpush.msra.mxu0 0.0
  %4381 = vmatpush.msra.mxu0 0.0
  %v4382 = vand.u32 %v4144, 4294901760
  %v4383 = vsub.f32 %v4144, %v4382
  %v4384 = vand.u32 %v4383, 4294901760
  %4385 = vmatpush.msra.mxu0 %v4384
  %v4386 = vand.u32 %v4142, 4294901760
  %v4387 = vsub.f32 %v4142, %v4386
  %v4388 = vand.u32 %v4387, 4294901760
  %4389 = vmatpush.msra.mxu0 %v4388
  %v4390 = vand.u32 %v4140, 4294901760
  %v4391 = vsub.f32 %v4140, %v4390
  %v4392 = vand.u32 %v4391, 4294901760
  %4393 = vmatpush.msra.mxu0 %v4392
  %v4394 = vand.u32 %v4138, 4294901760
  %v4395 = vsub.f32 %v4138, %v4394
  %v4396 = vand.u32 %v4395, 4294901760
  %4397 = vmatpush.msra.mxu0 %v4396
  %v4398 = vand.u32 %v4163, 4294901760
  %4399 = vmatmul.f32.gmra.mxu0 %v4398
  %v4400 = vpop.f32.mrf.mxu0
  %v4401 = vadd.f32 %v4350, %v4400
  %v4402 = vand.u32 %v4166, 4294901760
  %4403 = vmatmul.f32.gmra.mxu0 %v4402
  %v4404 = vpop.f32.mrf.mxu0
  %v4405 = vadd.f32 %v4356, %v4404
  %v4406 = vand.u32 %v4169, 4294901760
  %4407 = vmatmul.f32.gmra.mxu0 %v4406
  %v4408 = vpop.f32.mrf.mxu0
  %v4409 = vadd.f32 %v4362, %v4408
  %v4410 = vand.u32 %v4172, 4294901760
  %4411 = vmatmul.f32.gmra.mxu0 %v4410
  %v4412 = vpop.f32.mrf.mxu0
  %v4413 = vadd.f32 %v4368, %v4412
  %4414 = vdwg.mxu0
  %4415 = vmatpush.msra.mxu0 0.0
  %4416 = vmatpush.msra.mxu0 0.0
  %4417 = vmatpush.msra.mxu0 0.0
  %4418 = vmatpush.msra.mxu0 0.0
  %4419 = vmatpush.msra.mxu0 0.0
  %4420 = vmatpush.msra.mxu0 0.0
  %4421 = vmatpush.msra.mxu0 0.0
  %4422 = vmatpush.msra.mxu0 0.0
  %4423 = vmatpush.msra.mxu0 0.0
  %4424 = vmatpush.msra.mxu0 0.0
  %4425 = vmatpush.msra.mxu0 0.0
  %4426 = vmatpush.msra.mxu0 0.0
  %v4427 = vand.u32 %v4144, 4294901760
  %4428 = vmatpush.msra.mxu0 %v4427
  %v4429 = vand.u32 %v4142, 4294901760
  %4430 = vmatpush.msra.mxu0 %v4429
  %v4431 = vand.u32 %v4140, 4294901760
  %4432 = vmatpush.msra.mxu0 %v4431
  %v4433 = vand.u32 %v4138, 4294901760
  %4434 = vmatpush.msra.mxu0 %v4433
  %v4435 = vand.u32 %v4163, 4294901760
  %4436 = vmatmul.f32.gmra.mxu0 %v4435
  %v4437 = vpop.f32.mrf.mxu0
  %v4438 = vadd.f32 %v4401, %v4437
  %v4439 = vand.u32 %v4166, 4294901760
  %4440 = vmatmul.f32.gmra.mxu0 %v4439
  %v4441 = vpop.f32.mrf.mxu0
  %v4442 = vadd.f32 %v4405, %v4441
  %v4443 = vand.u32 %v4169, 4294901760
  %4444 = vmatmul.f32.gmra.mxu0 %v4443
  %v4445 = vpop.f32.mrf.mxu0
  %v4446 = vadd.f32 %v4409, %v4445
  %v4447 = vand.u32 %v4172, 4294901760
  %4448 = vmatmul.f32.gmra.mxu0 %v4447
  %v4449 = vpop.f32.mrf.mxu0
  %v4450 = vadd.f32 %v4413, %v4449
  %4451 = vdwg.mxu0
  %4452 = vmatpush.msra.mxu0 0.0
  %4453 = vmatpush.msra.mxu0 0.0
  %4454 = vmatpush.msra.mxu0 0.0
  %4455 = vmatpush.msra.mxu0 0.0
  %4456 = vmatpush.msra.mxu0 0.0
  %4457 = vmatpush.msra.mxu0 0.0
  %4458 = vmatpush.msra.mxu0 0.0
  %4459 = vmatpush.msra.mxu0 0.0
  %4460 = vmatpush.msra.mxu0 0.0
  %4461 = vmatpush.msra.mxu0 0.0
  %4462 = vmatpush.msra.mxu0 0.0
  %4463 = vmatpush.msra.mxu0 0.0
  %v4464 = vand.u32 %v4145, 4294901760
  %4465 = vmatpush.msra.mxu0 %v4464
  %v4466 = vand.u32 %v4143, 4294901760
  %4467 = vmatpush.msra.mxu0 %v4466
  %v4468 = vand.u32 %v4141, 4294901760
  %4469 = vmatpush.msra.mxu0 %v4468
  %v4470 = vand.u32 %v4139, 4294901760
  %4471 = vmatpush.msra.mxu0 %v4470
  %v4472 = vand.u32 %v4163, 4294901760
  %v4473 = vsub.f32 %v4163, %v4472
  %v4474 = vand.u32 %v4473, 4294901760
  %v4475 = vsub.f32 %v4473, %v4474
  %v4476 = vand.u32 %v4475, 4294901760
  %4477 = vmatmul.f32.gmra.mxu0 %v4476
  %v4478 = vpop.f32.mrf.mxu0
  %v4479 = vadd.f32 %v4148, %v4478
  %v4480 = vand.u32 %v4166, 4294901760
  %v4481 = vsub.f32 %v4166, %v4480
  %v4482 = vand.u32 %v4481, 4294901760
  %v4483 = vsub.f32 %v4481, %v4482
  %v4484 = vand.u32 %v4483, 4294901760
  %4485 = vmatmul.f32.gmra.mxu0 %v4484
  %v4486 = vpop.f32.mrf.mxu0
  %v4487 = vadd.f32 %v4152, %v4486
  %v4488 = vand.u32 %v4169, 4294901760
  %v4489 = vsub.f32 %v4169, %v4488
  %v4490 = vand.u32 %v4489, 4294901760
  %v4491 = vsub.f32 %v4489, %v4490
  %v4492 = vand.u32 %v4491, 4294901760
  %4493 = vmatmul.f32.gmra.mxu0 %v4492
  %v4494 = vpop.f32.mrf.mxu0
  %v4495 = vadd.f32 %v4156, %v4494
  %v4496 = vand.u32 %v4172, 4294901760
  %v4497 = vsub.f32 %v4172, %v4496
  %v4498 = vand.u32 %v4497, 4294901760
  %v4499 = vsub.f32 %v4497, %v4498
  %v4500 = vand.u32 %v4499, 4294901760
  %4501 = vmatmul.f32.gmra.mxu0 %v4500
  %v4502 = vpop.f32.mrf.mxu0
  %v4503 = vadd.f32 %v4160, %v4502
  %4504 = vdwg.mxu0
  %4505 = vmatpush.msra.mxu0 0.0
  %4506 = vmatpush.msra.mxu0 0.0
  %4507 = vmatpush.msra.mxu0 0.0
  %4508 = vmatpush.msra.mxu0 0.0
  %4509 = vmatpush.msra.mxu0 0.0
  %4510 = vmatpush.msra.mxu0 0.0
  %4511 = vmatpush.msra.mxu0 0.0
  %4512 = vmatpush.msra.mxu0 0.0
  %4513 = vmatpush.msra.mxu0 0.0
  %4514 = vmatpush.msra.mxu0 0.0
  %4515 = vmatpush.msra.mxu0 0.0
  %4516 = vmatpush.msra.mxu0 0.0
  %v4517 = vand.u32 %v4145, 4294901760
  %v4518 = vsub.f32 %v4145, %v4517
  %v4519 = vand.u32 %v4518, 4294901760
  %v4520 = vsub.f32 %v4518, %v4519
  %v4521 = vand.u32 %v4520, 4294901760
  %4522 = vmatpush.msra.mxu0 %v4521
  %v4523 = vand.u32 %v4143, 4294901760
  %v4524 = vsub.f32 %v4143, %v4523
  %v4525 = vand.u32 %v4524, 4294901760
  %v4526 = vsub.f32 %v4524, %v4525
  %v4527 = vand.u32 %v4526, 4294901760
  %4528 = vmatpush.msra.mxu0 %v4527
  %v4529 = vand.u32 %v4141, 4294901760
  %v4530 = vsub.f32 %v4141, %v4529
  %v4531 = vand.u32 %v4530, 4294901760
  %v4532 = vsub.f32 %v4530, %v4531
  %v4533 = vand.u32 %v4532, 4294901760
  %4534 = vmatpush.msra.mxu0 %v4533
  %v4535 = vand.u32 %v4139, 4294901760
  %v4536 = vsub.f32 %v4139, %v4535
  %v4537 = vand.u32 %v4536, 4294901760
  %v4538 = vsub.f32 %v4536, %v4537
  %v4539 = vand.u32 %v4538, 4294901760
  %4540 = vmatpush.msra.mxu0 %v4539
  %v4541 = vand.u32 %v4163, 4294901760
  %4542 = vmatmul.f32.gmra.mxu0 %v4541
  %v4543 = vpop.f32.mrf.mxu0
  %v4544 = vadd.f32 %v4479, %v4543
  %v4545 = vand.u32 %v4166, 4294901760
  %4546 = vmatmul.f32.gmra.mxu0 %v4545
  %v4547 = vpop.f32.mrf.mxu0
  %v4548 = vadd.f32 %v4487, %v4547
  %v4549 = vand.u32 %v4169, 4294901760
  %4550 = vmatmul.f32.gmra.mxu0 %v4549
  %v4551 = vpop.f32.mrf.mxu0
  %v4552 = vadd.f32 %v4495, %v4551
  %v4553 = vand.u32 %v4172, 4294901760
  %4554 = vmatmul.f32.gmra.mxu0 %v4553
  %v4555 = vpop.f32.mrf.mxu0
  %v4556 = vadd.f32 %v4503, %v4555
  %4557 = vdwg.mxu0
  %4558 = vmatpush.msra.mxu0 0.0
  %4559 = vmatpush.msra.mxu0 0.0
  %4560 = vmatpush.msra.mxu0 0.0
  %4561 = vmatpush.msra.mxu0 0.0
  %4562 = vmatpush.msra.mxu0 0.0
  %4563 = vmatpush.msra.mxu0 0.0
  %4564 = vmatpush.msra.mxu0 0.0
  %4565 = vmatpush.msra.mxu0 0.0
  %4566 = vmatpush.msra.mxu0 0.0
  %4567 = vmatpush.msra.mxu0 0.0
  %4568 = vmatpush.msra.mxu0 0.0
  %4569 = vmatpush.msra.mxu0 0.0
  %v4570 = vand.u32 %v4145, 4294901760
  %v4571 = vsub.f32 %v4145, %v4570
  %4572 = vmatpush.msra.mxu0 %v4571
  %v4573 = vand.u32 %v4143, 4294901760
  %v4574 = vsub.f32 %v4143, %v4573
  %4575 = vmatpush.msra.mxu0 %v4574
  %v4576 = vand.u32 %v4141, 4294901760
  %v4577 = vsub.f32 %v4141, %v4576
  %4578 = vmatpush.msra.mxu0 %v4577
  %v4579 = vand.u32 %v4139, 4294901760
  %v4580 = vsub.f32 %v4139, %v4579
  %4581 = vmatpush.msra.mxu0 %v4580
  %v4582 = vand.u32 %v4163, 4294901760
  %v4583 = vsub.f32 %v4163, %v4582
  %4584 = vmatmul.f32.gmra.mxu0 %v4583
  %v4585 = vpop.f32.mrf.mxu0
  %v4586 = vadd.f32 %v4544, %v4585
  %v4587 = vand.u32 %v4166, 4294901760
  %v4588 = vsub.f32 %v4166, %v4587
  %4589 = vmatmul.f32.gmra.mxu0 %v4588
  %v4590 = vpop.f32.mrf.mxu0
  %v4591 = vadd.f32 %v4548, %v4590
  %v4592 = vand.u32 %v4169, 4294901760
  %v4593 = vsub.f32 %v4169, %v4592
  %4594 = vmatmul.f32.gmra.mxu0 %v4593
  %v4595 = vpop.f32.mrf.mxu0
  %v4596 = vadd.f32 %v4552, %v4595
  %v4597 = vand.u32 %v4172, 4294901760
  %v4598 = vsub.f32 %v4172, %v4597
  %4599 = vmatmul.f32.gmra.mxu0 %v4598
  %v4600 = vpop.f32.mrf.mxu0
  %v4601 = vadd.f32 %v4556, %v4600
  %4602 = vdwg.mxu0
  %4603 = vmatpush.msra.mxu0 0.0
  %4604 = vmatpush.msra.mxu0 0.0
  %4605 = vmatpush.msra.mxu0 0.0
  %4606 = vmatpush.msra.mxu0 0.0
  %4607 = vmatpush.msra.mxu0 0.0
  %4608 = vmatpush.msra.mxu0 0.0
  %4609 = vmatpush.msra.mxu0 0.0
  %4610 = vmatpush.msra.mxu0 0.0
  %4611 = vmatpush.msra.mxu0 0.0
  %4612 = vmatpush.msra.mxu0 0.0
  %4613 = vmatpush.msra.mxu0 0.0
  %4614 = vmatpush.msra.mxu0 0.0
  %v4615 = vand.u32 %v4145, 4294901760
  %4616 = vmatpush.msra.mxu0 %v4615
  %v4617 = vand.u32 %v4143, 4294901760
  %4618 = vmatpush.msra.mxu0 %v4617
  %v4619 = vand.u32 %v4141, 4294901760
  %4620 = vmatpush.msra.mxu0 %v4619
  %v4621 = vand.u32 %v4139, 4294901760
  %4622 = vmatpush.msra.mxu0 %v4621
  %v4623 = vand.u32 %v4163, 4294901760
  %v4624 = vsub.f32 %v4163, %v4623
  %v4625 = vand.u32 %v4624, 4294901760
  %4626 = vmatmul.f32.gmra.mxu0 %v4625
  %v4627 = vpop.f32.mrf.mxu0
  %v4628 = vadd.f32 %v4586, %v4627
  %v4629 = vand.u32 %v4166, 4294901760
  %v4630 = vsub.f32 %v4166, %v4629
  %v4631 = vand.u32 %v4630, 4294901760
  %4632 = vmatmul.f32.gmra.mxu0 %v4631
  %v4633 = vpop.f32.mrf.mxu0
  %v4634 = vadd.f32 %v4591, %v4633
  %v4635 = vand.u32 %v4169, 4294901760
  %v4636 = vsub.f32 %v4169, %v4635
  %v4637 = vand.u32 %v4636, 4294901760
  %4638 = vmatmul.f32.gmra.mxu0 %v4637
  %v4639 = vpop.f32.mrf.mxu0
  %v4640 = vadd.f32 %v4596, %v4639
  %v4641 = vand.u32 %v4172, 4294901760
  %v4642 = vsub.f32 %v4172, %v4641
  %v4643 = vand.u32 %v4642, 4294901760
  %4644 = vmatmul.f32.gmra.mxu0 %v4643
  %v4645 = vpop.f32.mrf.mxu0
  %v4646 = vadd.f32 %v4601, %v4645
  %4647 = vdwg.mxu0
  %4648 = vmatpush.msra.mxu0 0.0
  %4649 = vmatpush.msra.mxu0 0.0
  %4650 = vmatpush.msra.mxu0 0.0
  %4651 = vmatpush.msra.mxu0 0.0
  %4652 = vmatpush.msra.mxu0 0.0
  %4653 = vmatpush.msra.mxu0 0.0
  %4654 = vmatpush.msra.mxu0 0.0
  %4655 = vmatpush.msra.mxu0 0.0
  %4656 = vmatpush.msra.mxu0 0.0
  %4657 = vmatpush.msra.mxu0 0.0
  %4658 = vmatpush.msra.mxu0 0.0
  %4659 = vmatpush.msra.mxu0 0.0
  %v4660 = vand.u32 %v4145, 4294901760
  %v4661 = vsub.f32 %v4145, %v4660
  %v4662 = vand.u32 %v4661, 4294901760
  %4663 = vmatpush.msra.mxu0 %v4662
  %v4664 = vand.u32 %v4143, 4294901760
  %v4665 = vsub.f32 %v4143, %v4664
  %v4666 = vand.u32 %v4665, 4294901760
  %4667 = vmatpush.msra.mxu0 %v4666
  %v4668 = vand.u32 %v4141, 4294901760
  %v4669 = vsub.f32 %v4141, %v4668
  %v4670 = vand.u32 %v4669, 4294901760
  %4671 = vmatpush.msra.mxu0 %v4670
  %v4672 = vand.u32 %v4139, 4294901760
  %v4673 = vsub.f32 %v4139, %v4672
  %v4674 = vand.u32 %v4673, 4294901760
  %4675 = vmatpush.msra.mxu0 %v4674
  %v4676 = vand.u32 %v4163, 4294901760
  %4677 = vmatmul.f32.gmra.mxu0 %v4676
  %v4678 = vpop.f32.mrf.mxu0
  %v4679 = vadd.f32 %v4628, %v4678
  %v4680 = vand.u32 %v4166, 4294901760
  %4681 = vmatmul.f32.gmra.mxu0 %v4680
  %v4682 = vpop.f32.mrf.mxu0
  %v4683 = vadd.f32 %v4634, %v4682
  %v4684 = vand.u32 %v4169, 4294901760
  %4685 = vmatmul.f32.gmra.mxu0 %v4684
  %v4686 = vpop.f32.mrf.mxu0
  %v4687 = vadd.f32 %v4640, %v4686
  %v4688 = vand.u32 %v4172, 4294901760
  %4689 = vmatmul.f32.gmra.mxu0 %v4688
  %v4690 = vpop.f32.mrf.mxu0
  %v4691 = vadd.f32 %v4646, %v4690
  %4692 = vdwg.mxu0
  %4693 = vmatpush.msra.mxu0 0.0
  %4694 = vmatpush.msra.mxu0 0.0
  %4695 = vmatpush.msra.mxu0 0.0
  %4696 = vmatpush.msra.mxu0 0.0
  %4697 = vmatpush.msra.mxu0 0.0
  %4698 = vmatpush.msra.mxu0 0.0
  %4699 = vmatpush.msra.mxu0 0.0
  %4700 = vmatpush.msra.mxu0 0.0
  %4701 = vmatpush.msra.mxu0 0.0
  %4702 = vmatpush.msra.mxu0 0.0
  %4703 = vmatpush.msra.mxu0 0.0
  %4704 = vmatpush.msra.mxu0 0.0
  %v4705 = vand.u32 %v4145, 4294901760
  %4706 = vmatpush.msra.mxu0 %v4705
  %v4707 = vand.u32 %v4143, 4294901760
  %4708 = vmatpush.msra.mxu0 %v4707
  %v4709 = vand.u32 %v4141, 4294901760
  %4710 = vmatpush.msra.mxu0 %v4709
  %v4711 = vand.u32 %v4139, 4294901760
  %4712 = vmatpush.msra.mxu0 %v4711
  %v4713 = vand.u32 %v4163, 4294901760
  %4714 = vmatmul.f32.gmra.mxu0 %v4713
  %v4715 = vpop.f32.mrf.mxu0
  %v4716 = vadd.f32 %v4679, %v4715
  %v4717 = vand.u32 %v4166, 4294901760
  %4718 = vmatmul.f32.gmra.mxu0 %v4717
  %v4719 = vpop.f32.mrf.mxu0
  %v4720 = vadd.f32 %v4683, %v4719
  %v4721 = vand.u32 %v4169, 4294901760
  %4722 = vmatmul.f32.gmra.mxu0 %v4721
  %v4723 = vpop.f32.mrf.mxu0
  %v4724 = vadd.f32 %v4687, %v4723
  %v4725 = vand.u32 %v4172, 4294901760
  %4726 = vmatmul.f32.gmra.mxu0 %v4725
  %v4727 = vpop.f32.mrf.mxu0
  %v4728 = vadd.f32 %v4691, %v4727
  %4729 = vdwg.mxu0
  %v4730 = vadd.f32 %v4438, %v754
  %v4731 = vadd.f32 %v4716, %v1312
  %v4732 = vadd.f32 %v4442, %v758
  %v4733 = vadd.f32 %v4720, %v1316
  %v4734 = vadd.f32 %v4446, %v762
  %v4735 = vadd.f32 %v4724, %v1320
  %v4736 = vadd.f32 %v4450, %v766
  %v4737 = vadd.f32 %v4728, %v1324
  %vm4738 = vcmp.ge.f32.partialorder %v4730, 0.0
  %vm4739 = vcmp.ge.f32.partialorder %v4731, 0.0
  %vm4740 = vcmp.ge.f32.partialorder %v4732, 0.0
  %vm4741 = vcmp.ge.f32.partialorder %v4733, 0.0
  %vm4742 = vcmp.ge.f32.partialorder %v4734, 0.0
  %vm4743 = vcmp.ge.f32.partialorder %v4735, 0.0
  %vm4744 = vcmp.ge.f32.partialorder %v4736, 0.0
  %vm4745 = vcmp.ge.f32.partialorder %v4737, 0.0
  %v4746 = vmul.f32 %v4730, 0.01
  %v4747 = vmul.f32 %v4731, 0.01
  %v4748 = vmul.f32 %v4732, 0.01
  %v4749 = vmul.f32 %v4733, 0.01
  %v4750 = vmul.f32 %v4734, 0.01
  %v4751 = vmul.f32 %v4735, 0.01
  %v4752 = vmul.f32 %v4736, 0.01
  %v4753 = vmul.f32 %v4737, 0.01
  %v4754 = vsel %vm4738, %v4730, %v4746
  %v4755 = vsel %vm4739, %v4731, %v4747
  %v4756 = vsel %vm4740, %v4732, %v4748
  %v4757 = vsel %vm4741, %v4733, %v4749
  %v4758 = vsel %vm4742, %v4734, %v4750
  %v4759 = vsel %vm4743, %v4735, %v4751
  %v4760 = vsel %vm4744, %v4736, %v4752
  %v4761 = vsel %vm4745, %v4737, %v4753
  %4762 = vmatpush.msra.mxu0 1.0
  %4763 = vmatpush.msra.mxu0 1.0
  %4764 = vmatpush.msra.mxu0 1.0
  %4765 = vmatpush.msra.mxu0 1.0
  %4766 = vmatpush.msra.mxu0 1.0
  %4767 = vmatpush.msra.mxu0 1.0
  %4768 = vmatpush.msra.mxu0 1.0
  %4769 = vmatpush.msra.mxu0 1.0
  %4770 = vmatpush.msra.mxu0 1.0
  %4771 = vmatpush.msra.mxu0 1.0
  %4772 = vmatpush.msra.mxu0 1.0
  %4773 = vmatpush.msra.mxu0 1.0
  %4774 = vmatpush.msra.mxu0 1.0
  %4775 = vmatpush.msra.mxu0 1.0
  %4776 = vmatpush.msra.mxu0 1.0
  %4777 = vmatpush.msra.mxu0 1.0
  %v4778 = vand.u32 %v4754, 4294901760
  %v4779 = vsub.f32 %v4754, %v4778
  %v4780 = vand.u32 %v4779, 4294901760
  %v4781 = vsub.f32 %v4779, %v4780
  %v4782 = vand.u32 %v4781, 4294901760
  %4783 = vmatmul.f32.gmra.mxu0 %v4782
  %v4784 = vpop.f32.mrf.mxu0
  %v4785 = vadd.f32 0.0, %v4784
  %v4786 = vand.u32 %v4756, 4294901760
  %v4787 = vsub.f32 %v4756, %v4786
  %v4788 = vand.u32 %v4787, 4294901760
  %v4789 = vsub.f32 %v4787, %v4788
  %v4790 = vand.u32 %v4789, 4294901760
  %4791 = vmatmul.f32.gmra.mxu0 %v4790
  %v4792 = vpop.f32.mrf.mxu0
  %v4793 = vadd.f32 0.0, %v4792
  %v4794 = vand.u32 %v4758, 4294901760
  %v4795 = vsub.f32 %v4758, %v4794
  %v4796 = vand.u32 %v4795, 4294901760
  %v4797 = vsub.f32 %v4795, %v4796
  %v4798 = vand.u32 %v4797, 4294901760
  %4799 = vmatmul.f32.gmra.mxu0 %v4798
  %v4800 = vpop.f32.mrf.mxu0
  %v4801 = vadd.f32 0.0, %v4800
  %v4802 = vand.u32 %v4760, 4294901760
  %v4803 = vsub.f32 %v4760, %v4802
  %v4804 = vand.u32 %v4803, 4294901760
  %v4805 = vsub.f32 %v4803, %v4804
  %v4806 = vand.u32 %v4805, 4294901760
  %4807 = vmatmul.f32.gmra.mxu0 %v4806
  %v4808 = vpop.f32.mrf.mxu0
  %v4809 = vadd.f32 0.0, %v4808
  %4810 = vdwg.mxu0
  %4811 = vmatpush.msra.mxu0 0.0
  %4812 = vmatpush.msra.mxu0 0.0
  %4813 = vmatpush.msra.mxu0 0.0
  %4814 = vmatpush.msra.mxu0 0.0
  %4815 = vmatpush.msra.mxu0 0.0
  %4816 = vmatpush.msra.mxu0 0.0
  %4817 = vmatpush.msra.mxu0 0.0
  %4818 = vmatpush.msra.mxu0 0.0
  %4819 = vmatpush.msra.mxu0 0.0
  %4820 = vmatpush.msra.mxu0 0.0
  %4821 = vmatpush.msra.mxu0 0.0
  %4822 = vmatpush.msra.mxu0 0.0
  %4823 = vmatpush.msra.mxu0 0.0
  %4824 = vmatpush.msra.mxu0 0.0
  %4825 = vmatpush.msra.mxu0 0.0
  %4826 = vmatpush.msra.mxu0 0.0
  %v4827 = vand.u32 %v4754, 4294901760
  %4828 = vmatmul.f32.gmra.mxu0 %v4827
  %v4829 = vpop.f32.mrf.mxu0
  %v4830 = vadd.f32 %v4785, %v4829
  %v4831 = vand.u32 %v4756, 4294901760
  %4832 = vmatmul.f32.gmra.mxu0 %v4831
  %v4833 = vpop.f32.mrf.mxu0
  %v4834 = vadd.f32 %v4793, %v4833
  %v4835 = vand.u32 %v4758, 4294901760
  %4836 = vmatmul.f32.gmra.mxu0 %v4835
  %v4837 = vpop.f32.mrf.mxu0
  %v4838 = vadd.f32 %v4801, %v4837
  %v4839 = vand.u32 %v4760, 4294901760
  %4840 = vmatmul.f32.gmra.mxu0 %v4839
  %v4841 = vpop.f32.mrf.mxu0
  %v4842 = vadd.f32 %v4809, %v4841
  %4843 = vdwg.mxu0
  %4844 = vmatpush.msra.mxu0 0.0
  %4845 = vmatpush.msra.mxu0 0.0
  %4846 = vmatpush.msra.mxu0 0.0
  %4847 = vmatpush.msra.mxu0 0.0
  %4848 = vmatpush.msra.mxu0 0.0
  %4849 = vmatpush.msra.mxu0 0.0
  %4850 = vmatpush.msra.mxu0 0.0
  %4851 = vmatpush.msra.mxu0 0.0
  %4852 = vmatpush.msra.mxu0 0.0
  %4853 = vmatpush.msra.mxu0 0.0
  %4854 = vmatpush.msra.mxu0 0.0
  %4855 = vmatpush.msra.mxu0 0.0
  %4856 = vmatpush.msra.mxu0 0.0
  %4857 = vmatpush.msra.mxu0 0.0
  %4858 = vmatpush.msra.mxu0 0.0
  %4859 = vmatpush.msra.mxu0 0.0
  %v4860 = vand.u32 %v4754, 4294901760
  %v4861 = vsub.f32 %v4754, %v4860
  %4862 = vmatmul.f32.gmra.mxu0 %v4861
  %v4863 = vpop.f32.mrf.mxu0
  %v4864 = vadd.f32 %v4830, %v4863
  %v4865 = vand.u32 %v4756, 4294901760
  %v4866 = vsub.f32 %v4756, %v4865
  %4867 = vmatmul.f32.gmra.mxu0 %v4866
  %v4868 = vpop.f32.mrf.mxu0
  %v4869 = vadd.f32 %v4834, %v4868
  %v4870 = vand.u32 %v4758, 4294901760
  %v4871 = vsub.f32 %v4758, %v4870
  %4872 = vmatmul.f32.gmra.mxu0 %v4871
  %v4873 = vpop.f32.mrf.mxu0
  %v4874 = vadd.f32 %v4838, %v4873
  %v4875 = vand.u32 %v4760, 4294901760
  %v4876 = vsub.f32 %v4760, %v4875
  %4877 = vmatmul.f32.gmra.mxu0 %v4876
  %v4878 = vpop.f32.mrf.mxu0
  %v4879 = vadd.f32 %v4842, %v4878
  %4880 = vdwg.mxu0
  %4881 = vmatpush.msra.mxu0 1.0
  %4882 = vmatpush.msra.mxu0 1.0
  %4883 = vmatpush.msra.mxu0 1.0
  %4884 = vmatpush.msra.mxu0 1.0
  %4885 = vmatpush.msra.mxu0 1.0
  %4886 = vmatpush.msra.mxu0 1.0
  %4887 = vmatpush.msra.mxu0 1.0
  %4888 = vmatpush.msra.mxu0 1.0
  %4889 = vmatpush.msra.mxu0 1.0
  %4890 = vmatpush.msra.mxu0 1.0
  %4891 = vmatpush.msra.mxu0 1.0
  %4892 = vmatpush.msra.mxu0 1.0
  %4893 = vmatpush.msra.mxu0 1.0
  %4894 = vmatpush.msra.mxu0 1.0
  %4895 = vmatpush.msra.mxu0 1.0
  %4896 = vmatpush.msra.mxu0 1.0
  %v4897 = vand.u32 %v4754, 4294901760
  %v4898 = vsub.f32 %v4754, %v4897
  %v4899 = vand.u32 %v4898, 4294901760
  %4900 = vmatmul.f32.gmra.mxu0 %v4899
  %v4901 = vpop.f32.mrf.mxu0
  %v4902 = vadd.f32 %v4864, %v4901
  %v4903 = vand.u32 %v4756, 4294901760
  %v4904 = vsub.f32 %v4756, %v4903
  %v4905 = vand.u32 %v4904, 4294901760
  %4906 = vmatmul.f32.gmra.mxu0 %v4905
  %v4907 = vpop.f32.mrf.mxu0
  %v4908 = vadd.f32 %v4869, %v4907
  %v4909 = vand.u32 %v4758, 4294901760
  %v4910 = vsub.f32 %v4758, %v4909
  %v4911 = vand.u32 %v4910, 4294901760
  %4912 = vmatmul.f32.gmra.mxu0 %v4911
  %v4913 = vpop.f32.mrf.mxu0
  %v4914 = vadd.f32 %v4874, %v4913
  %v4915 = vand.u32 %v4760, 4294901760
  %v4916 = vsub.f32 %v4760, %v4915
  %v4917 = vand.u32 %v4916, 4294901760
  %4918 = vmatmul.f32.gmra.mxu0 %v4917
  %v4919 = vpop.f32.mrf.mxu0
  %v4920 = vadd.f32 %v4879, %v4919
  %4921 = vdwg.mxu0
  %4922 = vmatpush.msra.mxu0 0.0
  %4923 = vmatpush.msra.mxu0 0.0
  %4924 = vmatpush.msra.mxu0 0.0
  %4925 = vmatpush.msra.mxu0 0.0
  %4926 = vmatpush.msra.mxu0 0.0
  %4927 = vmatpush.msra.mxu0 0.0
  %4928 = vmatpush.msra.mxu0 0.0
  %4929 = vmatpush.msra.mxu0 0.0
  %4930 = vmatpush.msra.mxu0 0.0
  %4931 = vmatpush.msra.mxu0 0.0
  %4932 = vmatpush.msra.mxu0 0.0
  %4933 = vmatpush.msra.mxu0 0.0
  %4934 = vmatpush.msra.mxu0 0.0
  %4935 = vmatpush.msra.mxu0 0.0
  %4936 = vmatpush.msra.mxu0 0.0
  %4937 = vmatpush.msra.mxu0 0.0
  %v4938 = vand.u32 %v4754, 4294901760
  %4939 = vmatmul.f32.gmra.mxu0 %v4938
  %v4940 = vpop.f32.mrf.mxu0
  %v4941 = vadd.f32 %v4902, %v4940
  %v4942 = vand.u32 %v4756, 4294901760
  %4943 = vmatmul.f32.gmra.mxu0 %v4942
  %v4944 = vpop.f32.mrf.mxu0
  %v4945 = vadd.f32 %v4908, %v4944
  %v4946 = vand.u32 %v4758, 4294901760
  %4947 = vmatmul.f32.gmra.mxu0 %v4946
  %v4948 = vpop.f32.mrf.mxu0
  %v4949 = vadd.f32 %v4914, %v4948
  %v4950 = vand.u32 %v4760, 4294901760
  %4951 = vmatmul.f32.gmra.mxu0 %v4950
  %v4952 = vpop.f32.mrf.mxu0
  %v4953 = vadd.f32 %v4920, %v4952
  %4954 = vdwg.mxu0
  %4955 = vmatpush.msra.mxu0 1.0
  %4956 = vmatpush.msra.mxu0 1.0
  %4957 = vmatpush.msra.mxu0 1.0
  %4958 = vmatpush.msra.mxu0 1.0
  %4959 = vmatpush.msra.mxu0 1.0
  %4960 = vmatpush.msra.mxu0 1.0
  %4961 = vmatpush.msra.mxu0 1.0
  %4962 = vmatpush.msra.mxu0 1.0
  %4963 = vmatpush.msra.mxu0 1.0
  %4964 = vmatpush.msra.mxu0 1.0
  %4965 = vmatpush.msra.mxu0 1.0
  %4966 = vmatpush.msra.mxu0 1.0
  %4967 = vmatpush.msra.mxu0 1.0
  %4968 = vmatpush.msra.mxu0 1.0
  %4969 = vmatpush.msra.mxu0 1.0
  %4970 = vmatpush.msra.mxu0 1.0
  %v4971 = vand.u32 %v4754, 4294901760
  %4972 = vmatmul.f32.gmra.mxu0 %v4971
  %v4973 = vpop.f32.mrf.mxu0
  %v4974 = vadd.f32 %v4941, %v4973
  %v4975 = vand.u32 %v4756, 4294901760
  %4976 = vmatmul.f32.gmra.mxu0 %v4975
  %v4977 = vpop.f32.mrf.mxu0
  %v4978 = vadd.f32 %v4945, %v4977
  %v4979 = vand.u32 %v4758, 4294901760
  %4980 = vmatmul.f32.gmra.mxu0 %v4979
  %v4981 = vpop.f32.mrf.mxu0
  %v4982 = vadd.f32 %v4949, %v4981
  %v4983 = vand.u32 %v4760, 4294901760
  %4984 = vmatmul.f32.gmra.mxu0 %v4983
  %v4985 = vpop.f32.mrf.mxu0
  %v4986 = vadd.f32 %v4953, %v4985
  %4987 = vdwg.mxu0
  %4988 = vmatpush.msra.mxu0 1.0
  %4989 = vmatpush.msra.mxu0 1.0
  %4990 = vmatpush.msra.mxu0 1.0
  %4991 = vmatpush.msra.mxu0 1.0
  %4992 = vmatpush.msra.mxu0 1.0
  %4993 = vmatpush.msra.mxu0 1.0
  %4994 = vmatpush.msra.mxu0 1.0
  %4995 = vmatpush.msra.mxu0 1.0
  %4996 = vmatpush.msra.mxu0 1.0
  %4997 = vmatpush.msra.mxu0 1.0
  %4998 = vmatpush.msra.mxu0 1.0
  %4999 = vmatpush.msra.mxu0 1.0
  %5000 = vmatpush.msra.mxu0 1.0
  %5001 = vmatpush.msra.mxu0 1.0
  %5002 = vmatpush.msra.mxu0 1.0
  %5003 = vmatpush.msra.mxu0 1.0
  %v5004 = vand.u32 %v4755, 4294901760
  %v5005 = vsub.f32 %v4755, %v5004
  %v5006 = vand.u32 %v5005, 4294901760
  %v5007 = vsub.f32 %v5005, %v5006
  %v5008 = vand.u32 %v5007, 4294901760
  %5009 = vmatmul.f32.gmra.mxu0 %v5008
  %v5010 = vpop.f32.mrf.mxu0
  %v5011 = vadd.f32 %v4974, %v5010
  %v5012 = vand.u32 %v4757, 4294901760
  %v5013 = vsub.f32 %v4757, %v5012
  %v5014 = vand.u32 %v5013, 4294901760
  %v5015 = vsub.f32 %v5013, %v5014
  %v5016 = vand.u32 %v5015, 4294901760
  %5017 = vmatmul.f32.gmra.mxu0 %v5016
  %v5018 = vpop.f32.mrf.mxu0
  %v5019 = vadd.f32 %v4978, %v5018
  %v5020 = vand.u32 %v4759, 4294901760
  %v5021 = vsub.f32 %v4759, %v5020
  %v5022 = vand.u32 %v5021, 4294901760
  %v5023 = vsub.f32 %v5021, %v5022
  %v5024 = vand.u32 %v5023, 4294901760
  %5025 = vmatmul.f32.gmra.mxu0 %v5024
  %v5026 = vpop.f32.mrf.mxu0
  %v5027 = vadd.f32 %v4982, %v5026
  %v5028 = vand.u32 %v4761, 4294901760
  %v5029 = vsub.f32 %v4761, %v5028
  %v5030 = vand.u32 %v5029, 4294901760
  %v5031 = vsub.f32 %v5029, %v5030
  %v5032 = vand.u32 %v5031, 4294901760
  %5033 = vmatmul.f32.gmra.mxu0 %v5032
  %v5034 = vpop.f32.mrf.mxu0
  %v5035 = vadd.f32 %v4986, %v5034
  %5036 = vdwg.mxu0
  %5037 = vmatpush.msra.mxu0 0.0
  %5038 = vmatpush.msra.mxu0 0.0
  %5039 = vmatpush.msra.mxu0 0.0
  %5040 = vmatpush.msra.mxu0 0.0
  %5041 = vmatpush.msra.mxu0 0.0
  %5042 = vmatpush.msra.mxu0 0.0
  %5043 = vmatpush.msra.mxu0 0.0
  %5044 = vmatpush.msra.mxu0 0.0
  %5045 = vmatpush.msra.mxu0 0.0
  %5046 = vmatpush.msra.mxu0 0.0
  %5047 = vmatpush.msra.mxu0 0.0
  %5048 = vmatpush.msra.mxu0 0.0
  %5049 = vmatpush.msra.mxu0 0.0
  %5050 = vmatpush.msra.mxu0 0.0
  %5051 = vmatpush.msra.mxu0 0.0
  %5052 = vmatpush.msra.mxu0 0.0
  %v5053 = vand.u32 %v4755, 4294901760
  %5054 = vmatmul.f32.gmra.mxu0 %v5053
  %v5055 = vpop.f32.mrf.mxu0
  %v5056 = vadd.f32 %v5011, %v5055
  %v5057 = vand.u32 %v4757, 4294901760
  %5058 = vmatmul.f32.gmra.mxu0 %v5057
  %v5059 = vpop.f32.mrf.mxu0
  %v5060 = vadd.f32 %v5019, %v5059
  %v5061 = vand.u32 %v4759, 4294901760
  %5062 = vmatmul.f32.gmra.mxu0 %v5061
  %v5063 = vpop.f32.mrf.mxu0
  %v5064 = vadd.f32 %v5027, %v5063
  %v5065 = vand.u32 %v4761, 4294901760
  %5066 = vmatmul.f32.gmra.mxu0 %v5065
  %v5067 = vpop.f32.mrf.mxu0
  %v5068 = vadd.f32 %v5035, %v5067
  %5069 = vdwg.mxu0
  %5070 = vmatpush.msra.mxu0 0.0
  %5071 = vmatpush.msra.mxu0 0.0
  %5072 = vmatpush.msra.mxu0 0.0
  %5073 = vmatpush.msra.mxu0 0.0
  %5074 = vmatpush.msra.mxu0 0.0
  %5075 = vmatpush.msra.mxu0 0.0
  %5076 = vmatpush.msra.mxu0 0.0
  %5077 = vmatpush.msra.mxu0 0.0
  %5078 = vmatpush.msra.mxu0 0.0
  %5079 = vmatpush.msra.mxu0 0.0
  %5080 = vmatpush.msra.mxu0 0.0
  %5081 = vmatpush.msra.mxu0 0.0
  %5082 = vmatpush.msra.mxu0 0.0
  %5083 = vmatpush.msra.mxu0 0.0
  %5084 = vmatpush.msra.mxu0 0.0
  %5085 = vmatpush.msra.mxu0 0.0
  %v5086 = vand.u32 %v4755, 4294901760
  %v5087 = vsub.f32 %v4755, %v5086
  %5088 = vmatmul.f32.gmra.mxu0 %v5087
  %v5089 = vpop.f32.mrf.mxu0
  %v5090 = vadd.f32 %v5056, %v5089
  %v5091 = vand.u32 %v4757, 4294901760
  %v5092 = vsub.f32 %v4757, %v5091
  %5093 = vmatmul.f32.gmra.mxu0 %v5092
  %v5094 = vpop.f32.mrf.mxu0
  %v5095 = vadd.f32 %v5060, %v5094
  %v5096 = vand.u32 %v4759, 4294901760
  %v5097 = vsub.f32 %v4759, %v5096
  %5098 = vmatmul.f32.gmra.mxu0 %v5097
  %v5099 = vpop.f32.mrf.mxu0
  %v5100 = vadd.f32 %v5064, %v5099
  %v5101 = vand.u32 %v4761, 4294901760
  %v5102 = vsub.f32 %v4761, %v5101
  %5103 = vmatmul.f32.gmra.mxu0 %v5102
  %v5104 = vpop.f32.mrf.mxu0
  %v5105 = vadd.f32 %v5068, %v5104
  %5106 = vdwg.mxu0
  %5107 = vmatpush.msra.mxu0 1.0
  %5108 = vmatpush.msra.mxu0 1.0
  %5109 = vmatpush.msra.mxu0 1.0
  %5110 = vmatpush.msra.mxu0 1.0
  %5111 = vmatpush.msra.mxu0 1.0
  %5112 = vmatpush.msra.mxu0 1.0
  %5113 = vmatpush.msra.mxu0 1.0
  %5114 = vmatpush.msra.mxu0 1.0
  %5115 = vmatpush.msra.mxu0 1.0
  %5116 = vmatpush.msra.mxu0 1.0
  %5117 = vmatpush.msra.mxu0 1.0
  %5118 = vmatpush.msra.mxu0 1.0
  %5119 = vmatpush.msra.mxu0 1.0
  %5120 = vmatpush.msra.mxu0 1.0
  %5121 = vmatpush.msra.mxu0 1.0
  %5122 = vmatpush.msra.mxu0 1.0
  %v5123 = vand.u32 %v4755, 4294901760
  %v5124 = vsub.f32 %v4755, %v5123
  %v5125 = vand.u32 %v5124, 4294901760
  %5126 = vmatmul.f32.gmra.mxu0 %v5125
  %v5127 = vpop.f32.mrf.mxu0
  %v5128 = vadd.f32 %v5090, %v5127
  %v5129 = vand.u32 %v4757, 4294901760
  %v5130 = vsub.f32 %v4757, %v5129
  %v5131 = vand.u32 %v5130, 4294901760
  %5132 = vmatmul.f32.gmra.mxu0 %v5131
  %v5133 = vpop.f32.mrf.mxu0
  %v5134 = vadd.f32 %v5095, %v5133
  %v5135 = vand.u32 %v4759, 4294901760
  %v5136 = vsub.f32 %v4759, %v5135
  %v5137 = vand.u32 %v5136, 4294901760
  %5138 = vmatmul.f32.gmra.mxu0 %v5137
  %v5139 = vpop.f32.mrf.mxu0
  %v5140 = vadd.f32 %v5100, %v5139
  %v5141 = vand.u32 %v4761, 4294901760
  %v5142 = vsub.f32 %v4761, %v5141
  %v5143 = vand.u32 %v5142, 4294901760
  %5144 = vmatmul.f32.gmra.mxu0 %v5143
  %v5145 = vpop.f32.mrf.mxu0
  %v5146 = vadd.f32 %v5105, %v5145
  %5147 = vdwg.mxu0
  %5148 = vmatpush.msra.mxu0 0.0
  %5149 = vmatpush.msra.mxu0 0.0
  %5150 = vmatpush.msra.mxu0 0.0
  %5151 = vmatpush.msra.mxu0 0.0
  %5152 = vmatpush.msra.mxu0 0.0
  %5153 = vmatpush.msra.mxu0 0.0
  %5154 = vmatpush.msra.mxu0 0.0
  %5155 = vmatpush.msra.mxu0 0.0
  %5156 = vmatpush.msra.mxu0 0.0
  %5157 = vmatpush.msra.mxu0 0.0
  %5158 = vmatpush.msra.mxu0 0.0
  %5159 = vmatpush.msra.mxu0 0.0
  %5160 = vmatpush.msra.mxu0 0.0
  %5161 = vmatpush.msra.mxu0 0.0
  %5162 = vmatpush.msra.mxu0 0.0
  %5163 = vmatpush.msra.mxu0 0.0
  %v5164 = vand.u32 %v4755, 4294901760
  %5165 = vmatmul.f32.gmra.mxu0 %v5164
  %v5166 = vpop.f32.mrf.mxu0
  %v5167 = vadd.f32 %v5128, %v5166
  %v5168 = vand.u32 %v4757, 4294901760
  %5169 = vmatmul.f32.gmra.mxu0 %v5168
  %v5170 = vpop.f32.mrf.mxu0
  %v5171 = vadd.f32 %v5134, %v5170
  %v5172 = vand.u32 %v4759, 4294901760
  %5173 = vmatmul.f32.gmra.mxu0 %v5172
  %v5174 = vpop.f32.mrf.mxu0
  %v5175 = vadd.f32 %v5140, %v5174
  %v5176 = vand.u32 %v4761, 4294901760
  %5177 = vmatmul.f32.gmra.mxu0 %v5176
  %v5178 = vpop.f32.mrf.mxu0
  %v5179 = vadd.f32 %v5146, %v5178
  %5180 = vdwg.mxu0
  %5181 = vmatpush.msra.mxu0 1.0
  %5182 = vmatpush.msra.mxu0 1.0
  %5183 = vmatpush.msra.mxu0 1.0
  %5184 = vmatpush.msra.mxu0 1.0
  %5185 = vmatpush.msra.mxu0 1.0
  %5186 = vmatpush.msra.mxu0 1.0
  %5187 = vmatpush.msra.mxu0 1.0
  %5188 = vmatpush.msra.mxu0 1.0
  %5189 = vmatpush.msra.mxu0 1.0
  %5190 = vmatpush.msra.mxu0 1.0
  %5191 = vmatpush.msra.mxu0 1.0
  %5192 = vmatpush.msra.mxu0 1.0
  %5193 = vmatpush.msra.mxu0 1.0
  %5194 = vmatpush.msra.mxu0 1.0
  %5195 = vmatpush.msra.mxu0 1.0
  %5196 = vmatpush.msra.mxu0 1.0
  %v5197 = vand.u32 %v4755, 4294901760
  %5198 = vmatmul.f32.gmra.mxu0 %v5197
  %v5199 = vpop.f32.mrf.mxu0
  %v5200 = vadd.f32 %v5167, %v5199
  %v5201 = vand.u32 %v4757, 4294901760
  %5202 = vmatmul.f32.gmra.mxu0 %v5201
  %v5203 = vpop.f32.mrf.mxu0
  %v5204 = vadd.f32 %v5171, %v5203
  %v5205 = vand.u32 %v4759, 4294901760
  %5206 = vmatmul.f32.gmra.mxu0 %v5205
  %v5207 = vpop.f32.mrf.mxu0
  %v5208 = vadd.f32 %v5175, %v5207
  %v5209 = vand.u32 %v4761, 4294901760
  %5210 = vmatmul.f32.gmra.mxu0 %v5209
  %v5211 = vpop.f32.mrf.mxu0
  %v5212 = vadd.f32 %v5179, %v5211
  %5213 = vdwg.mxu0
  %v5214 = vmul.f32 %v4754, %v4754
  %v5215 = vmul.f32 %v4755, %v4755
  %v5216 = vmul.f32 %v4756, %v4756
  %v5217 = vmul.f32 %v4757, %v4757
  %v5218 = vmul.f32 %v4758, %v4758
  %v5219 = vmul.f32 %v4759, %v4759
  %v5220 = vmul.f32 %v4760, %v4760
  %v5221 = vmul.f32 %v4761, %v4761
  %5222 = vmatpush.msra.mxu0 1.0
  %5223 = vmatpush.msra.mxu0 1.0
  %5224 = vmatpush.msra.mxu0 1.0
  %5225 = vmatpush.msra.mxu0 1.0
  %5226 = vmatpush.msra.mxu0 1.0
  %5227 = vmatpush.msra.mxu0 1.0
  %5228 = vmatpush.msra.mxu0 1.0
  %5229 = vmatpush.msra.mxu0 1.0
  %5230 = vmatpush.msra.mxu0 1.0
  %5231 = vmatpush.msra.mxu0 1.0
  %5232 = vmatpush.msra.mxu0 1.0
  %5233 = vmatpush.msra.mxu0 1.0
  %5234 = vmatpush.msra.mxu0 1.0
  %5235 = vmatpush.msra.mxu0 1.0
  %5236 = vmatpush.msra.mxu0 1.0
  %5237 = vmatpush.msra.mxu0 1.0
  %v5238 = vand.u32 %v5214, 4294901760
  %v5239 = vsub.f32 %v5214, %v5238
  %v5240 = vand.u32 %v5239, 4294901760
  %v5241 = vsub.f32 %v5239, %v5240
  %v5242 = vand.u32 %v5241, 4294901760
  %5243 = vmatmul.f32.gmra.mxu0 %v5242
  %v5244 = vpop.f32.mrf.mxu0
  %v5245 = vadd.f32 0.0, %v5244
  %v5246 = vand.u32 %v5216, 4294901760
  %v5247 = vsub.f32 %v5216, %v5246
  %v5248 = vand.u32 %v5247, 4294901760
  %v5249 = vsub.f32 %v5247, %v5248
  %v5250 = vand.u32 %v5249, 4294901760
  %5251 = vmatmul.f32.gmra.mxu0 %v5250
  %v5252 = vpop.f32.mrf.mxu0
  %v5253 = vadd.f32 0.0, %v5252
  %v5254 = vand.u32 %v5218, 4294901760
  %v5255 = vsub.f32 %v5218, %v5254
  %v5256 = vand.u32 %v5255, 4294901760
  %v5257 = vsub.f32 %v5255, %v5256
  %v5258 = vand.u32 %v5257, 4294901760
  %5259 = vmatmul.f32.gmra.mxu0 %v5258
  %v5260 = vpop.f32.mrf.mxu0
  %v5261 = vadd.f32 0.0, %v5260
  %v5262 = vand.u32 %v5220, 4294901760
  %v5263 = vsub.f32 %v5220, %v5262
  %v5264 = vand.u32 %v5263, 4294901760
  %v5265 = vsub.f32 %v5263, %v5264
  %v5266 = vand.u32 %v5265, 4294901760
  %5267 = vmatmul.f32.gmra.mxu0 %v5266
  %v5268 = vpop.f32.mrf.mxu0
  %v5269 = vadd.f32 0.0, %v5268
  %5270 = vdwg.mxu0
  %5271 = vmatpush.msra.mxu0 0.0
  %5272 = vmatpush.msra.mxu0 0.0
  %5273 = vmatpush.msra.mxu0 0.0
  %5274 = vmatpush.msra.mxu0 0.0
  %5275 = vmatpush.msra.mxu0 0.0
  %5276 = vmatpush.msra.mxu0 0.0
  %5277 = vmatpush.msra.mxu0 0.0
  %5278 = vmatpush.msra.mxu0 0.0
  %5279 = vmatpush.msra.mxu0 0.0
  %5280 = vmatpush.msra.mxu0 0.0
  %5281 = vmatpush.msra.mxu0 0.0
  %5282 = vmatpush.msra.mxu0 0.0
  %5283 = vmatpush.msra.mxu0 0.0
  %5284 = vmatpush.msra.mxu0 0.0
  %5285 = vmatpush.msra.mxu0 0.0
  %5286 = vmatpush.msra.mxu0 0.0
  %v5287 = vand.u32 %v5214, 4294901760
  %5288 = vmatmul.f32.gmra.mxu0 %v5287
  %v5289 = vpop.f32.mrf.mxu0
  %v5290 = vadd.f32 %v5245, %v5289
  %v5291 = vand.u32 %v5216, 4294901760
  %5292 = vmatmul.f32.gmra.mxu0 %v5291
  %v5293 = vpop.f32.mrf.mxu0
  %v5294 = vadd.f32 %v5253, %v5293
  %v5295 = vand.u32 %v5218, 4294901760
  %5296 = vmatmul.f32.gmra.mxu0 %v5295
  %v5297 = vpop.f32.mrf.mxu0
  %v5298 = vadd.f32 %v5261, %v5297
  %v5299 = vand.u32 %v5220, 4294901760
  %5300 = vmatmul.f32.gmra.mxu0 %v5299
  %v5301 = vpop.f32.mrf.mxu0
  %v5302 = vadd.f32 %v5269, %v5301
  %5303 = vdwg.mxu0
  %5304 = vmatpush.msra.mxu0 0.0
  %5305 = vmatpush.msra.mxu0 0.0
  %5306 = vmatpush.msra.mxu0 0.0
  %5307 = vmatpush.msra.mxu0 0.0
  %5308 = vmatpush.msra.mxu0 0.0
  %5309 = vmatpush.msra.mxu0 0.0
  %5310 = vmatpush.msra.mxu0 0.0
  %5311 = vmatpush.msra.mxu0 0.0
  %5312 = vmatpush.msra.mxu0 0.0
  %5313 = vmatpush.msra.mxu0 0.0
  %5314 = vmatpush.msra.mxu0 0.0
  %5315 = vmatpush.msra.mxu0 0.0
  %5316 = vmatpush.msra.mxu0 0.0
  %5317 = vmatpush.msra.mxu0 0.0
  %5318 = vmatpush.msra.mxu0 0.0
  %5319 = vmatpush.msra.mxu0 0.0
  %v5320 = vand.u32 %v5214, 4294901760
  %v5321 = vsub.f32 %v5214, %v5320
  %5322 = vmatmul.f32.gmra.mxu0 %v5321
  %v5323 = vpop.f32.mrf.mxu0
  %v5324 = vadd.f32 %v5290, %v5323
  %v5325 = vand.u32 %v5216, 4294901760
  %v5326 = vsub.f32 %v5216, %v5325
  %5327 = vmatmul.f32.gmra.mxu0 %v5326
  %v5328 = vpop.f32.mrf.mxu0
  %v5329 = vadd.f32 %v5294, %v5328
  %v5330 = vand.u32 %v5218, 4294901760
  %v5331 = vsub.f32 %v5218, %v5330
  %5332 = vmatmul.f32.gmra.mxu0 %v5331
  %v5333 = vpop.f32.mrf.mxu0
  %v5334 = vadd.f32 %v5298, %v5333
  %v5335 = vand.u32 %v5220, 4294901760
  %v5336 = vsub.f32 %v5220, %v5335
  %5337 = vmatmul.f32.gmra.mxu0 %v5336
  %v5338 = vpop.f32.mrf.mxu0
  %v5339 = vadd.f32 %v5302, %v5338
  %5340 = vdwg.mxu0
  %5341 = vmatpush.msra.mxu0 1.0
  %5342 = vmatpush.msra.mxu0 1.0
  %5343 = vmatpush.msra.mxu0 1.0
  %5344 = vmatpush.msra.mxu0 1.0
  %5345 = vmatpush.msra.mxu0 1.0
  %5346 = vmatpush.msra.mxu0 1.0
  %5347 = vmatpush.msra.mxu0 1.0
  %5348 = vmatpush.msra.mxu0 1.0
  %5349 = vmatpush.msra.mxu0 1.0
  %5350 = vmatpush.msra.mxu0 1.0
  %5351 = vmatpush.msra.mxu0 1.0
  %5352 = vmatpush.msra.mxu0 1.0
  %5353 = vmatpush.msra.mxu0 1.0
  %5354 = vmatpush.msra.mxu0 1.0
  %5355 = vmatpush.msra.mxu0 1.0
  %5356 = vmatpush.msra.mxu0 1.0
  %v5357 = vand.u32 %v5214, 4294901760
  %v5358 = vsub.f32 %v5214, %v5357
  %v5359 = vand.u32 %v5358, 4294901760
  %5360 = vmatmul.f32.gmra.mxu0 %v5359
  %v5361 = vpop.f32.mrf.mxu0
  %v5362 = vadd.f32 %v5324, %v5361
  %v5363 = vand.u32 %v5216, 4294901760
  %v5364 = vsub.f32 %v5216, %v5363
  %v5365 = vand.u32 %v5364, 4294901760
  %5366 = vmatmul.f32.gmra.mxu0 %v5365
  %v5367 = vpop.f32.mrf.mxu0
  %v5368 = vadd.f32 %v5329, %v5367
  %v5369 = vand.u32 %v5218, 4294901760
  %v5370 = vsub.f32 %v5218, %v5369
  %v5371 = vand.u32 %v5370, 4294901760
  %5372 = vmatmul.f32.gmra.mxu0 %v5371
  %v5373 = vpop.f32.mrf.mxu0
  %v5374 = vadd.f32 %v5334, %v5373
  %v5375 = vand.u32 %v5220, 4294901760
  %v5376 = vsub.f32 %v5220, %v5375
  %v5377 = vand.u32 %v5376, 4294901760
  %5378 = vmatmul.f32.gmra.mxu0 %v5377
  %v5379 = vpop.f32.mrf.mxu0
  %v5380 = vadd.f32 %v5339, %v5379
  %5381 = vdwg.mxu0
  %5382 = vmatpush.msra.mxu0 0.0
  %5383 = vmatpush.msra.mxu0 0.0
  %5384 = vmatpush.msra.mxu0 0.0
  %5385 = vmatpush.msra.mxu0 0.0
  %5386 = vmatpush.msra.mxu0 0.0
  %5387 = vmatpush.msra.mxu0 0.0
  %5388 = vmatpush.msra.mxu0 0.0
  %5389 = vmatpush.msra.mxu0 0.0
  %5390 = vmatpush.msra.mxu0 0.0
  %5391 = vmatpush.msra.mxu0 0.0
  %5392 = vmatpush.msra.mxu0 0.0
  %5393 = vmatpush.msra.mxu0 0.0
  %5394 = vmatpush.msra.mxu0 0.0
  %5395 = vmatpush.msra.mxu0 0.0
  %5396 = vmatpush.msra.mxu0 0.0
  %5397 = vmatpush.msra.mxu0 0.0
  %v5398 = vand.u32 %v5214, 4294901760
  %5399 = vmatmul.f32.gmra.mxu0 %v5398
  %v5400 = vpop.f32.mrf.mxu0
  %v5401 = vadd.f32 %v5362, %v5400
  %v5402 = vand.u32 %v5216, 4294901760
  %5403 = vmatmul.f32.gmra.mxu0 %v5402
  %v5404 = vpop.f32.mrf.mxu0
  %v5405 = vadd.f32 %v5368, %v5404
  %v5406 = vand.u32 %v5218, 4294901760
  %5407 = vmatmul.f32.gmra.mxu0 %v5406
  %v5408 = vpop.f32.mrf.mxu0
  %v5409 = vadd.f32 %v5374, %v5408
  %v5410 = vand.u32 %v5220, 4294901760
  %5411 = vmatmul.f32.gmra.mxu0 %v5410
  %v5412 = vpop.f32.mrf.mxu0
  %v5413 = vadd.f32 %v5380, %v5412
  %5414 = vdwg.mxu0
  %5415 = vmatpush.msra.mxu0 1.0
  %5416 = vmatpush.msra.mxu0 1.0
  %5417 = vmatpush.msra.mxu0 1.0
  %5418 = vmatpush.msra.mxu0 1.0
  %5419 = vmatpush.msra.mxu0 1.0
  %5420 = vmatpush.msra.mxu0 1.0
  %5421 = vmatpush.msra.mxu0 1.0
  %5422 = vmatpush.msra.mxu0 1.0
  %5423 = vmatpush.msra.mxu0 1.0
  %5424 = vmatpush.msra.mxu0 1.0
  %5425 = vmatpush.msra.mxu0 1.0
  %5426 = vmatpush.msra.mxu0 1.0
  %5427 = vmatpush.msra.mxu0 1.0
  %5428 = vmatpush.msra.mxu0 1.0
  %5429 = vmatpush.msra.mxu0 1.0
  %5430 = vmatpush.msra.mxu0 1.0
  %v5431 = vand.u32 %v5214, 4294901760
  %5432 = vmatmul.f32.gmra.mxu0 %v5431
  %v5433 = vpop.f32.mrf.mxu0
  %v5434 = vadd.f32 %v5401, %v5433
  %v5435 = vand.u32 %v5216, 4294901760
  %5436 = vmatmul.f32.gmra.mxu0 %v5435
  %v5437 = vpop.f32.mrf.mxu0
  %v5438 = vadd.f32 %v5405, %v5437
  %v5439 = vand.u32 %v5218, 4294901760
  %5440 = vmatmul.f32.gmra.mxu0 %v5439
  %v5441 = vpop.f32.mrf.mxu0
  %v5442 = vadd.f32 %v5409, %v5441
  %v5443 = vand.u32 %v5220, 4294901760
  %5444 = vmatmul.f32.gmra.mxu0 %v5443
  %v5445 = vpop.f32.mrf.mxu0
  %v5446 = vadd.f32 %v5413, %v5445
  %5447 = vdwg.mxu0
  %5448 = vmatpush.msra.mxu0 1.0
  %5449 = vmatpush.msra.mxu0 1.0
  %5450 = vmatpush.msra.mxu0 1.0
  %5451 = vmatpush.msra.mxu0 1.0
  %5452 = vmatpush.msra.mxu0 1.0
  %5453 = vmatpush.msra.mxu0 1.0
  %5454 = vmatpush.msra.mxu0 1.0
  %5455 = vmatpush.msra.mxu0 1.0
  %5456 = vmatpush.msra.mxu0 1.0
  %5457 = vmatpush.msra.mxu0 1.0
  %5458 = vmatpush.msra.mxu0 1.0
  %5459 = vmatpush.msra.mxu0 1.0
  %5460 = vmatpush.msra.mxu0 1.0
  %5461 = vmatpush.msra.mxu0 1.0
  %5462 = vmatpush.msra.mxu0 1.0
  %5463 = vmatpush.msra.mxu0 1.0
  %v5464 = vand.u32 %v5215, 4294901760
  %v5465 = vsub.f32 %v5215, %v5464
  %v5466 = vand.u32 %v5465, 4294901760
  %v5467 = vsub.f32 %v5465, %v5466
  %v5468 = vand.u32 %v5467, 4294901760
  %5469 = vmatmul.f32.gmra.mxu0 %v5468
  %v5470 = vpop.f32.mrf.mxu0
  %v5471 = vadd.f32 %v5434, %v5470
  %v5472 = vand.u32 %v5217, 4294901760
  %v5473 = vsub.f32 %v5217, %v5472
  %v5474 = vand.u32 %v5473, 4294901760
  %v5475 = vsub.f32 %v5473, %v5474
  %v5476 = vand.u32 %v5475, 4294901760
  %5477 = vmatmul.f32.gmra.mxu0 %v5476
  %v5478 = vpop.f32.mrf.mxu0
  %v5479 = vadd.f32 %v5438, %v5478
  %v5480 = vand.u32 %v5219, 4294901760
  %v5481 = vsub.f32 %v5219, %v5480
  %v5482 = vand.u32 %v5481, 4294901760
  %v5483 = vsub.f32 %v5481, %v5482
  %v5484 = vand.u32 %v5483, 4294901760
  %5485 = vmatmul.f32.gmra.mxu0 %v5484
  %v5486 = vpop.f32.mrf.mxu0
  %v5487 = vadd.f32 %v5442, %v5486
  %v5488 = vand.u32 %v5221, 4294901760
  %v5489 = vsub.f32 %v5221, %v5488
  %v5490 = vand.u32 %v5489, 4294901760
  %v5491 = vsub.f32 %v5489, %v5490
  %v5492 = vand.u32 %v5491, 4294901760
  %5493 = vmatmul.f32.gmra.mxu0 %v5492
  %v5494 = vpop.f32.mrf.mxu0
  %v5495 = vadd.f32 %v5446, %v5494
  %5496 = vdwg.mxu0
  %5497 = vmatpush.msra.mxu0 0.0
  %5498 = vmatpush.msra.mxu0 0.0
  %5499 = vmatpush.msra.mxu0 0.0
  %5500 = vmatpush.msra.mxu0 0.0
  %5501 = vmatpush.msra.mxu0 0.0
  %5502 = vmatpush.msra.mxu0 0.0
  %5503 = vmatpush.msra.mxu0 0.0
  %5504 = vmatpush.msra.mxu0 0.0
  %5505 = vmatpush.msra.mxu0 0.0
  %5506 = vmatpush.msra.mxu0 0.0
  %5507 = vmatpush.msra.mxu0 0.0
  %5508 = vmatpush.msra.mxu0 0.0
  %5509 = vmatpush.msra.mxu0 0.0
  %5510 = vmatpush.msra.mxu0 0.0
  %5511 = vmatpush.msra.mxu0 0.0
  %5512 = vmatpush.msra.mxu0 0.0
  %v5513 = vand.u32 %v5215, 4294901760
  %5514 = vmatmul.f32.gmra.mxu0 %v5513
  %v5515 = vpop.f32.mrf.mxu0
  %v5516 = vadd.f32 %v5471, %v5515
  %v5517 = vand.u32 %v5217, 4294901760
  %5518 = vmatmul.f32.gmra.mxu0 %v5517
  %v5519 = vpop.f32.mrf.mxu0
  %v5520 = vadd.f32 %v5479, %v5519
  %v5521 = vand.u32 %v5219, 4294901760
  %5522 = vmatmul.f32.gmra.mxu0 %v5521
  %v5523 = vpop.f32.mrf.mxu0
  %v5524 = vadd.f32 %v5487, %v5523
  %v5525 = vand.u32 %v5221, 4294901760
  %5526 = vmatmul.f32.gmra.mxu0 %v5525
  %v5527 = vpop.f32.mrf.mxu0
  %v5528 = vadd.f32 %v5495, %v5527
  %5529 = vdwg.mxu0
  %5530 = vmatpush.msra.mxu0 0.0
  %5531 = vmatpush.msra.mxu0 0.0
  %5532 = vmatpush.msra.mxu0 0.0
  %5533 = vmatpush.msra.mxu0 0.0
  %5534 = vmatpush.msra.mxu0 0.0
  %5535 = vmatpush.msra.mxu0 0.0
  %5536 = vmatpush.msra.mxu0 0.0
  %5537 = vmatpush.msra.mxu0 0.0
  %5538 = vmatpush.msra.mxu0 0.0
  %5539 = vmatpush.msra.mxu0 0.0
  %5540 = vmatpush.msra.mxu0 0.0
  %5541 = vmatpush.msra.mxu0 0.0
  %5542 = vmatpush.msra.mxu0 0.0
  %5543 = vmatpush.msra.mxu0 0.0
  %5544 = vmatpush.msra.mxu0 0.0
  %5545 = vmatpush.msra.mxu0 0.0
  %v5546 = vand.u32 %v5215, 4294901760
  %v5547 = vsub.f32 %v5215, %v5546
  %5548 = vmatmul.f32.gmra.mxu0 %v5547
  %v5549 = vpop.f32.mrf.mxu0
  %v5550 = vadd.f32 %v5516, %v5549
  %v5551 = vand.u32 %v5217, 4294901760
  %v5552 = vsub.f32 %v5217, %v5551
  %5553 = vmatmul.f32.gmra.mxu0 %v5552
  %v5554 = vpop.f32.mrf.mxu0
  %v5555 = vadd.f32 %v5520, %v5554
  %v5556 = vand.u32 %v5219, 4294901760
  %v5557 = vsub.f32 %v5219, %v5556
  %5558 = vmatmul.f32.gmra.mxu0 %v5557
  %v5559 = vpop.f32.mrf.mxu0
  %v5560 = vadd.f32 %v5524, %v5559
  %v5561 = vand.u32 %v5221, 4294901760
  %v5562 = vsub.f32 %v5221, %v5561
  %5563 = vmatmul.f32.gmra.mxu0 %v5562
  %v5564 = vpop.f32.mrf.mxu0
  %v5565 = vadd.f32 %v5528, %v5564
  %5566 = vdwg.mxu0
  %5567 = vmatpush.msra.mxu0 1.0
  %5568 = vmatpush.msra.mxu0 1.0
  %5569 = vmatpush.msra.mxu0 1.0
  %5570 = vmatpush.msra.mxu0 1.0
  %5571 = vmatpush.msra.mxu0 1.0
  %5572 = vmatpush.msra.mxu0 1.0
  %5573 = vmatpush.msra.mxu0 1.0
  %5574 = vmatpush.msra.mxu0 1.0
  %5575 = vmatpush.msra.mxu0 1.0
  %5576 = vmatpush.msra.mxu0 1.0
  %5577 = vmatpush.msra.mxu0 1.0
  %5578 = vmatpush.msra.mxu0 1.0
  %5579 = vmatpush.msra.mxu0 1.0
  %5580 = vmatpush.msra.mxu0 1.0
  %5581 = vmatpush.msra.mxu0 1.0
  %5582 = vmatpush.msra.mxu0 1.0
  %v5583 = vand.u32 %v5215, 4294901760
  %v5584 = vsub.f32 %v5215, %v5583
  %v5585 = vand.u32 %v5584, 4294901760
  %5586 = vmatmul.f32.gmra.mxu0 %v5585
  %v5587 = vpop.f32.mrf.mxu0
  %v5588 = vadd.f32 %v5550, %v5587
  %v5589 = vand.u32 %v5217, 4294901760
  %v5590 = vsub.f32 %v5217, %v5589
  %v5591 = vand.u32 %v5590, 4294901760
  %5592 = vmatmul.f32.gmra.mxu0 %v5591
  %v5593 = vpop.f32.mrf.mxu0
  %v5594 = vadd.f32 %v5555, %v5593
  %v5595 = vand.u32 %v5219, 4294901760
  %v5596 = vsub.f32 %v5219, %v5595
  %v5597 = vand.u32 %v5596, 4294901760
  %5598 = vmatmul.f32.gmra.mxu0 %v5597
  %v5599 = vpop.f32.mrf.mxu0
  %v5600 = vadd.f32 %v5560, %v5599
  %v5601 = vand.u32 %v5221, 4294901760
  %v5602 = vsub.f32 %v5221, %v5601
  %v5603 = vand.u32 %v5602, 4294901760
  %5604 = vmatmul.f32.gmra.mxu0 %v5603
  %v5605 = vpop.f32.mrf.mxu0
  %v5606 = vadd.f32 %v5565, %v5605
  %5607 = vdwg.mxu0
  %5608 = vmatpush.msra.mxu0 0.0
  %5609 = vmatpush.msra.mxu0 0.0
  %5610 = vmatpush.msra.mxu0 0.0
  %5611 = vmatpush.msra.mxu0 0.0
  %5612 = vmatpush.msra.mxu0 0.0
  %5613 = vmatpush.msra.mxu0 0.0
  %5614 = vmatpush.msra.mxu0 0.0
  %5615 = vmatpush.msra.mxu0 0.0
  %5616 = vmatpush.msra.mxu0 0.0
  %5617 = vmatpush.msra.mxu0 0.0
  %5618 = vmatpush.msra.mxu0 0.0
  %5619 = vmatpush.msra.mxu0 0.0
  %5620 = vmatpush.msra.mxu0 0.0
  %5621 = vmatpush.msra.mxu0 0.0
  %5622 = vmatpush.msra.mxu0 0.0
  %5623 = vmatpush.msra.mxu0 0.0
  %v5624 = vand.u32 %v5215, 4294901760
  %5625 = vmatmul.f32.gmra.mxu0 %v5624
  %v5626 = vpop.f32.mrf.mxu0
  %v5627 = vadd.f32 %v5588, %v5626
  %v5628 = vand.u32 %v5217, 4294901760
  %5629 = vmatmul.f32.gmra.mxu0 %v5628
  %v5630 = vpop.f32.mrf.mxu0
  %v5631 = vadd.f32 %v5594, %v5630
  %v5632 = vand.u32 %v5219, 4294901760
  %5633 = vmatmul.f32.gmra.mxu0 %v5632
  %v5634 = vpop.f32.mrf.mxu0
  %v5635 = vadd.f32 %v5600, %v5634
  %v5636 = vand.u32 %v5221, 4294901760
  %5637 = vmatmul.f32.gmra.mxu0 %v5636
  %v5638 = vpop.f32.mrf.mxu0
  %v5639 = vadd.f32 %v5606, %v5638
  %5640 = vdwg.mxu0
  %5641 = vmatpush.msra.mxu0 1.0
  %5642 = vmatpush.msra.mxu0 1.0
  %5643 = vmatpush.msra.mxu0 1.0
  %5644 = vmatpush.msra.mxu0 1.0
  %5645 = vmatpush.msra.mxu0 1.0
  %5646 = vmatpush.msra.mxu0 1.0
  %5647 = vmatpush.msra.mxu0 1.0
  %5648 = vmatpush.msra.mxu0 1.0
  %5649 = vmatpush.msra.mxu0 1.0
  %5650 = vmatpush.msra.mxu0 1.0
  %5651 = vmatpush.msra.mxu0 1.0
  %5652 = vmatpush.msra.mxu0 1.0
  %5653 = vmatpush.msra.mxu0 1.0
  %5654 = vmatpush.msra.mxu0 1.0
  %5655 = vmatpush.msra.mxu0 1.0
  %5656 = vmatpush.msra.mxu0 1.0
  %v5657 = vand.u32 %v5215, 4294901760
  %5658 = vmatmul.f32.gmra.mxu0 %v5657
  %v5659 = vpop.f32.mrf.mxu0
  %v5660 = vadd.f32 %v5627, %v5659
  %v5661 = vand.u32 %v5217, 4294901760
  %5662 = vmatmul.f32.gmra.mxu0 %v5661
  %v5663 = vpop.f32.mrf.mxu0
  %v5664 = vadd.f32 %v5631, %v5663
  %v5665 = vand.u32 %v5219, 4294901760
  %5666 = vmatmul.f32.gmra.mxu0 %v5665
  %v5667 = vpop.f32.mrf.mxu0
  %v5668 = vadd.f32 %v5635, %v5667
  %v5669 = vand.u32 %v5221, 4294901760
  %5670 = vmatmul.f32.gmra.mxu0 %v5669
  %v5671 = vpop.f32.mrf.mxu0
  %v5672 = vadd.f32 %v5639, %v5671
  %5673 = vdwg.mxu0
  %v5674 = vmul.f32 %v5200, 0.00390625
  %v5675 = vmul.f32 %v5204, 0.00390625
  %v5676 = vmul.f32 %v5208, 0.00390625
  %v5677 = vmul.f32 %v5212, 0.00390625
  %v5678 = vmul.f32 %v5660, 0.00390625
  %v5679 = vmul.f32 %v5664, 0.00390625
  %v5680 = vmul.f32 %v5668, 0.00390625
  %v5681 = vmul.f32 %v5672, 0.00390625
  %v5682 = vmul.f32 %v5674, %v5674
  %v5683 = vmul.f32 %v5675, %v5675
  %v5684 = vmul.f32 %v5676, %v5676
  %v5685 = vmul.f32 %v5677, %v5677
  %v5686 = vsub.f32 %v5678, %v5682
  %v5687 = vsub.f32 %v5679, %v5683
  %v5688 = vsub.f32 %v5680, %v5684
  %v5689 = vsub.f32 %v5681, %v5685
  %5691 = vset.pattern.permute.xlu0 0
  %5692 = vperm.xlu0 %5691, %v5674
  %v5693 = vpop.permute.xlu0 %5692
  %5696 = vset.pattern.permute.xlu0 0
  %5697 = vperm.xlu0 %5696, %v5675
  %v5698 = vpop.permute.xlu0 %5697
  %5701 = vset.pattern.permute.xlu0 0
  %5702 = vperm.xlu0 %5701, %v5676
  %v5703 = vpop.permute.xlu0 %5702
  %5706 = vset.pattern.permute.xlu0 0
  %5707 = vperm.xlu0 %5706, %v5677
  %v5708 = vpop.permute.xlu0 %5707
  %v5710 = vsub.f32 %v4754, %v5693
  %v5711 = vsub.f32 %v4755, %v5693
  %v5712 = vsub.f32 %v4756, %v5698
  %v5713 = vsub.f32 %v4757, %v5698
  %v5714 = vsub.f32 %v4758, %v5703
  %v5715 = vsub.f32 %v4759, %v5703
  %v5716 = vsub.f32 %v4760, %v5708
  %v5717 = vsub.f32 %v4761, %v5708
  %v5718 = vadd.f32 %v5686, 1e-05
  %v5719 = vadd.f32 %v5687, 1e-05
  %v5720 = vadd.f32 %v5688, 1e-05
  %v5721 = vadd.f32 %v5689, 1e-05
  %v5722 = vrsqrt.pop %v5718
  %v5723 = vmul.f32 %v5722, %v5718
  %v5724 = vmul.f32 %v5723, %v5722
  %v5725 = vmul.f32 0.5, %v5724
  %v5726 = vsub.f32 1.5, %v5725
  %v5727 = vmul.f32 %v5722, %v5726
  %vm5728 = vweird.f32 %v5718
  %vm5729 = vweird.f32 %v5722
  %vm5730 = vmor %vm5728, %vm5729
  %v5731 = vsel %vm5730, %v5722, %v5727
  %v5732 = vrsqrt.pop %v5719
  %v5733 = vmul.f32 %v5732, %v5719
  %v5734 = vmul.f32 %v5733, %v5732
  %v5735 = vmul.f32 0.5, %v5734
  %v5736 = vsub.f32 1.5, %v5735
  %v5737 = vmul.f32 %v5732, %v5736
  %vm5738 = vweird.f32 %v5719
  %vm5739 = vweird.f32 %v5732
  %vm5740 = vmor %vm5738, %vm5739
  %v5741 = vsel %vm5740, %v5732, %v5737
  %v5742 = vrsqrt.pop %v5720
  %v5743 = vmul.f32 %v5742, %v5720
  %v5744 = vmul.f32 %v5743, %v5742
  %v5745 = vmul.f32 0.5, %v5744
  %v5746 = vsub.f32 1.5, %v5745
  %v5747 = vmul.f32 %v5742, %v5746
  %vm5748 = vweird.f32 %v5720
  %vm5749 = vweird.f32 %v5742
  %vm5750 = vmor %vm5748, %vm5749
  %v5751 = vsel %vm5750, %v5742, %v5747
  %v5752 = vrsqrt.pop %v5721
  %v5753 = vmul.f32 %v5752, %v5721
  %v5754 = vmul.f32 %v5753, %v5752
  %v5755 = vmul.f32 0.5, %v5754
  %v5756 = vsub.f32 1.5, %v5755
  %v5757 = vmul.f32 %v5752, %v5756
  %vm5758 = vweird.f32 %v5721
  %vm5759 = vweird.f32 %v5752
  %vm5760 = vmor %vm5758, %vm5759
  %v5761 = vsel %vm5760, %v5752, %v5757
  %5763 = vset.pattern.permute.xlu0 0
  %5764 = vperm.xlu0 %5763, %v5731
  %v5765 = vpop.permute.xlu0 %5764
  %5768 = vset.pattern.permute.xlu0 0
  %5769 = vperm.xlu0 %5768, %v5741
  %v5770 = vpop.permute.xlu0 %5769
  %5773 = vset.pattern.permute.xlu0 0
  %5774 = vperm.xlu0 %5773, %v5751
  %v5775 = vpop.permute.xlu0 %5774
  %5778 = vset.pattern.permute.xlu0 0
  %5779 = vperm.xlu0 %5778, %v5761
  %v5780 = vpop.permute.xlu0 %5779
  %v5782 = vmul.f32 %v5710, %v5765
  %v5783 = vmul.f32 %v5711, %v5765
  %v5784 = vmul.f32 %v5712, %v5770
  %v5785 = vmul.f32 %v5713, %v5770
  %v5786 = vmul.f32 %v5714, %v5775
  %v5787 = vmul.f32 %v5715, %v5775
  %v5788 = vmul.f32 %v5716, %v5780
  %v5789 = vmul.f32 %v5717, %v5780
  %5790 = vset.pattern.permute.xlu0 8
  %5791 = vperm.xlu0 %5790, %v49
  %v5792 = vpop.permute.xlu0 %5791
  %5794 = vset.pattern.permute.xlu0 8
  %5795 = vperm.xlu0 %5794, %v50
  %v5796 = vpop.permute.xlu0 %5795
  %5798 = vset.pattern.permute.xlu0 8
  %5799 = vperm.xlu0 %5798, %v51
  %v5800 = vpop.permute.xlu0 %5799
  %5802 = vset.pattern.permute.xlu0 8
  %5803 = vperm.xlu0 %5802, %v52
  %v5804 = vpop.permute.xlu0 %5803
  %v5806 = vmul.f32 %v5782, %v5792
  %v5807 = vmul.f32 %v5783, %v5792
  %v5808 = vmul.f32 %v5784, %v5796
  %v5809 = vmul.f32 %v5785, %v5796
  %v5810 = vmul.f32 %v5786, %v5800
  %v5811 = vmul.f32 %v5787, %v5800
  %v5812 = vmul.f32 %v5788, %v5804
  %v5813 = vmul.f32 %v5789, %v5804
  %5814 = vset.pattern.permute.xlu0 9
  %5815 = vperm.xlu0 %5814, %v49
  %v5816 = vpop.permute.xlu0 %5815
  %5818 = vset.pattern.permute.xlu0 9
  %5819 = vperm.xlu0 %5818, %v50
  %v5820 = vpop.permute.xlu0 %5819
  %5822 = vset.pattern.permute.xlu0 9
  %5823 = vperm.xlu0 %5822, %v51
  %v5824 = vpop.permute.xlu0 %5823
  %5826 = vset.pattern.permute.xlu0 9
  %5827 = vperm.xlu0 %5826, %v52
  %v5828 = vpop.permute.xlu0 %5827
  %v5830 = vadd.f32 %v5806, %v5816
  %v5831 = vadd.f32 %v5807, %v5816
  %v5832 = vadd.f32 %v5808, %v5820
  %v5833 = vadd.f32 %v5809, %v5820
  %v5834 = vadd.f32 %v5810, %v5824
  %v5835 = vadd.f32 %v5811, %v5824
  %v5836 = vadd.f32 %v5812, %v5828
  %v5837 = vadd.f32 %v5813, %v5828
  %5838 = vset.pattern.permute.xlu0 3
  %5839 = vperm.xlu0 %5838, %v49
  %v5840 = vpop.permute.xlu0 %5839
  %5842 = vset.pattern.permute.xlu0 3
  %5843 = vperm.xlu0 %5842, %v50
  %v5844 = vpop.permute.xlu0 %5843
  %5846 = vset.pattern.permute.xlu0 3
  %5847 = vperm.xlu0 %5846, %v51
  %v5848 = vpop.permute.xlu0 %5847
  %5850 = vset.pattern.permute.xlu0 3
  %5851 = vperm.xlu0 %5850, %v52
  %v5852 = vpop.permute.xlu0 %5851
  %v5855 = vsel %vm105, %v2450, 0
  %v5858 = vsel %vm105, %v2451, 0
  %v5861 = vsel %vm105, %v2452, 0
  %v5864 = vsel %vm105, %v2453, 0
  %5866 = vmatpush.msra.mxu0 0.0
  %5867 = vmatpush.msra.mxu0 0.0
  %5868 = vmatpush.msra.mxu0 0.0
  %5869 = vmatpush.msra.mxu0 0.0
  %5870 = vmatpush.msra.mxu0 0.0
  %5871 = vmatpush.msra.mxu0 0.0
  %5872 = vmatpush.msra.mxu0 0.0
  %5873 = vmatpush.msra.mxu0 0.0
  %5874 = vmatpush.msra.mxu0 0.0
  %5875 = vmatpush.msra.mxu0 0.0
  %5876 = vmatpush.msra.mxu0 0.0
  %5877 = vmatpush.msra.mxu0 0.0
  %v5878 = vand.u32 %v5836, 4294901760
  %5879 = vmatpush.msra.mxu0 %v5878
  %v5880 = vand.u32 %v5834, 4294901760
  %5881 = vmatpush.msra.mxu0 %v5880
  %v5882 = vand.u32 %v5832, 4294901760
  %5883 = vmatpush.msra.mxu0 %v5882
  %v5884 = vand.u32 %v5830, 4294901760
  %5885 = vmatpush.msra.mxu0 %v5884
  %v5886 = vand.u32 %v5855, 4294901760
  %v5887 = vsub.f32 %v5855, %v5886
  %v5888 = vand.u32 %v5887, 4294901760
  %v5889 = vsub.f32 %v5887, %v5888
  %v5890 = vand.u32 %v5889, 4294901760
  %5891 = vmatmul.f32.gmra.mxu0 %v5890
  %v5892 = vpop.f32.mrf.mxu0
  %v5893 = vadd.f32 %v5840, %v5892
  %v5894 = vand.u32 %v5858, 4294901760
  %v5895 = vsub.f32 %v5858, %v5894
  %v5896 = vand.u32 %v5895, 4294901760
  %v5897 = vsub.f32 %v5895, %v5896
  %v5898 = vand.u32 %v5897, 4294901760
  %5899 = vmatmul.f32.gmra.mxu0 %v5898
  %v5900 = vpop.f32.mrf.mxu0
  %v5901 = vadd.f32 %v5844, %v5900
  %v5902 = vand.u32 %v5861, 4294901760
  %v5903 = vsub.f32 %v5861, %v5902
  %v5904 = vand.u32 %v5903, 4294901760
  %v5905 = vsub.f32 %v5903, %v5904
  %v5906 = vand.u32 %v5905, 4294901760
  %5907 = vmatmul.f32.gmra.mxu0 %v5906
  %v5908 = vpop.f32.mrf.mxu0
  %v5909 = vadd.f32 %v5848, %v5908
  %v5910 = vand.u32 %v5864, 4294901760
  %v5911 = vsub.f32 %v5864, %v5910
  %v5912 = vand.u32 %v5911, 4294901760
  %v5913 = vsub.f32 %v5911, %v5912
  %v5914 = vand.u32 %v5913, 4294901760
  %5915 = vmatmul.f32.gmra.mxu0 %v5914
  %v5916 = vpop.f32.mrf.mxu0
  %v5917 = vadd.f32 %v5852, %v5916
  %5918 = vdwg.mxu0
  %5919 = vmatpush.msra.mxu0 0.0
  %5920 = vmatpush.msra.mxu0 0.0
  %5921 = vmatpush.msra.mxu0 0.0
  %5922 = vmatpush.msra.mxu0 0.0
  %5923 = vmatpush.msra.mxu0 0.0
  %5924 = vmatpush.msra.mxu0 0.0
  %5925 = vmatpush.msra.mxu0 0.0
  %5926 = vmatpush.msra.mxu0 0.0
  %5927 = vmatpush.msra.mxu0 0.0
  %5928 = vmatpush.msra.mxu0 0.0
  %5929 = vmatpush.msra.mxu0 0.0
  %5930 = vmatpush.msra.mxu0 0.0
  %v5931 = vand.u32 %v5836, 4294901760
  %v5932 = vsub.f32 %v5836, %v5931
  %v5933 = vand.u32 %v5932, 4294901760
  %v5934 = vsub.f32 %v5932, %v5933
  %v5935 = vand.u32 %v5934, 4294901760
  %5936 = vmatpush.msra.mxu0 %v5935
  %v5937 = vand.u32 %v5834, 4294901760
  %v5938 = vsub.f32 %v5834, %v5937
  %v5939 = vand.u32 %v5938, 4294901760
  %v5940 = vsub.f32 %v5938, %v5939
  %v5941 = vand.u32 %v5940, 4294901760
  %5942 = vmatpush.msra.mxu0 %v5941
  %v5943 = vand.u32 %v5832, 4294901760
  %v5944 = vsub.f32 %v5832, %v5943
  %v5945 = vand.u32 %v5944, 4294901760
  %v5946 = vsub.f32 %v5944, %v5945
  %v5947 = vand.u32 %v5946, 4294901760
  %5948 = vmatpush.msra.mxu0 %v5947
  %v5949 = vand.u32 %v5830, 4294901760
  %v5950 = vsub.f32 %v5830, %v5949
  %v5951 = vand.u32 %v5950, 4294901760
  %v5952 = vsub.f32 %v5950, %v5951
  %v5953 = vand.u32 %v5952, 4294901760
  %5954 = vmatpush.msra.mxu0 %v5953
  %v5955 = vand.u32 %v5855, 4294901760
  %5956 = vmatmul.f32.gmra.mxu0 %v5955
  %v5957 = vpop.f32.mrf.mxu0
  %v5958 = vadd.f32 %v5893, %v5957
  %v5959 = vand.u32 %v5858, 4294901760
  %5960 = vmatmul.f32.gmra.mxu0 %v5959
  %v5961 = vpop.f32.mrf.mxu0
  %v5962 = vadd.f32 %v5901, %v5961
  %v5963 = vand.u32 %v5861, 4294901760
  %5964 = vmatmul.f32.gmra.mxu0 %v5963
  %v5965 = vpop.f32.mrf.mxu0
  %v5966 = vadd.f32 %v5909, %v5965
  %v5967 = vand.u32 %v5864, 4294901760
  %5968 = vmatmul.f32.gmra.mxu0 %v5967
  %v5969 = vpop.f32.mrf.mxu0
  %v5970 = vadd.f32 %v5917, %v5969
  %5971 = vdwg.mxu0
  %5972 = vmatpush.msra.mxu0 0.0
  %5973 = vmatpush.msra.mxu0 0.0
  %5974 = vmatpush.msra.mxu0 0.0
  %5975 = vmatpush.msra.mxu0 0.0
  %5976 = vmatpush.msra.mxu0 0.0
  %5977 = vmatpush.msra.mxu0 0.0
  %5978 = vmatpush.msra.mxu0 0.0
  %5979 = vmatpush.msra.mxu0 0.0
  %5980 = vmatpush.msra.mxu0 0.0
  %5981 = vmatpush.msra.mxu0 0.0
  %5982 = vmatpush.msra.mxu0 0.0
  %5983 = vmatpush.msra.mxu0 0.0
  %v5984 = vand.u32 %v5836, 4294901760
  %v5985 = vsub.f32 %v5836, %v5984
  %5986 = vmatpush.msra.mxu0 %v5985
  %v5987 = vand.u32 %v5834, 4294901760
  %v5988 = vsub.f32 %v5834, %v5987
  %5989 = vmatpush.msra.mxu0 %v5988
  %v5990 = vand.u32 %v5832, 4294901760
  %v5991 = vsub.f32 %v5832, %v5990
  %5992 = vmatpush.msra.mxu0 %v5991
  %v5993 = vand.u32 %v5830, 4294901760
  %v5994 = vsub.f32 %v5830, %v5993
  %5995 = vmatpush.msra.mxu0 %v5994
  %v5996 = vand.u32 %v5855, 4294901760
  %v5997 = vsub.f32 %v5855, %v5996
  %5998 = vmatmul.f32.gmra.mxu0 %v5997
  %v5999 = vpop.f32.mrf.mxu0
  %v6000 = vadd.f32 %v5958, %v5999
  %v6001 = vand.u32 %v5858, 4294901760
  %v6002 = vsub.f32 %v5858, %v6001
  %6003 = vmatmul.f32.gmra.mxu0 %v6002
  %v6004 = vpop.f32.mrf.mxu0
  %v6005 = vadd.f32 %v5962, %v6004
  %v6006 = vand.u32 %v5861, 4294901760
  %v6007 = vsub.f32 %v5861, %v6006
  %6008 = vmatmul.f32.gmra.mxu0 %v6007
  %v6009 = vpop.f32.mrf.mxu0
  %v6010 = vadd.f32 %v5966, %v6009
  %v6011 = vand.u32 %v5864, 4294901760
  %v6012 = vsub.f32 %v5864, %v6011
  %6013 = vmatmul.f32.gmra.mxu0 %v6012
  %v6014 = vpop.f32.mrf.mxu0
  %v6015 = vadd.f32 %v5970, %v6014
  %6016 = vdwg.mxu0
  %6017 = vmatpush.msra.mxu0 0.0
  %6018 = vmatpush.msra.mxu0 0.0
  %6019 = vmatpush.msra.mxu0 0.0
  %6020 = vmatpush.msra.mxu0 0.0
  %6021 = vmatpush.msra.mxu0 0.0
  %6022 = vmatpush.msra.mxu0 0.0
  %6023 = vmatpush.msra.mxu0 0.0
  %6024 = vmatpush.msra.mxu0 0.0
  %6025 = vmatpush.msra.mxu0 0.0
  %6026 = vmatpush.msra.mxu0 0.0
  %6027 = vmatpush.msra.mxu0 0.0
  %6028 = vmatpush.msra.mxu0 0.0
  %v6029 = vand.u32 %v5836, 4294901760
  %6030 = vmatpush.msra.mxu0 %v6029
  %v6031 = vand.u32 %v5834, 4294901760
  %6032 = vmatpush.msra.mxu0 %v6031
  %v6033 = vand.u32 %v5832, 4294901760
  %6034 = vmatpush.msra.mxu0 %v6033
  %v6035 = vand.u32 %v5830, 4294901760
  %6036 = vmatpush.msra.mxu0 %v6035
  %v6037 = vand.u32 %v5855, 4294901760
  %v6038 = vsub.f32 %v5855, %v6037
  %v6039 = vand.u32 %v6038, 4294901760
  %6040 = vmatmul.f32.gmra.mxu0 %v6039
  %v6041 = vpop.f32.mrf.mxu0
  %v6042 = vadd.f32 %v6000, %v6041
  %v6043 = vand.u32 %v5858, 4294901760
  %v6044 = vsub.f32 %v5858, %v6043
  %v6045 = vand.u32 %v6044, 4294901760
  %6046 = vmatmul.f32.gmra.mxu0 %v6045
  %v6047 = vpop.f32.mrf.mxu0
  %v6048 = vadd.f32 %v6005, %v6047
  %v6049 = vand.u32 %v5861, 4294901760
  %v6050 = vsub.f32 %v5861, %v6049
  %v6051 = vand.u32 %v6050, 4294901760
  %6052 = vmatmul.f32.gmra.mxu0 %v6051
  %v6053 = vpop.f32.mrf.mxu0
  %v6054 = vadd.f32 %v6010, %v6053
  %v6055 = vand.u32 %v5864, 4294901760
  %v6056 = vsub.f32 %v5864, %v6055
  %v6057 = vand.u32 %v6056, 4294901760
  %6058 = vmatmul.f32.gmra.mxu0 %v6057
  %v6059 = vpop.f32.mrf.mxu0
  %v6060 = vadd.f32 %v6015, %v6059
  %6061 = vdwg.mxu0
  %6062 = vmatpush.msra.mxu0 0.0
  %6063 = vmatpush.msra.mxu0 0.0
  %6064 = vmatpush.msra.mxu0 0.0
  %6065 = vmatpush.msra.mxu0 0.0
  %6066 = vmatpush.msra.mxu0 0.0
  %6067 = vmatpush.msra.mxu0 0.0
  %6068 = vmatpush.msra.mxu0 0.0
  %6069 = vmatpush.msra.mxu0 0.0
  %6070 = vmatpush.msra.mxu0 0.0
  %6071 = vmatpush.msra.mxu0 0.0
  %6072 = vmatpush.msra.mxu0 0.0
  %6073 = vmatpush.msra.mxu0 0.0
  %v6074 = vand.u32 %v5836, 4294901760
  %v6075 = vsub.f32 %v5836, %v6074
  %v6076 = vand.u32 %v6075, 4294901760
  %6077 = vmatpush.msra.mxu0 %v6076
  %v6078 = vand.u32 %v5834, 4294901760
  %v6079 = vsub.f32 %v5834, %v6078
  %v6080 = vand.u32 %v6079, 4294901760
  %6081 = vmatpush.msra.mxu0 %v6080
  %v6082 = vand.u32 %v5832, 4294901760
  %v6083 = vsub.f32 %v5832, %v6082
  %v6084 = vand.u32 %v6083, 4294901760
  %6085 = vmatpush.msra.mxu0 %v6084
  %v6086 = vand.u32 %v5830, 4294901760
  %v6087 = vsub.f32 %v5830, %v6086
  %v6088 = vand.u32 %v6087, 4294901760
  %6089 = vmatpush.msra.mxu0 %v6088
  %v6090 = vand.u32 %v5855, 4294901760
  %6091 = vmatmul.f32.gmra.mxu0 %v6090
  %v6092 = vpop.f32.mrf.mxu0
  %v6093 = vadd.f32 %v6042, %v6092
  %v6094 = vand.u32 %v5858, 4294901760
  %6095 = vmatmul.f32.gmra.mxu0 %v6094
  %v6096 = vpop.f32.mrf.mxu0
  %v6097 = vadd.f32 %v6048, %v6096
  %v6098 = vand.u32 %v5861, 4294901760
  %6099 = vmatmul.f32.gmra.mxu0 %v6098
  %v6100 = vpop.f32.mrf.mxu0
  %v6101 = vadd.f32 %v6054, %v6100
  %v6102 = vand.u32 %v5864, 4294901760
  %6103 = vmatmul.f32.gmra.mxu0 %v6102
  %v6104 = vpop.f32.mrf.mxu0
  %v6105 = vadd.f32 %v6060, %v6104
  %6106 = vdwg.mxu0
  %6107 = vmatpush.msra.mxu0 0.0
  %6108 = vmatpush.msra.mxu0 0.0
  %6109 = vmatpush.msra.mxu0 0.0
  %6110 = vmatpush.msra.mxu0 0.0
  %6111 = vmatpush.msra.mxu0 0.0
  %6112 = vmatpush.msra.mxu0 0.0
  %6113 = vmatpush.msra.mxu0 0.0
  %6114 = vmatpush.msra.mxu0 0.0
  %6115 = vmatpush.msra.mxu0 0.0
  %6116 = vmatpush.msra.mxu0 0.0
  %6117 = vmatpush.msra.mxu0 0.0
  %6118 = vmatpush.msra.mxu0 0.0
  %v6119 = vand.u32 %v5836, 4294901760
  %6120 = vmatpush.msra.mxu0 %v6119
  %v6121 = vand.u32 %v5834, 4294901760
  %6122 = vmatpush.msra.mxu0 %v6121
  %v6123 = vand.u32 %v5832, 4294901760
  %6124 = vmatpush.msra.mxu0 %v6123
  %v6125 = vand.u32 %v5830, 4294901760
  %6126 = vmatpush.msra.mxu0 %v6125
  %v6127 = vand.u32 %v5855, 4294901760
  %6128 = vmatmul.f32.gmra.mxu0 %v6127
  %v6129 = vpop.f32.mrf.mxu0
  %v6130 = vadd.f32 %v6093, %v6129
  %v6131 = vand.u32 %v5858, 4294901760
  %6132 = vmatmul.f32.gmra.mxu0 %v6131
  %v6133 = vpop.f32.mrf.mxu0
  %v6134 = vadd.f32 %v6097, %v6133
  %v6135 = vand.u32 %v5861, 4294901760
  %6136 = vmatmul.f32.gmra.mxu0 %v6135
  %v6137 = vpop.f32.mrf.mxu0
  %v6138 = vadd.f32 %v6101, %v6137
  %v6139 = vand.u32 %v5864, 4294901760
  %6140 = vmatmul.f32.gmra.mxu0 %v6139
  %v6141 = vpop.f32.mrf.mxu0
  %v6142 = vadd.f32 %v6105, %v6141
  %6143 = vdwg.mxu0
  %6144 = vmatpush.msra.mxu0 0.0
  %6145 = vmatpush.msra.mxu0 0.0
  %6146 = vmatpush.msra.mxu0 0.0
  %6147 = vmatpush.msra.mxu0 0.0
  %6148 = vmatpush.msra.mxu0 0.0
  %6149 = vmatpush.msra.mxu0 0.0
  %6150 = vmatpush.msra.mxu0 0.0
  %6151 = vmatpush.msra.mxu0 0.0
  %6152 = vmatpush.msra.mxu0 0.0
  %6153 = vmatpush.msra.mxu0 0.0
  %6154 = vmatpush.msra.mxu0 0.0
  %6155 = vmatpush.msra.mxu0 0.0
  %v6156 = vand.u32 %v5837, 4294901760
  %6157 = vmatpush.msra.mxu0 %v6156
  %v6158 = vand.u32 %v5835, 4294901760
  %6159 = vmatpush.msra.mxu0 %v6158
  %v6160 = vand.u32 %v5833, 4294901760
  %6161 = vmatpush.msra.mxu0 %v6160
  %v6162 = vand.u32 %v5831, 4294901760
  %6163 = vmatpush.msra.mxu0 %v6162
  %v6164 = vand.u32 %v5855, 4294901760
  %v6165 = vsub.f32 %v5855, %v6164
  %v6166 = vand.u32 %v6165, 4294901760
  %v6167 = vsub.f32 %v6165, %v6166
  %v6168 = vand.u32 %v6167, 4294901760
  %6169 = vmatmul.f32.gmra.mxu0 %v6168
  %v6170 = vpop.f32.mrf.mxu0
  %v6171 = vadd.f32 %v5840, %v6170
  %v6172 = vand.u32 %v5858, 4294901760
  %v6173 = vsub.f32 %v5858, %v6172
  %v6174 = vand.u32 %v6173, 4294901760
  %v6175 = vsub.f32 %v6173, %v6174
  %v6176 = vand.u32 %v6175, 4294901760
  %6177 = vmatmul.f32.gmra.mxu0 %v6176
  %v6178 = vpop.f32.mrf.mxu0
  %v6179 = vadd.f32 %v5844, %v6178
  %v6180 = vand.u32 %v5861, 4294901760
  %v6181 = vsub.f32 %v5861, %v6180
  %v6182 = vand.u32 %v6181, 4294901760
  %v6183 = vsub.f32 %v6181, %v6182
  %v6184 = vand.u32 %v6183, 4294901760
  %6185 = vmatmul.f32.gmra.mxu0 %v6184
  %v6186 = vpop.f32.mrf.mxu0
  %v6187 = vadd.f32 %v5848, %v6186
  %v6188 = vand.u32 %v5864, 4294901760
  %v6189 = vsub.f32 %v5864, %v6188
  %v6190 = vand.u32 %v6189, 4294901760
  %v6191 = vsub.f32 %v6189, %v6190
  %v6192 = vand.u32 %v6191, 4294901760
  %6193 = vmatmul.f32.gmra.mxu0 %v6192
  %v6194 = vpop.f32.mrf.mxu0
  %v6195 = vadd.f32 %v5852, %v6194
  %6196 = vdwg.mxu0
  %6197 = vmatpush.msra.mxu0 0.0
  %6198 = vmatpush.msra.mxu0 0.0
  %6199 = vmatpush.msra.mxu0 0.0
  %6200 = vmatpush.msra.mxu0 0.0
  %6201 = vmatpush.msra.mxu0 0.0
  %6202 = vmatpush.msra.mxu0 0.0
  %6203 = vmatpush.msra.mxu0 0.0
  %6204 = vmatpush.msra.mxu0 0.0
  %6205 = vmatpush.msra.mxu0 0.0
  %6206 = vmatpush.msra.mxu0 0.0
  %6207 = vmatpush.msra.mxu0 0.0
  %6208 = vmatpush.msra.mxu0 0.0
  %v6209 = vand.u32 %v5837, 4294901760
  %v6210 = vsub.f32 %v5837, %v6209
  %v6211 = vand.u32 %v6210, 4294901760
  %v6212 = vsub.f32 %v6210, %v6211
  %v6213 = vand.u32 %v6212, 4294901760
  %6214 = vmatpush.msra.mxu0 %v6213
  %v6215 = vand.u32 %v5835, 4294901760
  %v6216 = vsub.f32 %v5835, %v6215
  %v6217 = vand.u32 %v6216, 4294901760
  %v6218 = vsub.f32 %v6216, %v6217
  %v6219 = vand.u32 %v6218, 4294901760
  %6220 = vmatpush.msra.mxu0 %v6219
  %v6221 = vand.u32 %v5833, 4294901760
  %v6222 = vsub.f32 %v5833, %v6221
  %v6223 = vand.u32 %v6222, 4294901760
  %v6224 = vsub.f32 %v6222, %v6223
  %v6225 = vand.u32 %v6224, 4294901760
  %6226 = vmatpush.msra.mxu0 %v6225
  %v6227 = vand.u32 %v5831, 4294901760
  %v6228 = vsub.f32 %v5831, %v6227
  %v6229 = vand.u32 %v6228, 4294901760
  %v6230 = vsub.f32 %v6228, %v6229
  %v6231 = vand.u32 %v6230, 4294901760
  %6232 = vmatpush.msra.mxu0 %v6231
  %v6233 = vand.u32 %v5855, 4294901760
  %6234 = vmatmul.f32.gmra.mxu0 %v6233
  %v6235 = vpop.f32.mrf.mxu0
  %v6236 = vadd.f32 %v6171, %v6235
  %v6237 = vand.u32 %v5858, 4294901760
  %6238 = vmatmul.f32.gmra.mxu0 %v6237
  %v6239 = vpop.f32.mrf.mxu0
  %v6240 = vadd.f32 %v6179, %v6239
  %v6241 = vand.u32 %v5861, 4294901760
  %6242 = vmatmul.f32.gmra.mxu0 %v6241
  %v6243 = vpop.f32.mrf.mxu0
  %v6244 = vadd.f32 %v6187, %v6243
  %v6245 = vand.u32 %v5864, 4294901760
  %6246 = vmatmul.f32.gmra.mxu0 %v6245
  %v6247 = vpop.f32.mrf.mxu0
  %v6248 = vadd.f32 %v6195, %v6247
  %6249 = vdwg.mxu0
  %6250 = vmatpush.msra.mxu0 0.0
  %6251 = vmatpush.msra.mxu0 0.0
  %6252 = vmatpush.msra.mxu0 0.0
  %6253 = vmatpush.msra.mxu0 0.0
  %6254 = vmatpush.msra.mxu0 0.0
  %6255 = vmatpush.msra.mxu0 0.0
  %6256 = vmatpush.msra.mxu0 0.0
  %6257 = vmatpush.msra.mxu0 0.0
  %6258 = vmatpush.msra.mxu0 0.0
  %6259 = vmatpush.msra.mxu0 0.0
  %6260 = vmatpush.msra.mxu0 0.0
  %6261 = vmatpush.msra.mxu0 0.0
  %v6262 = vand.u32 %v5837, 4294901760
  %v6263 = vsub.f32 %v5837, %v6262
  %6264 = vmatpush.msra.mxu0 %v6263
  %v6265 = vand.u32 %v5835, 4294901760
  %v6266 = vsub.f32 %v5835, %v6265
  %6267 = vmatpush.msra.mxu0 %v6266
  %v6268 = vand.u32 %v5833, 4294901760
  %v6269 = vsub.f32 %v5833, %v6268
  %6270 = vmatpush.msra.mxu0 %v6269
  %v6271 = vand.u32 %v5831, 4294901760
  %v6272 = vsub.f32 %v5831, %v6271
  %6273 = vmatpush.msra.mxu0 %v6272
  %v6274 = vand.u32 %v5855, 4294901760
  %v6275 = vsub.f32 %v5855, %v6274
  %6276 = vmatmul.f32.gmra.mxu0 %v6275
  %v6277 = vpop.f32.mrf.mxu0
  %v6278 = vadd.f32 %v6236, %v6277
  %v6279 = vand.u32 %v5858, 4294901760
  %v6280 = vsub.f32 %v5858, %v6279
  %6281 = vmatmul.f32.gmra.mxu0 %v6280
  %v6282 = vpop.f32.mrf.mxu0
  %v6283 = vadd.f32 %v6240, %v6282
  %v6284 = vand.u32 %v5861, 4294901760
  %v6285 = vsub.f32 %v5861, %v6284
  %6286 = vmatmul.f32.gmra.mxu0 %v6285
  %v6287 = vpop.f32.mrf.mxu0
  %v6288 = vadd.f32 %v6244, %v6287
  %v6289 = vand.u32 %v5864, 4294901760
  %v6290 = vsub.f32 %v5864, %v6289
  %6291 = vmatmul.f32.gmra.mxu0 %v6290
  %v6292 = vpop.f32.mrf.mxu0
  %v6293 = vadd.f32 %v6248, %v6292
  %6294 = vdwg.mxu0
  %6295 = vmatpush.msra.mxu0 0.0
  %6296 = vmatpush.msra.mxu0 0.0
  %6297 = vmatpush.msra.mxu0 0.0
  %6298 = vmatpush.msra.mxu0 0.0
  %6299 = vmatpush.msra.mxu0 0.0
  %6300 = vmatpush.msra.mxu0 0.0
  %6301 = vmatpush.msra.mxu0 0.0
  %6302 = vmatpush.msra.mxu0 0.0
  %6303 = vmatpush.msra.mxu0 0.0
  %6304 = vmatpush.msra.mxu0 0.0
  %6305 = vmatpush.msra.mxu0 0.0
  %6306 = vmatpush.msra.mxu0 0.0
  %v6307 = vand.u32 %v5837, 4294901760
  %6308 = vmatpush.msra.mxu0 %v6307
  %v6309 = vand.u32 %v5835, 4294901760
  %6310 = vmatpush.msra.mxu0 %v6309
  %v6311 = vand.u32 %v5833, 4294901760
  %6312 = vmatpush.msra.mxu0 %v6311
  %v6313 = vand.u32 %v5831, 4294901760
  %6314 = vmatpush.msra.mxu0 %v6313
  %v6315 = vand.u32 %v5855, 4294901760
  %v6316 = vsub.f32 %v5855, %v6315
  %v6317 = vand.u32 %v6316, 4294901760
  %6318 = vmatmul.f32.gmra.mxu0 %v6317
  %v6319 = vpop.f32.mrf.mxu0
  %v6320 = vadd.f32 %v6278, %v6319
  %v6321 = vand.u32 %v5858, 4294901760
  %v6322 = vsub.f32 %v5858, %v6321
  %v6323 = vand.u32 %v6322, 4294901760
  %6324 = vmatmul.f32.gmra.mxu0 %v6323
  %v6325 = vpop.f32.mrf.mxu0
  %v6326 = vadd.f32 %v6283, %v6325
  %v6327 = vand.u32 %v5861, 4294901760
  %v6328 = vsub.f32 %v5861, %v6327
  %v6329 = vand.u32 %v6328, 4294901760
  %6330 = vmatmul.f32.gmra.mxu0 %v6329
  %v6331 = vpop.f32.mrf.mxu0
  %v6332 = vadd.f32 %v6288, %v6331
  %v6333 = vand.u32 %v5864, 4294901760
  %v6334 = vsub.f32 %v5864, %v6333
  %v6335 = vand.u32 %v6334, 4294901760
  %6336 = vmatmul.f32.gmra.mxu0 %v6335
  %v6337 = vpop.f32.mrf.mxu0
  %v6338 = vadd.f32 %v6293, %v6337
  %6339 = vdwg.mxu0
  %6340 = vmatpush.msra.mxu0 0.0
  %6341 = vmatpush.msra.mxu0 0.0
  %6342 = vmatpush.msra.mxu0 0.0
  %6343 = vmatpush.msra.mxu0 0.0
  %6344 = vmatpush.msra.mxu0 0.0
  %6345 = vmatpush.msra.mxu0 0.0
  %6346 = vmatpush.msra.mxu0 0.0
  %6347 = vmatpush.msra.mxu0 0.0
  %6348 = vmatpush.msra.mxu0 0.0
  %6349 = vmatpush.msra.mxu0 0.0
  %6350 = vmatpush.msra.mxu0 0.0
  %6351 = vmatpush.msra.mxu0 0.0
  %v6352 = vand.u32 %v5837, 4294901760
  %v6353 = vsub.f32 %v5837, %v6352
  %v6354 = vand.u32 %v6353, 4294901760
  %6355 = vmatpush.msra.mxu0 %v6354
  %v6356 = vand.u32 %v5835, 4294901760
  %v6357 = vsub.f32 %v5835, %v6356
  %v6358 = vand.u32 %v6357, 4294901760
  %6359 = vmatpush.msra.mxu0 %v6358
  %v6360 = vand.u32 %v5833, 4294901760
  %v6361 = vsub.f32 %v5833, %v6360
  %v6362 = vand.u32 %v6361, 4294901760
  %6363 = vmatpush.msra.mxu0 %v6362
  %v6364 = vand.u32 %v5831, 4294901760
  %v6365 = vsub.f32 %v5831, %v6364
  %v6366 = vand.u32 %v6365, 4294901760
  %6367 = vmatpush.msra.mxu0 %v6366
  %v6368 = vand.u32 %v5855, 4294901760
  %6369 = vmatmul.f32.gmra.mxu0 %v6368
  %v6370 = vpop.f32.mrf.mxu0
  %v6371 = vadd.f32 %v6320, %v6370
  %v6372 = vand.u32 %v5858, 4294901760
  %6373 = vmatmul.f32.gmra.mxu0 %v6372
  %v6374 = vpop.f32.mrf.mxu0
  %v6375 = vadd.f32 %v6326, %v6374
  %v6376 = vand.u32 %v5861, 4294901760
  %6377 = vmatmul.f32.gmra.mxu0 %v6376
  %v6378 = vpop.f32.mrf.mxu0
  %v6379 = vadd.f32 %v6332, %v6378
  %v6380 = vand.u32 %v5864, 4294901760
  %6381 = vmatmul.f32.gmra.mxu0 %v6380
  %v6382 = vpop.f32.mrf.mxu0
  %v6383 = vadd.f32 %v6338, %v6382
  %6384 = vdwg.mxu0
  %6385 = vmatpush.msra.mxu0 0.0
  %6386 = vmatpush.msra.mxu0 0.0
  %6387 = vmatpush.msra.mxu0 0.0
  %6388 = vmatpush.msra.mxu0 0.0
  %6389 = vmatpush.msra.mxu0 0.0
  %6390 = vmatpush.msra.mxu0 0.0
  %6391 = vmatpush.msra.mxu0 0.0
  %6392 = vmatpush.msra.mxu0 0.0
  %6393 = vmatpush.msra.mxu0 0.0
  %6394 = vmatpush.msra.mxu0 0.0
  %6395 = vmatpush.msra.mxu0 0.0
  %6396 = vmatpush.msra.mxu0 0.0
  %v6397 = vand.u32 %v5837, 4294901760
  %6398 = vmatpush.msra.mxu0 %v6397
  %v6399 = vand.u32 %v5835, 4294901760
  %6400 = vmatpush.msra.mxu0 %v6399
  %v6401 = vand.u32 %v5833, 4294901760
  %6402 = vmatpush.msra.mxu0 %v6401
  %v6403 = vand.u32 %v5831, 4294901760
  %6404 = vmatpush.msra.mxu0 %v6403
  %v6405 = vand.u32 %v5855, 4294901760
  %6406 = vmatmul.f32.gmra.mxu0 %v6405
  %v6407 = vpop.f32.mrf.mxu0
  %v6408 = vadd.f32 %v6371, %v6407
  %v6409 = vand.u32 %v5858, 4294901760
  %6410 = vmatmul.f32.gmra.mxu0 %v6409
  %v6411 = vpop.f32.mrf.mxu0
  %v6412 = vadd.f32 %v6375, %v6411
  %v6413 = vand.u32 %v5861, 4294901760
  %6414 = vmatmul.f32.gmra.mxu0 %v6413
  %v6415 = vpop.f32.mrf.mxu0
  %v6416 = vadd.f32 %v6379, %v6415
  %v6417 = vand.u32 %v5864, 4294901760
  %6418 = vmatmul.f32.gmra.mxu0 %v6417
  %v6419 = vpop.f32.mrf.mxu0
  %v6420 = vadd.f32 %v6383, %v6419
  %6421 = vdwg.mxu0
  %v6422 = vrot.slane %v6130, 4
  %v6423 = vmax.f32 %v6130, %v6422
  %v6424 = vrot.slane %v6423, 2
  %v6425 = vmax.f32 %v6423, %v6424
  %v6426 = vrot.slane %v6425, 1
  %v6427 = vmax.f32 %v6425, %v6426
  %v6428 = vrot.slane %v6408, 4
  %v6429 = vmax.f32 %v6408, %v6428
  %v6430 = vrot.slane %v6429, 2
  %v6431 = vmax.f32 %v6429, %v6430
  %v6432 = vrot.slane %v6431, 1
  %v6433 = vmax.f32 %v6431, %v6432
  %v6434 = vsub.f32 %v6130, %v6427
  %v6435 = vsub.f32 %v6408, %v6433
  %v6436 = vmul.f32 %v6434, 1.442695
  %v6437 = vpow.pop %v6436
  %v6438 = vmul.f32 %v6435, 1.442695
  %v6439 = vpow.pop %v6438
  %v6440 = vrot.slane %v6437, 4
  %v6441 = vadd.f32 %v6437, %v6440
  %v6442 = vrot.slane %v6441, 2
  %v6443 = vadd.f32 %v6441, %v6442
  %v6444 = vrot.slane %v6443, 1
  %v6445 = vadd.f32 %v6443, %v6444
  %v6446 = vrot.slane %v6439, 4
  %v6447 = vadd.f32 %v6439, %v6446
  %v6448 = vrot.slane %v6447, 2
  %v6449 = vadd.f32 %v6447, %v6448
  %v6450 = vrot.slane %v6449, 1
  %v6451 = vadd.f32 %v6449, %v6450
  %v6452 = vrcp.pop %v6445
  %v6453 = vmul.f32 %v6445, %v6452
  %v6454 = vsub.f32 1.0, %v6453
  %v6455 = vmul.f32 %v6452, %v6454
  %v6456 = vadd.f32 %v6452, %v6455
  %vm6457 = vweird.f32 %v6445
  %vm6458 = vweird.f32 %v6452
  %vm6459 = vmor %vm6457, %vm6458
  %v6460 = vsel %vm6459, %v6452, %v6456
  %v6461 = vand.u32 2147483647, %v6445
  %vm6462 = vcmp.eq.f32.partialorder %v6461, 8.507059e+37
  %v6463 = vand.u32 %v6445, 2147483648
  %v6464 = vor.u32 1.1754944e-38, %v6463
  %v6465 = vsel %vm6462, %v6464, %v6460
  %v6466 = vrcp.pop %v6451
  %v6467 = vmul.f32 %v6451, %v6466
  %v6468 = vsub.f32 1.0, %v6467
  %v6469 = vmul.f32 %v6466, %v6468
  %v6470 = vadd.f32 %v6466, %v6469
  %vm6471 = vweird.f32 %v6451
  %vm6472 = vweird.f32 %v6466
  %vm6473 = vmor %vm6471, %vm6472
  %v6474 = vsel %vm6473, %v6466, %v6470
  %v6475 = vand.u32 2147483647, %v6451
  %vm6476 = vcmp.eq.f32.partialorder %v6475, 8.507059e+37
  %v6477 = vand.u32 %v6451, 2147483648
  %v6478 = vor.u32 1.1754944e-38, %v6477
  %v6479 = vsel %vm6476, %v6478, %v6474
  %v6480 = vmul.f32 %v6437, %v6465
  %v6481 = vmul.f32 %v6439, %v6479
  %6482 = vst [vmem:[%s4] sm:$0xff] %v6480
  %6483 = vst [vmem:[%s4 + $0x8] sm:$0xff] %v6481
  %v6484 = vrot.slane %v6134, 4
  %v6485 = vmax.f32 %v6134, %v6484
  %v6486 = vrot.slane %v6485, 2
  %v6487 = vmax.f32 %v6485, %v6486
  %v6488 = vrot.slane %v6487, 1
  %v6489 = vmax.f32 %v6487, %v6488
  %v6490 = vrot.slane %v6412, 4
  %v6491 = vmax.f32 %v6412, %v6490
  %v6492 = vrot.slane %v6491, 2
  %v6493 = vmax.f32 %v6491, %v6492
  %v6494 = vrot.slane %v6493, 1
  %v6495 = vmax.f32 %v6493, %v6494
  %v6496 = vsub.f32 %v6134, %v6489
  %v6497 = vsub.f32 %v6412, %v6495
  %v6498 = vmul.f32 %v6496, 1.442695
  %v6499 = vpow.pop %v6498
  %v6500 = vmul.f32 %v6497, 1.442695
  %v6501 = vpow.pop %v6500
  %v6502 = vrot.slane %v6499, 4
  %v6503 = vadd.f32 %v6499, %v6502
  %v6504 = vrot.slane %v6503, 2
  %v6505 = vadd.f32 %v6503, %v6504
  %v6506 = vrot.slane %v6505, 1
  %v6507 = vadd.f32 %v6505, %v6506
  %v6508 = vrot.slane %v6501, 4
  %v6509 = vadd.f32 %v6501, %v6508
  %v6510 = vrot.slane %v6509, 2
  %v6511 = vadd.f32 %v6509, %v6510
  %v6512 = vrot.slane %v6511, 1
  %v6513 = vadd.f32 %v6511, %v6512
  %v6514 = vrcp.pop %v6507
  %v6515 = vmul.f32 %v6507, %v6514
  %v6516 = vsub.f32 1.0, %v6515
  %v6517 = vmul.f32 %v6514, %v6516
  %v6518 = vadd.f32 %v6514, %v6517
  %vm6519 = vweird.f32 %v6507
  %vm6520 = vweird.f32 %v6514
  %vm6521 = vmor %vm6519, %vm6520
  %v6522 = vsel %vm6521, %v6514, %v6518
  %v6523 = vand.u32 2147483647, %v6507
  %vm6524 = vcmp.eq.f32.partialorder %v6523, 8.507059e+37
  %v6525 = vand.u32 %v6507, 2147483648
  %v6526 = vor.u32 1.1754944e-38, %v6525
  %v6527 = vsel %vm6524, %v6526, %v6522
  %v6528 = vrcp.pop %v6513
  %v6529 = vmul.f32 %v6513, %v6528
  %v6530 = vsub.f32 1.0, %v6529
  %v6531 = vmul.f32 %v6528, %v6530
  %v6532 = vadd.f32 %v6528, %v6531
  %vm6533 = vweird.f32 %v6513
  %vm6534 = vweird.f32 %v6528
  %vm6535 = vmor %vm6533, %vm6534
  %v6536 = vsel %vm6535, %v6528, %v6532
  %v6537 = vand.u32 2147483647, %v6513
  %vm6538 = vcmp.eq.f32.partialorder %v6537, 8.507059e+37
  %v6539 = vand.u32 %v6513, 2147483648
  %v6540 = vor.u32 1.1754944e-38, %v6539
  %v6541 = vsel %vm6538, %v6540, %v6536
  %v6542 = vmul.f32 %v6499, %v6527
  %v6543 = vmul.f32 %v6501, %v6541
  %6544 = vst [vmem:[%s4 + $0x10] sm:$0xff] %v6542
  %6545 = vst [vmem:[%s4 + $0x18] sm:$0xff] %v6543
  %v6546 = vrot.slane %v6138, 4
  %v6547 = vmax.f32 %v6138, %v6546
  %v6548 = vrot.slane %v6547, 2
  %v6549 = vmax.f32 %v6547, %v6548
  %v6550 = vrot.slane %v6549, 1
  %v6551 = vmax.f32 %v6549, %v6550
  %v6552 = vrot.slane %v6416, 4
  %v6553 = vmax.f32 %v6416, %v6552
  %v6554 = vrot.slane %v6553, 2
  %v6555 = vmax.f32 %v6553, %v6554
  %v6556 = vrot.slane %v6555, 1
  %v6557 = vmax.f32 %v6555, %v6556
  %v6558 = vsub.f32 %v6138, %v6551
  %v6559 = vsub.f32 %v6416, %v6557
  %v6560 = vmul.f32 %v6558, 1.442695
  %v6561 = vpow.pop %v6560
  %v6562 = vmul.f32 %v6559, 1.442695
  %v6563 = vpow.pop %v6562
  %v6564 = vrot.slane %v6561, 4
  %v6565 = vadd.f32 %v6561, %v6564
  %v6566 = vrot.slane %v6565, 2
  %v6567 = vadd.f32 %v6565, %v6566
  %v6568 = vrot.slane %v6567, 1
  %v6569 = vadd.f32 %v6567, %v6568
  %v6570 = vrot.slane %v6563, 4
  %v6571 = vadd.f32 %v6563, %v6570
  %v6572 = vrot.slane %v6571, 2
  %v6573 = vadd.f32 %v6571, %v6572
  %v6574 = vrot.slane %v6573, 1
  %v6575 = vadd.f32 %v6573, %v6574
  %v6576 = vrcp.pop %v6569
  %v6577 = vmul.f32 %v6569, %v6576
  %v6578 = vsub.f32 1.0, %v6577
  %v6579 = vmul.f32 %v6576, %v6578
  %v6580 = vadd.f32 %v6576, %v6579
  %vm6581 = vweird.f32 %v6569
  %vm6582 = vweird.f32 %v6576
  %vm6583 = vmor %vm6581, %vm6582
  %v6584 = vsel %vm6583, %v6576, %v6580
  %v6585 = vand.u32 2147483647, %v6569
  %vm6586 = vcmp.eq.f32.partialorder %v6585, 8.507059e+37
  %v6587 = vand.u32 %v6569, 2147483648
  %v6588 = vor.u32 1.1754944e-38, %v6587
  %v6589 = vsel %vm6586, %v6588, %v6584
  %v6590 = vrcp.pop %v6575
  %v6591 = vmul.f32 %v6575, %v6590
  %v6592 = vsub.f32 1.0, %v6591
  %v6593 = vmul.f32 %v6590, %v6592
  %v6594 = vadd.f32 %v6590, %v6593
  %vm6595 = vweird.f32 %v6575
  %vm6596 = vweird.f32 %v6590
  %vm6597 = vmor %vm6595, %vm6596
  %v6598 = vsel %vm6597, %v6590, %v6594
  %v6599 = vand.u32 2147483647, %v6575
  %vm6600 = vcmp.eq.f32.partialorder %v6599, 8.507059e+37
  %v6601 = vand.u32 %v6575, 2147483648
  %v6602 = vor.u32 1.1754944e-38, %v6601
  %v6603 = vsel %vm6600, %v6602, %v6598
  %v6604 = vmul.f32 %v6561, %v6589
  %v6605 = vmul.f32 %v6563, %v6603
  %6606 = vst [vmem:[%s4 + $0x20] sm:$0xff] %v6604
  %6607 = vst [vmem:[%s4 + $0x28] sm:$0xff] %v6605
  %v6608 = vrot.slane %v6142, 4
  %v6609 = vmax.f32 %v6142, %v6608
  %v6610 = vrot.slane %v6609, 2
  %v6611 = vmax.f32 %v6609, %v6610
  %v6612 = vrot.slane %v6611, 1
  %v6613 = vmax.f32 %v6611, %v6612
  %v6614 = vrot.slane %v6420, 4
  %v6615 = vmax.f32 %v6420, %v6614
  %v6616 = vrot.slane %v6615, 2
  %v6617 = vmax.f32 %v6615, %v6616
  %v6618 = vrot.slane %v6617, 1
  %v6619 = vmax.f32 %v6617, %v6618
  %v6620 = vsub.f32 %v6142, %v6613
  %v6621 = vsub.f32 %v6420, %v6619
  %v6622 = vmul.f32 %v6620, 1.442695
  %v6623 = vpow.pop %v6622
  %v6624 = vmul.f32 %v6621, 1.442695
  %v6625 = vpow.pop %v6624
  %v6626 = vrot.slane %v6623, 4
  %v6627 = vadd.f32 %v6623, %v6626
  %v6628 = vrot.slane %v6627, 2
  %v6629 = vadd.f32 %v6627, %v6628
  %v6630 = vrot.slane %v6629, 1
  %v6631 = vadd.f32 %v6629, %v6630
  %v6632 = vrot.slane %v6625, 4
  %v6633 = vadd.f32 %v6625, %v6632
  %v6634 = vrot.slane %v6633, 2
  %v6635 = vadd.f32 %v6633, %v6634
  %v6636 = vrot.slane %v6635, 1
  %v6637 = vadd.f32 %v6635, %v6636
  %v6638 = vrcp.pop %v6631
  %v6639 = vmul.f32 %v6631, %v6638
  %v6640 = vsub.f32 1.0, %v6639
  %v6641 = vmul.f32 %v6638, %v6640
  %v6642 = vadd.f32 %v6638, %v6641
  %vm6643 = vweird.f32 %v6631
  %vm6644 = vweird.f32 %v6638
  %vm6645 = vmor %vm6643, %vm6644
  %v6646 = vsel %vm6645, %v6638, %v6642
  %v6647 = vand.u32 2147483647, %v6631
  %vm6648 = vcmp.eq.f32.partialorder %v6647, 8.507059e+37
  %v6649 = vand.u32 %v6631, 2147483648
  %v6650 = vor.u32 1.1754944e-38, %v6649
  %v6651 = vsel %vm6648, %v6650, %v6646
  %v6652 = vrcp.pop %v6637
  %v6653 = vmul.f32 %v6637, %v6652
  %v6654 = vsub.f32 1.0, %v6653
  %v6655 = vmul.f32 %v6652, %v6654
  %v6656 = vadd.f32 %v6652, %v6655
  %vm6657 = vweird.f32 %v6637
  %vm6658 = vweird.f32 %v6652
  %vm6659 = vmor %vm6657, %vm6658
  %v6660 = vsel %vm6659, %v6652, %v6656
  %v6661 = vand.u32 2147483647, %v6637
  %vm6662 = vcmp.eq.f32.partialorder %v6661, 8.507059e+37
  %v6663 = vand.u32 %v6637, 2147483648
  %v6664 = vor.u32 1.1754944e-38, %v6663
  %v6665 = vsel %vm6662, %v6664, %v6660
  %v6666 = vmul.f32 %v6623, %v6651
  %v6667 = vmul.f32 %v6625, %v6665
  %6668 = vst [vmem:[%s4 + $0x30] sm:$0xff] %v6666
  %6669 = vst [vmem:[%s4 + $0x38] sm:$0xff] %v6667
  // Predicated region
  $region18: #{resnet_forward.1} parent=0 // pred_check
    _
  $region19: #{resnet_forward.1} parent=0 // pred_check_branch
    %6671 = sbr.rel (0) target = $region21
  $region20: #{resnet_forward.1} parent=0 // pred_region
    _
  $region21: #{resnet_forward.1} parent=0 // pred_fallthru
    _
  // Predicated region
  $region22: #{resnet_forward.1} parent=0 // pred_check
    _
  $region23: #{resnet_forward.1} parent=0 // pred_check_branch
    %6673 = sbr.rel (0) target = $region25
  $region24: #{resnet_forward.1} parent=0 // pred_region
    _
  $region25: #{resnet_forward.1} parent=0 // pred_fallthru
    _

</llo_original>
